<compile_context>
chip_gen: v7x
topology: tpu7x:2x2x1
jax: 0.10.0
libtpu: 0.0.40
codegen_flags: <defaults>
</compile_context>

<pallas_src>
import jax
import jax.numpy as jnp
from jax import lax
from jax.experimental import pallas as pl
from jax.experimental.pallas import tpu as pltpu
import numpy as np


def _round_up(x, m):
    return (x + m - 1) // m * m


def _triple(v):
    return (v, v, v) if isinstance(v, int) else tuple(v)


# ---------------------------------------------------------------------------
# Forward wrapper: conv (im2col folded into the kernel) + fused BN stats,
# then a light BN-apply kernel.
# ---------------------------------------------------------------------------
def basic_conv3d_rbf(x, conv_w, gamma, beta, *, stride=1, padding=0, dilation=1,
                     eps=1e-5, compute_dtype=jnp.bfloat16, inter_dtype=jnp.bfloat16,
                     tm_target=8192):
    """x: (N, C_in, D, H, W) f32; conv_w: (C_out, C_in, kd, kh, kw) f32."""
    N, C_in, D, H, W = x.shape
    C_out = conv_w.shape[0]
    kd, kh, kw = conv_w.shape[2:]
    sd, sh, sw = _triple(stride)
    pd, ph, pw = _triple(padding)
    dd, dh, dw = _triple(dilation)

    Dp, Hp, Wp = D + 2 * pd, H + 2 * ph, W + 2 * pw
    Do = (Dp - dd * (kd - 1) - 1) // sd + 1
    Ho = (Hp - dh * (kh - 1) - 1) // sh + 1
    Wo = (Wp - dw * (kw - 1) - 1) // sw + 1
    Lp = Dp * Hp * Wp                       # padded flat volume per sample
    n_taps = kd * kh * kw

    # Static per-tap flat shifts (i, j, l) row-major; monotone, so last is the max.
    offsets = [i * dd * Hp * Wp + j * dh * Wp + l * dw
               for i in range(kd) for j in range(kh) for l in range(kw)]
    off_max = offsets[-1]
    HALO = max(128, _round_up(off_max, 128))
    BASE = HALO if HALO % 256 == 0 else 2 * HALO    # tile granule: HALO | BASE, 256 | BASE

    # --- per-generation VMEM budget -----------------------------------------
    try:
        vmem_phys = int(pltpu.get_tpu_info().vmem_capacity_bytes)
    except Exception:
        vmem_phys = 64 * 1024 * 1024
    vmem_limit = max(32 * 1024 * 1024, min(vmem_phys * 3 // 4, 100 * 1024 * 1024))
    vmem_budget = vmem_limit - 2 * 1024 * 1024

    cd_sz = jnp.dtype(compute_dtype).itemsize
    it_sz = jnp.dtype(inter_dtype).itemsize

    def _vmem_per_step(t):
        return (2 * n_taps * C_out * C_in * cd_sz        # weights (double-buffered)
                + 2 * C_in * t * cd_sz                   # main input slab (dbl-buf)
                + 2 * C_in * HALO * cd_sz                # halo slab (dbl-buf)
                + 2 * t * cd_sz                          # stats validity mask (dbl-buf)
                + 2 * C_out * t * it_sz                  # conv output tile (dbl-buf)
                + C_in * (t + HALO) * cd_sz              # stitched slab scratch
                + 3 * C_out * t * 4                      # f32 acc + dot/stats temporaries
                + 4 * C_out * 4 + (1 << 16))             # stats blocks + slack

    cap = max(BASE, min(_round_up(Lp, BASE), _round_up(tm_target, BASE)))
    cands = [k * BASE for k in range(cap // BASE, 0, -1)
             if _vmem_per_step(k * BASE) <= vmem_budget] or [BASE]
    tm = min(cands, key=lambda t: (_round_up(Lp, t), -t))   # least M padding, then biggest
    M_pad = _round_up(Lp, tm)
    num_m = M_pad // tm
    TM_IN = tm + HALO
    Lx = M_pad + HALO                                    # every halo read stays in-bounds
    ratio = tm // HALO

    # --- wrapper-side data prep (one pad+flatten; no kd*kh*kw expansion) ----
    xp = jnp.pad(x, ((0, 0), (0, 0), (pd, pd), (ph, ph), (pw, pw)))
    x_flat = xp.reshape(N, C_in, Lp)
    x_flat = jnp.pad(x_flat, ((0, 0), (0, 0), (0, Lx - Lp))).astype(compute_dtype)

    # taps-major weights: w_taps[t, co, c] = conv_w[co, c, i, j, l]
    w_taps = conv_w.transpose(2, 3, 4, 0, 1).reshape(n_taps, C_out, C_in).astype(compute_dtype)

    # validity mask over the padded flat grid: 1 on the Do*Ho*Wo real output positions.
    md = (jnp.arange(Dp) % sd == 0) & (jnp.arange(Dp) < Do * sd)
    mh = (jnp.arange(Hp) % sh == 0) & (jnp.arange(Hp) < Ho * sh)
    mw = (jnp.arange(Wp) % sw == 0) & (jnp.arange(Wp) < Wo * sw)
    mask = (md[:, None, None] & mh[None, :, None] & mw[None, None, :]).reshape(1, Lp)
    mask = jnp.pad(mask, ((0, 0), (0, M_pad - Lp))).astype(compute_dtype)

    # --- Kernel 1: conv (in-kernel im2col via static lane shifts) + BN stats -
    def conv_stats_kernel(w_ref, xm_ref, xh_ref, msk_ref, y_ref, sum_ref, ssq_ref, xs_ref):
        m = pl.program_id(1)

        @pl.when(m == 0)
        def _init():
            sum_ref[...] = jnp.zeros_like(sum_ref)
            ssq_ref[...] = jnp.zeros_like(ssq_ref)

        # Stitch tile + halo into one contiguous slab (aligned copies); every tap is
        # then a statically shifted window of this slab -> each input element is read
        # from HBM exactly once.
        xs_ref[:, :tm] = xm_ref[0]
        xs_ref[:, tm:] = xh_ref[0]

        acc = jnp.zeros((C_out, tm), jnp.float32)
        for t in range(n_taps):                                   # static unrolled taps
            xw = xs_ref[:, offsets[t]:offsets[t] + tm]            # (C_in, tm)
            acc = acc + jnp.dot(w_ref[t], xw, preferred_element_type=jnp.float32)

        y_ref[0] = acc.astype(y_ref.dtype)                        # bf16 intermediate

        # BN statistics from the f32 accumulator; mask drops padded-grid garbage.
        # NOTE: single-pass E[x^2]-E[x]^2 in f32; adequate at these magnitudes.
        msk = msk_ref[...].astype(jnp.float32)                    # (1, tm)
        sum_ref[...] += jnp.sum(acc * msk, axis=1, keepdims=True)[None]
        ssq_ref[...] += jnp.sum(acc * acc * msk, axis=1, keepdims=True)[None]

    cost1 = pl.CostEstimate(
        flops=2 * N * M_pad * C_out * C_in * n_taps,
        transcendentals=0,
        bytes_accessed=(N * C_in * (M_pad + num_m * HALO) * cd_sz
                        + N * M_pad * cd_sz
                        + N * C_out * M_pad * it_sz
                        + n_taps * C_out * C_in * cd_sz
                        + 2 * N * C_out * 4),
    )
    conv_y, ch_sum, ch_ssq = pl.pallas_call(
        conv_stats_kernel,
        out_shape=(
            jax.ShapeDtypeStruct((N, C_out, M_pad), inter_dtype),
            jax.ShapeDtypeStruct((N, C_out, 1), jnp.float32),
            jax.ShapeDtypeStruct((N, C_out, 1), jnp.float32),
        ),
        grid_spec=pltpu.PrefetchScalarGridSpec(
            num_scalar_prefetch=0,
            grid=(N, num_m),
            in_specs=[
                pl.BlockSpec((n_taps, C_out, C_in), lambda n, m: (0, 0, 0)),     # weights
                pl.BlockSpec((1, C_in, tm), lambda n, m: (n, 0, m)),             # main slab
                pl.BlockSpec((1, C_in, HALO), lambda n, m: (n, 0, (m + 1) * ratio)),  # halo
                pl.BlockSpec((1, tm), lambda n, m: (0, m)),                      # stats mask
            ],
            out_specs=(
                pl.BlockSpec((1, C_out, tm), lambda n, m: (n, 0, m)),            # conv tile
                pl.BlockSpec((1, C_out, 1), lambda n, m: (n, 0, 0)),             # sum partial
                pl.BlockSpec((1, C_out, 1), lambda n, m: (n, 0, 0)),             # ssq partial
            ),
            scratch_shapes=[pltpu.VMEM((C_in, TM_IN), compute_dtype)],
        ),
        compiler_params=pltpu.CompilerParams(
            dimension_semantics=("parallel", "arbitrary"),   # batch parallel (v7x 2 TCs)
            vmem_limit_bytes=vmem_limit,
        ),
        cost_estimate=cost1,
    )(w_taps, x_flat, x_flat, mask)

    # --- BN training-mode statistics (tiny epilogue; reduce per-batch partials)
    count = jnp.float32(N * Do * Ho * Wo)
    tot_sum = jnp.sum(ch_sum, axis=0)                       # (C_out, 1)
    tot_ssq = jnp.sum(ch_ssq, axis=0)
    mean = tot_sum / count
    var = jnp.maximum(tot_ssq / count - mean * mean, 0.0)   # biased variance
    inv = lax.rsqrt(var + jnp.float32(eps))
    scale = gamma.reshape(C_out, 1).astype(jnp.float32) * inv
    shift = beta.reshape(C_out, 1).astype(jnp.float32) - mean * scale

    # --- Kernel 2: apply normalization (streaming, both axes parallel) ------
    def bn_apply_kernel(y_ref, sc_ref, sh_ref, o_ref):
        o_ref[0] = (y_ref[0].astype(jnp.float32) * sc_ref[...] + sh_ref[...]).astype(o_ref.dtype)

    cost2 = pl.CostEstimate(
        flops=2 * N * C_out * M_pad,
        transcendentals=0,
        bytes_accessed=N * C_out * M_pad * (it_sz + 4) + 2 * C_out * 4,
    )
    y_bn = pl.pallas_call(
        bn_apply_kernel,
        out_shape=jax.ShapeDtypeStruct((N, C_out, M_pad), jnp.float32),
        grid_spec=pltpu.PrefetchScalarGridSpec(
            num_scalar_prefetch=0,
            grid=(N, num_m),
            in_specs=[
                pl.BlockSpec((1, C_out, tm), lambda n, m: (n, 0, m)),
                pl.BlockSpec((C_out, 1), lambda n, m: (0, 0)),
                pl.BlockSpec((C_out, 1), lambda n, m: (0, 0)),
            ],
            out_specs=pl.BlockSpec((1, C_out, tm), lambda n, m: (n, 0, m)),
        ),
        compiler_params=pltpu.CompilerParams(
            dimension_semantics=("parallel", "parallel"),
            vmem_limit_bytes=vmem_limit,
        ),
        cost_estimate=cost2,
    )(conv_y, scale, shift)

    # Output is already (N, C_out, ...) — no transpose; one strided compaction slice
    # extracts the real Do*Ho*Wo positions from the padded flat grid.
    y_bn = y_bn[:, :, :Lp].reshape(N, C_out, Dp, Hp, Wp)
    out = y_bn[:, :,
               : (Do - 1) * sd + 1 : sd,
               : (Ho - 1) * sh + 1 : sh,
               : (Wo - 1) * sw + 1 : sw]
    return out


# ---------------------------------------------------------------------------
# Pure-JAX reference (conv in compute_dtype, intermediate rounded like the kernel)
# ---------------------------------------------------------------------------
def _reference(x, conv_w, gamma, beta, *, stride, padding, dilation, eps=1e-5,
               compute_dtype=jnp.bfloat16, inter_dtype=jnp.bfloat16):
    s = _triple(stride)
    p = [(q, q) for q in _triple(padding)]
    d = _triple(dilation)
    y = lax.conv_general_dilated(
        x.astype(compute_dtype), conv_w.astype(compute_dtype),
        window_strides=s, padding=p, rhs_dilation=d,
        dimension_numbers=("NCDHW", "OIDHW", "NCDHW"),
        preferred_element_type=jnp.float32)
    y = y.astype(inter_dtype).astype(jnp.float32)
    mean = jnp.mean(y, axis=(0, 2, 3, 4), keepdims=True)
    var = jnp.mean((y - mean) ** 2, axis=(0, 2, 3, 4), keepdims=True)
    g = gamma.reshape(1, -1, 1, 1, 1)
    b = beta.reshape(1, -1, 1, 1, 1)
    return (y - mean) * lax.rsqrt(var + eps) * g + b


# ---------------------------------------------------------------------------
if __name__ == "__main__":
    # shapes consistent with the module: in_planes=4, out_planes=8, kernel_size=3,
    # stride=1, padding=1, dilation=1, input N=2, D=H=W=8.
    N, C_in, C_out = 2, 4, 8
    D = H = W = 8
    ks, stride, padding, dilation = 3, 1, 1, 1

    key = jax.random.PRNGKey(0)
    kx, kw_, kg, kb = jax.random.split(key, 4)

    x = jax.random.normal(kx, (N, C_in, D, H, W), dtype=jnp.float32)
    conv_w = jax.random.normal(kw_, (C_out, C_in, ks, ks, ks), dtype=jnp.float32) * 0.1
    gamma = 1.0 + 0.1 * jax.random.normal(kg, (C_out,), dtype=jnp.float32)
    beta = 0.1 * jax.random.normal(kb, (C_out,), dtype=jnp.float32)

    out = basic_conv3d_rbf(x, conv_w, gamma, beta,
                           stride=stride, padding=padding, dilation=dilation)
    out = jax.block_until_ready(out)
    assert out.shape == (N, C_out, D, H, W)

    ref = _reference(x, conv_w, gamma, beta, stride=stride, padding=padding,
                     dilation=dilation)
    np.testing.assert_allclose(np.asarray(out), np.asarray(ref), rtol=1e-2, atol=1e-2)

    print("KERNEL_OK")
</pallas_src>

<mosaic_0001>
module attributes {stable_mosaic.version = 11 : i64} {
  func.func @conv_stats_kernel(%arg0: i32, %arg1: i32, %arg2: memref<27x8x4xbf16, #tpu.memory_space<vmem>>, %arg3: memref<1x4x1024xbf16, #tpu.memory_space<vmem>>, %arg4: memref<1x4x256xbf16, #tpu.memory_space<vmem>>, %arg5: memref<1x1024xbf16, #tpu.memory_space<vmem>>, %arg6: memref<1x8x1024xbf16, #tpu.memory_space<vmem>>, %arg7: memref<1x8x1xf32, #tpu.memory_space<vmem>>, %arg8: memref<1x8x1xf32, #tpu.memory_space<vmem>>, %arg9: memref<4x1280xbf16, #tpu.memory_space<vmem>>) attributes {dimension_semantics = [#tpu.dimension_semantics<parallel>, #tpu.dimension_semantics<arbitrary>], iteration_bounds = array<i64: 2, 1>, scalar_prefetch = 0 : i64, scratch_operands = 1 : i64, tpu.core_type = #tpu.core_type<tc>, window_params = [{pipeline_mode = #tpu.pipeline_mode<synchronous>, transform_indices = @transform_0, window_bounds = array<i64: 27, 8, 4>}, {transform_indices = @transform_1, window_bounds = array<i64: 1, 4, 1024>}, {transform_indices = @transform_2, window_bounds = array<i64: 1, 4, 256>}, {transform_indices = @transform_3, window_bounds = array<i64: 1, 1024>}, {transform_indices = @transform_4, window_bounds = array<i64: 1, 8, 1024>}, {transform_indices = @transform_5, window_bounds = array<i64: 1, 8, 1>}, {transform_indices = @transform_6, window_bounds = array<i64: 1, 8, 1>}]} {
    %c0_i32 = arith.constant 0 : i32
    %0 = arith.cmpi eq, %arg1, %c0_i32 : i32
    %1 = arith.extui %0 : i1 to i32
    %c0_i32_0 = arith.constant 0 : i32
    %2 = arith.cmpi ne, %1, %c0_i32_0 : i32
    scf.if %2 {
      %cst_146 = arith.constant 0.000000e+00 : f32
      %168 = vector.broadcast %cst_146 : f32 to vector<1x8x1xf32>
      %c0_147 = arith.constant 0 : index
      %c0_148 = arith.constant 0 : index
      %c0_149 = arith.constant 0 : index
      %169 = vector.load %arg7[%c0_147, %c0_148, %c0_149] : memref<1x8x1xf32, #tpu.memory_space<vmem>>, vector<1x8x1xf32>
      tpu.vector_store %arg7[%c0_147, %c0_148, %c0_149], %168 {strides = array<i32>} : memref<1x8x1xf32, #tpu.memory_space<vmem>>, vector<1x8x1xf32>,
      %cst_150 = arith.constant 0.000000e+00 : f32
      %170 = vector.broadcast %cst_150 : f32 to vector<1x8x1xf32>
      %c0_151 = arith.constant 0 : index
      %c0_152 = arith.constant 0 : index
      %c0_153 = arith.constant 0 : index
      %171 = vector.load %arg8[%c0_151, %c0_152, %c0_153] : memref<1x8x1xf32, #tpu.memory_space<vmem>>, vector<1x8x1xf32>
      tpu.vector_store %arg8[%c0_151, %c0_152, %c0_153], %170 {strides = array<i32>} : memref<1x8x1xf32, #tpu.memory_space<vmem>>, vector<1x8x1xf32>,
    } else {
    }
    %c0 = arith.constant 0 : index
    %c0_1 = arith.constant 0 : index
    %c0_2 = arith.constant 0 : index
    %3 = vector.load %arg3[%c0, %c0_1, %c0_2] : memref<1x4x1024xbf16, #tpu.memory_space<vmem>>, vector<1x4x1024xbf16>
    %4 = vector.shape_cast %3 : vector<1x4x1024xbf16> to vector<4x1024xbf16>
    %c0_3 = arith.constant 0 : index
    %c0_4 = arith.constant 0 : index
    %5 = vector.load %arg9[%c0_3, %c0_4] : memref<4x1280xbf16, #tpu.memory_space<vmem>>, vector<4x1024xbf16>
    tpu.vector_store %arg9[%c0_3, %c0_4], %4 {strides = array<i32>} : memref<4x1280xbf16, #tpu.memory_space<vmem>>, vector<4x1024xbf16>,
    %c0_5 = arith.constant 0 : index
    %c0_6 = arith.constant 0 : index
    %c0_7 = arith.constant 0 : index
    %6 = vector.load %arg4[%c0_5, %c0_6, %c0_7] : memref<1x4x256xbf16, #tpu.memory_space<vmem>>, vector<1x4x256xbf16>
    %7 = vector.shape_cast %6 : vector<1x4x256xbf16> to vector<4x256xbf16>
    %c0_8 = arith.constant 0 : index
    %c1024 = arith.constant 1024 : index
    %8 = vector.load %arg9[%c0_8, %c1024] : memref<4x1280xbf16, #tpu.memory_space<vmem>>, vector<4x256xbf16>
    tpu.vector_store %arg9[%c0_8, %c1024], %7 {strides = array<i32>} : memref<4x1280xbf16, #tpu.memory_space<vmem>>, vector<4x256xbf16>,
    %cst = arith.constant 0.000000e+00 : f32
    %9 = vector.broadcast %cst : f32 to vector<8x1024xf32>
    %c0_9 = arith.constant 0 : index
    %c0_10 = arith.constant 0 : index
    %10 = vector.load %arg9[%c0_9, %c0_10] : memref<4x1280xbf16, #tpu.memory_space<vmem>>, vector<4x1024xbf16>
    %c0_11 = arith.constant 0 : index
    %c0_12 = arith.constant 0 : index
    %c0_13 = arith.constant 0 : index
    %11 = vector.load %arg2[%c0_11, %c0_12, %c0_13] : memref<27x8x4xbf16, #tpu.memory_space<vmem>>, vector<1x8x4xbf16>
    %12 = vector.shape_cast %11 : vector<1x8x4xbf16> to vector<8x4xbf16>
    %cst_14 = arith.constant dense<0.000000e+00> : vector<8x1024xf32>
    %13 = tpu.matmul %12, %10, %cst_14 {dimension_numbers = #tpu.dot_dimension_numbers<[1], [0], [0], [1], [0, 0, 1, 1], [], []>} : vector<8x4xbf16>, vector<4x1024xbf16>, vector<8x1024xf32> -> vector<8x1024xf32>
    %14 = arith.addf %9, %13 : vector<8x1024xf32>
    %c0_15 = arith.constant 0 : index
    %c1 = arith.constant 1 : index
    %15 = vector.load %arg9[%c0_15, %c1] : memref<4x1280xbf16, #tpu.memory_space<vmem>>, vector<4x1024xbf16>
    %c1_16 = arith.constant 1 : index
    %c0_17 = arith.constant 0 : index
    %c0_18 = arith.constant 0 : index
    %16 = vector.load %arg2[%c1_16, %c0_17, %c0_18] : memref<27x8x4xbf16, #tpu.memory_space<vmem>>, vector<1x8x4xbf16>
    %17 = vector.shape_cast %16 : vector<1x8x4xbf16> to vector<8x4xbf16>
    %cst_19 = arith.constant dense<0.000000e+00> : vector<8x1024xf32>
    %18 = tpu.matmul %17, %15, %cst_19 {dimension_numbers = #tpu.dot_dimension_numbers<[1], [0], [0], [1], [0, 0, 1, 1], [], []>} : vector<8x4xbf16>, vector<4x1024xbf16>, vector<8x1024xf32> -> vector<8x1024xf32>
    %19 = arith.addf %14, %18 : vector<8x1024xf32>
    %c0_20 = arith.constant 0 : index
    %c2 = arith.constant 2 : index
    %20 = vector.load %arg9[%c0_20, %c2] : memref<4x1280xbf16, #tpu.memory_space<vmem>>, vector<4x1024xbf16>
    %c2_21 = arith.constant 2 : index
    %c0_22 = arith.constant 0 : index
    %c0_23 = arith.constant 0 : index
    %21 = vector.load %arg2[%c2_21, %c0_22, %c0_23] : memref<27x8x4xbf16, #tpu.memory_space<vmem>>, vector<1x8x4xbf16>
    %22 = vector.shape_cast %21 : vector<1x8x4xbf16> to vector<8x4xbf16>
    %cst_24 = arith.constant dense<0.000000e+00> : vector<8x1024xf32>
    %23 = tpu.matmul %22, %20, %cst_24 {dimension_numbers = #tpu.dot_dimension_numbers<[1], [0], [0], [1], [0, 0, 1, 1], [], []>} : vector<8x4xbf16>, vector<4x1024xbf16>, vector<8x1024xf32> -> vector<8x1024xf32>
    %24 = arith.addf %19, %23 : vector<8x1024xf32>
    %c0_25 = arith.constant 0 : index
    %c10 = arith.constant 10 : index
    %25 = vector.load %arg9[%c0_25, %c10] : memref<4x1280xbf16, #tpu.memory_space<vmem>>, vector<4x1024xbf16>
    %c3 = arith.constant 3 : index
    %c0_26 = arith.constant 0 : index
    %c0_27 = arith.constant 0 : index
    %26 = vector.load %arg2[%c3, %c0_26, %c0_27] : memref<27x8x4xbf16, #tpu.memory_space<vmem>>, vector<1x8x4xbf16>
    %27 = vector.shape_cast %26 : vector<1x8x4xbf16> to vector<8x4xbf16>
    %cst_28 = arith.constant dense<0.000000e+00> : vector<8x1024xf32>
    %28 = tpu.matmul %27, %25, %cst_28 {dimension_numbers = #tpu.dot_dimension_numbers<[1], [0], [0], [1], [0, 0, 1, 1], [], []>} : vector<8x4xbf16>, vector<4x1024xbf16>, vector<8x1024xf32> -> vector<8x1024xf32>
    %29 = arith.addf %24, %28 : vector<8x1024xf32>
    %c0_29 = arith.constant 0 : index
    %c11 = arith.constant 11 : index
    %30 = vector.load %arg9[%c0_29, %c11] : memref<4x1280xbf16, #tpu.memory_space<vmem>>, vector<4x1024xbf16>
    %c4 = arith.constant 4 : index
    %c0_30 = arith.constant 0 : index
    %c0_31 = arith.constant 0 : index
    %31 = vector.load %arg2[%c4, %c0_30, %c0_31] : memref<27x8x4xbf16, #tpu.memory_space<vmem>>, vector<1x8x4xbf16>
    %32 = vector.shape_cast %31 : vector<1x8x4xbf16> to vector<8x4xbf16>
    %cst_32 = arith.constant dense<0.000000e+00> : vector<8x1024xf32>
    %33 = tpu.matmul %32, %30, %cst_32 {dimension_numbers = #tpu.dot_dimension_numbers<[1], [0], [0], [1], [0, 0, 1, 1], [], []>} : vector<8x4xbf16>, vector<4x1024xbf16>, vector<8x1024xf32> -> vector<8x1024xf32>
    %34 = arith.addf %29, %33 : vector<8x1024xf32>
    %c0_33 = arith.constant 0 : index
    %c12 = arith.constant 12 : index
    %35 = vector.load %arg9[%c0_33, %c12] : memref<4x1280xbf16, #tpu.memory_space<vmem>>, vector<4x1024xbf16>
    %c5 = arith.constant 5 : index
    %c0_34 = arith.constant 0 : index
    %c0_35 = arith.constant 0 : index
    %36 = vector.load %arg2[%c5, %c0_34, %c0_35] : memref<27x8x4xbf16, #tpu.memory_space<vmem>>, vector<1x8x4xbf16>
    %37 = vector.shape_cast %36 : vector<1x8x4xbf16> to vector<8x4xbf16>
    %cst_36 = arith.constant dense<0.000000e+00> : vector<8x1024xf32>
    %38 = tpu.matmul %37, %35, %cst_36 {dimension_numbers = #tpu.dot_dimension_numbers<[1], [0], [0], [1], [0, 0, 1, 1], [], []>} : vector<8x4xbf16>, vector<4x1024xbf16>, vector<8x1024xf32> -> vector<8x1024xf32>
    %39 = arith.addf %34, %38 : vector<8x1024xf32>
    %c0_37 = arith.constant 0 : index
    %c20 = arith.constant 20 : index
    %40 = vector.load %arg9[%c0_37, %c20] : memref<4x1280xbf16, #tpu.memory_space<vmem>>, vector<4x1024xbf16>
    %c6 = arith.constant 6 : index
    %c0_38 = arith.constant 0 : index
    %c0_39 = arith.constant 0 : index
    %41 = vector.load %arg2[%c6, %c0_38, %c0_39] : memref<27x8x4xbf16, #tpu.memory_space<vmem>>, vector<1x8x4xbf16>
    %42 = vector.shape_cast %41 : vector<1x8x4xbf16> to vector<8x4xbf16>
    %cst_40 = arith.constant dense<0.000000e+00> : vector<8x1024xf32>
    %43 = tpu.matmul %42, %40, %cst_40 {dimension_numbers = #tpu.dot_dimension_numbers<[1], [0], [0], [1], [0, 0, 1, 1], [], []>} : vector<8x4xbf16>, vector<4x1024xbf16>, vector<8x1024xf32> -> vector<8x1024xf32>
    %44 = arith.addf %39, %43 : vector<8x1024xf32>
    %c0_41 = arith.constant 0 : index
    %c21 = arith.constant 21 : index
    %45 = vector.load %arg9[%c0_41, %c21] : memref<4x1280xbf16, #tpu.memory_space<vmem>>, vector<4x1024xbf16>
    %c7 = arith.constant 7 : index
    %c0_42 = arith.constant 0 : index
    %c0_43 = arith.constant 0 : index
    %46 = vector.load %arg2[%c7, %c0_42, %c0_43] : memref<27x8x4xbf16, #tpu.memory_space<vmem>>, vector<1x8x4xbf16>
    %47 = vector.shape_cast %46 : vector<1x8x4xbf16> to vector<8x4xbf16>
    %cst_44 = arith.constant dense<0.000000e+00> : vector<8x1024xf32>
    %48 = tpu.matmul %47, %45, %cst_44 {dimension_numbers = #tpu.dot_dimension_numbers<[1], [0], [0], [1], [0, 0, 1, 1], [], []>} : vector<8x4xbf16>, vector<4x1024xbf16>, vector<8x1024xf32> -> vector<8x1024xf32>
    %49 = arith.addf %44, %48 : vector<8x1024xf32>
    %c0_45 = arith.constant 0 : index
    %c22 = arith.constant 22 : index
    %50 = vector.load %arg9[%c0_45, %c22] : memref<4x1280xbf16, #tpu.memory_space<vmem>>, vector<4x1024xbf16>
    %c8 = arith.constant 8 : index
    %c0_46 = arith.constant 0 : index
    %c0_47 = arith.constant 0 : index
    %51 = vector.load %arg2[%c8, %c0_46, %c0_47] : memref<27x8x4xbf16, #tpu.memory_space<vmem>>, vector<1x8x4xbf16>
    %52 = vector.shape_cast %51 : vector<1x8x4xbf16> to vector<8x4xbf16>
    %cst_48 = arith.constant dense<0.000000e+00> : vector<8x1024xf32>
    %53 = tpu.matmul %52, %50, %cst_48 {dimension_numbers = #tpu.dot_dimension_numbers<[1], [0], [0], [1], [0, 0, 1, 1], [], []>} : vector<8x4xbf16>, vector<4x1024xbf16>, vector<8x1024xf32> -> vector<8x1024xf32>
    %54 = arith.addf %49, %53 : vector<8x1024xf32>
    %c0_49 = arith.constant 0 : index
    %c100 = arith.constant 100 : index
    %55 = vector.load %arg9[%c0_49, %c100] : memref<4x1280xbf16, #tpu.memory_space<vmem>>, vector<4x1024xbf16>
    %c9 = arith.constant 9 : index
    %c0_50 = arith.constant 0 : index
    %c0_51 = arith.constant 0 : index
    %56 = vector.load %arg2[%c9, %c0_50, %c0_51] : memref<27x8x4xbf16, #tpu.memory_space<vmem>>, vector<1x8x4xbf16>
    %57 = vector.shape_cast %56 : vector<1x8x4xbf16> to vector<8x4xbf16>
    %cst_52 = arith.constant dense<0.000000e+00> : vector<8x1024xf32>
    %58 = tpu.matmul %57, %55, %cst_52 {dimension_numbers = #tpu.dot_dimension_numbers<[1], [0], [0], [1], [0, 0, 1, 1], [], []>} : vector<8x4xbf16>, vector<4x1024xbf16>, vector<8x1024xf32> -> vector<8x1024xf32>
    %59 = arith.addf %54, %58 : vector<8x1024xf32>
    %c0_53 = arith.constant 0 : index
    %c101 = arith.constant 101 : index
    %60 = vector.load %arg9[%c0_53, %c101] : memref<4x1280xbf16, #tpu.memory_space<vmem>>, vector<4x1024xbf16>
    %c10_54 = arith.constant 10 : index
    %c0_55 = arith.constant 0 : index
    %c0_56 = arith.constant 0 : index
    %61 = vector.load %arg2[%c10_54, %c0_55, %c0_56] : memref<27x8x4xbf16, #tpu.memory_space<vmem>>, vector<1x8x4xbf16>
    %62 = vector.shape_cast %61 : vector<1x8x4xbf16> to vector<8x4xbf16>
    %cst_57 = arith.constant dense<0.000000e+00> : vector<8x1024xf32>
    %63 = tpu.matmul %62, %60, %cst_57 {dimension_numbers = #tpu.dot_dimension_numbers<[1], [0], [0], [1], [0, 0, 1, 1], [], []>} : vector<8x4xbf16>, vector<4x1024xbf16>, vector<8x1024xf32> -> vector<8x1024xf32>
    %64 = arith.addf %59, %63 : vector<8x1024xf32>
    %c0_58 = arith.constant 0 : index
    %c102 = arith.constant 102 : index
    %65 = vector.load %arg9[%c0_58, %c102] : memref<4x1280xbf16, #tpu.memory_space<vmem>>, vector<4x1024xbf16>
    %c11_59 = arith.constant 11 : index
    %c0_60 = arith.constant 0 : index
    %c0_61 = arith.constant 0 : index
    %66 = vector.load %arg2[%c11_59, %c0_60, %c0_61] : memref<27x8x4xbf16, #tpu.memory_space<vmem>>, vector<1x8x4xbf16>
    %67 = vector.shape_cast %66 : vector<1x8x4xbf16> to vector<8x4xbf16>
    %cst_62 = arith.constant dense<0.000000e+00> : vector<8x1024xf32>
    %68 = tpu.matmul %67, %65, %cst_62 {dimension_numbers = #tpu.dot_dimension_numbers<[1], [0], [0], [1], [0, 0, 1, 1], [], []>} : vector<8x4xbf16>, vector<4x1024xbf16>, vector<8x1024xf32> -> vector<8x1024xf32>
    %69 = arith.addf %64, %68 : vector<8x1024xf32>
    %c0_63 = arith.constant 0 : index
    %c110 = arith.constant 110 : index
    %70 = vector.load %arg9[%c0_63, %c110] : memref<4x1280xbf16, #tpu.memory_space<vmem>>, vector<4x1024xbf16>
    %c12_64 = arith.constant 12 : index
    %c0_65 = arith.constant 0 : index
    %c0_66 = arith.constant 0 : index
    %71 = vector.load %arg2[%c12_64, %c0_65, %c0_66] : memref<27x8x4xbf16, #tpu.memory_space<vmem>>, vector<1x8x4xbf16>
    %72 = vector.shape_cast %71 : vector<1x8x4xbf16> to vector<8x4xbf16>
    %cst_67 = arith.constant dense<0.000000e+00> : vector<8x1024xf32>
    %73 = tpu.matmul %72, %70, %cst_67 {dimension_numbers = #tpu.dot_dimension_numbers<[1], [0], [0], [1], [0, 0, 1, 1], [], []>} : vector<8x4xbf16>, vector<4x1024xbf16>, vector<8x1024xf32> -> vector<8x1024xf32>
    %74 = arith.addf %69, %73 : vector<8x1024xf32>
    %c0_68 = arith.constant 0 : index
    %c111 = arith.constant 111 : index
    %75 = vector.load %arg9[%c0_68, %c111] : memref<4x1280xbf16, #tpu.memory_space<vmem>>, vector<4x1024xbf16>
    %c13 = arith.constant 13 : index
    %c0_69 = arith.constant 0 : index
    %c0_70 = arith.constant 0 : index
    %76 = vector.load %arg2[%c13, %c0_69, %c0_70] : memref<27x8x4xbf16, #tpu.memory_space<vmem>>, vector<1x8x4xbf16>
    %77 = vector.shape_cast %76 : vector<1x8x4xbf16> to vector<8x4xbf16>
    %cst_71 = arith.constant dense<0.000000e+00> : vector<8x1024xf32>
    %78 = tpu.matmul %77, %75, %cst_71 {dimension_numbers = #tpu.dot_dimension_numbers<[1], [0], [0], [1], [0, 0, 1, 1], [], []>} : vector<8x4xbf16>, vector<4x1024xbf16>, vector<8x1024xf32> -> vector<8x1024xf32>
    %79 = arith.addf %74, %78 : vector<8x1024xf32>
    %c0_72 = arith.constant 0 : index
    %c112 = arith.constant 112 : index
    %80 = vector.load %arg9[%c0_72, %c112] : memref<4x1280xbf16, #tpu.memory_space<vmem>>, vector<4x1024xbf16>
    %c14 = arith.constant 14 : index
    %c0_73 = arith.constant 0 : index
    %c0_74 = arith.constant 0 : index
    %81 = vector.load %arg2[%c14, %c0_73, %c0_74] : memref<27x8x4xbf16, #tpu.memory_space<vmem>>, vector<1x8x4xbf16>
    %82 = vector.shape_cast %81 : vector<1x8x4xbf16> to vector<8x4xbf16>
    %cst_75 = arith.constant dense<0.000000e+00> : vector<8x1024xf32>
    %83 = tpu.matmul %82, %80, %cst_75 {dimension_numbers = #tpu.dot_dimension_numbers<[1], [0], [0], [1], [0, 0, 1, 1], [], []>} : vector<8x4xbf16>, vector<4x1024xbf16>, vector<8x1024xf32> -> vector<8x1024xf32>
    %84 = arith.addf %79, %83 : vector<8x1024xf32>
    %c0_76 = arith.constant 0 : index
    %c120 = arith.constant 120 : index
    %85 = vector.load %arg9[%c0_76, %c120] : memref<4x1280xbf16, #tpu.memory_space<vmem>>, vector<4x1024xbf16>
    %c15 = arith.constant 15 : index
    %c0_77 = arith.constant 0 : index
    %c0_78 = arith.constant 0 : index
    %86 = vector.load %arg2[%c15, %c0_77, %c0_78] : memref<27x8x4xbf16, #tpu.memory_space<vmem>>, vector<1x8x4xbf16>
    %87 = vector.shape_cast %86 : vector<1x8x4xbf16> to vector<8x4xbf16>
    %cst_79 = arith.constant dense<0.000000e+00> : vector<8x1024xf32>
    %88 = tpu.matmul %87, %85, %cst_79 {dimension_numbers = #tpu.dot_dimension_numbers<[1], [0], [0], [1], [0, 0, 1, 1], [], []>} : vector<8x4xbf16>, vector<4x1024xbf16>, vector<8x1024xf32> -> vector<8x1024xf32>
    %89 = arith.addf %84, %88 : vector<8x1024xf32>
    %c0_80 = arith.constant 0 : index
    %c121 = arith.constant 121 : index
    %90 = vector.load %arg9[%c0_80, %c121] : memref<4x1280xbf16, #tpu.memory_space<vmem>>, vector<4x1024xbf16>
    %c16 = arith.constant 16 : index
    %c0_81 = arith.constant 0 : index
    %c0_82 = arith.constant 0 : index
    %91 = vector.load %arg2[%c16, %c0_81, %c0_82] : memref<27x8x4xbf16, #tpu.memory_space<vmem>>, vector<1x8x4xbf16>
    %92 = vector.shape_cast %91 : vector<1x8x4xbf16> to vector<8x4xbf16>
    %cst_83 = arith.constant dense<0.000000e+00> : vector<8x1024xf32>
    %93 = tpu.matmul %92, %90, %cst_83 {dimension_numbers = #tpu.dot_dimension_numbers<[1], [0], [0], [1], [0, 0, 1, 1], [], []>} : vector<8x4xbf16>, vector<4x1024xbf16>, vector<8x1024xf32> -> vector<8x1024xf32>
    %94 = arith.addf %89, %93 : vector<8x1024xf32>
    %c0_84 = arith.constant 0 : index
    %c122 = arith.constant 122 : index
    %95 = vector.load %arg9[%c0_84, %c122] : memref<4x1280xbf16, #tpu.memory_space<vmem>>, vector<4x1024xbf16>
    %c17 = arith.constant 17 : index
    %c0_85 = arith.constant 0 : index
    %c0_86 = arith.constant 0 : index
    %96 = vector.load %arg2[%c17, %c0_85, %c0_86] : memref<27x8x4xbf16, #tpu.memory_space<vmem>>, vector<1x8x4xbf16>
    %97 = vector.shape_cast %96 : vector<1x8x4xbf16> to vector<8x4xbf16>
    %cst_87 = arith.constant dense<0.000000e+00> : vector<8x1024xf32>
    %98 = tpu.matmul %97, %95, %cst_87 {dimension_numbers = #tpu.dot_dimension_numbers<[1], [0], [0], [1], [0, 0, 1, 1], [], []>} : vector<8x4xbf16>, vector<4x1024xbf16>, vector<8x1024xf32> -> vector<8x1024xf32>
    %99 = arith.addf %94, %98 : vector<8x1024xf32>
    %c0_88 = arith.constant 0 : index
    %c200 = arith.constant 200 : index
    %100 = vector.load %arg9[%c0_88, %c200] : memref<4x1280xbf16, #tpu.memory_space<vmem>>, vector<4x1024xbf16>
    %c18 = arith.constant 18 : index
    %c0_89 = arith.constant 0 : index
    %c0_90 = arith.constant 0 : index
    %101 = vector.load %arg2[%c18, %c0_89, %c0_90] : memref<27x8x4xbf16, #tpu.memory_space<vmem>>, vector<1x8x4xbf16>
    %102 = vector.shape_cast %101 : vector<1x8x4xbf16> to vector<8x4xbf16>
    %cst_91 = arith.constant dense<0.000000e+00> : vector<8x1024xf32>
    %103 = tpu.matmul %102, %100, %cst_91 {dimension_numbers = #tpu.dot_dimension_numbers<[1], [0], [0], [1], [0, 0, 1, 1], [], []>} : vector<8x4xbf16>, vector<4x1024xbf16>, vector<8x1024xf32> -> vector<8x1024xf32>
    %104 = arith.addf %99, %103 : vector<8x1024xf32>
    %c0_92 = arith.constant 0 : index
    %c201 = arith.constant 201 : index
    %105 = vector.load %arg9[%c0_92, %c201] : memref<4x1280xbf16, #tpu.memory_space<vmem>>, vector<4x1024xbf16>
    %c19 = arith.constant 19 : index
    %c0_93 = arith.constant 0 : index
    %c0_94 = arith.constant 0 : index
    %106 = vector.load %arg2[%c19, %c0_93, %c0_94] : memref<27x8x4xbf16, #tpu.memory_space<vmem>>, vector<1x8x4xbf16>
    %107 = vector.shape_cast %106 : vector<1x8x4xbf16> to vector<8x4xbf16>
    %cst_95 = arith.constant dense<0.000000e+00> : vector<8x1024xf32>
    %108 = tpu.matmul %107, %105, %cst_95 {dimension_numbers = #tpu.dot_dimension_numbers<[1], [0], [0], [1], [0, 0, 1, 1], [], []>} : vector<8x4xbf16>, vector<4x1024xbf16>, vector<8x1024xf32> -> vector<8x1024xf32>
    %109 = arith.addf %104, %108 : vector<8x1024xf32>
    %c0_96 = arith.constant 0 : index
    %c202 = arith.constant 202 : index
    %110 = vector.load %arg9[%c0_96, %c202] : memref<4x1280xbf16, #tpu.memory_space<vmem>>, vector<4x1024xbf16>
    %c20_97 = arith.constant 20 : index
    %c0_98 = arith.constant 0 : index
    %c0_99 = arith.constant 0 : index
    %111 = vector.load %arg2[%c20_97, %c0_98, %c0_99] : memref<27x8x4xbf16, #tpu.memory_space<vmem>>, vector<1x8x4xbf16>
    %112 = vector.shape_cast %111 : vector<1x8x4xbf16> to vector<8x4xbf16>
    %cst_100 = arith.constant dense<0.000000e+00> : vector<8x1024xf32>
    %113 = tpu.matmul %112, %110, %cst_100 {dimension_numbers = #tpu.dot_dimension_numbers<[1], [0], [0], [1], [0, 0, 1, 1], [], []>} : vector<8x4xbf16>, vector<4x1024xbf16>, vector<8x1024xf32> -> vector<8x1024xf32>
    %114 = arith.addf %109, %113 : vector<8x1024xf32>
    %c0_101 = arith.constant 0 : index
    %c210 = arith.constant 210 : index
    %115 = vector.load %arg9[%c0_101, %c210] : memref<4x1280xbf16, #tpu.memory_space<vmem>>, vector<4x1024xbf16>
    %c21_102 = arith.constant 21 : index
    %c0_103 = arith.constant 0 : index
    %c0_104 = arith.constant 0 : index
    %116 = vector.load %arg2[%c21_102, %c0_103, %c0_104] : memref<27x8x4xbf16, #tpu.memory_space<vmem>>, vector<1x8x4xbf16>
    %117 = vector.shape_cast %116 : vector<1x8x4xbf16> to vector<8x4xbf16>
    %cst_105 = arith.constant dense<0.000000e+00> : vector<8x1024xf32>
    %118 = tpu.matmul %117, %115, %cst_105 {dimension_numbers = #tpu.dot_dimension_numbers<[1], [0], [0], [1], [0, 0, 1, 1], [], []>} : vector<8x4xbf16>, vector<4x1024xbf16>, vector<8x1024xf32> -> vector<8x1024xf32>
    %119 = arith.addf %114, %118 : vector<8x1024xf32>
    %c0_106 = arith.constant 0 : index
    %c211 = arith.constant 211 : index
    %120 = vector.load %arg9[%c0_106, %c211] : memref<4x1280xbf16, #tpu.memory_space<vmem>>, vector<4x1024xbf16>
    %c22_107 = arith.constant 22 : index
    %c0_108 = arith.constant 0 : index
    %c0_109 = arith.constant 0 : index
    %121 = vector.load %arg2[%c22_107, %c0_108, %c0_109] : memref<27x8x4xbf16, #tpu.memory_space<vmem>>, vector<1x8x4xbf16>
    %122 = vector.shape_cast %121 : vector<1x8x4xbf16> to vector<8x4xbf16>
    %cst_110 = arith.constant dense<0.000000e+00> : vector<8x1024xf32>
    %123 = tpu.matmul %122, %120, %cst_110 {dimension_numbers = #tpu.dot_dimension_numbers<[1], [0], [0], [1], [0, 0, 1, 1], [], []>} : vector<8x4xbf16>, vector<4x1024xbf16>, vector<8x1024xf32> -> vector<8x1024xf32>
    %124 = arith.addf %119, %123 : vector<8x1024xf32>
    %c0_111 = arith.constant 0 : index
    %c212 = arith.constant 212 : index
    %125 = vector.load %arg9[%c0_111, %c212] : memref<4x1280xbf16, #tpu.memory_space<vmem>>, vector<4x1024xbf16>
    %c23 = arith.constant 23 : index
    %c0_112 = arith.constant 0 : index
    %c0_113 = arith.constant 0 : index
    %126 = vector.load %arg2[%c23, %c0_112, %c0_113] : memref<27x8x4xbf16, #tpu.memory_space<vmem>>, vector<1x8x4xbf16>
    %127 = vector.shape_cast %126 : vector<1x8x4xbf16> to vector<8x4xbf16>
    %cst_114 = arith.constant dense<0.000000e+00> : vector<8x1024xf32>
    %128 = tpu.matmul %127, %125, %cst_114 {dimension_numbers = #tpu.dot_dimension_numbers<[1], [0], [0], [1], [0, 0, 1, 1], [], []>} : vector<8x4xbf16>, vector<4x1024xbf16>, vector<8x1024xf32> -> vector<8x1024xf32>
    %129 = arith.addf %124, %128 : vector<8x1024xf32>
    %c0_115 = arith.constant 0 : index
    %c220 = arith.constant 220 : index
    %130 = vector.load %arg9[%c0_115, %c220] : memref<4x1280xbf16, #tpu.memory_space<vmem>>, vector<4x1024xbf16>
    %c24 = arith.constant 24 : index
    %c0_116 = arith.constant 0 : index
    %c0_117 = arith.constant 0 : index
    %131 = vector.load %arg2[%c24, %c0_116, %c0_117] : memref<27x8x4xbf16, #tpu.memory_space<vmem>>, vector<1x8x4xbf16>
    %132 = vector.shape_cast %131 : vector<1x8x4xbf16> to vector<8x4xbf16>
    %cst_118 = arith.constant dense<0.000000e+00> : vector<8x1024xf32>
    %133 = tpu.matmul %132, %130, %cst_118 {dimension_numbers = #tpu.dot_dimension_numbers<[1], [0], [0], [1], [0, 0, 1, 1], [], []>} : vector<8x4xbf16>, vector<4x1024xbf16>, vector<8x1024xf32> -> vector<8x1024xf32>
    %134 = arith.addf %129, %133 : vector<8x1024xf32>
    %c0_119 = arith.constant 0 : index
    %c221 = arith.constant 221 : index
    %135 = vector.load %arg9[%c0_119, %c221] : memref<4x1280xbf16, #tpu.memory_space<vmem>>, vector<4x1024xbf16>
    %c25 = arith.constant 25 : index
    %c0_120 = arith.constant 0 : index
    %c0_121 = arith.constant 0 : index
    %136 = vector.load %arg2[%c25, %c0_120, %c0_121] : memref<27x8x4xbf16, #tpu.memory_space<vmem>>, vector<1x8x4xbf16>
    %137 = vector.shape_cast %136 : vector<1x8x4xbf16> to vector<8x4xbf16>
    %cst_122 = arith.constant dense<0.000000e+00> : vector<8x1024xf32>
    %138 = tpu.matmul %137, %135, %cst_122 {dimension_numbers = #tpu.dot_dimension_numbers<[1], [0], [0], [1], [0, 0, 1, 1], [], []>} : vector<8x4xbf16>, vector<4x1024xbf16>, vector<8x1024xf32> -> vector<8x1024xf32>
    %139 = arith.addf %134, %138 : vector<8x1024xf32>
    %c0_123 = arith.constant 0 : index
    %c222 = arith.constant 222 : index
    %140 = vector.load %arg9[%c0_123, %c222] : memref<4x1280xbf16, #tpu.memory_space<vmem>>, vector<4x1024xbf16>
    %c26 = arith.constant 26 : index
    %c0_124 = arith.constant 0 : index
    %c0_125 = arith.constant 0 : index
    %141 = vector.load %arg2[%c26, %c0_124, %c0_125] : memref<27x8x4xbf16, #tpu.memory_space<vmem>>, vector<1x8x4xbf16>
    %142 = vector.shape_cast %141 : vector<1x8x4xbf16> to vector<8x4xbf16>
    %cst_126 = arith.constant dense<0.000000e+00> : vector<8x1024xf32>
    %143 = tpu.matmul %142, %140, %cst_126 {dimension_numbers = #tpu.dot_dimension_numbers<[1], [0], [0], [1], [0, 0, 1, 1], [], []>} : vector<8x4xbf16>, vector<4x1024xbf16>, vector<8x1024xf32> -> vector<8x1024xf32>
    %144 = arith.addf %139, %143 : vector<8x1024xf32>
    %145 = arith.truncf %144 : vector<8x1024xf32> to vector<8x1024xbf16>
    %c0_127 = arith.constant 0 : index
    %c0_128 = arith.constant 0 : index
    %c0_129 = arith.constant 0 : index
    %146 = vector.load %arg6[%c0_127, %c0_128, %c0_129] : memref<1x8x1024xbf16, #tpu.memory_space<vmem>>, vector<1x8x1024xbf16>
    %147 = vector.shape_cast %146 : vector<1x8x1024xbf16> to vector<8x1024xbf16>
    %148 = vector.shape_cast %145 : vector<8x1024xbf16> to vector<1x8x1024xbf16>
    tpu.vector_store %arg6[%c0_127, %c0_128, %c0_129], %148 {strides = array<i32>} : memref<1x8x1024xbf16, #tpu.memory_space<vmem>>, vector<1x8x1024xbf16>,
    %c0_130 = arith.constant 0 : index
    %c0_131 = arith.constant 0 : index
    %149 = vector.load %arg5[%c0_130, %c0_131] : memref<1x1024xbf16, #tpu.memory_space<vmem>>, vector<1x1024xbf16>
    %150 = arith.extf %149 : vector<1x1024xbf16> to vector<1x1024xf32>
    %c0_132 = arith.constant 0 : index
    %c0_133 = arith.constant 0 : index
    %c0_134 = arith.constant 0 : index
    %151 = vector.load %arg7[%c0_132, %c0_133, %c0_134] : memref<1x8x1xf32, #tpu.memory_space<vmem>>, vector<1x8x1xf32>
    %152 = vector.broadcast %150 : vector<1x1024xf32> to vector<8x1024xf32>
    %153 = arith.mulf %144, %152 : vector<8x1024xf32>
    %cst_135 = arith.constant dense<0.000000e+00> : vector<8xf32>
    %154 = vector.multi_reduction <add>, %153, %cst_135 [1] : vector<8x1024xf32> to vector<8xf32>
    %155 = vector.shape_cast %154 : vector<8xf32> to vector<8x1xf32>
    %156 = vector.shape_cast %155 : vector<8x1xf32> to vector<1x8x1xf32>
    %157 = arith.addf %151, %156 : vector<1x8x1xf32>
    %c0_136 = arith.constant 0 : index
    %c0_137 = arith.constant 0 : index
    %c0_138 = arith.constant 0 : index
    %158 = vector.load %arg7[%c0_136, %c0_137, %c0_138] : memref<1x8x1xf32, #tpu.memory_space<vmem>>, vector<1x8x1xf32>
    tpu.vector_store %arg7[%c0_136, %c0_137, %c0_138], %157 {strides = array<i32>} : memref<1x8x1xf32, #tpu.memory_space<vmem>>, vector<1x8x1xf32>,
    %c0_139 = arith.constant 0 : index
    %c0_140 = arith.constant 0 : index
    %c0_141 = arith.constant 0 : index
    %159 = vector.load %arg8[%c0_139, %c0_140, %c0_141] : memref<1x8x1xf32, #tpu.memory_space<vmem>>, vector<1x8x1xf32>
    %160 = arith.mulf %144, %144 : vector<8x1024xf32>
    %161 = vector.broadcast %150 : vector<1x1024xf32> to vector<8x1024xf32>
    %162 = arith.mulf %160, %161 : vector<8x1024xf32>
    %cst_142 = arith.constant dense<0.000000e+00> : vector<8xf32>
    %163 = vector.multi_reduction <add>, %162, %cst_142 [1] : vector<8x1024xf32> to vector<8xf32>
    %164 = vector.shape_cast %163 : vector<8xf32> to vector<8x1xf32>
    %165 = vector.shape_cast %164 : vector<8x1xf32> to vector<1x8x1xf32>
    %166 = arith.addf %159, %165 : vector<1x8x1xf32>
    %c0_143 = arith.constant 0 : index
    %c0_144 = arith.constant 0 : index
    %c0_145 = arith.constant 0 : index
    %167 = vector.load %arg8[%c0_143, %c0_144, %c0_145] : memref<1x8x1xf32, #tpu.memory_space<vmem>>, vector<1x8x1xf32>
    tpu.vector_store %arg8[%c0_143, %c0_144, %c0_145], %166 {strides = array<i32>} : memref<1x8x1xf32, #tpu.memory_space<vmem>>, vector<1x8x1xf32>,
    return
  }
  func.func @transform_0(%arg0: i32, %arg1: i32) -> (i32, i32, i32) {
    %c0_i32 = arith.constant 0 : i32
    %c0_i32_0 = arith.constant 0 : i32
    %c0_i32_1 = arith.constant 0 : i32
    %c0_i32_2 = arith.constant 0 : i32
    return %c0_i32, %c0_i32_0, %c0_i32_1 : i32, i32, i32
  }
  func.func @transform_1(%arg0: i32, %arg1: i32) -> (i32, i32, i32) {
    %c0_i32 = arith.constant 0 : i32
    %c0_i32_0 = arith.constant 0 : i32
    return %arg0, %c0_i32, %arg1 : i32, i32, i32
  }
  func.func @transform_2(%arg0: i32, %arg1: i32) -> (i32, i32, i32) {
    %c1_i32 = arith.constant 1 : i32
    %0 = arith.addi %arg1, %c1_i32 : i32
    %c4_i32 = arith.constant 4 : i32
    %1 = arith.muli %0, %c4_i32 : i32
    %c0_i32 = arith.constant 0 : i32
    %c0_i32_0 = arith.constant 0 : i32
    return %arg0, %c0_i32, %1 : i32, i32, i32
  }
  func.func @transform_3(%arg0: i32, %arg1: i32) -> (i32, i32) {
    %c0_i32 = arith.constant 0 : i32
    %c0_i32_0 = arith.constant 0 : i32
    return %c0_i32, %arg1 : i32, i32
  }
  func.func @transform_4(%arg0: i32, %arg1: i32) -> (i32, i32, i32) {
    %c0_i32 = arith.constant 0 : i32
    %c0_i32_0 = arith.constant 0 : i32
    return %arg0, %c0_i32, %arg1 : i32, i32, i32
  }
  func.func @transform_5(%arg0: i32, %arg1: i32) -> (i32, i32, i32) {
    %c0_i32 = arith.constant 0 : i32
    %c0_i32_0 = arith.constant 0 : i32
    %c0_i32_1 = arith.constant 0 : i32
    return %arg0, %c0_i32, %c0_i32_0 : i32, i32, i32
  }
  func.func @transform_6(%arg0: i32, %arg1: i32) -> (i32, i32, i32) {
    %c0_i32 = arith.constant 0 : i32
    %c0_i32_0 = arith.constant 0 : i32
    %c0_i32_1 = arith.constant 0 : i32
    return %arg0, %c0_i32, %c0_i32_0 : i32, i32, i32
  }
}

</mosaic_0001>

<llo_original>
// kernel: tpu_custom_call.1
$region0: #{tpu_custom_call.1}
  #allocation0 [shape = 'u32[]', space=smem, size = 0x4, offset = 0x4, fixed_abs, tag = 'smem constant byte address 0x4 - core index']
  #allocation1 [shape = 'u32[144,128]{1,0:T(1,128)}', space=vmem, size = 0x12000, scoped, tag = 'internal scratch']
  #allocation2 [shape = 'bf16[4,1280]{1,0:T(4,128)(2,1)}', space=vmem, size = 0x2800, scoped, tag = 'scratch operand']
  %s0 = inlined_call_operand.vmem [shape: bf16[27,8,4], index: 0, kind: input, shape index: {}]
  %s1 = inlined_call_operand.vmem [shape: bf16[2,4,1280], index: 1, kind: input, shape index: {}]
  %s2 = inlined_call_operand.vmem [shape: bf16[2,4,1280], index: 2, kind: input, shape index: {}]
  %s3 = inlined_call_operand.vmem [shape: bf16[1,1024], index: 3, kind: input, shape index: {}]
  %s4 = inlined_call_operand.hbm [shape: bf16[2,8,1024], index: 4, kind: output, shape index: {0}]
  %s5 = inlined_call_operand.vmem [shape: f32[2,8,1], index: 5, kind: output, shape index: {1}]
  %s6 = inlined_call_operand.vmem [shape: f32[2,8,1], index: 6, kind: output, shape index: {2}]
  %7 = xla_tuple %s4, %s5, %s6
  %s8 = sld [smem:[#allocation0]]
  $region69: #{tpu_custom_call.1} parent=0
    _
  %s10 = ssub.s32 1, %s8
  %s11 = scalar_select 0, %s10, %s8
  $region1: #{tpu_custom_call.1} parent=0
    #allocation3 [shape = 'u8[32768]{0}', space=vmem, size = 0x8000, scoped, tag = 'output window, operand 0']
    #allocation4 [shape = 's32[2]{0}', space=sflag, size = 0x8, scoped, tag = 'scoped memory for tpu_custom_call.1']
    %12 = vsyncpa [#allocation4], 0
    %s13 = scalar_lea.sflag [#allocation4], 1
    %14 = vsyncpa %s13, 0
    loop: start=0, step=1, limit=4
    $region2: #{tpu_custom_call.1} parent=1 // loop_pre_header
      _
    $region3: #{tpu_custom_call.1} parent=1 // loop_header
      %s16 = sphi 0, %s20
      %p17 = scmp.ge.s32.totalorder %s16, 4
      %s23 = sphi 0, %s35
      %s24 = sphi 0, %s31
      %s25 = sphi 0, %s23
      %s26 = sphi 0, %s24
      %s27 = sphi 0, %s25
      %s28 = sphi 0, %s26
      %s36 = sphi 0, %s36
      %s38 = sphi 0, %s36
      %s39 = sphi 0, %s38
      %s53 = sphi 0, %s39
      %s61 = sphi 0, %s63
      %s64 = sphi 0, %s61
      %s65 = sphi 0, %s64
      %s81 = sphi 0, %s65
      %s93 = sphi 0, %s95
      %s96 = sphi 0, %s93
      %s97 = sphi 0, %s96
      %s113 = sphi 0, %s97
      %s119 = sphi 0, %s121
      %s122 = sphi 0, %s119
      %s123 = sphi 0, %s122
      %s139 = sphi 0, %s123
      %s147 = sphi 0, %s149
      %s150 = sphi 0, %s147
      %s151 = sphi 0, %s150
      %s167 = sphi 0, %s151
      %s173 = sphi 0, %s175
      %s176 = sphi 0, %s173
      %s177 = sphi 0, %s176
      %s193 = sphi 0, %s177
      %s199 = sphi 0, %s201
      %s202 = sphi 0, %s199
      %s203 = sphi 0, %s202
      %s219 = sphi 0, %s203
    $region4: #{tpu_custom_call.1} parent=1 // loop_header_branch
      %19 = sbr.rel (%p17) target = $region8
    $region5: #{tpu_custom_call.1} parent=1 // loop_body
      %s21 = ssub.s32 %s16, 1
      %s22 = ssub.s32 %s16, 2
      %s29 = sadd.s32 1, %s24
      %p30 = scmp.ge.s32.totalorder %s29, 1
      %s31 = scalar_select %p30, 0, %s29
      %s32 = sadd.s32 1, %s23
      %s33 = scalar_select %p30, %s32, %s23
      %p34 = scmp.ge.s32.totalorder %s33, 2
      %s35 = scalar_select %p34, 0, %s33
      %s37 = sadd.s32 %s36, 1
      %p40 = scmp.eq.s32.totalorder %s16, 1
      %p41 = scmp.ne.s32.totalorder %s36, %s38
      %p42 = scmp.eq.s32.totalorder %s16, 0
      %p43 = por %p41, %p42
      %p44 = scmp.ne.s32.totalorder %s36, %s38
      %p45 = scmp.eq.s32.totalorder %s21, 1
      %p46 = por %p44, %p45
      %p47 = scmp.ne.s32.totalorder %s38, %s39
      %p48 = scmp.eq.s32.totalorder %s21, 0
      %p49 = por %p47, %p48
      %p50 = scmp.ne.s32.totalorder %s38, %s39
      %p51 = scmp.eq.s32.totalorder %s22, 1
      %p52 = por %p50, %p51
      %p54 = scmp.ne.s32.totalorder %s39, %s53
      %p55 = scmp.eq.s32.totalorder %s22, 0
      %p56 = por %p54, %p55
      %s57 = ssub.s32 %s23, %s35
      %s58 = ssub.s32 %s24, %s31
      %s59 = sor.u32 %s57, %s58
      %p60 = scmp.eq.s32.totalorder %s59, 0
      %s62 = sadd.s32 %s61, 1
      %s63 = scalar_select %p60, %s61, %s62
      %p66 = pneg %p60
      %p67 = scmp.eq.s32.totalorder %s16, 1
      %p68 = por %p66, %p67
      %p69 = scmp.ne.s32.totalorder %s61, %s64
      %p70 = scmp.eq.s32.totalorder %s16, 0
      %p71 = por %p69, %p70
      %p72 = scmp.ne.s32.totalorder %s61, %s64
      %p73 = scmp.eq.s32.totalorder %s21, 1
      %p74 = por %p72, %p73
      %p75 = scmp.ne.s32.totalorder %s64, %s65
      %p76 = scmp.eq.s32.totalorder %s21, 0
      %p77 = por %p75, %p76
      %p78 = scmp.ne.s32.totalorder %s64, %s65
      %p79 = scmp.eq.s32.totalorder %s22, 1
      %p80 = por %p78, %p79
      %p82 = scmp.ne.s32.totalorder %s65, %s81
      %p83 = scmp.eq.s32.totalorder %s22, 0
      %p84 = por %p82, %p83
      %s85 = sadd.s32 %s24, 1
      %s86 = smul.u32 %s85, 4
      %s87 = sadd.s32 %s31, 1
      %s88 = smul.u32 %s87, 4
      %s89 = ssub.s32 %s23, %s35
      %s90 = ssub.s32 %s86, %s88
      %s91 = sor.u32 %s89, %s90
      %p92 = scmp.eq.s32.totalorder %s91, 0
      %s94 = sadd.s32 %s93, 1
      %s95 = scalar_select %p92, %s93, %s94
      %p98 = pneg %p92
      %p99 = scmp.eq.s32.totalorder %s16, 1
      %p100 = por %p98, %p99
      %p101 = scmp.ne.s32.totalorder %s93, %s96
      %p102 = scmp.eq.s32.totalorder %s16, 0
      %p103 = por %p101, %p102
      %p104 = scmp.ne.s32.totalorder %s93, %s96
      %p105 = scmp.eq.s32.totalorder %s21, 1
      %p106 = por %p104, %p105
      %p107 = scmp.ne.s32.totalorder %s96, %s97
      %p108 = scmp.eq.s32.totalorder %s21, 0
      %p109 = por %p107, %p108
      %p110 = scmp.ne.s32.totalorder %s96, %s97
      %p111 = scmp.eq.s32.totalorder %s22, 1
      %p112 = por %p110, %p111
      %p114 = scmp.ne.s32.totalorder %s97, %s113
      %p115 = scmp.eq.s32.totalorder %s22, 0
      %p116 = por %p114, %p115
      %s117 = ssub.s32 %s24, %s31
      %p118 = scmp.eq.s32.totalorder %s117, 0
      %s120 = sadd.s32 %s119, 1
      %s121 = scalar_select %p118, %s119, %s120
      %p124 = pneg %p118
      %p125 = scmp.eq.s32.totalorder %s16, 1
      %p126 = por %p124, %p125
      %p127 = scmp.ne.s32.totalorder %s119, %s122
      %p128 = scmp.eq.s32.totalorder %s16, 0
      %p129 = por %p127, %p128
      %p130 = scmp.ne.s32.totalorder %s119, %s122
      %p131 = scmp.eq.s32.totalorder %s21, 1
      %p132 = por %p130, %p131
      %p133 = scmp.ne.s32.totalorder %s122, %s123
      %p134 = scmp.eq.s32.totalorder %s21, 0
      %p135 = por %p133, %p134
      %p136 = scmp.ne.s32.totalorder %s122, %s123
      %p137 = scmp.eq.s32.totalorder %s22, 1
      %p138 = por %p136, %p137
      %p140 = scmp.ne.s32.totalorder %s123, %s139
      %p141 = scmp.eq.s32.totalorder %s22, 0
      %p142 = por %p140, %p141
      %s143 = ssub.s32 %s23, %s35
      %s144 = ssub.s32 %s24, %s31
      %s145 = sor.u32 %s143, %s144
      %p146 = scmp.eq.s32.totalorder %s145, 0
      %s148 = sadd.s32 %s147, 1
      %s149 = scalar_select %p146, %s147, %s148
      %p152 = pneg %p146
      %p153 = scmp.eq.s32.totalorder %s16, 1
      %p154 = por %p152, %p153
      %p155 = scmp.ne.s32.totalorder %s147, %s150
      %p156 = scmp.eq.s32.totalorder %s16, 0
      %p157 = por %p155, %p156
      %p158 = scmp.ne.s32.totalorder %s147, %s150
      %p159 = scmp.eq.s32.totalorder %s21, 1
      %p160 = por %p158, %p159
      %p161 = scmp.ne.s32.totalorder %s150, %s151
      %p162 = scmp.eq.s32.totalorder %s21, 0
      %p163 = por %p161, %p162
      %p164 = scmp.ne.s32.totalorder %s150, %s151
      %p165 = scmp.eq.s32.totalorder %s22, 1
      %p166 = por %p164, %p165
      %p168 = scmp.ne.s32.totalorder %s151, %s167
      %p169 = scmp.eq.s32.totalorder %s22, 0
      %p170 = por %p168, %p169
      %s171 = ssub.s32 %s23, %s35
      %p172 = scmp.eq.s32.totalorder %s171, 0
      %s174 = sadd.s32 %s173, 1
      %s175 = scalar_select %p172, %s173, %s174
      %p178 = pneg %p172
      %p179 = scmp.eq.s32.totalorder %s16, 1
      %p180 = por %p178, %p179
      %p181 = scmp.ne.s32.totalorder %s173, %s176
      %p182 = scmp.eq.s32.totalorder %s16, 0
      %p183 = por %p181, %p182
      %p184 = scmp.ne.s32.totalorder %s173, %s176
      %p185 = scmp.eq.s32.totalorder %s21, 1
      %p186 = por %p184, %p185
      %p187 = scmp.ne.s32.totalorder %s176, %s177
      %p188 = scmp.eq.s32.totalorder %s21, 0
      %p189 = por %p187, %p188
      %p190 = scmp.ne.s32.totalorder %s176, %s177
      %p191 = scmp.eq.s32.totalorder %s22, 1
      %p192 = por %p190, %p191
      %p194 = scmp.ne.s32.totalorder %s177, %s193
      %p195 = scmp.eq.s32.totalorder %s22, 0
      %p196 = por %p194, %p195
      %s197 = ssub.s32 %s23, %s35
      %p198 = scmp.eq.s32.totalorder %s197, 0
      %s200 = sadd.s32 %s199, 1
      %s201 = scalar_select %p198, %s199, %s200
      %p204 = pneg %p198
      %p205 = scmp.eq.s32.totalorder %s16, 1
      %p206 = por %p204, %p205
      %p207 = scmp.ne.s32.totalorder %s199, %s202
      %p208 = scmp.eq.s32.totalorder %s16, 0
      %p209 = por %p207, %p208
      %p210 = scmp.ne.s32.totalorder %s199, %s202
      %p211 = scmp.eq.s32.totalorder %s21, 1
      %p212 = por %p210, %p211
      %p213 = scmp.ne.s32.totalorder %s202, %s203
      %p214 = scmp.eq.s32.totalorder %s21, 0
      %p215 = por %p213, %p214
      %p216 = scmp.ne.s32.totalorder %s202, %s203
      %p217 = scmp.eq.s32.totalorder %s22, 1
      %p218 = por %p216, %p217
      %p220 = scmp.ne.s32.totalorder %s203, %s219
      %p221 = scmp.eq.s32.totalorder %s22, 0
      %p222 = por %p220, %p221
      %p223 = scmp.le.s32.totalorder 1, %s16
      %p224 = scmp.lt.s32.totalorder %s16, 3
      %p225 = pnand %p223, %p224
      %p226 = pneg %p225
      // Predicated region
      $region9: #{tpu_custom_call.1} parent=5 // pred_check
        _
      $region10: #{tpu_custom_call.1} parent=5 // pred_check_branch
        %228 = sbr.rel (%p225) target = $region12
      $region11: #{tpu_custom_call.1} parent=5 // pred_region
        %s229 = ssub.s32 %s16, 1
        // Predicated region
        $region13: #{tpu_custom_call.1} parent=11 // pred_check
          %p230 = pneg %p49
        $region14: #{tpu_custom_call.1} parent=11 // pred_check_branch
          %232 = sbr.rel (%p230) target = $region16
        $region15: #{tpu_custom_call.1} parent=11 // pred_region
          _
        $region16: #{tpu_custom_call.1} parent=11 // pred_fallthru
          _
        // Predicated region
        $region17: #{tpu_custom_call.1} parent=11 // pred_check
          %p233 = pneg %p135
        $region18: #{tpu_custom_call.1} parent=11 // pred_check_branch
          %235 = sbr.rel (%p233) target = $region20
        $region19: #{tpu_custom_call.1} parent=11 // pred_region
          %s236 = smul.u32 8, %s26
          %p237 = scmp.lt.s32.totalorder %s236, 7
          %s238 = scalar_select %p237, %s236, 7
          %s239 = scalar_lea.vmem %s3, %s238
          %s240 = smul.u32 8, %s26
        $region20: #{tpu_custom_call.1} parent=11 // pred_fallthru
          _
      $region12: #{tpu_custom_call.1} parent=5 // pred_fallthru
        _
      %p241 = scmp.lt.s32.totalorder %s16, 2
      // Predicated region
      $region21: #{tpu_custom_call.1} parent=5 // pred_check
        %p242 = pneg %p241
      $region22: #{tpu_custom_call.1} parent=5 // pred_check_branch
        %244 = sbr.rel (%p242) target = $region24
      $region23: #{tpu_custom_call.1} parent=5 // pred_region
        // Predicated region
        $region25: #{tpu_custom_call.1} parent=23 // pred_check
          %p245 = pneg %p71
        $region26: #{tpu_custom_call.1} parent=23 // pred_check_branch
          %247 = sbr.rel (%p245) target = $region28
        $region27: #{tpu_custom_call.1} parent=23 // pred_region
          %s248 = smul.u32 8, %s24
          %s249 = ssub.s32 10, %s248
          %p250 = scmp.lt.s32.totalorder %s249, 8
          %s251 = scalar_select %p250, %s249, 8
          %s252 = smul.u32 32, %s251
          %p253 = scmp.lt.s32.totalorder %s23, 1
          %s254 = scalar_select %p253, %s23, 1
          %p255 = scmp.lt.s32.totalorder %s248, 9
          %s256 = scalar_select %p255, %s248, 9
          %s257 = smul.addr %s254, 10
          %s258 = sadd.s32 %s256, %s257
          %s259 = smul.addr %s258, 2
          %s260 = scalar_lea.vmem %s1, %s259
          %s261 = smul.u32 8, %s24
          %s262 = ssub.s32 10, %s261
          %p263 = scmp.lt.s32.totalorder %s262, 8
          %s264 = scalar_select %p263, %s262, 8
          %s265 = smul.u32 32, %s264
        $region28: #{tpu_custom_call.1} parent=23 // pred_fallthru
          _
        // Predicated region
        $region29: #{tpu_custom_call.1} parent=23 // pred_check
          %p266 = pneg %p103
        $region30: #{tpu_custom_call.1} parent=23 // pred_check_branch
          %268 = sbr.rel (%p266) target = $region32
        $region31: #{tpu_custom_call.1} parent=23 // pred_region
          %s269 = sadd.s32 %s24, 1
          %s270 = smul.u32 %s269, 4
          %s271 = smul.u32 2, %s270
          %p272 = scmp.lt.s32.totalorder %s23, 1
          %s273 = scalar_select %p272, %s23, 1
          %p274 = scmp.lt.s32.totalorder %s271, 9
          %s275 = scalar_select %p274, %s271, 9
          %s276 = smul.addr %s273, 10
          %s277 = sadd.s32 %s275, %s276
          %s278 = smul.addr %s277, 2
          %s279 = scalar_lea.vmem %s2, %s278
          %s280 = sadd.s32 %s24, 1
          %s281 = smul.u32 %s280, 4
          %s282 = smul.u32 2, %s281
        $region32: #{tpu_custom_call.1} parent=23 // pred_fallthru
          _
      $region24: #{tpu_custom_call.1} parent=5 // pred_fallthru
        _
      %p283 = scmp.le.s32.totalorder 1, %s16
      %p284 = scmp.lt.s32.totalorder %s16, 3
      %p285 = pnand %p283, %p284
      %p286 = pneg %p285
      // Predicated region
      $region33: #{tpu_custom_call.1} parent=5 // pred_check
        _
      $region34: #{tpu_custom_call.1} parent=5 // pred_check_branch
        %288 = sbr.rel (%p285) target = $region36
      $region35: #{tpu_custom_call.1} parent=5 // pred_region
        %s289 = ssub.s32 %s16, 1
        %p290 = pneg %p49
        %p291 = pneg %p46
        %s292 = smul.u32 8, %s26
        %s293 = ssub.s32 10, %s292
        %p294 = scmp.lt.s32.totalorder %s293, 8
        %s295 = scalar_select %p294, %s293, 8
        %s296 = smul.u32 32, %s295
        %p297 = scmp.lt.s32.totalorder %s25, 1
        %s298 = scalar_select %p297, %s25, 1
        %p299 = scmp.lt.s32.totalorder %s292, 9
        %s300 = scalar_select %p299, %s292, 9
        %s301 = smul.addr %s298, 10
        %s302 = sadd.s32 %s300, %s301
        %s303 = smul.addr %s302, 2
        %s304 = scalar_lea.vmem %s1, %s303
        %p305 = pneg %p77
        %p306 = pneg %p74
        %s307 = sadd.s32 %s26, 1
        %s308 = smul.u32 %s307, 4
        %s309 = smul.u32 2, %s308
        %p310 = scmp.lt.s32.totalorder %s25, 1
        %s311 = scalar_select %p310, %s25, 1
        %p312 = scmp.lt.s32.totalorder %s309, 9
        %s313 = scalar_select %p312, %s309, 9
        %s314 = smul.addr %s311, 10
        %s315 = sadd.s32 %s313, %s314
        %s316 = smul.addr %s315, 2
        %s317 = scalar_lea.vmem %s2, %s316
        %p318 = pneg %p109
        %p319 = pneg %p106
        %s320 = smul.u32 8, %s26
        %p321 = scmp.lt.s32.totalorder %s320, 7
        %s322 = scalar_select %p321, %s320, 7
        %s323 = scalar_lea.vmem %s3, %s322
        %p324 = pneg %p135
        %p325 = pneg %p132
        %p326 = pneg %p163
        %p327 = pneg %p160
        %s328 = sand.u32 %s150, 1
        %s329 = scalar_lea.sflag [#allocation4], %s328
        %s330 = sand.u32 %s150, 1
        %s331 = smul.addr %s330, 32
        %s332 = scalar_lea.vmem [#allocation3], %s331
        %p333 = pneg %p189
        %p334 = pneg %p186
        %p335 = scmp.lt.s32.totalorder %s25, 1
        %s336 = scalar_select %p335, %s25, 1
        %s337 = smul.addr %s336, 8
        %s338 = scalar_lea.vmem %s5, %s337
        %p339 = pneg %p215
        %p340 = pneg %p212
        %p341 = scmp.lt.s32.totalorder %s25, 1
        %s342 = scalar_select %p341, %s25, 1
        %s343 = smul.addr %s342, 8
        %s344 = scalar_lea.vmem %s6, %s343
        %s345 = smul.u32 8, %s26
        %s346 = ssub.s32 10, %s345
        %p347 = scmp.lt.s32.totalorder %s346, 8
        %s348 = scalar_select %p347, %s346, 8
        %s349 = smul.u32 32, %s348
        %p350 = scmp.lt.s32.totalorder %s25, 1
        %s351 = scalar_select %p350, %s25, 1
        %p352 = scmp.lt.s32.totalorder %s345, 9
        %s353 = scalar_select %p352, %s345, 9
        %s354 = smul.addr %s351, 10
        %s355 = sadd.s32 %s353, %s354
        %s356 = smul.addr %s355, 2
        %s357 = scalar_lea.vmem %s1, %s356
        %s358 = smul.u32 8, %s26
        %s359 = ssub.s32 10, %s358
        %p360 = scmp.lt.s32.totalorder %s359, 8
        %s361 = scalar_select %p360, %s359, 8
        %s362 = smul.u32 32, %s361
        %s363 = sadd.s32 %s26, 1
        %s364 = smul.u32 %s363, 4
        %s365 = smul.u32 2, %s364
        %p366 = scmp.lt.s32.totalorder %s25, 1
        %s367 = scalar_select %p366, %s25, 1
        %p368 = scmp.lt.s32.totalorder %s365, 9
        %s369 = scalar_select %p368, %s365, 9
        %s370 = smul.addr %s367, 10
        %s371 = sadd.s32 %s369, %s370
        %s372 = smul.addr %s371, 2
        %s373 = scalar_lea.vmem %s2, %s372
        %s374 = sadd.s32 %s26, 1
        %s375 = smul.u32 %s374, 4
        %s376 = smul.u32 2, %s375
        %s377 = smul.u32 8, %s26
        %p378 = scmp.lt.s32.totalorder %s377, 7
        %s379 = scalar_select %p378, %s377, 7
        %s380 = scalar_lea.vmem %s3, %s379
        %s381 = smul.u32 8, %s26
        %s382 = smul.u32 8, %s26
        %p383 = scmp.lt.s32.totalorder %s25, 1
        %s384 = scalar_select %p383, %s25, 1
        %s385 = smul.addr %s384, 8
        %s386 = scalar_lea.vmem %s5, %s385
        %p387 = scmp.lt.s32.totalorder %s25, 1
        %s388 = scalar_select %p387, %s25, 1
        %s389 = smul.addr %s388, 8
        %s390 = scalar_lea.vmem %s6, %s389
        %p392 = scmp.eq.s32.totalorder %s26, 0
        // Predicated region
        $region37: #{tpu_custom_call.1} parent=35 // pred_check
          %p393 = pneg %p392
        $region38: #{tpu_custom_call.1} parent=35 // pred_check_branch
          %395 = sbr.rel (%p393) target = $region40
        $region39: #{tpu_custom_call.1} parent=35 // pred_region
          %vm396 = vcmask 7168
          %397 = vst.msk [vmem:[%s386] sm:$0xff] %vm396, 0.0
          %398 = vst.msk [vmem:[%s390] sm:$0xff] %vm396, 0.0
        $region40: #{tpu_custom_call.1} parent=35 // pred_fallthru
          _
        %v399 = vld [vmem:[%s357] sm:$0xff]
        %v400 = vld [vmem:[%s357 + $0x8] sm:$0xff]
        %401 = vst [vmem:[#allocation2] sm:$0xff] %v399
        %402 = vst [vmem:[#allocation2 + $0x8] sm:$0xff] %v400
        %v403 = vld [vmem:[%s373] sm:$0xf]
        %404 = vst [vmem:[#allocation2 + $0x10] sm:$0xf] %v403
        %v405 = vld [vmem:[#allocation2] sm:$0xff]
        %v406 = vld [vmem:[#allocation2 + $0x8] sm:$0xff]
        %v407 = vld [vmem:[%s0] sm:$0xf]
        %v408 = vld [vmem:[#allocation2 + $0x10] sm:$0x3]
        %s409 = scalar_lea.vmem %s0, 4
        %v410 = vld [vmem:[%s409] sm:$0xf]
        %v414 = vcombine.high %v405, %v405
        %v416 = vunpack.c.l.s4 1983009808
        %v417 = vunpack.c.0.s8 %v416
        %v418 = vlaneseq
        %v419 = vshrl.u32 %v418, 7
        %v420 = vsub.s32 %v417, %v419
        %v421 = vrot.slane %v405, %v420
        %v423 = vunpack.c.l.s4 1983009808
        %v424 = vunpack.c.0.s8 %v423
        %v425 = vlaneseq
        %v426 = vshrl.u32 %v425, 7
        %v427 = vsub.s32 %v424, %v426
        %v428 = vrot.slane %v414, %v427
        %v429 = vcombine.high %v421, %v421
        %v430 = vcombine.high %v428, %v428
        %v431 = vcombine.high %v406, %v406
        %v433 = vunpack.c.l.s4 1983009808
        %v434 = vunpack.c.0.s8 %v433
        %v435 = vlaneseq
        %v436 = vshrl.u32 %v435, 7
        %v437 = vsub.s32 %v434, %v436
        %v438 = vrot.slane %v406, %v437
        %v440 = vunpack.c.l.s4 1983009808
        %v441 = vunpack.c.0.s8 %v440
        %v442 = vlaneseq
        %v443 = vshrl.u32 %v442, 7
        %v444 = vsub.s32 %v441, %v443
        %v445 = vrot.slane %v431, %v444
        %v446 = vcombine.high %v438, %v438
        %v447 = vcombine.high %v445, %v445
        %v449 = vunpack.c.l.s4 1983009808
        %v450 = vunpack.c.0.s8 %v449
        %v451 = vlaneseq
        %v452 = vshrl.u32 %v451, 7
        %v453 = vsub.s32 %v450, %v452
        %v454 = vrot.slane %v408, %v453
        %455 = vrot.lane.b32.xlu0 %v421, 127
        %v456 = vpop.permute.xlu0 %455
        %457 = vrot.lane.b32.xlu0 %v429, 127
        %v458 = vpop.permute.xlu0 %457
        %459 = vrot.lane.b32.xlu0 %v428, 127
        %v460 = vpop.permute.xlu0 %459
        %461 = vrot.lane.b32.xlu0 %v430, 127
        %v462 = vpop.permute.xlu0 %461
        %463 = vrot.lane.b32.xlu0 %v438, 127
        %v464 = vpop.permute.xlu0 %463
        %465 = vrot.lane.b32.xlu0 %v446, 127
        %v466 = vpop.permute.xlu0 %465
        %467 = vrot.lane.b32.xlu0 %v445, 127
        %v468 = vpop.permute.xlu0 %467
        %469 = vrot.lane.b32.xlu0 %v447, 127
        %v470 = vpop.permute.xlu0 %469
        %471 = vrot.lane.b32.xlu0 %v454, 127
        %v472 = vpop.permute.xlu0 %471
        %vm473 = vcmask 1039360
        %v474 = vsel %vm473, %v456, %v458
        %v475 = vsel %vm473, %v458, %v460
        %v476 = vsel %vm473, %v460, %v462
        %v477 = vsel %vm473, %v462, %v464
        %v478 = vsel %vm473, %v464, %v466
        %v479 = vsel %vm473, %v466, %v468
        %v480 = vsel %vm473, %v468, %v470
        %v481 = vsel %vm473, %v470, %v472
        %vm482 = vcmask 31744
        %v484 = vsel %vm482, %v410, 0
        %vm486 = vcmask 1041408
        %v488 = vsel %vm486, %v474, 0
        %v491 = vsel %vm486, %v475, 0
        %v494 = vsel %vm486, %v476, 0
        %v497 = vsel %vm486, %v477, 0
        %v500 = vsel %vm486, %v478, 0
        %v503 = vsel %vm486, %v479, 0
        %v506 = vsel %vm486, %v480, 0
        %v509 = vsel %vm486, %v481, 0
        %511 = vmatprep.subr.bf16.mxu0 %v491
        %512 = vmatpush1.bf16.msra.mxu0 %v488
        %513 = vmatprep.subr.bf16.mxu0 0
        %514 = vmatpush1.bf16.msra.mxu0 0
        %515 = vmatprep.subr.bf16.mxu0 0
        %516 = vmatpush1.bf16.msra.mxu0 0
        %517 = vmatprep.subr.bf16.mxu0 0
        %518 = vmatpush1.bf16.msra.mxu0 0
        %519 = vmatprep.subr.bf16.mxu0 0
        %520 = vmatpush1.bf16.msra.mxu0 0
        %521 = vmatprep.subr.bf16.mxu0 0
        %522 = vmatpush1.bf16.msra.mxu0 0
        %523 = vmatprep.subr.bf16.mxu0 0
        %524 = vmatpush1.bf16.msra.mxu0 0
        %525 = vmatprep.subr.bf16.mxu0 0
        %526 = vmatpush1.bf16.msra.mxu0 0
        %527 = vmatprep.subr.bf16.mxu0 0
        %528 = vmatpush1.bf16.msra.mxu0 0
        %529 = vmatprep.subr.bf16.mxu0 0
        %530 = vmatpush1.bf16.msra.mxu0 0
        %531 = vmatprep.subr.bf16.mxu0 0
        %532 = vmatpush1.bf16.msra.mxu0 0
        %533 = vmatprep.subr.bf16.mxu0 0
        %534 = vmatpush1.bf16.msra.mxu0 0
        %535 = vmatprep.subr.bf16.mxu0 0
        %536 = vmatpush1.bf16.msra.mxu0 0
        %537 = vmatprep.subr.bf16.mxu0 0
        %538 = vmatpush1.bf16.msra.mxu0 0
        %539 = vmatprep.subr.bf16.mxu0 0
        %540 = vmatpush1.bf16.msra.mxu0 0
        %541 = vmatprep.subr.bf16.mxu0 0
        %542 = vmatpush1.bf16.msra.mxu0 0
        %543 = vmatprep.mubr.bf16.mxu0 0
        %544 = vmatmul.mubr.bf16.gmra.mrb[0].mxu0 %v484
        %v545 = vpop.f32.mrb[0].mxu0
        %v546 = vadd.f32 0.0, %v545
        %v547 = vpop.f32.mrb[0].mxu0
        %v548 = vadd.f32 0.0, %v547
        %v549 = vpop.f32.mrb[0].mxu0
        %v550 = vpop.f32.mrb[0].mxu0
        %551 = vdwg.mxu0
        %552 = vmatprep.subr.bf16.mxu0 %v497
        %553 = vmatpush1.bf16.msra.mxu0 %v494
        %554 = vmatprep.subr.bf16.mxu0 0
        %555 = vmatpush1.bf16.msra.mxu0 0
        %556 = vmatprep.subr.bf16.mxu0 0
        %557 = vmatpush1.bf16.msra.mxu0 0
        %558 = vmatprep.subr.bf16.mxu0 0
        %559 = vmatpush1.bf16.msra.mxu0 0
        %560 = vmatprep.subr.bf16.mxu0 0
        %561 = vmatpush1.bf16.msra.mxu0 0
        %562 = vmatprep.subr.bf16.mxu0 0
        %563 = vmatpush1.bf16.msra.mxu0 0
        %564 = vmatprep.subr.bf16.mxu0 0
        %565 = vmatpush1.bf16.msra.mxu0 0
        %566 = vmatprep.subr.bf16.mxu0 0
        %567 = vmatpush1.bf16.msra.mxu0 0
        %568 = vmatprep.subr.bf16.mxu0 0
        %569 = vmatpush1.bf16.msra.mxu0 0
        %570 = vmatprep.subr.bf16.mxu0 0
        %571 = vmatpush1.bf16.msra.mxu0 0
        %572 = vmatprep.subr.bf16.mxu0 0
        %573 = vmatpush1.bf16.msra.mxu0 0
        %574 = vmatprep.subr.bf16.mxu0 0
        %575 = vmatpush1.bf16.msra.mxu0 0
        %576 = vmatprep.subr.bf16.mxu0 0
        %577 = vmatpush1.bf16.msra.mxu0 0
        %578 = vmatprep.subr.bf16.mxu0 0
        %579 = vmatpush1.bf16.msra.mxu0 0
        %580 = vmatprep.subr.bf16.mxu0 0
        %581 = vmatpush1.bf16.msra.mxu0 0
        %582 = vmatprep.subr.bf16.mxu0 0
        %583 = vmatpush1.bf16.msra.mxu0 0
        %584 = vmatprep.mubr.bf16.mxu0 0
        %585 = vmatmul.mubr.bf16.gmra.mrb[0].mxu0 %v484
        %v586 = vpop.f32.mrb[0].mxu0
        %v587 = vadd.f32 0.0, %v586
        %v588 = vpop.f32.mrb[0].mxu0
        %v589 = vadd.f32 0.0, %v588
        %v590 = vpop.f32.mrb[0].mxu0
        %v591 = vpop.f32.mrb[0].mxu0
        %592 = vdwg.mxu0
        %593 = vmatprep.subr.bf16.mxu0 %v503
        %594 = vmatpush1.bf16.msra.mxu0 %v500
        %595 = vmatprep.subr.bf16.mxu0 0
        %596 = vmatpush1.bf16.msra.mxu0 0
        %597 = vmatprep.subr.bf16.mxu0 0
        %598 = vmatpush1.bf16.msra.mxu0 0
        %599 = vmatprep.subr.bf16.mxu0 0
        %600 = vmatpush1.bf16.msra.mxu0 0
        %601 = vmatprep.subr.bf16.mxu0 0
        %602 = vmatpush1.bf16.msra.mxu0 0
        %603 = vmatprep.subr.bf16.mxu0 0
        %604 = vmatpush1.bf16.msra.mxu0 0
        %605 = vmatprep.subr.bf16.mxu0 0
        %606 = vmatpush1.bf16.msra.mxu0 0
        %607 = vmatprep.subr.bf16.mxu0 0
        %608 = vmatpush1.bf16.msra.mxu0 0
        %609 = vmatprep.subr.bf16.mxu0 0
        %610 = vmatpush1.bf16.msra.mxu0 0
        %611 = vmatprep.subr.bf16.mxu0 0
        %612 = vmatpush1.bf16.msra.mxu0 0
        %613 = vmatprep.subr.bf16.mxu0 0
        %614 = vmatpush1.bf16.msra.mxu0 0
        %615 = vmatprep.subr.bf16.mxu0 0
        %616 = vmatpush1.bf16.msra.mxu0 0
        %617 = vmatprep.subr.bf16.mxu0 0
        %618 = vmatpush1.bf16.msra.mxu0 0
        %619 = vmatprep.subr.bf16.mxu0 0
        %620 = vmatpush1.bf16.msra.mxu0 0
        %621 = vmatprep.subr.bf16.mxu0 0
        %622 = vmatpush1.bf16.msra.mxu0 0
        %623 = vmatprep.subr.bf16.mxu0 0
        %624 = vmatpush1.bf16.msra.mxu0 0
        %625 = vmatprep.mubr.bf16.mxu0 0
        %626 = vmatmul.mubr.bf16.gmra.mrb[0].mxu0 %v484
        %v627 = vpop.f32.mrb[0].mxu0
        %v628 = vadd.f32 0.0, %v627
        %v629 = vpop.f32.mrb[0].mxu0
        %v630 = vadd.f32 0.0, %v629
        %v631 = vpop.f32.mrb[0].mxu0
        %v632 = vpop.f32.mrb[0].mxu0
        %633 = vdwg.mxu0
        %634 = vmatprep.subr.bf16.mxu0 %v509
        %635 = vmatpush1.bf16.msra.mxu0 %v506
        %636 = vmatprep.subr.bf16.mxu0 0
        %637 = vmatpush1.bf16.msra.mxu0 0
        %638 = vmatprep.subr.bf16.mxu0 0
        %639 = vmatpush1.bf16.msra.mxu0 0
        %640 = vmatprep.subr.bf16.mxu0 0
        %641 = vmatpush1.bf16.msra.mxu0 0
        %642 = vmatprep.subr.bf16.mxu0 0
        %643 = vmatpush1.bf16.msra.mxu0 0
        %644 = vmatprep.subr.bf16.mxu0 0
        %645 = vmatpush1.bf16.msra.mxu0 0
        %646 = vmatprep.subr.bf16.mxu0 0
        %647 = vmatpush1.bf16.msra.mxu0 0
        %648 = vmatprep.subr.bf16.mxu0 0
        %649 = vmatpush1.bf16.msra.mxu0 0
        %650 = vmatprep.subr.bf16.mxu0 0
        %651 = vmatpush1.bf16.msra.mxu0 0
        %652 = vmatprep.subr.bf16.mxu0 0
        %653 = vmatpush1.bf16.msra.mxu0 0
        %654 = vmatprep.subr.bf16.mxu0 0
        %655 = vmatpush1.bf16.msra.mxu0 0
        %656 = vmatprep.subr.bf16.mxu0 0
        %657 = vmatpush1.bf16.msra.mxu0 0
        %658 = vmatprep.subr.bf16.mxu0 0
        %659 = vmatpush1.bf16.msra.mxu0 0
        %660 = vmatprep.subr.bf16.mxu0 0
        %661 = vmatpush1.bf16.msra.mxu0 0
        %662 = vmatprep.subr.bf16.mxu0 0
        %663 = vmatpush1.bf16.msra.mxu0 0
        %664 = vmatprep.subr.bf16.mxu0 0
        %665 = vmatpush1.bf16.msra.mxu0 0
        %666 = vmatprep.mubr.bf16.mxu0 0
        %667 = vmatmul.mubr.bf16.gmra.mrb[0].mxu0 %v484
        %v668 = vpop.f32.mrb[0].mxu0
        %v669 = vadd.f32 0.0, %v668
        %v670 = vpop.f32.mrb[0].mxu0
        %v671 = vadd.f32 0.0, %v670
        %v672 = vpop.f32.mrb[0].mxu0
        %v673 = vpop.f32.mrb[0].mxu0
        %674 = vdwg.mxu0
        %v676 = vsel %vm482, %v407, 0
        %v679 = vsel %vm486, %v421, 0
        %v682 = vsel %vm486, %v429, 0
        %v685 = vsel %vm486, %v428, 0
        %v688 = vsel %vm486, %v430, 0
        %v691 = vsel %vm486, %v438, 0
        %v694 = vsel %vm486, %v446, 0
        %v697 = vsel %vm486, %v445, 0
        %v700 = vsel %vm486, %v447, 0
        %702 = vmatprep.subr.bf16.mxu0 %v682
        %703 = vmatpush1.bf16.msra.mxu0 %v679
        %704 = vmatprep.subr.bf16.mxu0 0
        %705 = vmatpush1.bf16.msra.mxu0 0
        %706 = vmatprep.subr.bf16.mxu0 0
        %707 = vmatpush1.bf16.msra.mxu0 0
        %708 = vmatprep.subr.bf16.mxu0 0
        %709 = vmatpush1.bf16.msra.mxu0 0
        %710 = vmatprep.subr.bf16.mxu0 0
        %711 = vmatpush1.bf16.msra.mxu0 0
        %712 = vmatprep.subr.bf16.mxu0 0
        %713 = vmatpush1.bf16.msra.mxu0 0
        %714 = vmatprep.subr.bf16.mxu0 0
        %715 = vmatpush1.bf16.msra.mxu0 0
        %716 = vmatprep.subr.bf16.mxu0 0
        %717 = vmatpush1.bf16.msra.mxu0 0
        %718 = vmatprep.subr.bf16.mxu0 0
        %719 = vmatpush1.bf16.msra.mxu0 0
        %720 = vmatprep.subr.bf16.mxu0 0
        %721 = vmatpush1.bf16.msra.mxu0 0
        %722 = vmatprep.subr.bf16.mxu0 0
        %723 = vmatpush1.bf16.msra.mxu0 0
        %724 = vmatprep.subr.bf16.mxu0 0
        %725 = vmatpush1.bf16.msra.mxu0 0
        %726 = vmatprep.subr.bf16.mxu0 0
        %727 = vmatpush1.bf16.msra.mxu0 0
        %728 = vmatprep.subr.bf16.mxu0 0
        %729 = vmatpush1.bf16.msra.mxu0 0
        %730 = vmatprep.subr.bf16.mxu0 0
        %731 = vmatpush1.bf16.msra.mxu0 0
        %732 = vmatprep.subr.bf16.mxu0 0
        %733 = vmatpush1.bf16.msra.mxu0 0
        %734 = vmatprep.mubr.bf16.mxu0 0
        %735 = vmatmul.mubr.bf16.gmra.mrb[0].mxu0 %v676
        %v736 = vpop.f32.mrb[0].mxu0
        %v737 = vadd.f32 %v546, %v736
        %v738 = vpop.f32.mrb[0].mxu0
        %v739 = vadd.f32 %v548, %v738
        %v740 = vpop.f32.mrb[0].mxu0
        %v741 = vpop.f32.mrb[0].mxu0
        %742 = vdwg.mxu0
        %743 = vmatprep.subr.bf16.mxu0 %v688
        %744 = vmatpush1.bf16.msra.mxu0 %v685
        %745 = vmatprep.subr.bf16.mxu0 0
        %746 = vmatpush1.bf16.msra.mxu0 0
        %747 = vmatprep.subr.bf16.mxu0 0
        %748 = vmatpush1.bf16.msra.mxu0 0
        %749 = vmatprep.subr.bf16.mxu0 0
        %750 = vmatpush1.bf16.msra.mxu0 0
        %751 = vmatprep.subr.bf16.mxu0 0
        %752 = vmatpush1.bf16.msra.mxu0 0
        %753 = vmatprep.subr.bf16.mxu0 0
        %754 = vmatpush1.bf16.msra.mxu0 0
        %755 = vmatprep.subr.bf16.mxu0 0
        %756 = vmatpush1.bf16.msra.mxu0 0
        %757 = vmatprep.subr.bf16.mxu0 0
        %758 = vmatpush1.bf16.msra.mxu0 0
        %759 = vmatprep.subr.bf16.mxu0 0
        %760 = vmatpush1.bf16.msra.mxu0 0
        %761 = vmatprep.subr.bf16.mxu0 0
        %762 = vmatpush1.bf16.msra.mxu0 0
        %763 = vmatprep.subr.bf16.mxu0 0
        %764 = vmatpush1.bf16.msra.mxu0 0
        %765 = vmatprep.subr.bf16.mxu0 0
        %766 = vmatpush1.bf16.msra.mxu0 0
        %767 = vmatprep.subr.bf16.mxu0 0
        %768 = vmatpush1.bf16.msra.mxu0 0
        %769 = vmatprep.subr.bf16.mxu0 0
        %770 = vmatpush1.bf16.msra.mxu0 0
        %771 = vmatprep.subr.bf16.mxu0 0
        %772 = vmatpush1.bf16.msra.mxu0 0
        %773 = vmatprep.subr.bf16.mxu0 0
        %774 = vmatpush1.bf16.msra.mxu0 0
        %775 = vmatprep.mubr.bf16.mxu0 0
        %776 = vmatmul.mubr.bf16.gmra.mrb[0].mxu0 %v676
        %v777 = vpop.f32.mrb[0].mxu0
        %v778 = vadd.f32 %v587, %v777
        %v779 = vpop.f32.mrb[0].mxu0
        %v780 = vadd.f32 %v589, %v779
        %v781 = vpop.f32.mrb[0].mxu0
        %v782 = vpop.f32.mrb[0].mxu0
        %783 = vdwg.mxu0
        %784 = vmatprep.subr.bf16.mxu0 %v694
        %785 = vmatpush1.bf16.msra.mxu0 %v691
        %786 = vmatprep.subr.bf16.mxu0 0
        %787 = vmatpush1.bf16.msra.mxu0 0
        %788 = vmatprep.subr.bf16.mxu0 0
        %789 = vmatpush1.bf16.msra.mxu0 0
        %790 = vmatprep.subr.bf16.mxu0 0
        %791 = vmatpush1.bf16.msra.mxu0 0
        %792 = vmatprep.subr.bf16.mxu0 0
        %793 = vmatpush1.bf16.msra.mxu0 0
        %794 = vmatprep.subr.bf16.mxu0 0
        %795 = vmatpush1.bf16.msra.mxu0 0
        %796 = vmatprep.subr.bf16.mxu0 0
        %797 = vmatpush1.bf16.msra.mxu0 0
        %798 = vmatprep.subr.bf16.mxu0 0
        %799 = vmatpush1.bf16.msra.mxu0 0
        %800 = vmatprep.subr.bf16.mxu0 0
        %801 = vmatpush1.bf16.msra.mxu0 0
        %802 = vmatprep.subr.bf16.mxu0 0
        %803 = vmatpush1.bf16.msra.mxu0 0
        %804 = vmatprep.subr.bf16.mxu0 0
        %805 = vmatpush1.bf16.msra.mxu0 0
        %806 = vmatprep.subr.bf16.mxu0 0
        %807 = vmatpush1.bf16.msra.mxu0 0
        %808 = vmatprep.subr.bf16.mxu0 0
        %809 = vmatpush1.bf16.msra.mxu0 0
        %810 = vmatprep.subr.bf16.mxu0 0
        %811 = vmatpush1.bf16.msra.mxu0 0
        %812 = vmatprep.subr.bf16.mxu0 0
        %813 = vmatpush1.bf16.msra.mxu0 0
        %814 = vmatprep.subr.bf16.mxu0 0
        %815 = vmatpush1.bf16.msra.mxu0 0
        %816 = vmatprep.mubr.bf16.mxu0 0
        %817 = vmatmul.mubr.bf16.gmra.mrb[0].mxu0 %v676
        %v818 = vpop.f32.mrb[0].mxu0
        %v819 = vadd.f32 %v628, %v818
        %v820 = vpop.f32.mrb[0].mxu0
        %v821 = vadd.f32 %v630, %v820
        %v822 = vpop.f32.mrb[0].mxu0
        %v823 = vpop.f32.mrb[0].mxu0
        %824 = vdwg.mxu0
        %825 = vmatprep.subr.bf16.mxu0 %v700
        %826 = vmatpush1.bf16.msra.mxu0 %v697
        %827 = vmatprep.subr.bf16.mxu0 0
        %828 = vmatpush1.bf16.msra.mxu0 0
        %829 = vmatprep.subr.bf16.mxu0 0
        %830 = vmatpush1.bf16.msra.mxu0 0
        %831 = vmatprep.subr.bf16.mxu0 0
        %832 = vmatpush1.bf16.msra.mxu0 0
        %833 = vmatprep.subr.bf16.mxu0 0
        %834 = vmatpush1.bf16.msra.mxu0 0
        %835 = vmatprep.subr.bf16.mxu0 0
        %836 = vmatpush1.bf16.msra.mxu0 0
        %837 = vmatprep.subr.bf16.mxu0 0
        %838 = vmatpush1.bf16.msra.mxu0 0
        %839 = vmatprep.subr.bf16.mxu0 0
        %840 = vmatpush1.bf16.msra.mxu0 0
        %841 = vmatprep.subr.bf16.mxu0 0
        %842 = vmatpush1.bf16.msra.mxu0 0
        %843 = vmatprep.subr.bf16.mxu0 0
        %844 = vmatpush1.bf16.msra.mxu0 0
        %845 = vmatprep.subr.bf16.mxu0 0
        %846 = vmatpush1.bf16.msra.mxu0 0
        %847 = vmatprep.subr.bf16.mxu0 0
        %848 = vmatpush1.bf16.msra.mxu0 0
        %849 = vmatprep.subr.bf16.mxu0 0
        %850 = vmatpush1.bf16.msra.mxu0 0
        %851 = vmatprep.subr.bf16.mxu0 0
        %852 = vmatpush1.bf16.msra.mxu0 0
        %853 = vmatprep.subr.bf16.mxu0 0
        %854 = vmatpush1.bf16.msra.mxu0 0
        %855 = vmatprep.subr.bf16.mxu0 0
        %856 = vmatpush1.bf16.msra.mxu0 0
        %857 = vmatprep.mubr.bf16.mxu0 0
        %858 = vmatmul.mubr.bf16.gmra.mrb[0].mxu0 %v676
        %v859 = vpop.f32.mrb[0].mxu0
        %v860 = vadd.f32 %v669, %v859
        %v861 = vpop.f32.mrb[0].mxu0
        %v862 = vadd.f32 %v671, %v861
        %v863 = vpop.f32.mrb[0].mxu0
        %v864 = vpop.f32.mrb[0].mxu0
        %865 = vdwg.mxu0
        %v866 = vld [vmem:[#allocation2] sm:$0xff]
        %v867 = vld [vmem:[#allocation2 + $0x8] sm:$0xff]
        %v868 = vld [vmem:[#allocation2 + $0x10] sm:$0x3]
        %s869 = scalar_lea.vmem %s0, 8
        %v870 = vld [vmem:[%s869] sm:$0xf]
        %v874 = vcombine.high %v866, %v866
        %v876 = vunpack.c.l.s4 1983009808
        %v877 = vunpack.c.0.s8 %v876
        %v878 = vlaneseq
        %v879 = vshrl.u32 %v878, 7
        %v880 = vsub.s32 %v877, %v879
        %v881 = vrot.slane %v866, %v880
        %v883 = vunpack.c.l.s4 1983009808
        %v884 = vunpack.c.0.s8 %v883
        %v885 = vlaneseq
        %v886 = vshrl.u32 %v885, 7
        %v887 = vsub.s32 %v884, %v886
        %v888 = vrot.slane %v874, %v887
        %v889 = vcombine.high %v881, %v881
        %v890 = vcombine.high %v888, %v888
        %v891 = vcombine.high %v867, %v867
        %v893 = vunpack.c.l.s4 1983009808
        %v894 = vunpack.c.0.s8 %v893
        %v895 = vlaneseq
        %v896 = vshrl.u32 %v895, 7
        %v897 = vsub.s32 %v894, %v896
        %v898 = vrot.slane %v867, %v897
        %v900 = vunpack.c.l.s4 1983009808
        %v901 = vunpack.c.0.s8 %v900
        %v902 = vlaneseq
        %v903 = vshrl.u32 %v902, 7
        %v904 = vsub.s32 %v901, %v903
        %v905 = vrot.slane %v891, %v904
        %v906 = vcombine.high %v898, %v898
        %v907 = vcombine.high %v905, %v905
        %v909 = vunpack.c.l.s4 1983009808
        %v910 = vunpack.c.0.s8 %v909
        %v911 = vlaneseq
        %v912 = vshrl.u32 %v911, 7
        %v913 = vsub.s32 %v910, %v912
        %v914 = vrot.slane %v868, %v913
        %915 = vrot.lane.b32.xlu0 %v881, 126
        %v916 = vpop.permute.xlu0 %915
        %917 = vrot.lane.b32.xlu0 %v889, 126
        %v918 = vpop.permute.xlu0 %917
        %919 = vrot.lane.b32.xlu0 %v888, 126
        %v920 = vpop.permute.xlu0 %919
        %921 = vrot.lane.b32.xlu0 %v890, 126
        %v922 = vpop.permute.xlu0 %921
        %923 = vrot.lane.b32.xlu0 %v898, 126
        %v924 = vpop.permute.xlu0 %923
        %925 = vrot.lane.b32.xlu0 %v906, 126
        %v926 = vpop.permute.xlu0 %925
        %927 = vrot.lane.b32.xlu0 %v905, 126
        %v928 = vpop.permute.xlu0 %927
        %929 = vrot.lane.b32.xlu0 %v907, 126
        %v930 = vpop.permute.xlu0 %929
        %931 = vrot.lane.b32.xlu0 %v914, 126
        %v932 = vpop.permute.xlu0 %931
        %vm933 = vcmask 1031168
        %v934 = vsel %vm933, %v916, %v918
        %v935 = vsel %vm933, %v918, %v920
        %v936 = vsel %vm933, %v920, %v922
        %v937 = vsel %vm933, %v922, %v924
        %v938 = vsel %vm933, %v924, %v926
        %v939 = vsel %vm933, %v926, %v928
        %v940 = vsel %vm933, %v928, %v930
        %v941 = vsel %vm933, %v930, %v932
        %v943 = vsel %vm482, %v870, 0
        %v946 = vsel %vm486, %v934, 0
        %v949 = vsel %vm486, %v935, 0
        %v952 = vsel %vm486, %v936, 0
        %v955 = vsel %vm486, %v937, 0
        %v958 = vsel %vm486, %v938, 0
        %v961 = vsel %vm486, %v939, 0
        %v964 = vsel %vm486, %v940, 0
        %v967 = vsel %vm486, %v941, 0
        %969 = vmatprep.subr.bf16.mxu0 %v949
        %970 = vmatpush1.bf16.msra.mxu0 %v946
        %971 = vmatprep.subr.bf16.mxu0 0
        %972 = vmatpush1.bf16.msra.mxu0 0
        %973 = vmatprep.subr.bf16.mxu0 0
        %974 = vmatpush1.bf16.msra.mxu0 0
        %975 = vmatprep.subr.bf16.mxu0 0
        %976 = vmatpush1.bf16.msra.mxu0 0
        %977 = vmatprep.subr.bf16.mxu0 0
        %978 = vmatpush1.bf16.msra.mxu0 0
        %979 = vmatprep.subr.bf16.mxu0 0
        %980 = vmatpush1.bf16.msra.mxu0 0
        %981 = vmatprep.subr.bf16.mxu0 0
        %982 = vmatpush1.bf16.msra.mxu0 0
        %983 = vmatprep.subr.bf16.mxu0 0
        %984 = vmatpush1.bf16.msra.mxu0 0
        %985 = vmatprep.subr.bf16.mxu0 0
        %986 = vmatpush1.bf16.msra.mxu0 0
        %987 = vmatprep.subr.bf16.mxu0 0
        %988 = vmatpush1.bf16.msra.mxu0 0
        %989 = vmatprep.subr.bf16.mxu0 0
        %990 = vmatpush1.bf16.msra.mxu0 0
        %991 = vmatprep.subr.bf16.mxu0 0
        %992 = vmatpush1.bf16.msra.mxu0 0
        %993 = vmatprep.subr.bf16.mxu0 0
        %994 = vmatpush1.bf16.msra.mxu0 0
        %995 = vmatprep.subr.bf16.mxu0 0
        %996 = vmatpush1.bf16.msra.mxu0 0
        %997 = vmatprep.subr.bf16.mxu0 0
        %998 = vmatpush1.bf16.msra.mxu0 0
        %999 = vmatprep.subr.bf16.mxu0 0
        %1000 = vmatpush1.bf16.msra.mxu0 0
        %1001 = vmatprep.mubr.bf16.mxu0 0
        %1002 = vmatmul.mubr.bf16.gmra.mrb[0].mxu0 %v943
        %v1003 = vpop.f32.mrb[0].mxu0
        %v1004 = vadd.f32 0.0, %v1003
        %v1005 = vpop.f32.mrb[0].mxu0
        %v1006 = vadd.f32 0.0, %v1005
        %v1007 = vpop.f32.mrb[0].mxu0
        %v1008 = vpop.f32.mrb[0].mxu0
        %1009 = vdwg.mxu0
        %1010 = vmatprep.subr.bf16.mxu0 %v955
        %1011 = vmatpush1.bf16.msra.mxu0 %v952
        %1012 = vmatprep.subr.bf16.mxu0 0
        %1013 = vmatpush1.bf16.msra.mxu0 0
        %1014 = vmatprep.subr.bf16.mxu0 0
        %1015 = vmatpush1.bf16.msra.mxu0 0
        %1016 = vmatprep.subr.bf16.mxu0 0
        %1017 = vmatpush1.bf16.msra.mxu0 0
        %1018 = vmatprep.subr.bf16.mxu0 0
        %1019 = vmatpush1.bf16.msra.mxu0 0
        %1020 = vmatprep.subr.bf16.mxu0 0
        %1021 = vmatpush1.bf16.msra.mxu0 0
        %1022 = vmatprep.subr.bf16.mxu0 0
        %1023 = vmatpush1.bf16.msra.mxu0 0
        %1024 = vmatprep.subr.bf16.mxu0 0
        %1025 = vmatpush1.bf16.msra.mxu0 0
        %1026 = vmatprep.subr.bf16.mxu0 0
        %1027 = vmatpush1.bf16.msra.mxu0 0
        %1028 = vmatprep.subr.bf16.mxu0 0
        %1029 = vmatpush1.bf16.msra.mxu0 0
        %1030 = vmatprep.subr.bf16.mxu0 0
        %1031 = vmatpush1.bf16.msra.mxu0 0
        %1032 = vmatprep.subr.bf16.mxu0 0
        %1033 = vmatpush1.bf16.msra.mxu0 0
        %1034 = vmatprep.subr.bf16.mxu0 0
        %1035 = vmatpush1.bf16.msra.mxu0 0
        %1036 = vmatprep.subr.bf16.mxu0 0
        %1037 = vmatpush1.bf16.msra.mxu0 0
        %1038 = vmatprep.subr.bf16.mxu0 0
        %1039 = vmatpush1.bf16.msra.mxu0 0
        %1040 = vmatprep.subr.bf16.mxu0 0
        %1041 = vmatpush1.bf16.msra.mxu0 0
        %1042 = vmatprep.mubr.bf16.mxu0 0
        %1043 = vmatmul.mubr.bf16.gmra.mrb[0].mxu0 %v943
        %v1044 = vpop.f32.mrb[0].mxu0
        %v1045 = vadd.f32 0.0, %v1044
        %v1046 = vpop.f32.mrb[0].mxu0
        %v1047 = vadd.f32 0.0, %v1046
        %v1048 = vpop.f32.mrb[0].mxu0
        %v1049 = vpop.f32.mrb[0].mxu0
        %1050 = vdwg.mxu0
        %1051 = vmatprep.subr.bf16.mxu0 %v961
        %1052 = vmatpush1.bf16.msra.mxu0 %v958
        %1053 = vmatprep.subr.bf16.mxu0 0
        %1054 = vmatpush1.bf16.msra.mxu0 0
        %1055 = vmatprep.subr.bf16.mxu0 0
        %1056 = vmatpush1.bf16.msra.mxu0 0
        %1057 = vmatprep.subr.bf16.mxu0 0
        %1058 = vmatpush1.bf16.msra.mxu0 0
        %1059 = vmatprep.subr.bf16.mxu0 0
        %1060 = vmatpush1.bf16.msra.mxu0 0
        %1061 = vmatprep.subr.bf16.mxu0 0
        %1062 = vmatpush1.bf16.msra.mxu0 0
        %1063 = vmatprep.subr.bf16.mxu0 0
        %1064 = vmatpush1.bf16.msra.mxu0 0
        %1065 = vmatprep.subr.bf16.mxu0 0
        %1066 = vmatpush1.bf16.msra.mxu0 0
        %1067 = vmatprep.subr.bf16.mxu0 0
        %1068 = vmatpush1.bf16.msra.mxu0 0
        %1069 = vmatprep.subr.bf16.mxu0 0
        %1070 = vmatpush1.bf16.msra.mxu0 0
        %1071 = vmatprep.subr.bf16.mxu0 0
        %1072 = vmatpush1.bf16.msra.mxu0 0
        %1073 = vmatprep.subr.bf16.mxu0 0
        %1074 = vmatpush1.bf16.msra.mxu0 0
        %1075 = vmatprep.subr.bf16.mxu0 0
        %1076 = vmatpush1.bf16.msra.mxu0 0
        %1077 = vmatprep.subr.bf16.mxu0 0
        %1078 = vmatpush1.bf16.msra.mxu0 0
        %1079 = vmatprep.subr.bf16.mxu0 0
        %1080 = vmatpush1.bf16.msra.mxu0 0
        %1081 = vmatprep.subr.bf16.mxu0 0
        %1082 = vmatpush1.bf16.msra.mxu0 0
        %1083 = vmatprep.mubr.bf16.mxu0 0
        %1084 = vmatmul.mubr.bf16.gmra.mrb[0].mxu0 %v943
        %v1085 = vpop.f32.mrb[0].mxu0
        %v1086 = vadd.f32 0.0, %v1085
        %v1087 = vpop.f32.mrb[0].mxu0
        %v1088 = vadd.f32 0.0, %v1087
        %v1089 = vpop.f32.mrb[0].mxu0
        %v1090 = vpop.f32.mrb[0].mxu0
        %1091 = vdwg.mxu0
        %1092 = vmatprep.subr.bf16.mxu0 %v967
        %1093 = vmatpush1.bf16.msra.mxu0 %v964
        %1094 = vmatprep.subr.bf16.mxu0 0
        %1095 = vmatpush1.bf16.msra.mxu0 0
        %1096 = vmatprep.subr.bf16.mxu0 0
        %1097 = vmatpush1.bf16.msra.mxu0 0
        %1098 = vmatprep.subr.bf16.mxu0 0
        %1099 = vmatpush1.bf16.msra.mxu0 0
        %1100 = vmatprep.subr.bf16.mxu0 0
        %1101 = vmatpush1.bf16.msra.mxu0 0
        %1102 = vmatprep.subr.bf16.mxu0 0
        %1103 = vmatpush1.bf16.msra.mxu0 0
        %1104 = vmatprep.subr.bf16.mxu0 0
        %1105 = vmatpush1.bf16.msra.mxu0 0
        %1106 = vmatprep.subr.bf16.mxu0 0
        %1107 = vmatpush1.bf16.msra.mxu0 0
        %1108 = vmatprep.subr.bf16.mxu0 0
        %1109 = vmatpush1.bf16.msra.mxu0 0
        %1110 = vmatprep.subr.bf16.mxu0 0
        %1111 = vmatpush1.bf16.msra.mxu0 0
        %1112 = vmatprep.subr.bf16.mxu0 0
        %1113 = vmatpush1.bf16.msra.mxu0 0
        %1114 = vmatprep.subr.bf16.mxu0 0
        %1115 = vmatpush1.bf16.msra.mxu0 0
        %1116 = vmatprep.subr.bf16.mxu0 0
        %1117 = vmatpush1.bf16.msra.mxu0 0
        %1118 = vmatprep.subr.bf16.mxu0 0
        %1119 = vmatpush1.bf16.msra.mxu0 0
        %1120 = vmatprep.subr.bf16.mxu0 0
        %1121 = vmatpush1.bf16.msra.mxu0 0
        %1122 = vmatprep.subr.bf16.mxu0 0
        %1123 = vmatpush1.bf16.msra.mxu0 0
        %1124 = vmatprep.mubr.bf16.mxu0 0
        %1125 = vmatmul.mubr.bf16.gmra.mrb[0].mxu0 %v943
        %v1126 = vpop.f32.mrb[0].mxu0
        %v1127 = vadd.f32 0.0, %v1126
        %v1128 = vpop.f32.mrb[0].mxu0
        %v1129 = vadd.f32 0.0, %v1128
        %v1130 = vpop.f32.mrb[0].mxu0
        %v1131 = vpop.f32.mrb[0].mxu0
        %1132 = vdwg.mxu0
        %v1133 = vadd.f32 %v737, %v1004
        %v1134 = vadd.f32 %v739, %v1006
        %v1135 = vadd.f32 %v778, %v1045
        %v1136 = vadd.f32 %v780, %v1047
        %v1137 = vadd.f32 %v819, %v1086
        %v1138 = vadd.f32 %v821, %v1088
        %v1139 = vadd.f32 %v860, %v1127
        %v1140 = vadd.f32 %v862, %v1129
        %v1141 = vld [vmem:[#allocation2] sm:$0xff]
        %v1142 = vld [vmem:[#allocation2 + $0x8] sm:$0xff]
        %v1143 = vld [vmem:[#allocation2 + $0x10] sm:$0x3]
        %s1144 = scalar_lea.vmem %s0, 12
        %v1145 = vld [vmem:[%s1144] sm:$0xf]
        %v1149 = vcombine.high %v1141, %v1141
        %v1151 = vunpack.c.l.s4 1983009808
        %v1152 = vunpack.c.0.s8 %v1151
        %v1153 = vlaneseq
        %v1154 = vshrl.u32 %v1153, 7
        %v1155 = vsub.s32 %v1152, %v1154
        %v1156 = vrot.slane %v1141, %v1155
        %v1158 = vunpack.c.l.s4 1983009808
        %v1159 = vunpack.c.0.s8 %v1158
        %v1160 = vlaneseq
        %v1161 = vshrl.u32 %v1160, 7
        %v1162 = vsub.s32 %v1159, %v1161
        %v1163 = vrot.slane %v1149, %v1162
        %v1164 = vcombine.high %v1156, %v1156
        %v1165 = vcombine.high %v1163, %v1163
        %v1166 = vcombine.high %v1142, %v1142
        %v1168 = vunpack.c.l.s4 1983009808
        %v1169 = vunpack.c.0.s8 %v1168
        %v1170 = vlaneseq
        %v1171 = vshrl.u32 %v1170, 7
        %v1172 = vsub.s32 %v1169, %v1171
        %v1173 = vrot.slane %v1142, %v1172
        %v1175 = vunpack.c.l.s4 1983009808
        %v1176 = vunpack.c.0.s8 %v1175
        %v1177 = vlaneseq
        %v1178 = vshrl.u32 %v1177, 7
        %v1179 = vsub.s32 %v1176, %v1178
        %v1180 = vrot.slane %v1166, %v1179
        %v1181 = vcombine.high %v1173, %v1173
        %v1182 = vcombine.high %v1180, %v1180
        %v1184 = vunpack.c.l.s4 1983009808
        %v1185 = vunpack.c.0.s8 %v1184
        %v1186 = vlaneseq
        %v1187 = vshrl.u32 %v1186, 7
        %v1188 = vsub.s32 %v1185, %v1187
        %v1189 = vrot.slane %v1143, %v1188
        %1190 = vrot.lane.b32.xlu0 %v1156, 118
        %v1191 = vpop.permute.xlu0 %1190
        %1192 = vrot.lane.b32.xlu0 %v1164, 118
        %v1193 = vpop.permute.xlu0 %1192
        %1194 = vrot.lane.b32.xlu0 %v1163, 118
        %v1195 = vpop.permute.xlu0 %1194
        %1196 = vrot.lane.b32.xlu0 %v1165, 118
        %v1197 = vpop.permute.xlu0 %1196
        %1198 = vrot.lane.b32.xlu0 %v1173, 118
        %v1199 = vpop.permute.xlu0 %1198
        %1200 = vrot.lane.b32.xlu0 %v1181, 118
        %v1201 = vpop.permute.xlu0 %1200
        %1202 = vrot.lane.b32.xlu0 %v1180, 118
        %v1203 = vpop.permute.xlu0 %1202
        %1204 = vrot.lane.b32.xlu0 %v1182, 118
        %v1205 = vpop.permute.xlu0 %1204
        %1206 = vrot.lane.b32.xlu0 %v1189, 118
        %v1207 = vpop.permute.xlu0 %1206
        %vm1208 = vcmask 965632
        %v1209 = vsel %vm1208, %v1191, %v1193
        %v1210 = vsel %vm1208, %v1193, %v1195
        %v1211 = vsel %vm1208, %v1195, %v1197
        %v1212 = vsel %vm1208, %v1197, %v1199
        %v1213 = vsel %vm1208, %v1199, %v1201
        %v1214 = vsel %vm1208, %v1201, %v1203
        %v1215 = vsel %vm1208, %v1203, %v1205
        %v1216 = vsel %vm1208, %v1205, %v1207
        %v1218 = vsel %vm482, %v1145, 0
        %v1221 = vsel %vm486, %v1209, 0
        %v1224 = vsel %vm486, %v1210, 0
        %v1227 = vsel %vm486, %v1211, 0
        %v1230 = vsel %vm486, %v1212, 0
        %v1233 = vsel %vm486, %v1213, 0
        %v1236 = vsel %vm486, %v1214, 0
        %v1239 = vsel %vm486, %v1215, 0
        %v1242 = vsel %vm486, %v1216, 0
        %1244 = vmatprep.subr.bf16.mxu0 %v1224
        %1245 = vmatpush1.bf16.msra.mxu0 %v1221
        %1246 = vmatprep.subr.bf16.mxu0 0
        %1247 = vmatpush1.bf16.msra.mxu0 0
        %1248 = vmatprep.subr.bf16.mxu0 0
        %1249 = vmatpush1.bf16.msra.mxu0 0
        %1250 = vmatprep.subr.bf16.mxu0 0
        %1251 = vmatpush1.bf16.msra.mxu0 0
        %1252 = vmatprep.subr.bf16.mxu0 0
        %1253 = vmatpush1.bf16.msra.mxu0 0
        %1254 = vmatprep.subr.bf16.mxu0 0
        %1255 = vmatpush1.bf16.msra.mxu0 0
        %1256 = vmatprep.subr.bf16.mxu0 0
        %1257 = vmatpush1.bf16.msra.mxu0 0
        %1258 = vmatprep.subr.bf16.mxu0 0
        %1259 = vmatpush1.bf16.msra.mxu0 0
        %1260 = vmatprep.subr.bf16.mxu0 0
        %1261 = vmatpush1.bf16.msra.mxu0 0
        %1262 = vmatprep.subr.bf16.mxu0 0
        %1263 = vmatpush1.bf16.msra.mxu0 0
        %1264 = vmatprep.subr.bf16.mxu0 0
        %1265 = vmatpush1.bf16.msra.mxu0 0
        %1266 = vmatprep.subr.bf16.mxu0 0
        %1267 = vmatpush1.bf16.msra.mxu0 0
        %1268 = vmatprep.subr.bf16.mxu0 0
        %1269 = vmatpush1.bf16.msra.mxu0 0
        %1270 = vmatprep.subr.bf16.mxu0 0
        %1271 = vmatpush1.bf16.msra.mxu0 0
        %1272 = vmatprep.subr.bf16.mxu0 0
        %1273 = vmatpush1.bf16.msra.mxu0 0
        %1274 = vmatprep.subr.bf16.mxu0 0
        %1275 = vmatpush1.bf16.msra.mxu0 0
        %1276 = vmatprep.mubr.bf16.mxu0 0
        %1277 = vmatmul.mubr.bf16.gmra.mrb[0].mxu0 %v1218
        %v1278 = vpop.f32.mrb[0].mxu0
        %v1279 = vadd.f32 0.0, %v1278
        %v1280 = vpop.f32.mrb[0].mxu0
        %v1281 = vadd.f32 0.0, %v1280
        %v1282 = vpop.f32.mrb[0].mxu0
        %v1283 = vpop.f32.mrb[0].mxu0
        %1284 = vdwg.mxu0
        %1285 = vmatprep.subr.bf16.mxu0 %v1230
        %1286 = vmatpush1.bf16.msra.mxu0 %v1227
        %1287 = vmatprep.subr.bf16.mxu0 0
        %1288 = vmatpush1.bf16.msra.mxu0 0
        %1289 = vmatprep.subr.bf16.mxu0 0
        %1290 = vmatpush1.bf16.msra.mxu0 0
        %1291 = vmatprep.subr.bf16.mxu0 0
        %1292 = vmatpush1.bf16.msra.mxu0 0
        %1293 = vmatprep.subr.bf16.mxu0 0
        %1294 = vmatpush1.bf16.msra.mxu0 0
        %1295 = vmatprep.subr.bf16.mxu0 0
        %1296 = vmatpush1.bf16.msra.mxu0 0
        %1297 = vmatprep.subr.bf16.mxu0 0
        %1298 = vmatpush1.bf16.msra.mxu0 0
        %1299 = vmatprep.subr.bf16.mxu0 0
        %1300 = vmatpush1.bf16.msra.mxu0 0
        %1301 = vmatprep.subr.bf16.mxu0 0
        %1302 = vmatpush1.bf16.msra.mxu0 0
        %1303 = vmatprep.subr.bf16.mxu0 0
        %1304 = vmatpush1.bf16.msra.mxu0 0
        %1305 = vmatprep.subr.bf16.mxu0 0
        %1306 = vmatpush1.bf16.msra.mxu0 0
        %1307 = vmatprep.subr.bf16.mxu0 0
        %1308 = vmatpush1.bf16.msra.mxu0 0
        %1309 = vmatprep.subr.bf16.mxu0 0
        %1310 = vmatpush1.bf16.msra.mxu0 0
        %1311 = vmatprep.subr.bf16.mxu0 0
        %1312 = vmatpush1.bf16.msra.mxu0 0
        %1313 = vmatprep.subr.bf16.mxu0 0
        %1314 = vmatpush1.bf16.msra.mxu0 0
        %1315 = vmatprep.subr.bf16.mxu0 0
        %1316 = vmatpush1.bf16.msra.mxu0 0
        %1317 = vmatprep.mubr.bf16.mxu0 0
        %1318 = vmatmul.mubr.bf16.gmra.mrb[0].mxu0 %v1218
        %v1319 = vpop.f32.mrb[0].mxu0
        %v1320 = vadd.f32 0.0, %v1319
        %v1321 = vpop.f32.mrb[0].mxu0
        %v1322 = vadd.f32 0.0, %v1321
        %v1323 = vpop.f32.mrb[0].mxu0
        %v1324 = vpop.f32.mrb[0].mxu0
        %1325 = vdwg.mxu0
        %1326 = vmatprep.subr.bf16.mxu0 %v1236
        %1327 = vmatpush1.bf16.msra.mxu0 %v1233
        %1328 = vmatprep.subr.bf16.mxu0 0
        %1329 = vmatpush1.bf16.msra.mxu0 0
        %1330 = vmatprep.subr.bf16.mxu0 0
        %1331 = vmatpush1.bf16.msra.mxu0 0
        %1332 = vmatprep.subr.bf16.mxu0 0
        %1333 = vmatpush1.bf16.msra.mxu0 0
        %1334 = vmatprep.subr.bf16.mxu0 0
        %1335 = vmatpush1.bf16.msra.mxu0 0
        %1336 = vmatprep.subr.bf16.mxu0 0
        %1337 = vmatpush1.bf16.msra.mxu0 0
        %1338 = vmatprep.subr.bf16.mxu0 0
        %1339 = vmatpush1.bf16.msra.mxu0 0
        %1340 = vmatprep.subr.bf16.mxu0 0
        %1341 = vmatpush1.bf16.msra.mxu0 0
        %1342 = vmatprep.subr.bf16.mxu0 0
        %1343 = vmatpush1.bf16.msra.mxu0 0
        %1344 = vmatprep.subr.bf16.mxu0 0
        %1345 = vmatpush1.bf16.msra.mxu0 0
        %1346 = vmatprep.subr.bf16.mxu0 0
        %1347 = vmatpush1.bf16.msra.mxu0 0
        %1348 = vmatprep.subr.bf16.mxu0 0
        %1349 = vmatpush1.bf16.msra.mxu0 0
        %1350 = vmatprep.subr.bf16.mxu0 0
        %1351 = vmatpush1.bf16.msra.mxu0 0
        %1352 = vmatprep.subr.bf16.mxu0 0
        %1353 = vmatpush1.bf16.msra.mxu0 0
        %1354 = vmatprep.subr.bf16.mxu0 0
        %1355 = vmatpush1.bf16.msra.mxu0 0
        %1356 = vmatprep.subr.bf16.mxu0 0
        %1357 = vmatpush1.bf16.msra.mxu0 0
        %1358 = vmatprep.mubr.bf16.mxu0 0
        %1359 = vmatmul.mubr.bf16.gmra.mrb[0].mxu0 %v1218
        %v1360 = vpop.f32.mrb[0].mxu0
        %v1361 = vadd.f32 0.0, %v1360
        %v1362 = vpop.f32.mrb[0].mxu0
        %v1363 = vadd.f32 0.0, %v1362
        %v1364 = vpop.f32.mrb[0].mxu0
        %v1365 = vpop.f32.mrb[0].mxu0
        %1366 = vdwg.mxu0
        %1367 = vmatprep.subr.bf16.mxu0 %v1242
        %1368 = vmatpush1.bf16.msra.mxu0 %v1239
        %1369 = vmatprep.subr.bf16.mxu0 0
        %1370 = vmatpush1.bf16.msra.mxu0 0
        %1371 = vmatprep.subr.bf16.mxu0 0
        %1372 = vmatpush1.bf16.msra.mxu0 0
        %1373 = vmatprep.subr.bf16.mxu0 0
        %1374 = vmatpush1.bf16.msra.mxu0 0
        %1375 = vmatprep.subr.bf16.mxu0 0
        %1376 = vmatpush1.bf16.msra.mxu0 0
        %1377 = vmatprep.subr.bf16.mxu0 0
        %1378 = vmatpush1.bf16.msra.mxu0 0
        %1379 = vmatprep.subr.bf16.mxu0 0
        %1380 = vmatpush1.bf16.msra.mxu0 0
        %1381 = vmatprep.subr.bf16.mxu0 0
        %1382 = vmatpush1.bf16.msra.mxu0 0
        %1383 = vmatprep.subr.bf16.mxu0 0
        %1384 = vmatpush1.bf16.msra.mxu0 0
        %1385 = vmatprep.subr.bf16.mxu0 0
        %1386 = vmatpush1.bf16.msra.mxu0 0
        %1387 = vmatprep.subr.bf16.mxu0 0
        %1388 = vmatpush1.bf16.msra.mxu0 0
        %1389 = vmatprep.subr.bf16.mxu0 0
        %1390 = vmatpush1.bf16.msra.mxu0 0
        %1391 = vmatprep.subr.bf16.mxu0 0
        %1392 = vmatpush1.bf16.msra.mxu0 0
        %1393 = vmatprep.subr.bf16.mxu0 0
        %1394 = vmatpush1.bf16.msra.mxu0 0
        %1395 = vmatprep.subr.bf16.mxu0 0
        %1396 = vmatpush1.bf16.msra.mxu0 0
        %1397 = vmatprep.subr.bf16.mxu0 0
        %1398 = vmatpush1.bf16.msra.mxu0 0
        %1399 = vmatprep.mubr.bf16.mxu0 0
        %1400 = vmatmul.mubr.bf16.gmra.mrb[0].mxu0 %v1218
        %v1401 = vpop.f32.mrb[0].mxu0
        %v1402 = vadd.f32 0.0, %v1401
        %v1403 = vpop.f32.mrb[0].mxu0
        %v1404 = vadd.f32 0.0, %v1403
        %v1405 = vpop.f32.mrb[0].mxu0
        %v1406 = vpop.f32.mrb[0].mxu0
        %1407 = vdwg.mxu0
        %v1408 = vadd.f32 %v1133, %v1279
        %v1409 = vadd.f32 %v1134, %v1281
        %v1410 = vadd.f32 %v1135, %v1320
        %v1411 = vadd.f32 %v1136, %v1322
        %v1412 = vadd.f32 %v1137, %v1361
        %v1413 = vadd.f32 %v1138, %v1363
        %v1414 = vadd.f32 %v1139, %v1402
        %v1415 = vadd.f32 %v1140, %v1404
        %v1416 = vld [vmem:[#allocation2] sm:$0xff]
        %v1417 = vld [vmem:[#allocation2 + $0x8] sm:$0xff]
        %v1418 = vld [vmem:[#allocation2 + $0x10] sm:$0x3]
        %s1419 = scalar_lea.vmem %s0, 16
        %v1420 = vld [vmem:[%s1419] sm:$0xf]
        %v1424 = vcombine.high %v1416, %v1416
        %v1426 = vunpack.c.l.s4 1983009808
        %v1427 = vunpack.c.0.s8 %v1426
        %v1428 = vlaneseq
        %v1429 = vshrl.u32 %v1428, 7
        %v1430 = vsub.s32 %v1427, %v1429
        %v1431 = vrot.slane %v1416, %v1430
        %v1433 = vunpack.c.l.s4 1983009808
        %v1434 = vunpack.c.0.s8 %v1433
        %v1435 = vlaneseq
        %v1436 = vshrl.u32 %v1435, 7
        %v1437 = vsub.s32 %v1434, %v1436
        %v1438 = vrot.slane %v1424, %v1437
        %v1439 = vcombine.high %v1431, %v1431
        %v1440 = vcombine.high %v1438, %v1438
        %v1441 = vcombine.high %v1417, %v1417
        %v1443 = vunpack.c.l.s4 1983009808
        %v1444 = vunpack.c.0.s8 %v1443
        %v1445 = vlaneseq
        %v1446 = vshrl.u32 %v1445, 7
        %v1447 = vsub.s32 %v1444, %v1446
        %v1448 = vrot.slane %v1417, %v1447
        %v1450 = vunpack.c.l.s4 1983009808
        %v1451 = vunpack.c.0.s8 %v1450
        %v1452 = vlaneseq
        %v1453 = vshrl.u32 %v1452, 7
        %v1454 = vsub.s32 %v1451, %v1453
        %v1455 = vrot.slane %v1441, %v1454
        %v1456 = vcombine.high %v1448, %v1448
        %v1457 = vcombine.high %v1455, %v1455
        %v1459 = vunpack.c.l.s4 1983009808
        %v1460 = vunpack.c.0.s8 %v1459
        %v1461 = vlaneseq
        %v1462 = vshrl.u32 %v1461, 7
        %v1463 = vsub.s32 %v1460, %v1462
        %v1464 = vrot.slane %v1418, %v1463
        %1465 = vrot.lane.b32.xlu0 %v1431, 117
        %v1466 = vpop.permute.xlu0 %1465
        %1467 = vrot.lane.b32.xlu0 %v1439, 117
        %v1468 = vpop.permute.xlu0 %1467
        %1469 = vrot.lane.b32.xlu0 %v1438, 117
        %v1470 = vpop.permute.xlu0 %1469
        %1471 = vrot.lane.b32.xlu0 %v1440, 117
        %v1472 = vpop.permute.xlu0 %1471
        %1473 = vrot.lane.b32.xlu0 %v1448, 117
        %v1474 = vpop.permute.xlu0 %1473
        %1475 = vrot.lane.b32.xlu0 %v1456, 117
        %v1476 = vpop.permute.xlu0 %1475
        %1477 = vrot.lane.b32.xlu0 %v1455, 117
        %v1478 = vpop.permute.xlu0 %1477
        %1479 = vrot.lane.b32.xlu0 %v1457, 117
        %v1480 = vpop.permute.xlu0 %1479
        %1481 = vrot.lane.b32.xlu0 %v1464, 117
        %v1482 = vpop.permute.xlu0 %1481
        %vm1483 = vcmask 957440
        %v1484 = vsel %vm1483, %v1466, %v1468
        %v1485 = vsel %vm1483, %v1468, %v1470
        %v1486 = vsel %vm1483, %v1470, %v1472
        %v1487 = vsel %vm1483, %v1472, %v1474
        %v1488 = vsel %vm1483, %v1474, %v1476
        %v1489 = vsel %vm1483, %v1476, %v1478
        %v1490 = vsel %vm1483, %v1478, %v1480
        %v1491 = vsel %vm1483, %v1480, %v1482
        %v1493 = vsel %vm482, %v1420, 0
        %v1496 = vsel %vm486, %v1484, 0
        %v1499 = vsel %vm486, %v1485, 0
        %v1502 = vsel %vm486, %v1486, 0
        %v1505 = vsel %vm486, %v1487, 0
        %v1508 = vsel %vm486, %v1488, 0
        %v1511 = vsel %vm486, %v1489, 0
        %v1514 = vsel %vm486, %v1490, 0
        %v1517 = vsel %vm486, %v1491, 0
        %1519 = vmatprep.subr.bf16.mxu0 %v1499
        %1520 = vmatpush1.bf16.msra.mxu0 %v1496
        %1521 = vmatprep.subr.bf16.mxu0 0
        %1522 = vmatpush1.bf16.msra.mxu0 0
        %1523 = vmatprep.subr.bf16.mxu0 0
        %1524 = vmatpush1.bf16.msra.mxu0 0
        %1525 = vmatprep.subr.bf16.mxu0 0
        %1526 = vmatpush1.bf16.msra.mxu0 0
        %1527 = vmatprep.subr.bf16.mxu0 0
        %1528 = vmatpush1.bf16.msra.mxu0 0
        %1529 = vmatprep.subr.bf16.mxu0 0
        %1530 = vmatpush1.bf16.msra.mxu0 0
        %1531 = vmatprep.subr.bf16.mxu0 0
        %1532 = vmatpush1.bf16.msra.mxu0 0
        %1533 = vmatprep.subr.bf16.mxu0 0
        %1534 = vmatpush1.bf16.msra.mxu0 0
        %1535 = vmatprep.subr.bf16.mxu0 0
        %1536 = vmatpush1.bf16.msra.mxu0 0
        %1537 = vmatprep.subr.bf16.mxu0 0
        %1538 = vmatpush1.bf16.msra.mxu0 0
        %1539 = vmatprep.subr.bf16.mxu0 0
        %1540 = vmatpush1.bf16.msra.mxu0 0
        %1541 = vmatprep.subr.bf16.mxu0 0
        %1542 = vmatpush1.bf16.msra.mxu0 0
        %1543 = vmatprep.subr.bf16.mxu0 0
        %1544 = vmatpush1.bf16.msra.mxu0 0
        %1545 = vmatprep.subr.bf16.mxu0 0
        %1546 = vmatpush1.bf16.msra.mxu0 0
        %1547 = vmatprep.subr.bf16.mxu0 0
        %1548 = vmatpush1.bf16.msra.mxu0 0
        %1549 = vmatprep.subr.bf16.mxu0 0
        %1550 = vmatpush1.bf16.msra.mxu0 0
        %1551 = vmatprep.mubr.bf16.mxu0 0
        %1552 = vmatmul.mubr.bf16.gmra.mrb[0].mxu0 %v1493
        %v1553 = vpop.f32.mrb[0].mxu0
        %v1554 = vadd.f32 0.0, %v1553
        %v1555 = vpop.f32.mrb[0].mxu0
        %v1556 = vadd.f32 0.0, %v1555
        %v1557 = vpop.f32.mrb[0].mxu0
        %v1558 = vpop.f32.mrb[0].mxu0
        %1559 = vdwg.mxu0
        %1560 = vmatprep.subr.bf16.mxu0 %v1505
        %1561 = vmatpush1.bf16.msra.mxu0 %v1502
        %1562 = vmatprep.subr.bf16.mxu0 0
        %1563 = vmatpush1.bf16.msra.mxu0 0
        %1564 = vmatprep.subr.bf16.mxu0 0
        %1565 = vmatpush1.bf16.msra.mxu0 0
        %1566 = vmatprep.subr.bf16.mxu0 0
        %1567 = vmatpush1.bf16.msra.mxu0 0
        %1568 = vmatprep.subr.bf16.mxu0 0
        %1569 = vmatpush1.bf16.msra.mxu0 0
        %1570 = vmatprep.subr.bf16.mxu0 0
        %1571 = vmatpush1.bf16.msra.mxu0 0
        %1572 = vmatprep.subr.bf16.mxu0 0
        %1573 = vmatpush1.bf16.msra.mxu0 0
        %1574 = vmatprep.subr.bf16.mxu0 0
        %1575 = vmatpush1.bf16.msra.mxu0 0
        %1576 = vmatprep.subr.bf16.mxu0 0
        %1577 = vmatpush1.bf16.msra.mxu0 0
        %1578 = vmatprep.subr.bf16.mxu0 0
        %1579 = vmatpush1.bf16.msra.mxu0 0
        %1580 = vmatprep.subr.bf16.mxu0 0
        %1581 = vmatpush1.bf16.msra.mxu0 0
        %1582 = vmatprep.subr.bf16.mxu0 0
        %1583 = vmatpush1.bf16.msra.mxu0 0
        %1584 = vmatprep.subr.bf16.mxu0 0
        %1585 = vmatpush1.bf16.msra.mxu0 0
        %1586 = vmatprep.subr.bf16.mxu0 0
        %1587 = vmatpush1.bf16.msra.mxu0 0
        %1588 = vmatprep.subr.bf16.mxu0 0
        %1589 = vmatpush1.bf16.msra.mxu0 0
        %1590 = vmatprep.subr.bf16.mxu0 0
        %1591 = vmatpush1.bf16.msra.mxu0 0
        %1592 = vmatprep.mubr.bf16.mxu0 0
        %1593 = vmatmul.mubr.bf16.gmra.mrb[0].mxu0 %v1493
        %v1594 = vpop.f32.mrb[0].mxu0
        %v1595 = vadd.f32 0.0, %v1594
        %v1596 = vpop.f32.mrb[0].mxu0
        %v1597 = vadd.f32 0.0, %v1596
        %v1598 = vpop.f32.mrb[0].mxu0
        %v1599 = vpop.f32.mrb[0].mxu0
        %1600 = vdwg.mxu0
        %1601 = vmatprep.subr.bf16.mxu0 %v1511
        %1602 = vmatpush1.bf16.msra.mxu0 %v1508
        %1603 = vmatprep.subr.bf16.mxu0 0
        %1604 = vmatpush1.bf16.msra.mxu0 0
        %1605 = vmatprep.subr.bf16.mxu0 0
        %1606 = vmatpush1.bf16.msra.mxu0 0
        %1607 = vmatprep.subr.bf16.mxu0 0
        %1608 = vmatpush1.bf16.msra.mxu0 0
        %1609 = vmatprep.subr.bf16.mxu0 0
        %1610 = vmatpush1.bf16.msra.mxu0 0
        %1611 = vmatprep.subr.bf16.mxu0 0
        %1612 = vmatpush1.bf16.msra.mxu0 0
        %1613 = vmatprep.subr.bf16.mxu0 0
        %1614 = vmatpush1.bf16.msra.mxu0 0
        %1615 = vmatprep.subr.bf16.mxu0 0
        %1616 = vmatpush1.bf16.msra.mxu0 0
        %1617 = vmatprep.subr.bf16.mxu0 0
        %1618 = vmatpush1.bf16.msra.mxu0 0
        %1619 = vmatprep.subr.bf16.mxu0 0
        %1620 = vmatpush1.bf16.msra.mxu0 0
        %1621 = vmatprep.subr.bf16.mxu0 0
        %1622 = vmatpush1.bf16.msra.mxu0 0
        %1623 = vmatprep.subr.bf16.mxu0 0
        %1624 = vmatpush1.bf16.msra.mxu0 0
        %1625 = vmatprep.subr.bf16.mxu0 0
        %1626 = vmatpush1.bf16.msra.mxu0 0
        %1627 = vmatprep.subr.bf16.mxu0 0
        %1628 = vmatpush1.bf16.msra.mxu0 0
        %1629 = vmatprep.subr.bf16.mxu0 0
        %1630 = vmatpush1.bf16.msra.mxu0 0
        %1631 = vmatprep.subr.bf16.mxu0 0
        %1632 = vmatpush1.bf16.msra.mxu0 0
        %1633 = vmatprep.mubr.bf16.mxu0 0
        %1634 = vmatmul.mubr.bf16.gmra.mrb[0].mxu0 %v1493
        %v1635 = vpop.f32.mrb[0].mxu0
        %v1636 = vadd.f32 0.0, %v1635
        %v1637 = vpop.f32.mrb[0].mxu0
        %v1638 = vadd.f32 0.0, %v1637
        %v1639 = vpop.f32.mrb[0].mxu0
        %v1640 = vpop.f32.mrb[0].mxu0
        %1641 = vdwg.mxu0
        %1642 = vmatprep.subr.bf16.mxu0 %v1517
        %1643 = vmatpush1.bf16.msra.mxu0 %v1514
        %1644 = vmatprep.subr.bf16.mxu0 0
        %1645 = vmatpush1.bf16.msra.mxu0 0
        %1646 = vmatprep.subr.bf16.mxu0 0
        %1647 = vmatpush1.bf16.msra.mxu0 0
        %1648 = vmatprep.subr.bf16.mxu0 0
        %1649 = vmatpush1.bf16.msra.mxu0 0
        %1650 = vmatprep.subr.bf16.mxu0 0
        %1651 = vmatpush1.bf16.msra.mxu0 0
        %1652 = vmatprep.subr.bf16.mxu0 0
        %1653 = vmatpush1.bf16.msra.mxu0 0
        %1654 = vmatprep.subr.bf16.mxu0 0
        %1655 = vmatpush1.bf16.msra.mxu0 0
        %1656 = vmatprep.subr.bf16.mxu0 0
        %1657 = vmatpush1.bf16.msra.mxu0 0
        %1658 = vmatprep.subr.bf16.mxu0 0
        %1659 = vmatpush1.bf16.msra.mxu0 0
        %1660 = vmatprep.subr.bf16.mxu0 0
        %1661 = vmatpush1.bf16.msra.mxu0 0
        %1662 = vmatprep.subr.bf16.mxu0 0
        %1663 = vmatpush1.bf16.msra.mxu0 0
        %1664 = vmatprep.subr.bf16.mxu0 0
        %1665 = vmatpush1.bf16.msra.mxu0 0
        %1666 = vmatprep.subr.bf16.mxu0 0
        %1667 = vmatpush1.bf16.msra.mxu0 0
        %1668 = vmatprep.subr.bf16.mxu0 0
        %1669 = vmatpush1.bf16.msra.mxu0 0
        %1670 = vmatprep.subr.bf16.mxu0 0
        %1671 = vmatpush1.bf16.msra.mxu0 0
        %1672 = vmatprep.subr.bf16.mxu0 0
        %1673 = vmatpush1.bf16.msra.mxu0 0
        %1674 = vmatprep.mubr.bf16.mxu0 0
        %1675 = vmatmul.mubr.bf16.gmra.mrb[0].mxu0 %v1493
        %v1676 = vpop.f32.mrb[0].mxu0
        %v1677 = vadd.f32 0.0, %v1676
        %v1678 = vpop.f32.mrb[0].mxu0
        %v1679 = vadd.f32 0.0, %v1678
        %v1680 = vpop.f32.mrb[0].mxu0
        %v1681 = vpop.f32.mrb[0].mxu0
        %1682 = vdwg.mxu0
        %v1683 = vadd.f32 %v1408, %v1554
        %v1684 = vadd.f32 %v1409, %v1556
        %v1685 = vadd.f32 %v1410, %v1595
        %v1686 = vadd.f32 %v1411, %v1597
        %v1687 = vadd.f32 %v1412, %v1636
        %v1688 = vadd.f32 %v1413, %v1638
        %v1689 = vadd.f32 %v1414, %v1677
        %v1690 = vadd.f32 %v1415, %v1679
        %v1691 = vld [vmem:[#allocation2] sm:$0xff]
        %v1692 = vld [vmem:[#allocation2 + $0x8] sm:$0xff]
        %v1693 = vld [vmem:[#allocation2 + $0x10] sm:$0x3]
        %s1694 = scalar_lea.vmem %s0, 20
        %v1695 = vld [vmem:[%s1694] sm:$0xf]
        %v1699 = vcombine.high %v1691, %v1691
        %v1701 = vunpack.c.l.s4 1983009808
        %v1702 = vunpack.c.0.s8 %v1701
        %v1703 = vlaneseq
        %v1704 = vshrl.u32 %v1703, 7
        %v1705 = vsub.s32 %v1702, %v1704
        %v1706 = vrot.slane %v1691, %v1705
        %v1708 = vunpack.c.l.s4 1983009808
        %v1709 = vunpack.c.0.s8 %v1708
        %v1710 = vlaneseq
        %v1711 = vshrl.u32 %v1710, 7
        %v1712 = vsub.s32 %v1709, %v1711
        %v1713 = vrot.slane %v1699, %v1712
        %v1714 = vcombine.high %v1706, %v1706
        %v1715 = vcombine.high %v1713, %v1713
        %v1716 = vcombine.high %v1692, %v1692
        %v1718 = vunpack.c.l.s4 1983009808
        %v1719 = vunpack.c.0.s8 %v1718
        %v1720 = vlaneseq
        %v1721 = vshrl.u32 %v1720, 7
        %v1722 = vsub.s32 %v1719, %v1721
        %v1723 = vrot.slane %v1692, %v1722
        %v1725 = vunpack.c.l.s4 1983009808
        %v1726 = vunpack.c.0.s8 %v1725
        %v1727 = vlaneseq
        %v1728 = vshrl.u32 %v1727, 7
        %v1729 = vsub.s32 %v1726, %v1728
        %v1730 = vrot.slane %v1716, %v1729
        %v1731 = vcombine.high %v1723, %v1723
        %v1732 = vcombine.high %v1730, %v1730
        %v1734 = vunpack.c.l.s4 1983009808
        %v1735 = vunpack.c.0.s8 %v1734
        %v1736 = vlaneseq
        %v1737 = vshrl.u32 %v1736, 7
        %v1738 = vsub.s32 %v1735, %v1737
        %v1739 = vrot.slane %v1693, %v1738
        %1740 = vrot.lane.b32.xlu0 %v1706, 116
        %v1741 = vpop.permute.xlu0 %1740
        %1742 = vrot.lane.b32.xlu0 %v1714, 116
        %v1743 = vpop.permute.xlu0 %1742
        %1744 = vrot.lane.b32.xlu0 %v1713, 116
        %v1745 = vpop.permute.xlu0 %1744
        %1746 = vrot.lane.b32.xlu0 %v1715, 116
        %v1747 = vpop.permute.xlu0 %1746
        %1748 = vrot.lane.b32.xlu0 %v1723, 116
        %v1749 = vpop.permute.xlu0 %1748
        %1750 = vrot.lane.b32.xlu0 %v1731, 116
        %v1751 = vpop.permute.xlu0 %1750
        %1752 = vrot.lane.b32.xlu0 %v1730, 116
        %v1753 = vpop.permute.xlu0 %1752
        %1754 = vrot.lane.b32.xlu0 %v1732, 116
        %v1755 = vpop.permute.xlu0 %1754
        %1756 = vrot.lane.b32.xlu0 %v1739, 116
        %v1757 = vpop.permute.xlu0 %1756
        %vm1758 = vcmask 949248
        %v1759 = vsel %vm1758, %v1741, %v1743
        %v1760 = vsel %vm1758, %v1743, %v1745
        %v1761 = vsel %vm1758, %v1745, %v1747
        %v1762 = vsel %vm1758, %v1747, %v1749
        %v1763 = vsel %vm1758, %v1749, %v1751
        %v1764 = vsel %vm1758, %v1751, %v1753
        %v1765 = vsel %vm1758, %v1753, %v1755
        %v1766 = vsel %vm1758, %v1755, %v1757
        %v1768 = vsel %vm482, %v1695, 0
        %v1771 = vsel %vm486, %v1759, 0
        %v1774 = vsel %vm486, %v1760, 0
        %v1777 = vsel %vm486, %v1761, 0
        %v1780 = vsel %vm486, %v1762, 0
        %v1783 = vsel %vm486, %v1763, 0
        %v1786 = vsel %vm486, %v1764, 0
        %v1789 = vsel %vm486, %v1765, 0
        %v1792 = vsel %vm486, %v1766, 0
        %1794 = vmatprep.subr.bf16.mxu0 %v1774
        %1795 = vmatpush1.bf16.msra.mxu0 %v1771
        %1796 = vmatprep.subr.bf16.mxu0 0
        %1797 = vmatpush1.bf16.msra.mxu0 0
        %1798 = vmatprep.subr.bf16.mxu0 0
        %1799 = vmatpush1.bf16.msra.mxu0 0
        %1800 = vmatprep.subr.bf16.mxu0 0
        %1801 = vmatpush1.bf16.msra.mxu0 0
        %1802 = vmatprep.subr.bf16.mxu0 0
        %1803 = vmatpush1.bf16.msra.mxu0 0
        %1804 = vmatprep.subr.bf16.mxu0 0
        %1805 = vmatpush1.bf16.msra.mxu0 0
        %1806 = vmatprep.subr.bf16.mxu0 0
        %1807 = vmatpush1.bf16.msra.mxu0 0
        %1808 = vmatprep.subr.bf16.mxu0 0
        %1809 = vmatpush1.bf16.msra.mxu0 0
        %1810 = vmatprep.subr.bf16.mxu0 0
        %1811 = vmatpush1.bf16.msra.mxu0 0
        %1812 = vmatprep.subr.bf16.mxu0 0
        %1813 = vmatpush1.bf16.msra.mxu0 0
        %1814 = vmatprep.subr.bf16.mxu0 0
        %1815 = vmatpush1.bf16.msra.mxu0 0
        %1816 = vmatprep.subr.bf16.mxu0 0
        %1817 = vmatpush1.bf16.msra.mxu0 0
        %1818 = vmatprep.subr.bf16.mxu0 0
        %1819 = vmatpush1.bf16.msra.mxu0 0
        %1820 = vmatprep.subr.bf16.mxu0 0
        %1821 = vmatpush1.bf16.msra.mxu0 0
        %1822 = vmatprep.subr.bf16.mxu0 0
        %1823 = vmatpush1.bf16.msra.mxu0 0
        %1824 = vmatprep.subr.bf16.mxu0 0
        %1825 = vmatpush1.bf16.msra.mxu0 0
        %1826 = vmatprep.mubr.bf16.mxu0 0
        %1827 = vmatmul.mubr.bf16.gmra.mrb[0].mxu0 %v1768
        %v1828 = vpop.f32.mrb[0].mxu0
        %v1829 = vadd.f32 0.0, %v1828
        %v1830 = vpop.f32.mrb[0].mxu0
        %v1831 = vadd.f32 0.0, %v1830
        %v1832 = vpop.f32.mrb[0].mxu0
        %v1833 = vpop.f32.mrb[0].mxu0
        %1834 = vdwg.mxu0
        %1835 = vmatprep.subr.bf16.mxu0 %v1780
        %1836 = vmatpush1.bf16.msra.mxu0 %v1777
        %1837 = vmatprep.subr.bf16.mxu0 0
        %1838 = vmatpush1.bf16.msra.mxu0 0
        %1839 = vmatprep.subr.bf16.mxu0 0
        %1840 = vmatpush1.bf16.msra.mxu0 0
        %1841 = vmatprep.subr.bf16.mxu0 0
        %1842 = vmatpush1.bf16.msra.mxu0 0
        %1843 = vmatprep.subr.bf16.mxu0 0
        %1844 = vmatpush1.bf16.msra.mxu0 0
        %1845 = vmatprep.subr.bf16.mxu0 0
        %1846 = vmatpush1.bf16.msra.mxu0 0
        %1847 = vmatprep.subr.bf16.mxu0 0
        %1848 = vmatpush1.bf16.msra.mxu0 0
        %1849 = vmatprep.subr.bf16.mxu0 0
        %1850 = vmatpush1.bf16.msra.mxu0 0
        %1851 = vmatprep.subr.bf16.mxu0 0
        %1852 = vmatpush1.bf16.msra.mxu0 0
        %1853 = vmatprep.subr.bf16.mxu0 0
        %1854 = vmatpush1.bf16.msra.mxu0 0
        %1855 = vmatprep.subr.bf16.mxu0 0
        %1856 = vmatpush1.bf16.msra.mxu0 0
        %1857 = vmatprep.subr.bf16.mxu0 0
        %1858 = vmatpush1.bf16.msra.mxu0 0
        %1859 = vmatprep.subr.bf16.mxu0 0
        %1860 = vmatpush1.bf16.msra.mxu0 0
        %1861 = vmatprep.subr.bf16.mxu0 0
        %1862 = vmatpush1.bf16.msra.mxu0 0
        %1863 = vmatprep.subr.bf16.mxu0 0
        %1864 = vmatpush1.bf16.msra.mxu0 0
        %1865 = vmatprep.subr.bf16.mxu0 0
        %1866 = vmatpush1.bf16.msra.mxu0 0
        %1867 = vmatprep.mubr.bf16.mxu0 0
        %1868 = vmatmul.mubr.bf16.gmra.mrb[0].mxu0 %v1768
        %v1869 = vpop.f32.mrb[0].mxu0
        %v1870 = vadd.f32 0.0, %v1869
        %v1871 = vpop.f32.mrb[0].mxu0
        %v1872 = vadd.f32 0.0, %v1871
        %v1873 = vpop.f32.mrb[0].mxu0
        %v1874 = vpop.f32.mrb[0].mxu0
        %1875 = vdwg.mxu0
        %1876 = vmatprep.subr.bf16.mxu0 %v1786
        %1877 = vmatpush1.bf16.msra.mxu0 %v1783
        %1878 = vmatprep.subr.bf16.mxu0 0
        %1879 = vmatpush1.bf16.msra.mxu0 0
        %1880 = vmatprep.subr.bf16.mxu0 0
        %1881 = vmatpush1.bf16.msra.mxu0 0
        %1882 = vmatprep.subr.bf16.mxu0 0
        %1883 = vmatpush1.bf16.msra.mxu0 0
        %1884 = vmatprep.subr.bf16.mxu0 0
        %1885 = vmatpush1.bf16.msra.mxu0 0
        %1886 = vmatprep.subr.bf16.mxu0 0
        %1887 = vmatpush1.bf16.msra.mxu0 0
        %1888 = vmatprep.subr.bf16.mxu0 0
        %1889 = vmatpush1.bf16.msra.mxu0 0
        %1890 = vmatprep.subr.bf16.mxu0 0
        %1891 = vmatpush1.bf16.msra.mxu0 0
        %1892 = vmatprep.subr.bf16.mxu0 0
        %1893 = vmatpush1.bf16.msra.mxu0 0
        %1894 = vmatprep.subr.bf16.mxu0 0
        %1895 = vmatpush1.bf16.msra.mxu0 0
        %1896 = vmatprep.subr.bf16.mxu0 0
        %1897 = vmatpush1.bf16.msra.mxu0 0
        %1898 = vmatprep.subr.bf16.mxu0 0
        %1899 = vmatpush1.bf16.msra.mxu0 0
        %1900 = vmatprep.subr.bf16.mxu0 0
        %1901 = vmatpush1.bf16.msra.mxu0 0
        %1902 = vmatprep.subr.bf16.mxu0 0
        %1903 = vmatpush1.bf16.msra.mxu0 0
        %1904 = vmatprep.subr.bf16.mxu0 0
        %1905 = vmatpush1.bf16.msra.mxu0 0
        %1906 = vmatprep.subr.bf16.mxu0 0
        %1907 = vmatpush1.bf16.msra.mxu0 0
        %1908 = vmatprep.mubr.bf16.mxu0 0
        %1909 = vmatmul.mubr.bf16.gmra.mrb[0].mxu0 %v1768
        %v1910 = vpop.f32.mrb[0].mxu0
        %v1911 = vadd.f32 0.0, %v1910
        %v1912 = vpop.f32.mrb[0].mxu0
        %v1913 = vadd.f32 0.0, %v1912
        %v1914 = vpop.f32.mrb[0].mxu0
        %v1915 = vpop.f32.mrb[0].mxu0
        %1916 = vdwg.mxu0
        %1917 = vmatprep.subr.bf16.mxu0 %v1792
        %1918 = vmatpush1.bf16.msra.mxu0 %v1789
        %1919 = vmatprep.subr.bf16.mxu0 0
        %1920 = vmatpush1.bf16.msra.mxu0 0
        %1921 = vmatprep.subr.bf16.mxu0 0
        %1922 = vmatpush1.bf16.msra.mxu0 0
        %1923 = vmatprep.subr.bf16.mxu0 0
        %1924 = vmatpush1.bf16.msra.mxu0 0
        %1925 = vmatprep.subr.bf16.mxu0 0
        %1926 = vmatpush1.bf16.msra.mxu0 0
        %1927 = vmatprep.subr.bf16.mxu0 0
        %1928 = vmatpush1.bf16.msra.mxu0 0
        %1929 = vmatprep.subr.bf16.mxu0 0
        %1930 = vmatpush1.bf16.msra.mxu0 0
        %1931 = vmatprep.subr.bf16.mxu0 0
        %1932 = vmatpush1.bf16.msra.mxu0 0
        %1933 = vmatprep.subr.bf16.mxu0 0
        %1934 = vmatpush1.bf16.msra.mxu0 0
        %1935 = vmatprep.subr.bf16.mxu0 0
        %1936 = vmatpush1.bf16.msra.mxu0 0
        %1937 = vmatprep.subr.bf16.mxu0 0
        %1938 = vmatpush1.bf16.msra.mxu0 0
        %1939 = vmatprep.subr.bf16.mxu0 0
        %1940 = vmatpush1.bf16.msra.mxu0 0
        %1941 = vmatprep.subr.bf16.mxu0 0
        %1942 = vmatpush1.bf16.msra.mxu0 0
        %1943 = vmatprep.subr.bf16.mxu0 0
        %1944 = vmatpush1.bf16.msra.mxu0 0
        %1945 = vmatprep.subr.bf16.mxu0 0
        %1946 = vmatpush1.bf16.msra.mxu0 0
        %1947 = vmatprep.subr.bf16.mxu0 0
        %1948 = vmatpush1.bf16.msra.mxu0 0
        %1949 = vmatprep.mubr.bf16.mxu0 0
        %1950 = vmatmul.mubr.bf16.gmra.mrb[0].mxu0 %v1768
        %v1951 = vpop.f32.mrb[0].mxu0
        %v1952 = vadd.f32 0.0, %v1951
        %v1953 = vpop.f32.mrb[0].mxu0
        %v1954 = vadd.f32 0.0, %v1953
        %v1955 = vpop.f32.mrb[0].mxu0
        %v1956 = vpop.f32.mrb[0].mxu0
        %1957 = vdwg.mxu0
        %v1958 = vadd.f32 %v1683, %v1829
        %v1959 = vadd.f32 %v1684, %v1831
        %v1960 = vadd.f32 %v1685, %v1870
        %v1961 = vadd.f32 %v1686, %v1872
        %v1962 = vadd.f32 %v1687, %v1911
        %v1963 = vadd.f32 %v1688, %v1913
        %v1964 = vadd.f32 %v1689, %v1952
        %v1965 = vadd.f32 %v1690, %v1954
        %v1966 = vld [vmem:[#allocation2] sm:$0xff]
        %v1967 = vld [vmem:[#allocation2 + $0x8] sm:$0xff]
        %v1968 = vld [vmem:[#allocation2 + $0x10] sm:$0x3]
        %s1969 = scalar_lea.vmem %s0, 24
        %v1970 = vld [vmem:[%s1969] sm:$0xf]
        %v1974 = vcombine.high %v1966, %v1966
        %v1976 = vunpack.c.l.s4 1983009808
        %v1977 = vunpack.c.0.s8 %v1976
        %v1978 = vlaneseq
        %v1979 = vshrl.u32 %v1978, 7
        %v1980 = vsub.s32 %v1977, %v1979
        %v1981 = vrot.slane %v1966, %v1980
        %v1983 = vunpack.c.l.s4 1983009808
        %v1984 = vunpack.c.0.s8 %v1983
        %v1985 = vlaneseq
        %v1986 = vshrl.u32 %v1985, 7
        %v1987 = vsub.s32 %v1984, %v1986
        %v1988 = vrot.slane %v1974, %v1987
        %v1989 = vcombine.high %v1981, %v1981
        %v1990 = vcombine.high %v1988, %v1988
        %v1991 = vcombine.high %v1967, %v1967
        %v1993 = vunpack.c.l.s4 1983009808
        %v1994 = vunpack.c.0.s8 %v1993
        %v1995 = vlaneseq
        %v1996 = vshrl.u32 %v1995, 7
        %v1997 = vsub.s32 %v1994, %v1996
        %v1998 = vrot.slane %v1967, %v1997
        %v2000 = vunpack.c.l.s4 1983009808
        %v2001 = vunpack.c.0.s8 %v2000
        %v2002 = vlaneseq
        %v2003 = vshrl.u32 %v2002, 7
        %v2004 = vsub.s32 %v2001, %v2003
        %v2005 = vrot.slane %v1991, %v2004
        %v2006 = vcombine.high %v1998, %v1998
        %v2007 = vcombine.high %v2005, %v2005
        %v2009 = vunpack.c.l.s4 1983009808
        %v2010 = vunpack.c.0.s8 %v2009
        %v2011 = vlaneseq
        %v2012 = vshrl.u32 %v2011, 7
        %v2013 = vsub.s32 %v2010, %v2012
        %v2014 = vrot.slane %v1968, %v2013
        %2015 = vrot.lane.b32.xlu0 %v1981, 108
        %v2016 = vpop.permute.xlu0 %2015
        %2017 = vrot.lane.b32.xlu0 %v1989, 108
        %v2018 = vpop.permute.xlu0 %2017
        %2019 = vrot.lane.b32.xlu0 %v1988, 108
        %v2020 = vpop.permute.xlu0 %2019
        %2021 = vrot.lane.b32.xlu0 %v1990, 108
        %v2022 = vpop.permute.xlu0 %2021
        %2023 = vrot.lane.b32.xlu0 %v1998, 108
        %v2024 = vpop.permute.xlu0 %2023
        %2025 = vrot.lane.b32.xlu0 %v2006, 108
        %v2026 = vpop.permute.xlu0 %2025
        %2027 = vrot.lane.b32.xlu0 %v2005, 108
        %v2028 = vpop.permute.xlu0 %2027
        %2029 = vrot.lane.b32.xlu0 %v2007, 108
        %v2030 = vpop.permute.xlu0 %2029
        %2031 = vrot.lane.b32.xlu0 %v2014, 108
        %v2032 = vpop.permute.xlu0 %2031
        %vm2033 = vcmask 883712
        %v2034 = vsel %vm2033, %v2016, %v2018
        %v2035 = vsel %vm2033, %v2018, %v2020
        %v2036 = vsel %vm2033, %v2020, %v2022
        %v2037 = vsel %vm2033, %v2022, %v2024
        %v2038 = vsel %vm2033, %v2024, %v2026
        %v2039 = vsel %vm2033, %v2026, %v2028
        %v2040 = vsel %vm2033, %v2028, %v2030
        %v2041 = vsel %vm2033, %v2030, %v2032
        %v2043 = vsel %vm482, %v1970, 0
        %v2046 = vsel %vm486, %v2034, 0
        %v2049 = vsel %vm486, %v2035, 0
        %v2052 = vsel %vm486, %v2036, 0
        %v2055 = vsel %vm486, %v2037, 0
        %v2058 = vsel %vm486, %v2038, 0
        %v2061 = vsel %vm486, %v2039, 0
        %v2064 = vsel %vm486, %v2040, 0
        %v2067 = vsel %vm486, %v2041, 0
        %2069 = vmatprep.subr.bf16.mxu0 %v2049
        %2070 = vmatpush1.bf16.msra.mxu0 %v2046
        %2071 = vmatprep.subr.bf16.mxu0 0
        %2072 = vmatpush1.bf16.msra.mxu0 0
        %2073 = vmatprep.subr.bf16.mxu0 0
        %2074 = vmatpush1.bf16.msra.mxu0 0
        %2075 = vmatprep.subr.bf16.mxu0 0
        %2076 = vmatpush1.bf16.msra.mxu0 0
        %2077 = vmatprep.subr.bf16.mxu0 0
        %2078 = vmatpush1.bf16.msra.mxu0 0
        %2079 = vmatprep.subr.bf16.mxu0 0
        %2080 = vmatpush1.bf16.msra.mxu0 0
        %2081 = vmatprep.subr.bf16.mxu0 0
        %2082 = vmatpush1.bf16.msra.mxu0 0
        %2083 = vmatprep.subr.bf16.mxu0 0
        %2084 = vmatpush1.bf16.msra.mxu0 0
        %2085 = vmatprep.subr.bf16.mxu0 0
        %2086 = vmatpush1.bf16.msra.mxu0 0
        %2087 = vmatprep.subr.bf16.mxu0 0
        %2088 = vmatpush1.bf16.msra.mxu0 0
        %2089 = vmatprep.subr.bf16.mxu0 0
        %2090 = vmatpush1.bf16.msra.mxu0 0
        %2091 = vmatprep.subr.bf16.mxu0 0
        %2092 = vmatpush1.bf16.msra.mxu0 0
        %2093 = vmatprep.subr.bf16.mxu0 0
        %2094 = vmatpush1.bf16.msra.mxu0 0
        %2095 = vmatprep.subr.bf16.mxu0 0
        %2096 = vmatpush1.bf16.msra.mxu0 0
        %2097 = vmatprep.subr.bf16.mxu0 0
        %2098 = vmatpush1.bf16.msra.mxu0 0
        %2099 = vmatprep.subr.bf16.mxu0 0
        %2100 = vmatpush1.bf16.msra.mxu0 0
        %2101 = vmatprep.mubr.bf16.mxu0 0
        %2102 = vmatmul.mubr.bf16.gmra.mrb[0].mxu0 %v2043
        %v2103 = vpop.f32.mrb[0].mxu0
        %v2104 = vadd.f32 0.0, %v2103
        %v2105 = vpop.f32.mrb[0].mxu0
        %v2106 = vadd.f32 0.0, %v2105
        %v2107 = vpop.f32.mrb[0].mxu0
        %v2108 = vpop.f32.mrb[0].mxu0
        %2109 = vdwg.mxu0
        %2110 = vmatprep.subr.bf16.mxu0 %v2055
        %2111 = vmatpush1.bf16.msra.mxu0 %v2052
        %2112 = vmatprep.subr.bf16.mxu0 0
        %2113 = vmatpush1.bf16.msra.mxu0 0
        %2114 = vmatprep.subr.bf16.mxu0 0
        %2115 = vmatpush1.bf16.msra.mxu0 0
        %2116 = vmatprep.subr.bf16.mxu0 0
        %2117 = vmatpush1.bf16.msra.mxu0 0
        %2118 = vmatprep.subr.bf16.mxu0 0
        %2119 = vmatpush1.bf16.msra.mxu0 0
        %2120 = vmatprep.subr.bf16.mxu0 0
        %2121 = vmatpush1.bf16.msra.mxu0 0
        %2122 = vmatprep.subr.bf16.mxu0 0
        %2123 = vmatpush1.bf16.msra.mxu0 0
        %2124 = vmatprep.subr.bf16.mxu0 0
        %2125 = vmatpush1.bf16.msra.mxu0 0
        %2126 = vmatprep.subr.bf16.mxu0 0
        %2127 = vmatpush1.bf16.msra.mxu0 0
        %2128 = vmatprep.subr.bf16.mxu0 0
        %2129 = vmatpush1.bf16.msra.mxu0 0
        %2130 = vmatprep.subr.bf16.mxu0 0
        %2131 = vmatpush1.bf16.msra.mxu0 0
        %2132 = vmatprep.subr.bf16.mxu0 0
        %2133 = vmatpush1.bf16.msra.mxu0 0
        %2134 = vmatprep.subr.bf16.mxu0 0
        %2135 = vmatpush1.bf16.msra.mxu0 0
        %2136 = vmatprep.subr.bf16.mxu0 0
        %2137 = vmatpush1.bf16.msra.mxu0 0
        %2138 = vmatprep.subr.bf16.mxu0 0
        %2139 = vmatpush1.bf16.msra.mxu0 0
        %2140 = vmatprep.subr.bf16.mxu0 0
        %2141 = vmatpush1.bf16.msra.mxu0 0
        %2142 = vmatprep.mubr.bf16.mxu0 0
        %2143 = vmatmul.mubr.bf16.gmra.mrb[0].mxu0 %v2043
        %v2144 = vpop.f32.mrb[0].mxu0
        %v2145 = vadd.f32 0.0, %v2144
        %v2146 = vpop.f32.mrb[0].mxu0
        %v2147 = vadd.f32 0.0, %v2146
        %v2148 = vpop.f32.mrb[0].mxu0
        %v2149 = vpop.f32.mrb[0].mxu0
        %2150 = vdwg.mxu0
        %2151 = vmatprep.subr.bf16.mxu0 %v2061
        %2152 = vmatpush1.bf16.msra.mxu0 %v2058
        %2153 = vmatprep.subr.bf16.mxu0 0
        %2154 = vmatpush1.bf16.msra.mxu0 0
        %2155 = vmatprep.subr.bf16.mxu0 0
        %2156 = vmatpush1.bf16.msra.mxu0 0
        %2157 = vmatprep.subr.bf16.mxu0 0
        %2158 = vmatpush1.bf16.msra.mxu0 0
        %2159 = vmatprep.subr.bf16.mxu0 0
        %2160 = vmatpush1.bf16.msra.mxu0 0
        %2161 = vmatprep.subr.bf16.mxu0 0
        %2162 = vmatpush1.bf16.msra.mxu0 0
        %2163 = vmatprep.subr.bf16.mxu0 0
        %2164 = vmatpush1.bf16.msra.mxu0 0
        %2165 = vmatprep.subr.bf16.mxu0 0
        %2166 = vmatpush1.bf16.msra.mxu0 0
        %2167 = vmatprep.subr.bf16.mxu0 0
        %2168 = vmatpush1.bf16.msra.mxu0 0
        %2169 = vmatprep.subr.bf16.mxu0 0
        %2170 = vmatpush1.bf16.msra.mxu0 0
        %2171 = vmatprep.subr.bf16.mxu0 0
        %2172 = vmatpush1.bf16.msra.mxu0 0
        %2173 = vmatprep.subr.bf16.mxu0 0
        %2174 = vmatpush1.bf16.msra.mxu0 0
        %2175 = vmatprep.subr.bf16.mxu0 0
        %2176 = vmatpush1.bf16.msra.mxu0 0
        %2177 = vmatprep.subr.bf16.mxu0 0
        %2178 = vmatpush1.bf16.msra.mxu0 0
        %2179 = vmatprep.subr.bf16.mxu0 0
        %2180 = vmatpush1.bf16.msra.mxu0 0
        %2181 = vmatprep.subr.bf16.mxu0 0
        %2182 = vmatpush1.bf16.msra.mxu0 0
        %2183 = vmatprep.mubr.bf16.mxu0 0
        %2184 = vmatmul.mubr.bf16.gmra.mrb[0].mxu0 %v2043
        %v2185 = vpop.f32.mrb[0].mxu0
        %v2186 = vadd.f32 0.0, %v2185
        %v2187 = vpop.f32.mrb[0].mxu0
        %v2188 = vadd.f32 0.0, %v2187
        %v2189 = vpop.f32.mrb[0].mxu0
        %v2190 = vpop.f32.mrb[0].mxu0
        %2191 = vdwg.mxu0
        %2192 = vmatprep.subr.bf16.mxu0 %v2067
        %2193 = vmatpush1.bf16.msra.mxu0 %v2064
        %2194 = vmatprep.subr.bf16.mxu0 0
        %2195 = vmatpush1.bf16.msra.mxu0 0
        %2196 = vmatprep.subr.bf16.mxu0 0
        %2197 = vmatpush1.bf16.msra.mxu0 0
        %2198 = vmatprep.subr.bf16.mxu0 0
        %2199 = vmatpush1.bf16.msra.mxu0 0
        %2200 = vmatprep.subr.bf16.mxu0 0
        %2201 = vmatpush1.bf16.msra.mxu0 0
        %2202 = vmatprep.subr.bf16.mxu0 0
        %2203 = vmatpush1.bf16.msra.mxu0 0
        %2204 = vmatprep.subr.bf16.mxu0 0
        %2205 = vmatpush1.bf16.msra.mxu0 0
        %2206 = vmatprep.subr.bf16.mxu0 0
        %2207 = vmatpush1.bf16.msra.mxu0 0
        %2208 = vmatprep.subr.bf16.mxu0 0
        %2209 = vmatpush1.bf16.msra.mxu0 0
        %2210 = vmatprep.subr.bf16.mxu0 0
        %2211 = vmatpush1.bf16.msra.mxu0 0
        %2212 = vmatprep.subr.bf16.mxu0 0
        %2213 = vmatpush1.bf16.msra.mxu0 0
        %2214 = vmatprep.subr.bf16.mxu0 0
        %2215 = vmatpush1.bf16.msra.mxu0 0
        %2216 = vmatprep.subr.bf16.mxu0 0
        %2217 = vmatpush1.bf16.msra.mxu0 0
        %2218 = vmatprep.subr.bf16.mxu0 0
        %2219 = vmatpush1.bf16.msra.mxu0 0
        %2220 = vmatprep.subr.bf16.mxu0 0
        %2221 = vmatpush1.bf16.msra.mxu0 0
        %2222 = vmatprep.subr.bf16.mxu0 0
        %2223 = vmatpush1.bf16.msra.mxu0 0
        %2224 = vmatprep.mubr.bf16.mxu0 0
        %2225 = vmatmul.mubr.bf16.gmra.mrb[0].mxu0 %v2043
        %v2226 = vpop.f32.mrb[0].mxu0
        %v2227 = vadd.f32 0.0, %v2226
        %v2228 = vpop.f32.mrb[0].mxu0
        %v2229 = vadd.f32 0.0, %v2228
        %v2230 = vpop.f32.mrb[0].mxu0
        %v2231 = vpop.f32.mrb[0].mxu0
        %2232 = vdwg.mxu0
        %v2233 = vadd.f32 %v1958, %v2104
        %v2234 = vadd.f32 %v1959, %v2106
        %v2235 = vadd.f32 %v1960, %v2145
        %v2236 = vadd.f32 %v1961, %v2147
        %v2237 = vadd.f32 %v1962, %v2186
        %v2238 = vadd.f32 %v1963, %v2188
        %v2239 = vadd.f32 %v1964, %v2227
        %v2240 = vadd.f32 %v1965, %v2229
        %v2241 = vld [vmem:[#allocation2] sm:$0xff]
        %v2242 = vld [vmem:[#allocation2 + $0x8] sm:$0xff]
        %v2243 = vld [vmem:[#allocation2 + $0x10] sm:$0x3]
        %s2244 = scalar_lea.vmem %s0, 28
        %v2245 = vld [vmem:[%s2244] sm:$0xf]
        %v2249 = vcombine.high %v2241, %v2241
        %v2251 = vunpack.c.l.s4 1983009808
        %v2252 = vunpack.c.0.s8 %v2251
        %v2253 = vlaneseq
        %v2254 = vshrl.u32 %v2253, 7
        %v2255 = vsub.s32 %v2252, %v2254
        %v2256 = vrot.slane %v2241, %v2255
        %v2258 = vunpack.c.l.s4 1983009808
        %v2259 = vunpack.c.0.s8 %v2258
        %v2260 = vlaneseq
        %v2261 = vshrl.u32 %v2260, 7
        %v2262 = vsub.s32 %v2259, %v2261
        %v2263 = vrot.slane %v2249, %v2262
        %v2264 = vcombine.high %v2256, %v2256
        %v2265 = vcombine.high %v2263, %v2263
        %v2266 = vcombine.high %v2242, %v2242
        %v2268 = vunpack.c.l.s4 1983009808
        %v2269 = vunpack.c.0.s8 %v2268
        %v2270 = vlaneseq
        %v2271 = vshrl.u32 %v2270, 7
        %v2272 = vsub.s32 %v2269, %v2271
        %v2273 = vrot.slane %v2242, %v2272
        %v2275 = vunpack.c.l.s4 1983009808
        %v2276 = vunpack.c.0.s8 %v2275
        %v2277 = vlaneseq
        %v2278 = vshrl.u32 %v2277, 7
        %v2279 = vsub.s32 %v2276, %v2278
        %v2280 = vrot.slane %v2266, %v2279
        %v2281 = vcombine.high %v2273, %v2273
        %v2282 = vcombine.high %v2280, %v2280
        %v2284 = vunpack.c.l.s4 1983009808
        %v2285 = vunpack.c.0.s8 %v2284
        %v2286 = vlaneseq
        %v2287 = vshrl.u32 %v2286, 7
        %v2288 = vsub.s32 %v2285, %v2287
        %v2289 = vrot.slane %v2243, %v2288
        %2290 = vrot.lane.b32.xlu0 %v2256, 107
        %v2291 = vpop.permute.xlu0 %2290
        %2292 = vrot.lane.b32.xlu0 %v2264, 107
        %v2293 = vpop.permute.xlu0 %2292
        %2294 = vrot.lane.b32.xlu0 %v2263, 107
        %v2295 = vpop.permute.xlu0 %2294
        %2296 = vrot.lane.b32.xlu0 %v2265, 107
        %v2297 = vpop.permute.xlu0 %2296
        %2298 = vrot.lane.b32.xlu0 %v2273, 107
        %v2299 = vpop.permute.xlu0 %2298
        %2300 = vrot.lane.b32.xlu0 %v2281, 107
        %v2301 = vpop.permute.xlu0 %2300
        %2302 = vrot.lane.b32.xlu0 %v2280, 107
        %v2303 = vpop.permute.xlu0 %2302
        %2304 = vrot.lane.b32.xlu0 %v2282, 107
        %v2305 = vpop.permute.xlu0 %2304
        %2306 = vrot.lane.b32.xlu0 %v2289, 107
        %v2307 = vpop.permute.xlu0 %2306
        %vm2308 = vcmask 875520
        %v2309 = vsel %vm2308, %v2291, %v2293
        %v2310 = vsel %vm2308, %v2293, %v2295
        %v2311 = vsel %vm2308, %v2295, %v2297
        %v2312 = vsel %vm2308, %v2297, %v2299
        %v2313 = vsel %vm2308, %v2299, %v2301
        %v2314 = vsel %vm2308, %v2301, %v2303
        %v2315 = vsel %vm2308, %v2303, %v2305
        %v2316 = vsel %vm2308, %v2305, %v2307
        %v2318 = vsel %vm482, %v2245, 0
        %v2321 = vsel %vm486, %v2309, 0
        %v2324 = vsel %vm486, %v2310, 0
        %v2327 = vsel %vm486, %v2311, 0
        %v2330 = vsel %vm486, %v2312, 0
        %v2333 = vsel %vm486, %v2313, 0
        %v2336 = vsel %vm486, %v2314, 0
        %v2339 = vsel %vm486, %v2315, 0
        %v2342 = vsel %vm486, %v2316, 0
        %2344 = vmatprep.subr.bf16.mxu0 %v2324
        %2345 = vmatpush1.bf16.msra.mxu0 %v2321
        %2346 = vmatprep.subr.bf16.mxu0 0
        %2347 = vmatpush1.bf16.msra.mxu0 0
        %2348 = vmatprep.subr.bf16.mxu0 0
        %2349 = vmatpush1.bf16.msra.mxu0 0
        %2350 = vmatprep.subr.bf16.mxu0 0
        %2351 = vmatpush1.bf16.msra.mxu0 0
        %2352 = vmatprep.subr.bf16.mxu0 0
        %2353 = vmatpush1.bf16.msra.mxu0 0
        %2354 = vmatprep.subr.bf16.mxu0 0
        %2355 = vmatpush1.bf16.msra.mxu0 0
        %2356 = vmatprep.subr.bf16.mxu0 0
        %2357 = vmatpush1.bf16.msra.mxu0 0
        %2358 = vmatprep.subr.bf16.mxu0 0
        %2359 = vmatpush1.bf16.msra.mxu0 0
        %2360 = vmatprep.subr.bf16.mxu0 0
        %2361 = vmatpush1.bf16.msra.mxu0 0
        %2362 = vmatprep.subr.bf16.mxu0 0
        %2363 = vmatpush1.bf16.msra.mxu0 0
        %2364 = vmatprep.subr.bf16.mxu0 0
        %2365 = vmatpush1.bf16.msra.mxu0 0
        %2366 = vmatprep.subr.bf16.mxu0 0
        %2367 = vmatpush1.bf16.msra.mxu0 0
        %2368 = vmatprep.subr.bf16.mxu0 0
        %2369 = vmatpush1.bf16.msra.mxu0 0
        %2370 = vmatprep.subr.bf16.mxu0 0
        %2371 = vmatpush1.bf16.msra.mxu0 0
        %2372 = vmatprep.subr.bf16.mxu0 0
        %2373 = vmatpush1.bf16.msra.mxu0 0
        %2374 = vmatprep.subr.bf16.mxu0 0
        %2375 = vmatpush1.bf16.msra.mxu0 0
        %2376 = vmatprep.mubr.bf16.mxu0 0
        %2377 = vmatmul.mubr.bf16.gmra.mrb[0].mxu0 %v2318
        %v2378 = vpop.f32.mrb[0].mxu0
        %v2379 = vadd.f32 0.0, %v2378
        %v2380 = vpop.f32.mrb[0].mxu0
        %v2381 = vadd.f32 0.0, %v2380
        %v2382 = vpop.f32.mrb[0].mxu0
        %v2383 = vpop.f32.mrb[0].mxu0
        %2384 = vdwg.mxu0
        %2385 = vmatprep.subr.bf16.mxu0 %v2330
        %2386 = vmatpush1.bf16.msra.mxu0 %v2327
        %2387 = vmatprep.subr.bf16.mxu0 0
        %2388 = vmatpush1.bf16.msra.mxu0 0
        %2389 = vmatprep.subr.bf16.mxu0 0
        %2390 = vmatpush1.bf16.msra.mxu0 0
        %2391 = vmatprep.subr.bf16.mxu0 0
        %2392 = vmatpush1.bf16.msra.mxu0 0
        %2393 = vmatprep.subr.bf16.mxu0 0
        %2394 = vmatpush1.bf16.msra.mxu0 0
        %2395 = vmatprep.subr.bf16.mxu0 0
        %2396 = vmatpush1.bf16.msra.mxu0 0
        %2397 = vmatprep.subr.bf16.mxu0 0
        %2398 = vmatpush1.bf16.msra.mxu0 0
        %2399 = vmatprep.subr.bf16.mxu0 0
        %2400 = vmatpush1.bf16.msra.mxu0 0
        %2401 = vmatprep.subr.bf16.mxu0 0
        %2402 = vmatpush1.bf16.msra.mxu0 0
        %2403 = vmatprep.subr.bf16.mxu0 0
        %2404 = vmatpush1.bf16.msra.mxu0 0
        %2405 = vmatprep.subr.bf16.mxu0 0
        %2406 = vmatpush1.bf16.msra.mxu0 0
        %2407 = vmatprep.subr.bf16.mxu0 0
        %2408 = vmatpush1.bf16.msra.mxu0 0
        %2409 = vmatprep.subr.bf16.mxu0 0
        %2410 = vmatpush1.bf16.msra.mxu0 0
        %2411 = vmatprep.subr.bf16.mxu0 0
        %2412 = vmatpush1.bf16.msra.mxu0 0
        %2413 = vmatprep.subr.bf16.mxu0 0
        %2414 = vmatpush1.bf16.msra.mxu0 0
        %2415 = vmatprep.subr.bf16.mxu0 0
        %2416 = vmatpush1.bf16.msra.mxu0 0
        %2417 = vmatprep.mubr.bf16.mxu0 0
        %2418 = vmatmul.mubr.bf16.gmra.mrb[0].mxu0 %v2318
        %v2419 = vpop.f32.mrb[0].mxu0
        %v2420 = vadd.f32 0.0, %v2419
        %v2421 = vpop.f32.mrb[0].mxu0
        %v2422 = vadd.f32 0.0, %v2421
        %v2423 = vpop.f32.mrb[0].mxu0
        %v2424 = vpop.f32.mrb[0].mxu0
        %2425 = vdwg.mxu0
        %2426 = vmatprep.subr.bf16.mxu0 %v2336
        %2427 = vmatpush1.bf16.msra.mxu0 %v2333
        %2428 = vmatprep.subr.bf16.mxu0 0
        %2429 = vmatpush1.bf16.msra.mxu0 0
        %2430 = vmatprep.subr.bf16.mxu0 0
        %2431 = vmatpush1.bf16.msra.mxu0 0
        %2432 = vmatprep.subr.bf16.mxu0 0
        %2433 = vmatpush1.bf16.msra.mxu0 0
        %2434 = vmatprep.subr.bf16.mxu0 0
        %2435 = vmatpush1.bf16.msra.mxu0 0
        %2436 = vmatprep.subr.bf16.mxu0 0
        %2437 = vmatpush1.bf16.msra.mxu0 0
        %2438 = vmatprep.subr.bf16.mxu0 0
        %2439 = vmatpush1.bf16.msra.mxu0 0
        %2440 = vmatprep.subr.bf16.mxu0 0
        %2441 = vmatpush1.bf16.msra.mxu0 0
        %2442 = vmatprep.subr.bf16.mxu0 0
        %2443 = vmatpush1.bf16.msra.mxu0 0
        %2444 = vmatprep.subr.bf16.mxu0 0
        %2445 = vmatpush1.bf16.msra.mxu0 0
        %2446 = vmatprep.subr.bf16.mxu0 0
        %2447 = vmatpush1.bf16.msra.mxu0 0
        %2448 = vmatprep.subr.bf16.mxu0 0
        %2449 = vmatpush1.bf16.msra.mxu0 0
        %2450 = vmatprep.subr.bf16.mxu0 0
        %2451 = vmatpush1.bf16.msra.mxu0 0
        %2452 = vmatprep.subr.bf16.mxu0 0
        %2453 = vmatpush1.bf16.msra.mxu0 0
        %2454 = vmatprep.subr.bf16.mxu0 0
        %2455 = vmatpush1.bf16.msra.mxu0 0
        %2456 = vmatprep.subr.bf16.mxu0 0
        %2457 = vmatpush1.bf16.msra.mxu0 0
        %2458 = vmatprep.mubr.bf16.mxu0 0
        %2459 = vmatmul.mubr.bf16.gmra.mrb[0].mxu0 %v2318
        %v2460 = vpop.f32.mrb[0].mxu0
        %v2461 = vadd.f32 0.0, %v2460
        %v2462 = vpop.f32.mrb[0].mxu0
        %v2463 = vadd.f32 0.0, %v2462
        %v2464 = vpop.f32.mrb[0].mxu0
        %v2465 = vpop.f32.mrb[0].mxu0
        %2466 = vdwg.mxu0
        %2467 = vmatprep.subr.bf16.mxu0 %v2342
        %2468 = vmatpush1.bf16.msra.mxu0 %v2339
        %2469 = vmatprep.subr.bf16.mxu0 0
        %2470 = vmatpush1.bf16.msra.mxu0 0
        %2471 = vmatprep.subr.bf16.mxu0 0
        %2472 = vmatpush1.bf16.msra.mxu0 0
        %2473 = vmatprep.subr.bf16.mxu0 0
        %2474 = vmatpush1.bf16.msra.mxu0 0
        %2475 = vmatprep.subr.bf16.mxu0 0
        %2476 = vmatpush1.bf16.msra.mxu0 0
        %2477 = vmatprep.subr.bf16.mxu0 0
        %2478 = vmatpush1.bf16.msra.mxu0 0
        %2479 = vmatprep.subr.bf16.mxu0 0
        %2480 = vmatpush1.bf16.msra.mxu0 0
        %2481 = vmatprep.subr.bf16.mxu0 0
        %2482 = vmatpush1.bf16.msra.mxu0 0
        %2483 = vmatprep.subr.bf16.mxu0 0
        %2484 = vmatpush1.bf16.msra.mxu0 0
        %2485 = vmatprep.subr.bf16.mxu0 0
        %2486 = vmatpush1.bf16.msra.mxu0 0
        %2487 = vmatprep.subr.bf16.mxu0 0
        %2488 = vmatpush1.bf16.msra.mxu0 0
        %2489 = vmatprep.subr.bf16.mxu0 0
        %2490 = vmatpush1.bf16.msra.mxu0 0
        %2491 = vmatprep.subr.bf16.mxu0 0
        %2492 = vmatpush1.bf16.msra.mxu0 0
        %2493 = vmatprep.subr.bf16.mxu0 0
        %2494 = vmatpush1.bf16.msra.mxu0 0
        %2495 = vmatprep.subr.bf16.mxu0 0
        %2496 = vmatpush1.bf16.msra.mxu0 0
        %2497 = vmatprep.subr.bf16.mxu0 0
        %2498 = vmatpush1.bf16.msra.mxu0 0
        %2499 = vmatprep.mubr.bf16.mxu0 0
        %2500 = vmatmul.mubr.bf16.gmra.mrb[0].mxu0 %v2318
        %v2501 = vpop.f32.mrb[0].mxu0
        %v2502 = vadd.f32 0.0, %v2501
        %v2503 = vpop.f32.mrb[0].mxu0
        %v2504 = vadd.f32 0.0, %v2503
        %v2505 = vpop.f32.mrb[0].mxu0
        %v2506 = vpop.f32.mrb[0].mxu0
        %2507 = vdwg.mxu0
        %v2508 = vadd.f32 %v2233, %v2379
        %v2509 = vadd.f32 %v2234, %v2381
        %v2510 = vadd.f32 %v2235, %v2420
        %v2511 = vadd.f32 %v2236, %v2422
        %v2512 = vadd.f32 %v2237, %v2461
        %v2513 = vadd.f32 %v2238, %v2463
        %v2514 = vadd.f32 %v2239, %v2502
        %v2515 = vadd.f32 %v2240, %v2504
        %v2516 = vld [vmem:[#allocation2] sm:$0xff]
        %v2517 = vld [vmem:[#allocation2 + $0x8] sm:$0xff]
        %v2518 = vld [vmem:[#allocation2 + $0x10] sm:$0x3]
        %s2519 = scalar_lea.vmem %s0, 32
        %v2520 = vld [vmem:[%s2519] sm:$0xf]
        %v2524 = vcombine.high %v2516, %v2516
        %v2526 = vunpack.c.l.s4 1983009808
        %v2527 = vunpack.c.0.s8 %v2526
        %v2528 = vlaneseq
        %v2529 = vshrl.u32 %v2528, 7
        %v2530 = vsub.s32 %v2527, %v2529
        %v2531 = vrot.slane %v2516, %v2530
        %v2533 = vunpack.c.l.s4 1983009808
        %v2534 = vunpack.c.0.s8 %v2533
        %v2535 = vlaneseq
        %v2536 = vshrl.u32 %v2535, 7
        %v2537 = vsub.s32 %v2534, %v2536
        %v2538 = vrot.slane %v2524, %v2537
        %v2539 = vcombine.high %v2531, %v2531
        %v2540 = vcombine.high %v2538, %v2538
        %v2541 = vcombine.high %v2517, %v2517
        %v2543 = vunpack.c.l.s4 1983009808
        %v2544 = vunpack.c.0.s8 %v2543
        %v2545 = vlaneseq
        %v2546 = vshrl.u32 %v2545, 7
        %v2547 = vsub.s32 %v2544, %v2546
        %v2548 = vrot.slane %v2517, %v2547
        %v2550 = vunpack.c.l.s4 1983009808
        %v2551 = vunpack.c.0.s8 %v2550
        %v2552 = vlaneseq
        %v2553 = vshrl.u32 %v2552, 7
        %v2554 = vsub.s32 %v2551, %v2553
        %v2555 = vrot.slane %v2541, %v2554
        %v2556 = vcombine.high %v2548, %v2548
        %v2557 = vcombine.high %v2555, %v2555
        %v2559 = vunpack.c.l.s4 1983009808
        %v2560 = vunpack.c.0.s8 %v2559
        %v2561 = vlaneseq
        %v2562 = vshrl.u32 %v2561, 7
        %v2563 = vsub.s32 %v2560, %v2562
        %v2564 = vrot.slane %v2518, %v2563
        %2565 = vrot.lane.b32.xlu0 %v2531, 106
        %v2566 = vpop.permute.xlu0 %2565
        %2567 = vrot.lane.b32.xlu0 %v2539, 106
        %v2568 = vpop.permute.xlu0 %2567
        %2569 = vrot.lane.b32.xlu0 %v2538, 106
        %v2570 = vpop.permute.xlu0 %2569
        %2571 = vrot.lane.b32.xlu0 %v2540, 106
        %v2572 = vpop.permute.xlu0 %2571
        %2573 = vrot.lane.b32.xlu0 %v2548, 106
        %v2574 = vpop.permute.xlu0 %2573
        %2575 = vrot.lane.b32.xlu0 %v2556, 106
        %v2576 = vpop.permute.xlu0 %2575
        %2577 = vrot.lane.b32.xlu0 %v2555, 106
        %v2578 = vpop.permute.xlu0 %2577
        %2579 = vrot.lane.b32.xlu0 %v2557, 106
        %v2580 = vpop.permute.xlu0 %2579
        %2581 = vrot.lane.b32.xlu0 %v2564, 106
        %v2582 = vpop.permute.xlu0 %2581
        %vm2583 = vcmask 867328
        %v2584 = vsel %vm2583, %v2566, %v2568
        %v2585 = vsel %vm2583, %v2568, %v2570
        %v2586 = vsel %vm2583, %v2570, %v2572
        %v2587 = vsel %vm2583, %v2572, %v2574
        %v2588 = vsel %vm2583, %v2574, %v2576
        %v2589 = vsel %vm2583, %v2576, %v2578
        %v2590 = vsel %vm2583, %v2578, %v2580
        %v2591 = vsel %vm2583, %v2580, %v2582
        %v2593 = vsel %vm482, %v2520, 0
        %v2596 = vsel %vm486, %v2584, 0
        %v2599 = vsel %vm486, %v2585, 0
        %v2602 = vsel %vm486, %v2586, 0
        %v2605 = vsel %vm486, %v2587, 0
        %v2608 = vsel %vm486, %v2588, 0
        %v2611 = vsel %vm486, %v2589, 0
        %v2614 = vsel %vm486, %v2590, 0
        %v2617 = vsel %vm486, %v2591, 0
        %2619 = vmatprep.subr.bf16.mxu0 %v2599
        %2620 = vmatpush1.bf16.msra.mxu0 %v2596
        %2621 = vmatprep.subr.bf16.mxu0 0
        %2622 = vmatpush1.bf16.msra.mxu0 0
        %2623 = vmatprep.subr.bf16.mxu0 0
        %2624 = vmatpush1.bf16.msra.mxu0 0
        %2625 = vmatprep.subr.bf16.mxu0 0
        %2626 = vmatpush1.bf16.msra.mxu0 0
        %2627 = vmatprep.subr.bf16.mxu0 0
        %2628 = vmatpush1.bf16.msra.mxu0 0
        %2629 = vmatprep.subr.bf16.mxu0 0
        %2630 = vmatpush1.bf16.msra.mxu0 0
        %2631 = vmatprep.subr.bf16.mxu0 0
        %2632 = vmatpush1.bf16.msra.mxu0 0
        %2633 = vmatprep.subr.bf16.mxu0 0
        %2634 = vmatpush1.bf16.msra.mxu0 0
        %2635 = vmatprep.subr.bf16.mxu0 0
        %2636 = vmatpush1.bf16.msra.mxu0 0
        %2637 = vmatprep.subr.bf16.mxu0 0
        %2638 = vmatpush1.bf16.msra.mxu0 0
        %2639 = vmatprep.subr.bf16.mxu0 0
        %2640 = vmatpush1.bf16.msra.mxu0 0
        %2641 = vmatprep.subr.bf16.mxu0 0
        %2642 = vmatpush1.bf16.msra.mxu0 0
        %2643 = vmatprep.subr.bf16.mxu0 0
        %2644 = vmatpush1.bf16.msra.mxu0 0
        %2645 = vmatprep.subr.bf16.mxu0 0
        %2646 = vmatpush1.bf16.msra.mxu0 0
        %2647 = vmatprep.subr.bf16.mxu0 0
        %2648 = vmatpush1.bf16.msra.mxu0 0
        %2649 = vmatprep.subr.bf16.mxu0 0
        %2650 = vmatpush1.bf16.msra.mxu0 0
        %2651 = vmatprep.mubr.bf16.mxu0 0
        %2652 = vmatmul.mubr.bf16.gmra.mrb[0].mxu0 %v2593
        %v2653 = vpop.f32.mrb[0].mxu0
        %v2654 = vadd.f32 0.0, %v2653
        %v2655 = vpop.f32.mrb[0].mxu0
        %v2656 = vadd.f32 0.0, %v2655
        %v2657 = vpop.f32.mrb[0].mxu0
        %v2658 = vpop.f32.mrb[0].mxu0
        %2659 = vdwg.mxu0
        %2660 = vmatprep.subr.bf16.mxu0 %v2605
        %2661 = vmatpush1.bf16.msra.mxu0 %v2602
        %2662 = vmatprep.subr.bf16.mxu0 0
        %2663 = vmatpush1.bf16.msra.mxu0 0
        %2664 = vmatprep.subr.bf16.mxu0 0
        %2665 = vmatpush1.bf16.msra.mxu0 0
        %2666 = vmatprep.subr.bf16.mxu0 0
        %2667 = vmatpush1.bf16.msra.mxu0 0
        %2668 = vmatprep.subr.bf16.mxu0 0
        %2669 = vmatpush1.bf16.msra.mxu0 0
        %2670 = vmatprep.subr.bf16.mxu0 0
        %2671 = vmatpush1.bf16.msra.mxu0 0
        %2672 = vmatprep.subr.bf16.mxu0 0
        %2673 = vmatpush1.bf16.msra.mxu0 0
        %2674 = vmatprep.subr.bf16.mxu0 0
        %2675 = vmatpush1.bf16.msra.mxu0 0
        %2676 = vmatprep.subr.bf16.mxu0 0
        %2677 = vmatpush1.bf16.msra.mxu0 0
        %2678 = vmatprep.subr.bf16.mxu0 0
        %2679 = vmatpush1.bf16.msra.mxu0 0
        %2680 = vmatprep.subr.bf16.mxu0 0
        %2681 = vmatpush1.bf16.msra.mxu0 0
        %2682 = vmatprep.subr.bf16.mxu0 0
        %2683 = vmatpush1.bf16.msra.mxu0 0
        %2684 = vmatprep.subr.bf16.mxu0 0
        %2685 = vmatpush1.bf16.msra.mxu0 0
        %2686 = vmatprep.subr.bf16.mxu0 0
        %2687 = vmatpush1.bf16.msra.mxu0 0
        %2688 = vmatprep.subr.bf16.mxu0 0
        %2689 = vmatpush1.bf16.msra.mxu0 0
        %2690 = vmatprep.subr.bf16.mxu0 0
        %2691 = vmatpush1.bf16.msra.mxu0 0
        %2692 = vmatprep.mubr.bf16.mxu0 0
        %2693 = vmatmul.mubr.bf16.gmra.mrb[0].mxu0 %v2593
        %v2694 = vpop.f32.mrb[0].mxu0
        %v2695 = vadd.f32 0.0, %v2694
        %v2696 = vpop.f32.mrb[0].mxu0
        %v2697 = vadd.f32 0.0, %v2696
        %v2698 = vpop.f32.mrb[0].mxu0
        %v2699 = vpop.f32.mrb[0].mxu0
        %2700 = vdwg.mxu0
        %2701 = vmatprep.subr.bf16.mxu0 %v2611
        %2702 = vmatpush1.bf16.msra.mxu0 %v2608
        %2703 = vmatprep.subr.bf16.mxu0 0
        %2704 = vmatpush1.bf16.msra.mxu0 0
        %2705 = vmatprep.subr.bf16.mxu0 0
        %2706 = vmatpush1.bf16.msra.mxu0 0
        %2707 = vmatprep.subr.bf16.mxu0 0
        %2708 = vmatpush1.bf16.msra.mxu0 0
        %2709 = vmatprep.subr.bf16.mxu0 0
        %2710 = vmatpush1.bf16.msra.mxu0 0
        %2711 = vmatprep.subr.bf16.mxu0 0
        %2712 = vmatpush1.bf16.msra.mxu0 0
        %2713 = vmatprep.subr.bf16.mxu0 0
        %2714 = vmatpush1.bf16.msra.mxu0 0
        %2715 = vmatprep.subr.bf16.mxu0 0
        %2716 = vmatpush1.bf16.msra.mxu0 0
        %2717 = vmatprep.subr.bf16.mxu0 0
        %2718 = vmatpush1.bf16.msra.mxu0 0
        %2719 = vmatprep.subr.bf16.mxu0 0
        %2720 = vmatpush1.bf16.msra.mxu0 0
        %2721 = vmatprep.subr.bf16.mxu0 0
        %2722 = vmatpush1.bf16.msra.mxu0 0
        %2723 = vmatprep.subr.bf16.mxu0 0
        %2724 = vmatpush1.bf16.msra.mxu0 0
        %2725 = vmatprep.subr.bf16.mxu0 0
        %2726 = vmatpush1.bf16.msra.mxu0 0
        %2727 = vmatprep.subr.bf16.mxu0 0
        %2728 = vmatpush1.bf16.msra.mxu0 0
        %2729 = vmatprep.subr.bf16.mxu0 0
        %2730 = vmatpush1.bf16.msra.mxu0 0
        %2731 = vmatprep.subr.bf16.mxu0 0
        %2732 = vmatpush1.bf16.msra.mxu0 0
        %2733 = vmatprep.mubr.bf16.mxu0 0
        %2734 = vmatmul.mubr.bf16.gmra.mrb[0].mxu0 %v2593
        %v2735 = vpop.f32.mrb[0].mxu0
        %v2736 = vadd.f32 0.0, %v2735
        %v2737 = vpop.f32.mrb[0].mxu0
        %v2738 = vadd.f32 0.0, %v2737
        %v2739 = vpop.f32.mrb[0].mxu0
        %v2740 = vpop.f32.mrb[0].mxu0
        %2741 = vdwg.mxu0
        %2742 = vmatprep.subr.bf16.mxu0 %v2617
        %2743 = vmatpush1.bf16.msra.mxu0 %v2614
        %2744 = vmatprep.subr.bf16.mxu0 0
        %2745 = vmatpush1.bf16.msra.mxu0 0
        %2746 = vmatprep.subr.bf16.mxu0 0
        %2747 = vmatpush1.bf16.msra.mxu0 0
        %2748 = vmatprep.subr.bf16.mxu0 0
        %2749 = vmatpush1.bf16.msra.mxu0 0
        %2750 = vmatprep.subr.bf16.mxu0 0
        %2751 = vmatpush1.bf16.msra.mxu0 0
        %2752 = vmatprep.subr.bf16.mxu0 0
        %2753 = vmatpush1.bf16.msra.mxu0 0
        %2754 = vmatprep.subr.bf16.mxu0 0
        %2755 = vmatpush1.bf16.msra.mxu0 0
        %2756 = vmatprep.subr.bf16.mxu0 0
        %2757 = vmatpush1.bf16.msra.mxu0 0
        %2758 = vmatprep.subr.bf16.mxu0 0
        %2759 = vmatpush1.bf16.msra.mxu0 0
        %2760 = vmatprep.subr.bf16.mxu0 0
        %2761 = vmatpush1.bf16.msra.mxu0 0
        %2762 = vmatprep.subr.bf16.mxu0 0
        %2763 = vmatpush1.bf16.msra.mxu0 0
        %2764 = vmatprep.subr.bf16.mxu0 0
        %2765 = vmatpush1.bf16.msra.mxu0 0
        %2766 = vmatprep.subr.bf16.mxu0 0
        %2767 = vmatpush1.bf16.msra.mxu0 0
        %2768 = vmatprep.subr.bf16.mxu0 0
        %2769 = vmatpush1.bf16.msra.mxu0 0
        %2770 = vmatprep.subr.bf16.mxu0 0
        %2771 = vmatpush1.bf16.msra.mxu0 0
        %2772 = vmatprep.subr.bf16.mxu0 0
        %2773 = vmatpush1.bf16.msra.mxu0 0
        %2774 = vmatprep.mubr.bf16.mxu0 0
        %2775 = vmatmul.mubr.bf16.gmra.mrb[0].mxu0 %v2593
        %v2776 = vpop.f32.mrb[0].mxu0
        %v2777 = vadd.f32 0.0, %v2776
        %v2778 = vpop.f32.mrb[0].mxu0
        %v2779 = vadd.f32 0.0, %v2778
        %v2780 = vpop.f32.mrb[0].mxu0
        %v2781 = vpop.f32.mrb[0].mxu0
        %2782 = vdwg.mxu0
        %v2783 = vadd.f32 %v2508, %v2654
        %v2784 = vadd.f32 %v2509, %v2656
        %v2785 = vadd.f32 %v2510, %v2695
        %v2786 = vadd.f32 %v2511, %v2697
        %v2787 = vadd.f32 %v2512, %v2736
        %v2788 = vadd.f32 %v2513, %v2738
        %v2789 = vadd.f32 %v2514, %v2777
        %v2790 = vadd.f32 %v2515, %v2779
        %v2791 = vld [vmem:[#allocation2] sm:$0xff]
        %v2792 = vld [vmem:[#allocation2 + $0x8] sm:$0xff]
        %v2793 = vld [vmem:[#allocation2 + $0x10] sm:$0x3]
        %s2794 = scalar_lea.vmem %s0, 36
        %v2795 = vld [vmem:[%s2794] sm:$0xf]
        %v2799 = vcombine.high %v2791, %v2791
        %v2801 = vunpack.c.l.s4 1983009808
        %v2802 = vunpack.c.0.s8 %v2801
        %v2803 = vlaneseq
        %v2804 = vshrl.u32 %v2803, 7
        %v2805 = vsub.s32 %v2802, %v2804
        %v2806 = vrot.slane %v2791, %v2805
        %v2808 = vunpack.c.l.s4 1983009808
        %v2809 = vunpack.c.0.s8 %v2808
        %v2810 = vlaneseq
        %v2811 = vshrl.u32 %v2810, 7
        %v2812 = vsub.s32 %v2809, %v2811
        %v2813 = vrot.slane %v2799, %v2812
        %v2814 = vcombine.high %v2806, %v2806
        %v2815 = vcombine.high %v2813, %v2813
        %v2816 = vcombine.high %v2792, %v2792
        %v2818 = vunpack.c.l.s4 1983009808
        %v2819 = vunpack.c.0.s8 %v2818
        %v2820 = vlaneseq
        %v2821 = vshrl.u32 %v2820, 7
        %v2822 = vsub.s32 %v2819, %v2821
        %v2823 = vrot.slane %v2792, %v2822
        %v2825 = vunpack.c.l.s4 1983009808
        %v2826 = vunpack.c.0.s8 %v2825
        %v2827 = vlaneseq
        %v2828 = vshrl.u32 %v2827, 7
        %v2829 = vsub.s32 %v2826, %v2828
        %v2830 = vrot.slane %v2816, %v2829
        %v2831 = vcombine.high %v2823, %v2823
        %v2832 = vcombine.high %v2830, %v2830
        %v2834 = vunpack.c.l.s4 1983009808
        %v2835 = vunpack.c.0.s8 %v2834
        %v2836 = vlaneseq
        %v2837 = vshrl.u32 %v2836, 7
        %v2838 = vsub.s32 %v2835, %v2837
        %v2839 = vrot.slane %v2793, %v2838
        %2840 = vrot.lane.b32.xlu0 %v2806, 28
        %v2841 = vpop.permute.xlu0 %2840
        %2842 = vrot.lane.b32.xlu0 %v2814, 28
        %v2843 = vpop.permute.xlu0 %2842
        %2844 = vrot.lane.b32.xlu0 %v2813, 28
        %v2845 = vpop.permute.xlu0 %2844
        %2846 = vrot.lane.b32.xlu0 %v2815, 28
        %v2847 = vpop.permute.xlu0 %2846
        %2848 = vrot.lane.b32.xlu0 %v2823, 28
        %v2849 = vpop.permute.xlu0 %2848
        %2850 = vrot.lane.b32.xlu0 %v2831, 28
        %v2851 = vpop.permute.xlu0 %2850
        %2852 = vrot.lane.b32.xlu0 %v2830, 28
        %v2853 = vpop.permute.xlu0 %2852
        %2854 = vrot.lane.b32.xlu0 %v2832, 28
        %v2855 = vpop.permute.xlu0 %2854
        %2856 = vrot.lane.b32.xlu0 %v2839, 28
        %v2857 = vpop.permute.xlu0 %2856
        %vm2858 = vcmask 228352
        %v2859 = vsel %vm2858, %v2841, %v2843
        %v2860 = vsel %vm2858, %v2843, %v2845
        %v2861 = vsel %vm2858, %v2845, %v2847
        %v2862 = vsel %vm2858, %v2847, %v2849
        %v2863 = vsel %vm2858, %v2849, %v2851
        %v2864 = vsel %vm2858, %v2851, %v2853
        %v2865 = vsel %vm2858, %v2853, %v2855
        %v2866 = vsel %vm2858, %v2855, %v2857
        %v2868 = vsel %vm482, %v2795, 0
        %v2871 = vsel %vm486, %v2859, 0
        %v2874 = vsel %vm486, %v2860, 0
        %v2877 = vsel %vm486, %v2861, 0
        %v2880 = vsel %vm486, %v2862, 0
        %v2883 = vsel %vm486, %v2863, 0
        %v2886 = vsel %vm486, %v2864, 0
        %v2889 = vsel %vm486, %v2865, 0
        %v2892 = vsel %vm486, %v2866, 0
        %2894 = vmatprep.subr.bf16.mxu0 %v2874
        %2895 = vmatpush1.bf16.msra.mxu0 %v2871
        %2896 = vmatprep.subr.bf16.mxu0 0
        %2897 = vmatpush1.bf16.msra.mxu0 0
        %2898 = vmatprep.subr.bf16.mxu0 0
        %2899 = vmatpush1.bf16.msra.mxu0 0
        %2900 = vmatprep.subr.bf16.mxu0 0
        %2901 = vmatpush1.bf16.msra.mxu0 0
        %2902 = vmatprep.subr.bf16.mxu0 0
        %2903 = vmatpush1.bf16.msra.mxu0 0
        %2904 = vmatprep.subr.bf16.mxu0 0
        %2905 = vmatpush1.bf16.msra.mxu0 0
        %2906 = vmatprep.subr.bf16.mxu0 0
        %2907 = vmatpush1.bf16.msra.mxu0 0
        %2908 = vmatprep.subr.bf16.mxu0 0
        %2909 = vmatpush1.bf16.msra.mxu0 0
        %2910 = vmatprep.subr.bf16.mxu0 0
        %2911 = vmatpush1.bf16.msra.mxu0 0
        %2912 = vmatprep.subr.bf16.mxu0 0
        %2913 = vmatpush1.bf16.msra.mxu0 0
        %2914 = vmatprep.subr.bf16.mxu0 0
        %2915 = vmatpush1.bf16.msra.mxu0 0
        %2916 = vmatprep.subr.bf16.mxu0 0
        %2917 = vmatpush1.bf16.msra.mxu0 0
        %2918 = vmatprep.subr.bf16.mxu0 0
        %2919 = vmatpush1.bf16.msra.mxu0 0
        %2920 = vmatprep.subr.bf16.mxu0 0
        %2921 = vmatpush1.bf16.msra.mxu0 0
        %2922 = vmatprep.subr.bf16.mxu0 0
        %2923 = vmatpush1.bf16.msra.mxu0 0
        %2924 = vmatprep.subr.bf16.mxu0 0
        %2925 = vmatpush1.bf16.msra.mxu0 0
        %2926 = vmatprep.mubr.bf16.mxu0 0
        %2927 = vmatmul.mubr.bf16.gmra.mrb[0].mxu0 %v2868
        %v2928 = vpop.f32.mrb[0].mxu0
        %v2929 = vadd.f32 0.0, %v2928
        %v2930 = vpop.f32.mrb[0].mxu0
        %v2931 = vadd.f32 0.0, %v2930
        %v2932 = vpop.f32.mrb[0].mxu0
        %v2933 = vpop.f32.mrb[0].mxu0
        %2934 = vdwg.mxu0
        %2935 = vmatprep.subr.bf16.mxu0 %v2880
        %2936 = vmatpush1.bf16.msra.mxu0 %v2877
        %2937 = vmatprep.subr.bf16.mxu0 0
        %2938 = vmatpush1.bf16.msra.mxu0 0
        %2939 = vmatprep.subr.bf16.mxu0 0
        %2940 = vmatpush1.bf16.msra.mxu0 0
        %2941 = vmatprep.subr.bf16.mxu0 0
        %2942 = vmatpush1.bf16.msra.mxu0 0
        %2943 = vmatprep.subr.bf16.mxu0 0
        %2944 = vmatpush1.bf16.msra.mxu0 0
        %2945 = vmatprep.subr.bf16.mxu0 0
        %2946 = vmatpush1.bf16.msra.mxu0 0
        %2947 = vmatprep.subr.bf16.mxu0 0
        %2948 = vmatpush1.bf16.msra.mxu0 0
        %2949 = vmatprep.subr.bf16.mxu0 0
        %2950 = vmatpush1.bf16.msra.mxu0 0
        %2951 = vmatprep.subr.bf16.mxu0 0
        %2952 = vmatpush1.bf16.msra.mxu0 0
        %2953 = vmatprep.subr.bf16.mxu0 0
        %2954 = vmatpush1.bf16.msra.mxu0 0
        %2955 = vmatprep.subr.bf16.mxu0 0
        %2956 = vmatpush1.bf16.msra.mxu0 0
        %2957 = vmatprep.subr.bf16.mxu0 0
        %2958 = vmatpush1.bf16.msra.mxu0 0
        %2959 = vmatprep.subr.bf16.mxu0 0
        %2960 = vmatpush1.bf16.msra.mxu0 0
        %2961 = vmatprep.subr.bf16.mxu0 0
        %2962 = vmatpush1.bf16.msra.mxu0 0
        %2963 = vmatprep.subr.bf16.mxu0 0
        %2964 = vmatpush1.bf16.msra.mxu0 0
        %2965 = vmatprep.subr.bf16.mxu0 0
        %2966 = vmatpush1.bf16.msra.mxu0 0
        %2967 = vmatprep.mubr.bf16.mxu0 0
        %2968 = vmatmul.mubr.bf16.gmra.mrb[0].mxu0 %v2868
        %v2969 = vpop.f32.mrb[0].mxu0
        %v2970 = vadd.f32 0.0, %v2969
        %v2971 = vpop.f32.mrb[0].mxu0
        %v2972 = vadd.f32 0.0, %v2971
        %v2973 = vpop.f32.mrb[0].mxu0
        %v2974 = vpop.f32.mrb[0].mxu0
        %2975 = vdwg.mxu0
        %2976 = vmatprep.subr.bf16.mxu0 %v2886
        %2977 = vmatpush1.bf16.msra.mxu0 %v2883
        %2978 = vmatprep.subr.bf16.mxu0 0
        %2979 = vmatpush1.bf16.msra.mxu0 0
        %2980 = vmatprep.subr.bf16.mxu0 0
        %2981 = vmatpush1.bf16.msra.mxu0 0
        %2982 = vmatprep.subr.bf16.mxu0 0
        %2983 = vmatpush1.bf16.msra.mxu0 0
        %2984 = vmatprep.subr.bf16.mxu0 0
        %2985 = vmatpush1.bf16.msra.mxu0 0
        %2986 = vmatprep.subr.bf16.mxu0 0
        %2987 = vmatpush1.bf16.msra.mxu0 0
        %2988 = vmatprep.subr.bf16.mxu0 0
        %2989 = vmatpush1.bf16.msra.mxu0 0
        %2990 = vmatprep.subr.bf16.mxu0 0
        %2991 = vmatpush1.bf16.msra.mxu0 0
        %2992 = vmatprep.subr.bf16.mxu0 0
        %2993 = vmatpush1.bf16.msra.mxu0 0
        %2994 = vmatprep.subr.bf16.mxu0 0
        %2995 = vmatpush1.bf16.msra.mxu0 0
        %2996 = vmatprep.subr.bf16.mxu0 0
        %2997 = vmatpush1.bf16.msra.mxu0 0
        %2998 = vmatprep.subr.bf16.mxu0 0
        %2999 = vmatpush1.bf16.msra.mxu0 0
        %3000 = vmatprep.subr.bf16.mxu0 0
        %3001 = vmatpush1.bf16.msra.mxu0 0
        %3002 = vmatprep.subr.bf16.mxu0 0
        %3003 = vmatpush1.bf16.msra.mxu0 0
        %3004 = vmatprep.subr.bf16.mxu0 0
        %3005 = vmatpush1.bf16.msra.mxu0 0
        %3006 = vmatprep.subr.bf16.mxu0 0
        %3007 = vmatpush1.bf16.msra.mxu0 0
        %3008 = vmatprep.mubr.bf16.mxu0 0
        %3009 = vmatmul.mubr.bf16.gmra.mrb[0].mxu0 %v2868
        %v3010 = vpop.f32.mrb[0].mxu0
        %v3011 = vadd.f32 0.0, %v3010
        %v3012 = vpop.f32.mrb[0].mxu0
        %v3013 = vadd.f32 0.0, %v3012
        %v3014 = vpop.f32.mrb[0].mxu0
        %v3015 = vpop.f32.mrb[0].mxu0
        %3016 = vdwg.mxu0
        %3017 = vmatprep.subr.bf16.mxu0 %v2892
        %3018 = vmatpush1.bf16.msra.mxu0 %v2889
        %3019 = vmatprep.subr.bf16.mxu0 0
        %3020 = vmatpush1.bf16.msra.mxu0 0
        %3021 = vmatprep.subr.bf16.mxu0 0
        %3022 = vmatpush1.bf16.msra.mxu0 0
        %3023 = vmatprep.subr.bf16.mxu0 0
        %3024 = vmatpush1.bf16.msra.mxu0 0
        %3025 = vmatprep.subr.bf16.mxu0 0
        %3026 = vmatpush1.bf16.msra.mxu0 0
        %3027 = vmatprep.subr.bf16.mxu0 0
        %3028 = vmatpush1.bf16.msra.mxu0 0
        %3029 = vmatprep.subr.bf16.mxu0 0
        %3030 = vmatpush1.bf16.msra.mxu0 0
        %3031 = vmatprep.subr.bf16.mxu0 0
        %3032 = vmatpush1.bf16.msra.mxu0 0
        %3033 = vmatprep.subr.bf16.mxu0 0
        %3034 = vmatpush1.bf16.msra.mxu0 0
        %3035 = vmatprep.subr.bf16.mxu0 0
        %3036 = vmatpush1.bf16.msra.mxu0 0
        %3037 = vmatprep.subr.bf16.mxu0 0
        %3038 = vmatpush1.bf16.msra.mxu0 0
        %3039 = vmatprep.subr.bf16.mxu0 0
        %3040 = vmatpush1.bf16.msra.mxu0 0
        %3041 = vmatprep.subr.bf16.mxu0 0
        %3042 = vmatpush1.bf16.msra.mxu0 0
        %3043 = vmatprep.subr.bf16.mxu0 0
        %3044 = vmatpush1.bf16.msra.mxu0 0
        %3045 = vmatprep.subr.bf16.mxu0 0
        %3046 = vmatpush1.bf16.msra.mxu0 0
        %3047 = vmatprep.subr.bf16.mxu0 0
        %3048 = vmatpush1.bf16.msra.mxu0 0
        %3049 = vmatprep.mubr.bf16.mxu0 0
        %3050 = vmatmul.mubr.bf16.gmra.mrb[0].mxu0 %v2868
        %v3051 = vpop.f32.mrb[0].mxu0
        %v3052 = vadd.f32 0.0, %v3051
        %v3053 = vpop.f32.mrb[0].mxu0
        %v3054 = vadd.f32 0.0, %v3053
        %v3055 = vpop.f32.mrb[0].mxu0
        %v3056 = vpop.f32.mrb[0].mxu0
        %3057 = vdwg.mxu0
        %v3058 = vadd.f32 %v2783, %v2929
        %v3059 = vadd.f32 %v2784, %v2931
        %v3060 = vadd.f32 %v2785, %v2970
        %v3061 = vadd.f32 %v2786, %v2972
        %v3062 = vadd.f32 %v2787, %v3011
        %v3063 = vadd.f32 %v2788, %v3013
        %v3064 = vadd.f32 %v2789, %v3052
        %v3065 = vadd.f32 %v2790, %v3054
        %v3066 = vld [vmem:[#allocation2] sm:$0xff]
        %v3067 = vld [vmem:[#allocation2 + $0x8] sm:$0xff]
        %v3068 = vld [vmem:[#allocation2 + $0x10] sm:$0x3]
        %s3069 = scalar_lea.vmem %s0, 40
        %v3070 = vld [vmem:[%s3069] sm:$0xf]
        %v3074 = vcombine.high %v3066, %v3066
        %v3076 = vunpack.c.l.s4 1983009808
        %v3077 = vunpack.c.0.s8 %v3076
        %v3078 = vlaneseq
        %v3079 = vshrl.u32 %v3078, 7
        %v3080 = vsub.s32 %v3077, %v3079
        %v3081 = vrot.slane %v3066, %v3080
        %v3083 = vunpack.c.l.s4 1983009808
        %v3084 = vunpack.c.0.s8 %v3083
        %v3085 = vlaneseq
        %v3086 = vshrl.u32 %v3085, 7
        %v3087 = vsub.s32 %v3084, %v3086
        %v3088 = vrot.slane %v3074, %v3087
        %v3089 = vcombine.high %v3081, %v3081
        %v3090 = vcombine.high %v3088, %v3088
        %v3091 = vcombine.high %v3067, %v3067
        %v3093 = vunpack.c.l.s4 1983009808
        %v3094 = vunpack.c.0.s8 %v3093
        %v3095 = vlaneseq
        %v3096 = vshrl.u32 %v3095, 7
        %v3097 = vsub.s32 %v3094, %v3096
        %v3098 = vrot.slane %v3067, %v3097
        %v3100 = vunpack.c.l.s4 1983009808
        %v3101 = vunpack.c.0.s8 %v3100
        %v3102 = vlaneseq
        %v3103 = vshrl.u32 %v3102, 7
        %v3104 = vsub.s32 %v3101, %v3103
        %v3105 = vrot.slane %v3091, %v3104
        %v3106 = vcombine.high %v3098, %v3098
        %v3107 = vcombine.high %v3105, %v3105
        %v3109 = vunpack.c.l.s4 1983009808
        %v3110 = vunpack.c.0.s8 %v3109
        %v3111 = vlaneseq
        %v3112 = vshrl.u32 %v3111, 7
        %v3113 = vsub.s32 %v3110, %v3112
        %v3114 = vrot.slane %v3068, %v3113
        %3115 = vrot.lane.b32.xlu0 %v3081, 27
        %v3116 = vpop.permute.xlu0 %3115
        %3117 = vrot.lane.b32.xlu0 %v3089, 27
        %v3118 = vpop.permute.xlu0 %3117
        %3119 = vrot.lane.b32.xlu0 %v3088, 27
        %v3120 = vpop.permute.xlu0 %3119
        %3121 = vrot.lane.b32.xlu0 %v3090, 27
        %v3122 = vpop.permute.xlu0 %3121
        %3123 = vrot.lane.b32.xlu0 %v3098, 27
        %v3124 = vpop.permute.xlu0 %3123
        %3125 = vrot.lane.b32.xlu0 %v3106, 27
        %v3126 = vpop.permute.xlu0 %3125
        %3127 = vrot.lane.b32.xlu0 %v3105, 27
        %v3128 = vpop.permute.xlu0 %3127
        %3129 = vrot.lane.b32.xlu0 %v3107, 27
        %v3130 = vpop.permute.xlu0 %3129
        %3131 = vrot.lane.b32.xlu0 %v3114, 27
        %v3132 = vpop.permute.xlu0 %3131
        %vm3133 = vcmask 220160
        %v3134 = vsel %vm3133, %v3116, %v3118
        %v3135 = vsel %vm3133, %v3118, %v3120
        %v3136 = vsel %vm3133, %v3120, %v3122
        %v3137 = vsel %vm3133, %v3122, %v3124
        %v3138 = vsel %vm3133, %v3124, %v3126
        %v3139 = vsel %vm3133, %v3126, %v3128
        %v3140 = vsel %vm3133, %v3128, %v3130
        %v3141 = vsel %vm3133, %v3130, %v3132
        %v3143 = vsel %vm482, %v3070, 0
        %v3146 = vsel %vm486, %v3134, 0
        %v3149 = vsel %vm486, %v3135, 0
        %v3152 = vsel %vm486, %v3136, 0
        %v3155 = vsel %vm486, %v3137, 0
        %v3158 = vsel %vm486, %v3138, 0
        %v3161 = vsel %vm486, %v3139, 0
        %v3164 = vsel %vm486, %v3140, 0
        %v3167 = vsel %vm486, %v3141, 0
        %3169 = vmatprep.subr.bf16.mxu0 %v3149
        %3170 = vmatpush1.bf16.msra.mxu0 %v3146
        %3171 = vmatprep.subr.bf16.mxu0 0
        %3172 = vmatpush1.bf16.msra.mxu0 0
        %3173 = vmatprep.subr.bf16.mxu0 0
        %3174 = vmatpush1.bf16.msra.mxu0 0
        %3175 = vmatprep.subr.bf16.mxu0 0
        %3176 = vmatpush1.bf16.msra.mxu0 0
        %3177 = vmatprep.subr.bf16.mxu0 0
        %3178 = vmatpush1.bf16.msra.mxu0 0
        %3179 = vmatprep.subr.bf16.mxu0 0
        %3180 = vmatpush1.bf16.msra.mxu0 0
        %3181 = vmatprep.subr.bf16.mxu0 0
        %3182 = vmatpush1.bf16.msra.mxu0 0
        %3183 = vmatprep.subr.bf16.mxu0 0
        %3184 = vmatpush1.bf16.msra.mxu0 0
        %3185 = vmatprep.subr.bf16.mxu0 0
        %3186 = vmatpush1.bf16.msra.mxu0 0
        %3187 = vmatprep.subr.bf16.mxu0 0
        %3188 = vmatpush1.bf16.msra.mxu0 0
        %3189 = vmatprep.subr.bf16.mxu0 0
        %3190 = vmatpush1.bf16.msra.mxu0 0
        %3191 = vmatprep.subr.bf16.mxu0 0
        %3192 = vmatpush1.bf16.msra.mxu0 0
        %3193 = vmatprep.subr.bf16.mxu0 0
        %3194 = vmatpush1.bf16.msra.mxu0 0
        %3195 = vmatprep.subr.bf16.mxu0 0
        %3196 = vmatpush1.bf16.msra.mxu0 0
        %3197 = vmatprep.subr.bf16.mxu0 0
        %3198 = vmatpush1.bf16.msra.mxu0 0
        %3199 = vmatprep.subr.bf16.mxu0 0
        %3200 = vmatpush1.bf16.msra.mxu0 0
        %3201 = vmatprep.mubr.bf16.mxu0 0
        %3202 = vmatmul.mubr.bf16.gmra.mrb[0].mxu0 %v3143
        %v3203 = vpop.f32.mrb[0].mxu0
        %v3204 = vadd.f32 0.0, %v3203
        %v3205 = vpop.f32.mrb[0].mxu0
        %v3206 = vadd.f32 0.0, %v3205
        %v3207 = vpop.f32.mrb[0].mxu0
        %v3208 = vpop.f32.mrb[0].mxu0
        %3209 = vdwg.mxu0
        %3210 = vmatprep.subr.bf16.mxu0 %v3155
        %3211 = vmatpush1.bf16.msra.mxu0 %v3152
        %3212 = vmatprep.subr.bf16.mxu0 0
        %3213 = vmatpush1.bf16.msra.mxu0 0
        %3214 = vmatprep.subr.bf16.mxu0 0
        %3215 = vmatpush1.bf16.msra.mxu0 0
        %3216 = vmatprep.subr.bf16.mxu0 0
        %3217 = vmatpush1.bf16.msra.mxu0 0
        %3218 = vmatprep.subr.bf16.mxu0 0
        %3219 = vmatpush1.bf16.msra.mxu0 0
        %3220 = vmatprep.subr.bf16.mxu0 0
        %3221 = vmatpush1.bf16.msra.mxu0 0
        %3222 = vmatprep.subr.bf16.mxu0 0
        %3223 = vmatpush1.bf16.msra.mxu0 0
        %3224 = vmatprep.subr.bf16.mxu0 0
        %3225 = vmatpush1.bf16.msra.mxu0 0
        %3226 = vmatprep.subr.bf16.mxu0 0
        %3227 = vmatpush1.bf16.msra.mxu0 0
        %3228 = vmatprep.subr.bf16.mxu0 0
        %3229 = vmatpush1.bf16.msra.mxu0 0
        %3230 = vmatprep.subr.bf16.mxu0 0
        %3231 = vmatpush1.bf16.msra.mxu0 0
        %3232 = vmatprep.subr.bf16.mxu0 0
        %3233 = vmatpush1.bf16.msra.mxu0 0
        %3234 = vmatprep.subr.bf16.mxu0 0
        %3235 = vmatpush1.bf16.msra.mxu0 0
        %3236 = vmatprep.subr.bf16.mxu0 0
        %3237 = vmatpush1.bf16.msra.mxu0 0
        %3238 = vmatprep.subr.bf16.mxu0 0
        %3239 = vmatpush1.bf16.msra.mxu0 0
        %3240 = vmatprep.subr.bf16.mxu0 0
        %3241 = vmatpush1.bf16.msra.mxu0 0
        %3242 = vmatprep.mubr.bf16.mxu0 0
        %3243 = vmatmul.mubr.bf16.gmra.mrb[0].mxu0 %v3143
        %v3244 = vpop.f32.mrb[0].mxu0
        %v3245 = vadd.f32 0.0, %v3244
        %v3246 = vpop.f32.mrb[0].mxu0
        %v3247 = vadd.f32 0.0, %v3246
        %v3248 = vpop.f32.mrb[0].mxu0
        %v3249 = vpop.f32.mrb[0].mxu0
        %3250 = vdwg.mxu0
        %3251 = vmatprep.subr.bf16.mxu0 %v3161
        %3252 = vmatpush1.bf16.msra.mxu0 %v3158
        %3253 = vmatprep.subr.bf16.mxu0 0
        %3254 = vmatpush1.bf16.msra.mxu0 0
        %3255 = vmatprep.subr.bf16.mxu0 0
        %3256 = vmatpush1.bf16.msra.mxu0 0
        %3257 = vmatprep.subr.bf16.mxu0 0
        %3258 = vmatpush1.bf16.msra.mxu0 0
        %3259 = vmatprep.subr.bf16.mxu0 0
        %3260 = vmatpush1.bf16.msra.mxu0 0
        %3261 = vmatprep.subr.bf16.mxu0 0
        %3262 = vmatpush1.bf16.msra.mxu0 0
        %3263 = vmatprep.subr.bf16.mxu0 0
        %3264 = vmatpush1.bf16.msra.mxu0 0
        %3265 = vmatprep.subr.bf16.mxu0 0
        %3266 = vmatpush1.bf16.msra.mxu0 0
        %3267 = vmatprep.subr.bf16.mxu0 0
        %3268 = vmatpush1.bf16.msra.mxu0 0
        %3269 = vmatprep.subr.bf16.mxu0 0
        %3270 = vmatpush1.bf16.msra.mxu0 0
        %3271 = vmatprep.subr.bf16.mxu0 0
        %3272 = vmatpush1.bf16.msra.mxu0 0
        %3273 = vmatprep.subr.bf16.mxu0 0
        %3274 = vmatpush1.bf16.msra.mxu0 0
        %3275 = vmatprep.subr.bf16.mxu0 0
        %3276 = vmatpush1.bf16.msra.mxu0 0
        %3277 = vmatprep.subr.bf16.mxu0 0
        %3278 = vmatpush1.bf16.msra.mxu0 0
        %3279 = vmatprep.subr.bf16.mxu0 0
        %3280 = vmatpush1.bf16.msra.mxu0 0
        %3281 = vmatprep.subr.bf16.mxu0 0
        %3282 = vmatpush1.bf16.msra.mxu0 0
        %3283 = vmatprep.mubr.bf16.mxu0 0
        %3284 = vmatmul.mubr.bf16.gmra.mrb[0].mxu0 %v3143
        %v3285 = vpop.f32.mrb[0].mxu0
        %v3286 = vadd.f32 0.0, %v3285
        %v3287 = vpop.f32.mrb[0].mxu0
        %v3288 = vadd.f32 0.0, %v3287
        %v3289 = vpop.f32.mrb[0].mxu0
        %v3290 = vpop.f32.mrb[0].mxu0
        %3291 = vdwg.mxu0
        %3292 = vmatprep.subr.bf16.mxu0 %v3167
        %3293 = vmatpush1.bf16.msra.mxu0 %v3164
        %3294 = vmatprep.subr.bf16.mxu0 0
        %3295 = vmatpush1.bf16.msra.mxu0 0
        %3296 = vmatprep.subr.bf16.mxu0 0
        %3297 = vmatpush1.bf16.msra.mxu0 0
        %3298 = vmatprep.subr.bf16.mxu0 0
        %3299 = vmatpush1.bf16.msra.mxu0 0
        %3300 = vmatprep.subr.bf16.mxu0 0
        %3301 = vmatpush1.bf16.msra.mxu0 0
        %3302 = vmatprep.subr.bf16.mxu0 0
        %3303 = vmatpush1.bf16.msra.mxu0 0
        %3304 = vmatprep.subr.bf16.mxu0 0
        %3305 = vmatpush1.bf16.msra.mxu0 0
        %3306 = vmatprep.subr.bf16.mxu0 0
        %3307 = vmatpush1.bf16.msra.mxu0 0
        %3308 = vmatprep.subr.bf16.mxu0 0
        %3309 = vmatpush1.bf16.msra.mxu0 0
        %3310 = vmatprep.subr.bf16.mxu0 0
        %3311 = vmatpush1.bf16.msra.mxu0 0
        %3312 = vmatprep.subr.bf16.mxu0 0
        %3313 = vmatpush1.bf16.msra.mxu0 0
        %3314 = vmatprep.subr.bf16.mxu0 0
        %3315 = vmatpush1.bf16.msra.mxu0 0
        %3316 = vmatprep.subr.bf16.mxu0 0
        %3317 = vmatpush1.bf16.msra.mxu0 0
        %3318 = vmatprep.subr.bf16.mxu0 0
        %3319 = vmatpush1.bf16.msra.mxu0 0
        %3320 = vmatprep.subr.bf16.mxu0 0
        %3321 = vmatpush1.bf16.msra.mxu0 0
        %3322 = vmatprep.subr.bf16.mxu0 0
        %3323 = vmatpush1.bf16.msra.mxu0 0
        %3324 = vmatprep.mubr.bf16.mxu0 0
        %3325 = vmatmul.mubr.bf16.gmra.mrb[0].mxu0 %v3143
        %v3326 = vpop.f32.mrb[0].mxu0
        %v3327 = vadd.f32 0.0, %v3326
        %v3328 = vpop.f32.mrb[0].mxu0
        %v3329 = vadd.f32 0.0, %v3328
        %v3330 = vpop.f32.mrb[0].mxu0
        %v3331 = vpop.f32.mrb[0].mxu0
        %3332 = vdwg.mxu0
        %v3333 = vadd.f32 %v3058, %v3204
        %v3334 = vadd.f32 %v3059, %v3206
        %v3335 = vadd.f32 %v3060, %v3245
        %v3336 = vadd.f32 %v3061, %v3247
        %v3337 = vadd.f32 %v3062, %v3286
        %v3338 = vadd.f32 %v3063, %v3288
        %v3339 = vadd.f32 %v3064, %v3327
        %v3340 = vadd.f32 %v3065, %v3329
        %v3341 = vld [vmem:[#allocation2] sm:$0xff]
        %v3342 = vld [vmem:[#allocation2 + $0x8] sm:$0xff]
        %v3343 = vld [vmem:[#allocation2 + $0x10] sm:$0x3]
        %s3344 = scalar_lea.vmem %s0, 44
        %v3345 = vld [vmem:[%s3344] sm:$0xf]
        %v3349 = vcombine.high %v3341, %v3341
        %v3351 = vunpack.c.l.s4 1983009808
        %v3352 = vunpack.c.0.s8 %v3351
        %v3353 = vlaneseq
        %v3354 = vshrl.u32 %v3353, 7
        %v3355 = vsub.s32 %v3352, %v3354
        %v3356 = vrot.slane %v3341, %v3355
        %v3358 = vunpack.c.l.s4 1983009808
        %v3359 = vunpack.c.0.s8 %v3358
        %v3360 = vlaneseq
        %v3361 = vshrl.u32 %v3360, 7
        %v3362 = vsub.s32 %v3359, %v3361
        %v3363 = vrot.slane %v3349, %v3362
        %v3364 = vcombine.high %v3356, %v3356
        %v3365 = vcombine.high %v3363, %v3363
        %v3366 = vcombine.high %v3342, %v3342
        %v3368 = vunpack.c.l.s4 1983009808
        %v3369 = vunpack.c.0.s8 %v3368
        %v3370 = vlaneseq
        %v3371 = vshrl.u32 %v3370, 7
        %v3372 = vsub.s32 %v3369, %v3371
        %v3373 = vrot.slane %v3342, %v3372
        %v3375 = vunpack.c.l.s4 1983009808
        %v3376 = vunpack.c.0.s8 %v3375
        %v3377 = vlaneseq
        %v3378 = vshrl.u32 %v3377, 7
        %v3379 = vsub.s32 %v3376, %v3378
        %v3380 = vrot.slane %v3366, %v3379
        %v3381 = vcombine.high %v3373, %v3373
        %v3382 = vcombine.high %v3380, %v3380
        %v3384 = vunpack.c.l.s4 1983009808
        %v3385 = vunpack.c.0.s8 %v3384
        %v3386 = vlaneseq
        %v3387 = vshrl.u32 %v3386, 7
        %v3388 = vsub.s32 %v3385, %v3387
        %v3389 = vrot.slane %v3343, %v3388
        %3390 = vrot.lane.b32.xlu0 %v3356, 26
        %v3391 = vpop.permute.xlu0 %3390
        %3392 = vrot.lane.b32.xlu0 %v3364, 26
        %v3393 = vpop.permute.xlu0 %3392
        %3394 = vrot.lane.b32.xlu0 %v3363, 26
        %v3395 = vpop.permute.xlu0 %3394
        %3396 = vrot.lane.b32.xlu0 %v3365, 26
        %v3397 = vpop.permute.xlu0 %3396
        %3398 = vrot.lane.b32.xlu0 %v3373, 26
        %v3399 = vpop.permute.xlu0 %3398
        %3400 = vrot.lane.b32.xlu0 %v3381, 26
        %v3401 = vpop.permute.xlu0 %3400
        %3402 = vrot.lane.b32.xlu0 %v3380, 26
        %v3403 = vpop.permute.xlu0 %3402
        %3404 = vrot.lane.b32.xlu0 %v3382, 26
        %v3405 = vpop.permute.xlu0 %3404
        %3406 = vrot.lane.b32.xlu0 %v3389, 26
        %v3407 = vpop.permute.xlu0 %3406
        %vm3408 = vcmask 211968
        %v3409 = vsel %vm3408, %v3391, %v3393
        %v3410 = vsel %vm3408, %v3393, %v3395
        %v3411 = vsel %vm3408, %v3395, %v3397
        %v3412 = vsel %vm3408, %v3397, %v3399
        %v3413 = vsel %vm3408, %v3399, %v3401
        %v3414 = vsel %vm3408, %v3401, %v3403
        %v3415 = vsel %vm3408, %v3403, %v3405
        %v3416 = vsel %vm3408, %v3405, %v3407
        %v3418 = vsel %vm482, %v3345, 0
        %v3421 = vsel %vm486, %v3409, 0
        %v3424 = vsel %vm486, %v3410, 0
        %v3427 = vsel %vm486, %v3411, 0
        %v3430 = vsel %vm486, %v3412, 0
        %v3433 = vsel %vm486, %v3413, 0
        %v3436 = vsel %vm486, %v3414, 0
        %v3439 = vsel %vm486, %v3415, 0
        %v3442 = vsel %vm486, %v3416, 0
        %3444 = vmatprep.subr.bf16.mxu0 %v3424
        %3445 = vmatpush1.bf16.msra.mxu0 %v3421
        %3446 = vmatprep.subr.bf16.mxu0 0
        %3447 = vmatpush1.bf16.msra.mxu0 0
        %3448 = vmatprep.subr.bf16.mxu0 0
        %3449 = vmatpush1.bf16.msra.mxu0 0
        %3450 = vmatprep.subr.bf16.mxu0 0
        %3451 = vmatpush1.bf16.msra.mxu0 0
        %3452 = vmatprep.subr.bf16.mxu0 0
        %3453 = vmatpush1.bf16.msra.mxu0 0
        %3454 = vmatprep.subr.bf16.mxu0 0
        %3455 = vmatpush1.bf16.msra.mxu0 0
        %3456 = vmatprep.subr.bf16.mxu0 0
        %3457 = vmatpush1.bf16.msra.mxu0 0
        %3458 = vmatprep.subr.bf16.mxu0 0
        %3459 = vmatpush1.bf16.msra.mxu0 0
        %3460 = vmatprep.subr.bf16.mxu0 0
        %3461 = vmatpush1.bf16.msra.mxu0 0
        %3462 = vmatprep.subr.bf16.mxu0 0
        %3463 = vmatpush1.bf16.msra.mxu0 0
        %3464 = vmatprep.subr.bf16.mxu0 0
        %3465 = vmatpush1.bf16.msra.mxu0 0
        %3466 = vmatprep.subr.bf16.mxu0 0
        %3467 = vmatpush1.bf16.msra.mxu0 0
        %3468 = vmatprep.subr.bf16.mxu0 0
        %3469 = vmatpush1.bf16.msra.mxu0 0
        %3470 = vmatprep.subr.bf16.mxu0 0
        %3471 = vmatpush1.bf16.msra.mxu0 0
        %3472 = vmatprep.subr.bf16.mxu0 0
        %3473 = vmatpush1.bf16.msra.mxu0 0
        %3474 = vmatprep.subr.bf16.mxu0 0
        %3475 = vmatpush1.bf16.msra.mxu0 0
        %3476 = vmatprep.mubr.bf16.mxu0 0
        %3477 = vmatmul.mubr.bf16.gmra.mrb[0].mxu0 %v3418
        %v3478 = vpop.f32.mrb[0].mxu0
        %v3479 = vadd.f32 0.0, %v3478
        %v3480 = vpop.f32.mrb[0].mxu0
        %v3481 = vadd.f32 0.0, %v3480
        %v3482 = vpop.f32.mrb[0].mxu0
        %v3483 = vpop.f32.mrb[0].mxu0
        %3484 = vdwg.mxu0
        %3485 = vmatprep.subr.bf16.mxu0 %v3430
        %3486 = vmatpush1.bf16.msra.mxu0 %v3427
        %3487 = vmatprep.subr.bf16.mxu0 0
        %3488 = vmatpush1.bf16.msra.mxu0 0
        %3489 = vmatprep.subr.bf16.mxu0 0
        %3490 = vmatpush1.bf16.msra.mxu0 0
        %3491 = vmatprep.subr.bf16.mxu0 0
        %3492 = vmatpush1.bf16.msra.mxu0 0
        %3493 = vmatprep.subr.bf16.mxu0 0
        %3494 = vmatpush1.bf16.msra.mxu0 0
        %3495 = vmatprep.subr.bf16.mxu0 0
        %3496 = vmatpush1.bf16.msra.mxu0 0
        %3497 = vmatprep.subr.bf16.mxu0 0
        %3498 = vmatpush1.bf16.msra.mxu0 0
        %3499 = vmatprep.subr.bf16.mxu0 0
        %3500 = vmatpush1.bf16.msra.mxu0 0
        %3501 = vmatprep.subr.bf16.mxu0 0
        %3502 = vmatpush1.bf16.msra.mxu0 0
        %3503 = vmatprep.subr.bf16.mxu0 0
        %3504 = vmatpush1.bf16.msra.mxu0 0
        %3505 = vmatprep.subr.bf16.mxu0 0
        %3506 = vmatpush1.bf16.msra.mxu0 0
        %3507 = vmatprep.subr.bf16.mxu0 0
        %3508 = vmatpush1.bf16.msra.mxu0 0
        %3509 = vmatprep.subr.bf16.mxu0 0
        %3510 = vmatpush1.bf16.msra.mxu0 0
        %3511 = vmatprep.subr.bf16.mxu0 0
        %3512 = vmatpush1.bf16.msra.mxu0 0
        %3513 = vmatprep.subr.bf16.mxu0 0
        %3514 = vmatpush1.bf16.msra.mxu0 0
        %3515 = vmatprep.subr.bf16.mxu0 0
        %3516 = vmatpush1.bf16.msra.mxu0 0
        %3517 = vmatprep.mubr.bf16.mxu0 0
        %3518 = vmatmul.mubr.bf16.gmra.mrb[0].mxu0 %v3418
        %v3519 = vpop.f32.mrb[0].mxu0
        %v3520 = vadd.f32 0.0, %v3519
        %v3521 = vpop.f32.mrb[0].mxu0
        %v3522 = vadd.f32 0.0, %v3521
        %v3523 = vpop.f32.mrb[0].mxu0
        %v3524 = vpop.f32.mrb[0].mxu0
        %3525 = vdwg.mxu0
        %3526 = vmatprep.subr.bf16.mxu0 %v3436
        %3527 = vmatpush1.bf16.msra.mxu0 %v3433
        %3528 = vmatprep.subr.bf16.mxu0 0
        %3529 = vmatpush1.bf16.msra.mxu0 0
        %3530 = vmatprep.subr.bf16.mxu0 0
        %3531 = vmatpush1.bf16.msra.mxu0 0
        %3532 = vmatprep.subr.bf16.mxu0 0
        %3533 = vmatpush1.bf16.msra.mxu0 0
        %3534 = vmatprep.subr.bf16.mxu0 0
        %3535 = vmatpush1.bf16.msra.mxu0 0
        %3536 = vmatprep.subr.bf16.mxu0 0
        %3537 = vmatpush1.bf16.msra.mxu0 0
        %3538 = vmatprep.subr.bf16.mxu0 0
        %3539 = vmatpush1.bf16.msra.mxu0 0
        %3540 = vmatprep.subr.bf16.mxu0 0
        %3541 = vmatpush1.bf16.msra.mxu0 0
        %3542 = vmatprep.subr.bf16.mxu0 0
        %3543 = vmatpush1.bf16.msra.mxu0 0
        %3544 = vmatprep.subr.bf16.mxu0 0
        %3545 = vmatpush1.bf16.msra.mxu0 0
        %3546 = vmatprep.subr.bf16.mxu0 0
        %3547 = vmatpush1.bf16.msra.mxu0 0
        %3548 = vmatprep.subr.bf16.mxu0 0
        %3549 = vmatpush1.bf16.msra.mxu0 0
        %3550 = vmatprep.subr.bf16.mxu0 0
        %3551 = vmatpush1.bf16.msra.mxu0 0
        %3552 = vmatprep.subr.bf16.mxu0 0
        %3553 = vmatpush1.bf16.msra.mxu0 0
        %3554 = vmatprep.subr.bf16.mxu0 0
        %3555 = vmatpush1.bf16.msra.mxu0 0
        %3556 = vmatprep.subr.bf16.mxu0 0
        %3557 = vmatpush1.bf16.msra.mxu0 0
        %3558 = vmatprep.mubr.bf16.mxu0 0
        %3559 = vmatmul.mubr.bf16.gmra.mrb[0].mxu0 %v3418
        %v3560 = vpop.f32.mrb[0].mxu0
        %v3561 = vadd.f32 0.0, %v3560
        %v3562 = vpop.f32.mrb[0].mxu0
        %v3563 = vadd.f32 0.0, %v3562
        %v3564 = vpop.f32.mrb[0].mxu0
        %v3565 = vpop.f32.mrb[0].mxu0
        %3566 = vdwg.mxu0
        %3567 = vmatprep.subr.bf16.mxu0 %v3442
        %3568 = vmatpush1.bf16.msra.mxu0 %v3439
        %3569 = vmatprep.subr.bf16.mxu0 0
        %3570 = vmatpush1.bf16.msra.mxu0 0
        %3571 = vmatprep.subr.bf16.mxu0 0
        %3572 = vmatpush1.bf16.msra.mxu0 0
        %3573 = vmatprep.subr.bf16.mxu0 0
        %3574 = vmatpush1.bf16.msra.mxu0 0
        %3575 = vmatprep.subr.bf16.mxu0 0
        %3576 = vmatpush1.bf16.msra.mxu0 0
        %3577 = vmatprep.subr.bf16.mxu0 0
        %3578 = vmatpush1.bf16.msra.mxu0 0
        %3579 = vmatprep.subr.bf16.mxu0 0
        %3580 = vmatpush1.bf16.msra.mxu0 0
        %3581 = vmatprep.subr.bf16.mxu0 0
        %3582 = vmatpush1.bf16.msra.mxu0 0
        %3583 = vmatprep.subr.bf16.mxu0 0
        %3584 = vmatpush1.bf16.msra.mxu0 0
        %3585 = vmatprep.subr.bf16.mxu0 0
        %3586 = vmatpush1.bf16.msra.mxu0 0
        %3587 = vmatprep.subr.bf16.mxu0 0
        %3588 = vmatpush1.bf16.msra.mxu0 0
        %3589 = vmatprep.subr.bf16.mxu0 0
        %3590 = vmatpush1.bf16.msra.mxu0 0
        %3591 = vmatprep.subr.bf16.mxu0 0
        %3592 = vmatpush1.bf16.msra.mxu0 0
        %3593 = vmatprep.subr.bf16.mxu0 0
        %3594 = vmatpush1.bf16.msra.mxu0 0
        %3595 = vmatprep.subr.bf16.mxu0 0
        %3596 = vmatpush1.bf16.msra.mxu0 0
        %3597 = vmatprep.subr.bf16.mxu0 0
        %3598 = vmatpush1.bf16.msra.mxu0 0
        %3599 = vmatprep.mubr.bf16.mxu0 0
        %3600 = vmatmul.mubr.bf16.gmra.mrb[0].mxu0 %v3418
        %v3601 = vpop.f32.mrb[0].mxu0
        %v3602 = vadd.f32 0.0, %v3601
        %v3603 = vpop.f32.mrb[0].mxu0
        %v3604 = vadd.f32 0.0, %v3603
        %v3605 = vpop.f32.mrb[0].mxu0
        %v3606 = vpop.f32.mrb[0].mxu0
        %3607 = vdwg.mxu0
        %v3608 = vadd.f32 %v3333, %v3479
        %v3609 = vadd.f32 %v3334, %v3481
        %v3610 = vadd.f32 %v3335, %v3520
        %v3611 = vadd.f32 %v3336, %v3522
        %v3612 = vadd.f32 %v3337, %v3561
        %v3613 = vadd.f32 %v3338, %v3563
        %v3614 = vadd.f32 %v3339, %v3602
        %v3615 = vadd.f32 %v3340, %v3604
        %v3616 = vld [vmem:[#allocation2] sm:$0xff]
        %v3617 = vld [vmem:[#allocation2 + $0x8] sm:$0xff]
        %v3618 = vld [vmem:[#allocation2 + $0x10] sm:$0x3]
        %s3619 = scalar_lea.vmem %s0, 48
        %v3620 = vld [vmem:[%s3619] sm:$0xf]
        %v3624 = vcombine.high %v3616, %v3616
        %v3626 = vunpack.c.l.s4 1983009808
        %v3627 = vunpack.c.0.s8 %v3626
        %v3628 = vlaneseq
        %v3629 = vshrl.u32 %v3628, 7
        %v3630 = vsub.s32 %v3627, %v3629
        %v3631 = vrot.slane %v3616, %v3630
        %v3633 = vunpack.c.l.s4 1983009808
        %v3634 = vunpack.c.0.s8 %v3633
        %v3635 = vlaneseq
        %v3636 = vshrl.u32 %v3635, 7
        %v3637 = vsub.s32 %v3634, %v3636
        %v3638 = vrot.slane %v3624, %v3637
        %v3639 = vcombine.high %v3631, %v3631
        %v3640 = vcombine.high %v3638, %v3638
        %v3641 = vcombine.high %v3617, %v3617
        %v3643 = vunpack.c.l.s4 1983009808
        %v3644 = vunpack.c.0.s8 %v3643
        %v3645 = vlaneseq
        %v3646 = vshrl.u32 %v3645, 7
        %v3647 = vsub.s32 %v3644, %v3646
        %v3648 = vrot.slane %v3617, %v3647
        %v3650 = vunpack.c.l.s4 1983009808
        %v3651 = vunpack.c.0.s8 %v3650
        %v3652 = vlaneseq
        %v3653 = vshrl.u32 %v3652, 7
        %v3654 = vsub.s32 %v3651, %v3653
        %v3655 = vrot.slane %v3641, %v3654
        %v3656 = vcombine.high %v3648, %v3648
        %v3657 = vcombine.high %v3655, %v3655
        %v3659 = vunpack.c.l.s4 1983009808
        %v3660 = vunpack.c.0.s8 %v3659
        %v3661 = vlaneseq
        %v3662 = vshrl.u32 %v3661, 7
        %v3663 = vsub.s32 %v3660, %v3662
        %v3664 = vrot.slane %v3618, %v3663
        %3665 = vrot.lane.b32.xlu0 %v3631, 18
        %v3666 = vpop.permute.xlu0 %3665
        %3667 = vrot.lane.b32.xlu0 %v3639, 18
        %v3668 = vpop.permute.xlu0 %3667
        %3669 = vrot.lane.b32.xlu0 %v3638, 18
        %v3670 = vpop.permute.xlu0 %3669
        %3671 = vrot.lane.b32.xlu0 %v3640, 18
        %v3672 = vpop.permute.xlu0 %3671
        %3673 = vrot.lane.b32.xlu0 %v3648, 18
        %v3674 = vpop.permute.xlu0 %3673
        %3675 = vrot.lane.b32.xlu0 %v3656, 18
        %v3676 = vpop.permute.xlu0 %3675
        %3677 = vrot.lane.b32.xlu0 %v3655, 18
        %v3678 = vpop.permute.xlu0 %3677
        %3679 = vrot.lane.b32.xlu0 %v3657, 18
        %v3680 = vpop.permute.xlu0 %3679
        %3681 = vrot.lane.b32.xlu0 %v3664, 18
        %v3682 = vpop.permute.xlu0 %3681
        %vm3683 = vcmask 146432
        %v3684 = vsel %vm3683, %v3666, %v3668
        %v3685 = vsel %vm3683, %v3668, %v3670
        %v3686 = vsel %vm3683, %v3670, %v3672
        %v3687 = vsel %vm3683, %v3672, %v3674
        %v3688 = vsel %vm3683, %v3674, %v3676
        %v3689 = vsel %vm3683, %v3676, %v3678
        %v3690 = vsel %vm3683, %v3678, %v3680
        %v3691 = vsel %vm3683, %v3680, %v3682
        %v3693 = vsel %vm482, %v3620, 0
        %v3696 = vsel %vm486, %v3684, 0
        %v3699 = vsel %vm486, %v3685, 0
        %v3702 = vsel %vm486, %v3686, 0
        %v3705 = vsel %vm486, %v3687, 0
        %v3708 = vsel %vm486, %v3688, 0
        %v3711 = vsel %vm486, %v3689, 0
        %v3714 = vsel %vm486, %v3690, 0
        %v3717 = vsel %vm486, %v3691, 0
        %3719 = vmatprep.subr.bf16.mxu0 %v3699
        %3720 = vmatpush1.bf16.msra.mxu0 %v3696
        %3721 = vmatprep.subr.bf16.mxu0 0
        %3722 = vmatpush1.bf16.msra.mxu0 0
        %3723 = vmatprep.subr.bf16.mxu0 0
        %3724 = vmatpush1.bf16.msra.mxu0 0
        %3725 = vmatprep.subr.bf16.mxu0 0
        %3726 = vmatpush1.bf16.msra.mxu0 0
        %3727 = vmatprep.subr.bf16.mxu0 0
        %3728 = vmatpush1.bf16.msra.mxu0 0
        %3729 = vmatprep.subr.bf16.mxu0 0
        %3730 = vmatpush1.bf16.msra.mxu0 0
        %3731 = vmatprep.subr.bf16.mxu0 0
        %3732 = vmatpush1.bf16.msra.mxu0 0
        %3733 = vmatprep.subr.bf16.mxu0 0
        %3734 = vmatpush1.bf16.msra.mxu0 0
        %3735 = vmatprep.subr.bf16.mxu0 0
        %3736 = vmatpush1.bf16.msra.mxu0 0
        %3737 = vmatprep.subr.bf16.mxu0 0
        %3738 = vmatpush1.bf16.msra.mxu0 0
        %3739 = vmatprep.subr.bf16.mxu0 0
        %3740 = vmatpush1.bf16.msra.mxu0 0
        %3741 = vmatprep.subr.bf16.mxu0 0
        %3742 = vmatpush1.bf16.msra.mxu0 0
        %3743 = vmatprep.subr.bf16.mxu0 0
        %3744 = vmatpush1.bf16.msra.mxu0 0
        %3745 = vmatprep.subr.bf16.mxu0 0
        %3746 = vmatpush1.bf16.msra.mxu0 0
        %3747 = vmatprep.subr.bf16.mxu0 0
        %3748 = vmatpush1.bf16.msra.mxu0 0
        %3749 = vmatprep.subr.bf16.mxu0 0
        %3750 = vmatpush1.bf16.msra.mxu0 0
        %3751 = vmatprep.mubr.bf16.mxu0 0
        %3752 = vmatmul.mubr.bf16.gmra.mrb[0].mxu0 %v3693
        %v3753 = vpop.f32.mrb[0].mxu0
        %v3754 = vadd.f32 0.0, %v3753
        %v3755 = vpop.f32.mrb[0].mxu0
        %v3756 = vadd.f32 0.0, %v3755
        %v3757 = vpop.f32.mrb[0].mxu0
        %v3758 = vpop.f32.mrb[0].mxu0
        %3759 = vdwg.mxu0
        %3760 = vmatprep.subr.bf16.mxu0 %v3705
        %3761 = vmatpush1.bf16.msra.mxu0 %v3702
        %3762 = vmatprep.subr.bf16.mxu0 0
        %3763 = vmatpush1.bf16.msra.mxu0 0
        %3764 = vmatprep.subr.bf16.mxu0 0
        %3765 = vmatpush1.bf16.msra.mxu0 0
        %3766 = vmatprep.subr.bf16.mxu0 0
        %3767 = vmatpush1.bf16.msra.mxu0 0
        %3768 = vmatprep.subr.bf16.mxu0 0
        %3769 = vmatpush1.bf16.msra.mxu0 0
        %3770 = vmatprep.subr.bf16.mxu0 0
        %3771 = vmatpush1.bf16.msra.mxu0 0
        %3772 = vmatprep.subr.bf16.mxu0 0
        %3773 = vmatpush1.bf16.msra.mxu0 0
        %3774 = vmatprep.subr.bf16.mxu0 0
        %3775 = vmatpush1.bf16.msra.mxu0 0
        %3776 = vmatprep.subr.bf16.mxu0 0
        %3777 = vmatpush1.bf16.msra.mxu0 0
        %3778 = vmatprep.subr.bf16.mxu0 0
        %3779 = vmatpush1.bf16.msra.mxu0 0
        %3780 = vmatprep.subr.bf16.mxu0 0
        %3781 = vmatpush1.bf16.msra.mxu0 0
        %3782 = vmatprep.subr.bf16.mxu0 0
        %3783 = vmatpush1.bf16.msra.mxu0 0
        %3784 = vmatprep.subr.bf16.mxu0 0
        %3785 = vmatpush1.bf16.msra.mxu0 0
        %3786 = vmatprep.subr.bf16.mxu0 0
        %3787 = vmatpush1.bf16.msra.mxu0 0
        %3788 = vmatprep.subr.bf16.mxu0 0
        %3789 = vmatpush1.bf16.msra.mxu0 0
        %3790 = vmatprep.subr.bf16.mxu0 0
        %3791 = vmatpush1.bf16.msra.mxu0 0
        %3792 = vmatprep.mubr.bf16.mxu0 0
        %3793 = vmatmul.mubr.bf16.gmra.mrb[0].mxu0 %v3693
        %v3794 = vpop.f32.mrb[0].mxu0
        %v3795 = vadd.f32 0.0, %v3794
        %v3796 = vpop.f32.mrb[0].mxu0
        %v3797 = vadd.f32 0.0, %v3796
        %v3798 = vpop.f32.mrb[0].mxu0
        %v3799 = vpop.f32.mrb[0].mxu0
        %3800 = vdwg.mxu0
        %3801 = vmatprep.subr.bf16.mxu0 %v3711
        %3802 = vmatpush1.bf16.msra.mxu0 %v3708
        %3803 = vmatprep.subr.bf16.mxu0 0
        %3804 = vmatpush1.bf16.msra.mxu0 0
        %3805 = vmatprep.subr.bf16.mxu0 0
        %3806 = vmatpush1.bf16.msra.mxu0 0
        %3807 = vmatprep.subr.bf16.mxu0 0
        %3808 = vmatpush1.bf16.msra.mxu0 0
        %3809 = vmatprep.subr.bf16.mxu0 0
        %3810 = vmatpush1.bf16.msra.mxu0 0
        %3811 = vmatprep.subr.bf16.mxu0 0
        %3812 = vmatpush1.bf16.msra.mxu0 0
        %3813 = vmatprep.subr.bf16.mxu0 0
        %3814 = vmatpush1.bf16.msra.mxu0 0
        %3815 = vmatprep.subr.bf16.mxu0 0
        %3816 = vmatpush1.bf16.msra.mxu0 0
        %3817 = vmatprep.subr.bf16.mxu0 0
        %3818 = vmatpush1.bf16.msra.mxu0 0
        %3819 = vmatprep.subr.bf16.mxu0 0
        %3820 = vmatpush1.bf16.msra.mxu0 0
        %3821 = vmatprep.subr.bf16.mxu0 0
        %3822 = vmatpush1.bf16.msra.mxu0 0
        %3823 = vmatprep.subr.bf16.mxu0 0
        %3824 = vmatpush1.bf16.msra.mxu0 0
        %3825 = vmatprep.subr.bf16.mxu0 0
        %3826 = vmatpush1.bf16.msra.mxu0 0
        %3827 = vmatprep.subr.bf16.mxu0 0
        %3828 = vmatpush1.bf16.msra.mxu0 0
        %3829 = vmatprep.subr.bf16.mxu0 0
        %3830 = vmatpush1.bf16.msra.mxu0 0
        %3831 = vmatprep.subr.bf16.mxu0 0
        %3832 = vmatpush1.bf16.msra.mxu0 0
        %3833 = vmatprep.mubr.bf16.mxu0 0
        %3834 = vmatmul.mubr.bf16.gmra.mrb[0].mxu0 %v3693
        %v3835 = vpop.f32.mrb[0].mxu0
        %v3836 = vadd.f32 0.0, %v3835
        %v3837 = vpop.f32.mrb[0].mxu0
        %v3838 = vadd.f32 0.0, %v3837
        %v3839 = vpop.f32.mrb[0].mxu0
        %v3840 = vpop.f32.mrb[0].mxu0
        %3841 = vdwg.mxu0
        %3842 = vmatprep.subr.bf16.mxu0 %v3717
        %3843 = vmatpush1.bf16.msra.mxu0 %v3714
        %3844 = vmatprep.subr.bf16.mxu0 0
        %3845 = vmatpush1.bf16.msra.mxu0 0
        %3846 = vmatprep.subr.bf16.mxu0 0
        %3847 = vmatpush1.bf16.msra.mxu0 0
        %3848 = vmatprep.subr.bf16.mxu0 0
        %3849 = vmatpush1.bf16.msra.mxu0 0
        %3850 = vmatprep.subr.bf16.mxu0 0
        %3851 = vmatpush1.bf16.msra.mxu0 0
        %3852 = vmatprep.subr.bf16.mxu0 0
        %3853 = vmatpush1.bf16.msra.mxu0 0
        %3854 = vmatprep.subr.bf16.mxu0 0
        %3855 = vmatpush1.bf16.msra.mxu0 0
        %3856 = vmatprep.subr.bf16.mxu0 0
        %3857 = vmatpush1.bf16.msra.mxu0 0
        %3858 = vmatprep.subr.bf16.mxu0 0
        %3859 = vmatpush1.bf16.msra.mxu0 0
        %3860 = vmatprep.subr.bf16.mxu0 0
        %3861 = vmatpush1.bf16.msra.mxu0 0
        %3862 = vmatprep.subr.bf16.mxu0 0
        %3863 = vmatpush1.bf16.msra.mxu0 0
        %3864 = vmatprep.subr.bf16.mxu0 0
        %3865 = vmatpush1.bf16.msra.mxu0 0
        %3866 = vmatprep.subr.bf16.mxu0 0
        %3867 = vmatpush1.bf16.msra.mxu0 0
        %3868 = vmatprep.subr.bf16.mxu0 0
        %3869 = vmatpush1.bf16.msra.mxu0 0
        %3870 = vmatprep.subr.bf16.mxu0 0
        %3871 = vmatpush1.bf16.msra.mxu0 0
        %3872 = vmatprep.subr.bf16.mxu0 0
        %3873 = vmatpush1.bf16.msra.mxu0 0
        %3874 = vmatprep.mubr.bf16.mxu0 0
        %3875 = vmatmul.mubr.bf16.gmra.mrb[0].mxu0 %v3693
        %v3876 = vpop.f32.mrb[0].mxu0
        %v3877 = vadd.f32 0.0, %v3876
        %v3878 = vpop.f32.mrb[0].mxu0
        %v3879 = vadd.f32 0.0, %v3878
        %v3880 = vpop.f32.mrb[0].mxu0
        %v3881 = vpop.f32.mrb[0].mxu0
        %3882 = vdwg.mxu0
        %v3883 = vadd.f32 %v3608, %v3754
        %v3884 = vadd.f32 %v3609, %v3756
        %v3885 = vadd.f32 %v3610, %v3795
        %v3886 = vadd.f32 %v3611, %v3797
        %v3887 = vadd.f32 %v3612, %v3836
        %v3888 = vadd.f32 %v3613, %v3838
        %v3889 = vadd.f32 %v3614, %v3877
        %v3890 = vadd.f32 %v3615, %v3879
        %v3891 = vld [vmem:[#allocation2] sm:$0xff]
        %v3892 = vld [vmem:[#allocation2 + $0x8] sm:$0xff]
        %v3893 = vld [vmem:[#allocation2 + $0x10] sm:$0x3]
        %s3894 = scalar_lea.vmem %s0, 52
        %v3895 = vld [vmem:[%s3894] sm:$0xf]
        %v3899 = vcombine.high %v3891, %v3891
        %v3901 = vunpack.c.l.s4 1983009808
        %v3902 = vunpack.c.0.s8 %v3901
        %v3903 = vlaneseq
        %v3904 = vshrl.u32 %v3903, 7
        %v3905 = vsub.s32 %v3902, %v3904
        %v3906 = vrot.slane %v3891, %v3905
        %v3908 = vunpack.c.l.s4 1983009808
        %v3909 = vunpack.c.0.s8 %v3908
        %v3910 = vlaneseq
        %v3911 = vshrl.u32 %v3910, 7
        %v3912 = vsub.s32 %v3909, %v3911
        %v3913 = vrot.slane %v3899, %v3912
        %v3914 = vcombine.high %v3906, %v3906
        %v3915 = vcombine.high %v3913, %v3913
        %v3916 = vcombine.high %v3892, %v3892
        %v3918 = vunpack.c.l.s4 1983009808
        %v3919 = vunpack.c.0.s8 %v3918
        %v3920 = vlaneseq
        %v3921 = vshrl.u32 %v3920, 7
        %v3922 = vsub.s32 %v3919, %v3921
        %v3923 = vrot.slane %v3892, %v3922
        %v3925 = vunpack.c.l.s4 1983009808
        %v3926 = vunpack.c.0.s8 %v3925
        %v3927 = vlaneseq
        %v3928 = vshrl.u32 %v3927, 7
        %v3929 = vsub.s32 %v3926, %v3928
        %v3930 = vrot.slane %v3916, %v3929
        %v3931 = vcombine.high %v3923, %v3923
        %v3932 = vcombine.high %v3930, %v3930
        %v3934 = vunpack.c.l.s4 1983009808
        %v3935 = vunpack.c.0.s8 %v3934
        %v3936 = vlaneseq
        %v3937 = vshrl.u32 %v3936, 7
        %v3938 = vsub.s32 %v3935, %v3937
        %v3939 = vrot.slane %v3893, %v3938
        %3940 = vrot.lane.b32.xlu0 %v3906, 17
        %v3941 = vpop.permute.xlu0 %3940
        %3942 = vrot.lane.b32.xlu0 %v3914, 17
        %v3943 = vpop.permute.xlu0 %3942
        %3944 = vrot.lane.b32.xlu0 %v3913, 17
        %v3945 = vpop.permute.xlu0 %3944
        %3946 = vrot.lane.b32.xlu0 %v3915, 17
        %v3947 = vpop.permute.xlu0 %3946
        %3948 = vrot.lane.b32.xlu0 %v3923, 17
        %v3949 = vpop.permute.xlu0 %3948
        %3950 = vrot.lane.b32.xlu0 %v3931, 17
        %v3951 = vpop.permute.xlu0 %3950
        %3952 = vrot.lane.b32.xlu0 %v3930, 17
        %v3953 = vpop.permute.xlu0 %3952
        %3954 = vrot.lane.b32.xlu0 %v3932, 17
        %v3955 = vpop.permute.xlu0 %3954
        %3956 = vrot.lane.b32.xlu0 %v3939, 17
        %v3957 = vpop.permute.xlu0 %3956
        %vm3958 = vcmask 138240
        %v3959 = vsel %vm3958, %v3941, %v3943
        %v3960 = vsel %vm3958, %v3943, %v3945
        %v3961 = vsel %vm3958, %v3945, %v3947
        %v3962 = vsel %vm3958, %v3947, %v3949
        %v3963 = vsel %vm3958, %v3949, %v3951
        %v3964 = vsel %vm3958, %v3951, %v3953
        %v3965 = vsel %vm3958, %v3953, %v3955
        %v3966 = vsel %vm3958, %v3955, %v3957
        %v3968 = vsel %vm482, %v3895, 0
        %v3971 = vsel %vm486, %v3959, 0
        %v3974 = vsel %vm486, %v3960, 0
        %v3977 = vsel %vm486, %v3961, 0
        %v3980 = vsel %vm486, %v3962, 0
        %v3983 = vsel %vm486, %v3963, 0
        %v3986 = vsel %vm486, %v3964, 0
        %v3989 = vsel %vm486, %v3965, 0
        %v3992 = vsel %vm486, %v3966, 0
        %3994 = vmatprep.subr.bf16.mxu0 %v3974
        %3995 = vmatpush1.bf16.msra.mxu0 %v3971
        %3996 = vmatprep.subr.bf16.mxu0 0
        %3997 = vmatpush1.bf16.msra.mxu0 0
        %3998 = vmatprep.subr.bf16.mxu0 0
        %3999 = vmatpush1.bf16.msra.mxu0 0
        %4000 = vmatprep.subr.bf16.mxu0 0
        %4001 = vmatpush1.bf16.msra.mxu0 0
        %4002 = vmatprep.subr.bf16.mxu0 0
        %4003 = vmatpush1.bf16.msra.mxu0 0
        %4004 = vmatprep.subr.bf16.mxu0 0
        %4005 = vmatpush1.bf16.msra.mxu0 0
        %4006 = vmatprep.subr.bf16.mxu0 0
        %4007 = vmatpush1.bf16.msra.mxu0 0
        %4008 = vmatprep.subr.bf16.mxu0 0
        %4009 = vmatpush1.bf16.msra.mxu0 0
        %4010 = vmatprep.subr.bf16.mxu0 0
        %4011 = vmatpush1.bf16.msra.mxu0 0
        %4012 = vmatprep.subr.bf16.mxu0 0
        %4013 = vmatpush1.bf16.msra.mxu0 0
        %4014 = vmatprep.subr.bf16.mxu0 0
        %4015 = vmatpush1.bf16.msra.mxu0 0
        %4016 = vmatprep.subr.bf16.mxu0 0
        %4017 = vmatpush1.bf16.msra.mxu0 0
        %4018 = vmatprep.subr.bf16.mxu0 0
        %4019 = vmatpush1.bf16.msra.mxu0 0
        %4020 = vmatprep.subr.bf16.mxu0 0
        %4021 = vmatpush1.bf16.msra.mxu0 0
        %4022 = vmatprep.subr.bf16.mxu0 0
        %4023 = vmatpush1.bf16.msra.mxu0 0
        %4024 = vmatprep.subr.bf16.mxu0 0
        %4025 = vmatpush1.bf16.msra.mxu0 0
        %4026 = vmatprep.mubr.bf16.mxu0 0
        %4027 = vmatmul.mubr.bf16.gmra.mrb[0].mxu0 %v3968
        %v4028 = vpop.f32.mrb[0].mxu0
        %v4029 = vadd.f32 0.0, %v4028
        %v4030 = vpop.f32.mrb[0].mxu0
        %v4031 = vadd.f32 0.0, %v4030
        %v4032 = vpop.f32.mrb[0].mxu0
        %v4033 = vpop.f32.mrb[0].mxu0
        %4034 = vdwg.mxu0
        %4035 = vmatprep.subr.bf16.mxu0 %v3980
        %4036 = vmatpush1.bf16.msra.mxu0 %v3977
        %4037 = vmatprep.subr.bf16.mxu0 0
        %4038 = vmatpush1.bf16.msra.mxu0 0
        %4039 = vmatprep.subr.bf16.mxu0 0
        %4040 = vmatpush1.bf16.msra.mxu0 0
        %4041 = vmatprep.subr.bf16.mxu0 0
        %4042 = vmatpush1.bf16.msra.mxu0 0
        %4043 = vmatprep.subr.bf16.mxu0 0
        %4044 = vmatpush1.bf16.msra.mxu0 0
        %4045 = vmatprep.subr.bf16.mxu0 0
        %4046 = vmatpush1.bf16.msra.mxu0 0
        %4047 = vmatprep.subr.bf16.mxu0 0
        %4048 = vmatpush1.bf16.msra.mxu0 0
        %4049 = vmatprep.subr.bf16.mxu0 0
        %4050 = vmatpush1.bf16.msra.mxu0 0
        %4051 = vmatprep.subr.bf16.mxu0 0
        %4052 = vmatpush1.bf16.msra.mxu0 0
        %4053 = vmatprep.subr.bf16.mxu0 0
        %4054 = vmatpush1.bf16.msra.mxu0 0
        %4055 = vmatprep.subr.bf16.mxu0 0
        %4056 = vmatpush1.bf16.msra.mxu0 0
        %4057 = vmatprep.subr.bf16.mxu0 0
        %4058 = vmatpush1.bf16.msra.mxu0 0
        %4059 = vmatprep.subr.bf16.mxu0 0
        %4060 = vmatpush1.bf16.msra.mxu0 0
        %4061 = vmatprep.subr.bf16.mxu0 0
        %4062 = vmatpush1.bf16.msra.mxu0 0
        %4063 = vmatprep.subr.bf16.mxu0 0
        %4064 = vmatpush1.bf16.msra.mxu0 0
        %4065 = vmatprep.subr.bf16.mxu0 0
        %4066 = vmatpush1.bf16.msra.mxu0 0
        %4067 = vmatprep.mubr.bf16.mxu0 0
        %4068 = vmatmul.mubr.bf16.gmra.mrb[0].mxu0 %v3968
        %v4069 = vpop.f32.mrb[0].mxu0
        %v4070 = vadd.f32 0.0, %v4069
        %v4071 = vpop.f32.mrb[0].mxu0
        %v4072 = vadd.f32 0.0, %v4071
        %v4073 = vpop.f32.mrb[0].mxu0
        %v4074 = vpop.f32.mrb[0].mxu0
        %4075 = vdwg.mxu0
        %4076 = vmatprep.subr.bf16.mxu0 %v3986
        %4077 = vmatpush1.bf16.msra.mxu0 %v3983
        %4078 = vmatprep.subr.bf16.mxu0 0
        %4079 = vmatpush1.bf16.msra.mxu0 0
        %4080 = vmatprep.subr.bf16.mxu0 0
        %4081 = vmatpush1.bf16.msra.mxu0 0
        %4082 = vmatprep.subr.bf16.mxu0 0
        %4083 = vmatpush1.bf16.msra.mxu0 0
        %4084 = vmatprep.subr.bf16.mxu0 0
        %4085 = vmatpush1.bf16.msra.mxu0 0
        %4086 = vmatprep.subr.bf16.mxu0 0
        %4087 = vmatpush1.bf16.msra.mxu0 0
        %4088 = vmatprep.subr.bf16.mxu0 0
        %4089 = vmatpush1.bf16.msra.mxu0 0
        %4090 = vmatprep.subr.bf16.mxu0 0
        %4091 = vmatpush1.bf16.msra.mxu0 0
        %4092 = vmatprep.subr.bf16.mxu0 0
        %4093 = vmatpush1.bf16.msra.mxu0 0
        %4094 = vmatprep.subr.bf16.mxu0 0
        %4095 = vmatpush1.bf16.msra.mxu0 0
        %4096 = vmatprep.subr.bf16.mxu0 0
        %4097 = vmatpush1.bf16.msra.mxu0 0
        %4098 = vmatprep.subr.bf16.mxu0 0
        %4099 = vmatpush1.bf16.msra.mxu0 0
        %4100 = vmatprep.subr.bf16.mxu0 0
        %4101 = vmatpush1.bf16.msra.mxu0 0
        %4102 = vmatprep.subr.bf16.mxu0 0
        %4103 = vmatpush1.bf16.msra.mxu0 0
        %4104 = vmatprep.subr.bf16.mxu0 0
        %4105 = vmatpush1.bf16.msra.mxu0 0
        %4106 = vmatprep.subr.bf16.mxu0 0
        %4107 = vmatpush1.bf16.msra.mxu0 0
        %4108 = vmatprep.mubr.bf16.mxu0 0
        %4109 = vmatmul.mubr.bf16.gmra.mrb[0].mxu0 %v3968
        %v4110 = vpop.f32.mrb[0].mxu0
        %v4111 = vadd.f32 0.0, %v4110
        %v4112 = vpop.f32.mrb[0].mxu0
        %v4113 = vadd.f32 0.0, %v4112
        %v4114 = vpop.f32.mrb[0].mxu0
        %v4115 = vpop.f32.mrb[0].mxu0
        %4116 = vdwg.mxu0
        %4117 = vmatprep.subr.bf16.mxu0 %v3992
        %4118 = vmatpush1.bf16.msra.mxu0 %v3989
        %4119 = vmatprep.subr.bf16.mxu0 0
        %4120 = vmatpush1.bf16.msra.mxu0 0
        %4121 = vmatprep.subr.bf16.mxu0 0
        %4122 = vmatpush1.bf16.msra.mxu0 0
        %4123 = vmatprep.subr.bf16.mxu0 0
        %4124 = vmatpush1.bf16.msra.mxu0 0
        %4125 = vmatprep.subr.bf16.mxu0 0
        %4126 = vmatpush1.bf16.msra.mxu0 0
        %4127 = vmatprep.subr.bf16.mxu0 0
        %4128 = vmatpush1.bf16.msra.mxu0 0
        %4129 = vmatprep.subr.bf16.mxu0 0
        %4130 = vmatpush1.bf16.msra.mxu0 0
        %4131 = vmatprep.subr.bf16.mxu0 0
        %4132 = vmatpush1.bf16.msra.mxu0 0
        %4133 = vmatprep.subr.bf16.mxu0 0
        %4134 = vmatpush1.bf16.msra.mxu0 0
        %4135 = vmatprep.subr.bf16.mxu0 0
        %4136 = vmatpush1.bf16.msra.mxu0 0
        %4137 = vmatprep.subr.bf16.mxu0 0
        %4138 = vmatpush1.bf16.msra.mxu0 0
        %4139 = vmatprep.subr.bf16.mxu0 0
        %4140 = vmatpush1.bf16.msra.mxu0 0
        %4141 = vmatprep.subr.bf16.mxu0 0
        %4142 = vmatpush1.bf16.msra.mxu0 0
        %4143 = vmatprep.subr.bf16.mxu0 0
        %4144 = vmatpush1.bf16.msra.mxu0 0
        %4145 = vmatprep.subr.bf16.mxu0 0
        %4146 = vmatpush1.bf16.msra.mxu0 0
        %4147 = vmatprep.subr.bf16.mxu0 0
        %4148 = vmatpush1.bf16.msra.mxu0 0
        %4149 = vmatprep.mubr.bf16.mxu0 0
        %4150 = vmatmul.mubr.bf16.gmra.mrb[0].mxu0 %v3968
        %v4151 = vpop.f32.mrb[0].mxu0
        %v4152 = vadd.f32 0.0, %v4151
        %v4153 = vpop.f32.mrb[0].mxu0
        %v4154 = vadd.f32 0.0, %v4153
        %v4155 = vpop.f32.mrb[0].mxu0
        %v4156 = vpop.f32.mrb[0].mxu0
        %4157 = vdwg.mxu0
        %v4158 = vadd.f32 %v3883, %v4029
        %v4159 = vadd.f32 %v3884, %v4031
        %v4160 = vadd.f32 %v3885, %v4070
        %v4161 = vadd.f32 %v3886, %v4072
        %v4162 = vadd.f32 %v3887, %v4111
        %v4163 = vadd.f32 %v3888, %v4113
        %v4164 = vadd.f32 %v3889, %v4152
        %v4165 = vadd.f32 %v3890, %v4154
        %v4166 = vld [vmem:[#allocation2] sm:$0xff]
        %v4167 = vld [vmem:[#allocation2 + $0x8] sm:$0xff]
        %v4168 = vld [vmem:[#allocation2 + $0x10] sm:$0x3]
        %s4169 = scalar_lea.vmem %s0, 56
        %v4170 = vld [vmem:[%s4169] sm:$0xf]
        %v4174 = vcombine.high %v4166, %v4166
        %v4176 = vunpack.c.l.s4 1983009808
        %v4177 = vunpack.c.0.s8 %v4176
        %v4178 = vlaneseq
        %v4179 = vshrl.u32 %v4178, 7
        %v4180 = vsub.s32 %v4177, %v4179
        %v4181 = vrot.slane %v4166, %v4180
        %v4183 = vunpack.c.l.s4 1983009808
        %v4184 = vunpack.c.0.s8 %v4183
        %v4185 = vlaneseq
        %v4186 = vshrl.u32 %v4185, 7
        %v4187 = vsub.s32 %v4184, %v4186
        %v4188 = vrot.slane %v4174, %v4187
        %v4189 = vcombine.high %v4181, %v4181
        %v4190 = vcombine.high %v4188, %v4188
        %v4191 = vcombine.high %v4167, %v4167
        %v4193 = vunpack.c.l.s4 1983009808
        %v4194 = vunpack.c.0.s8 %v4193
        %v4195 = vlaneseq
        %v4196 = vshrl.u32 %v4195, 7
        %v4197 = vsub.s32 %v4194, %v4196
        %v4198 = vrot.slane %v4167, %v4197
        %v4200 = vunpack.c.l.s4 1983009808
        %v4201 = vunpack.c.0.s8 %v4200
        %v4202 = vlaneseq
        %v4203 = vshrl.u32 %v4202, 7
        %v4204 = vsub.s32 %v4201, %v4203
        %v4205 = vrot.slane %v4191, %v4204
        %v4206 = vcombine.high %v4198, %v4198
        %v4207 = vcombine.high %v4205, %v4205
        %v4209 = vunpack.c.l.s4 1983009808
        %v4210 = vunpack.c.0.s8 %v4209
        %v4211 = vlaneseq
        %v4212 = vshrl.u32 %v4211, 7
        %v4213 = vsub.s32 %v4210, %v4212
        %v4214 = vrot.slane %v4168, %v4213
        %4215 = vrot.lane.b32.xlu0 %v4181, 16
        %v4216 = vpop.permute.xlu0 %4215
        %4217 = vrot.lane.b32.xlu0 %v4189, 16
        %v4218 = vpop.permute.xlu0 %4217
        %4219 = vrot.lane.b32.xlu0 %v4188, 16
        %v4220 = vpop.permute.xlu0 %4219
        %4221 = vrot.lane.b32.xlu0 %v4190, 16
        %v4222 = vpop.permute.xlu0 %4221
        %4223 = vrot.lane.b32.xlu0 %v4198, 16
        %v4224 = vpop.permute.xlu0 %4223
        %4225 = vrot.lane.b32.xlu0 %v4206, 16
        %v4226 = vpop.permute.xlu0 %4225
        %4227 = vrot.lane.b32.xlu0 %v4205, 16
        %v4228 = vpop.permute.xlu0 %4227
        %4229 = vrot.lane.b32.xlu0 %v4207, 16
        %v4230 = vpop.permute.xlu0 %4229
        %4231 = vrot.lane.b32.xlu0 %v4214, 16
        %v4232 = vpop.permute.xlu0 %4231
        %vm4233 = vcmask 130048
        %v4234 = vsel %vm4233, %v4216, %v4218
        %v4235 = vsel %vm4233, %v4218, %v4220
        %v4236 = vsel %vm4233, %v4220, %v4222
        %v4237 = vsel %vm4233, %v4222, %v4224
        %v4238 = vsel %vm4233, %v4224, %v4226
        %v4239 = vsel %vm4233, %v4226, %v4228
        %v4240 = vsel %vm4233, %v4228, %v4230
        %v4241 = vsel %vm4233, %v4230, %v4232
        %v4243 = vsel %vm482, %v4170, 0
        %v4246 = vsel %vm486, %v4234, 0
        %v4249 = vsel %vm486, %v4235, 0
        %v4252 = vsel %vm486, %v4236, 0
        %v4255 = vsel %vm486, %v4237, 0
        %v4258 = vsel %vm486, %v4238, 0
        %v4261 = vsel %vm486, %v4239, 0
        %v4264 = vsel %vm486, %v4240, 0
        %v4267 = vsel %vm486, %v4241, 0
        %4269 = vmatprep.subr.bf16.mxu0 %v4249
        %4270 = vmatpush1.bf16.msra.mxu0 %v4246
        %4271 = vmatprep.subr.bf16.mxu0 0
        %4272 = vmatpush1.bf16.msra.mxu0 0
        %4273 = vmatprep.subr.bf16.mxu0 0
        %4274 = vmatpush1.bf16.msra.mxu0 0
        %4275 = vmatprep.subr.bf16.mxu0 0
        %4276 = vmatpush1.bf16.msra.mxu0 0
        %4277 = vmatprep.subr.bf16.mxu0 0
        %4278 = vmatpush1.bf16.msra.mxu0 0
        %4279 = vmatprep.subr.bf16.mxu0 0
        %4280 = vmatpush1.bf16.msra.mxu0 0
        %4281 = vmatprep.subr.bf16.mxu0 0
        %4282 = vmatpush1.bf16.msra.mxu0 0
        %4283 = vmatprep.subr.bf16.mxu0 0
        %4284 = vmatpush1.bf16.msra.mxu0 0
        %4285 = vmatprep.subr.bf16.mxu0 0
        %4286 = vmatpush1.bf16.msra.mxu0 0
        %4287 = vmatprep.subr.bf16.mxu0 0
        %4288 = vmatpush1.bf16.msra.mxu0 0
        %4289 = vmatprep.subr.bf16.mxu0 0
        %4290 = vmatpush1.bf16.msra.mxu0 0
        %4291 = vmatprep.subr.bf16.mxu0 0
        %4292 = vmatpush1.bf16.msra.mxu0 0
        %4293 = vmatprep.subr.bf16.mxu0 0
        %4294 = vmatpush1.bf16.msra.mxu0 0
        %4295 = vmatprep.subr.bf16.mxu0 0
        %4296 = vmatpush1.bf16.msra.mxu0 0
        %4297 = vmatprep.subr.bf16.mxu0 0
        %4298 = vmatpush1.bf16.msra.mxu0 0
        %4299 = vmatprep.subr.bf16.mxu0 0
        %4300 = vmatpush1.bf16.msra.mxu0 0
        %4301 = vmatprep.mubr.bf16.mxu0 0
        %4302 = vmatmul.mubr.bf16.gmra.mrb[0].mxu0 %v4243
        %v4303 = vpop.f32.mrb[0].mxu0
        %v4304 = vadd.f32 0.0, %v4303
        %v4305 = vpop.f32.mrb[0].mxu0
        %v4306 = vadd.f32 0.0, %v4305
        %v4307 = vpop.f32.mrb[0].mxu0
        %v4308 = vpop.f32.mrb[0].mxu0
        %4309 = vdwg.mxu0
        %4310 = vmatprep.subr.bf16.mxu0 %v4255
        %4311 = vmatpush1.bf16.msra.mxu0 %v4252
        %4312 = vmatprep.subr.bf16.mxu0 0
        %4313 = vmatpush1.bf16.msra.mxu0 0
        %4314 = vmatprep.subr.bf16.mxu0 0
        %4315 = vmatpush1.bf16.msra.mxu0 0
        %4316 = vmatprep.subr.bf16.mxu0 0
        %4317 = vmatpush1.bf16.msra.mxu0 0
        %4318 = vmatprep.subr.bf16.mxu0 0
        %4319 = vmatpush1.bf16.msra.mxu0 0
        %4320 = vmatprep.subr.bf16.mxu0 0
        %4321 = vmatpush1.bf16.msra.mxu0 0
        %4322 = vmatprep.subr.bf16.mxu0 0
        %4323 = vmatpush1.bf16.msra.mxu0 0
        %4324 = vmatprep.subr.bf16.mxu0 0
        %4325 = vmatpush1.bf16.msra.mxu0 0
        %4326 = vmatprep.subr.bf16.mxu0 0
        %4327 = vmatpush1.bf16.msra.mxu0 0
        %4328 = vmatprep.subr.bf16.mxu0 0
        %4329 = vmatpush1.bf16.msra.mxu0 0
        %4330 = vmatprep.subr.bf16.mxu0 0
        %4331 = vmatpush1.bf16.msra.mxu0 0
        %4332 = vmatprep.subr.bf16.mxu0 0
        %4333 = vmatpush1.bf16.msra.mxu0 0
        %4334 = vmatprep.subr.bf16.mxu0 0
        %4335 = vmatpush1.bf16.msra.mxu0 0
        %4336 = vmatprep.subr.bf16.mxu0 0
        %4337 = vmatpush1.bf16.msra.mxu0 0
        %4338 = vmatprep.subr.bf16.mxu0 0
        %4339 = vmatpush1.bf16.msra.mxu0 0
        %4340 = vmatprep.subr.bf16.mxu0 0
        %4341 = vmatpush1.bf16.msra.mxu0 0
        %4342 = vmatprep.mubr.bf16.mxu0 0
        %4343 = vmatmul.mubr.bf16.gmra.mrb[0].mxu0 %v4243
        %v4344 = vpop.f32.mrb[0].mxu0
        %v4345 = vadd.f32 0.0, %v4344
        %v4346 = vpop.f32.mrb[0].mxu0
        %v4347 = vadd.f32 0.0, %v4346
        %v4348 = vpop.f32.mrb[0].mxu0
        %v4349 = vpop.f32.mrb[0].mxu0
        %4350 = vdwg.mxu0
        %4351 = vmatprep.subr.bf16.mxu0 %v4261
        %4352 = vmatpush1.bf16.msra.mxu0 %v4258
        %4353 = vmatprep.subr.bf16.mxu0 0
        %4354 = vmatpush1.bf16.msra.mxu0 0
        %4355 = vmatprep.subr.bf16.mxu0 0
        %4356 = vmatpush1.bf16.msra.mxu0 0
        %4357 = vmatprep.subr.bf16.mxu0 0
        %4358 = vmatpush1.bf16.msra.mxu0 0
        %4359 = vmatprep.subr.bf16.mxu0 0
        %4360 = vmatpush1.bf16.msra.mxu0 0
        %4361 = vmatprep.subr.bf16.mxu0 0
        %4362 = vmatpush1.bf16.msra.mxu0 0
        %4363 = vmatprep.subr.bf16.mxu0 0
        %4364 = vmatpush1.bf16.msra.mxu0 0
        %4365 = vmatprep.subr.bf16.mxu0 0
        %4366 = vmatpush1.bf16.msra.mxu0 0
        %4367 = vmatprep.subr.bf16.mxu0 0
        %4368 = vmatpush1.bf16.msra.mxu0 0
        %4369 = vmatprep.subr.bf16.mxu0 0
        %4370 = vmatpush1.bf16.msra.mxu0 0
        %4371 = vmatprep.subr.bf16.mxu0 0
        %4372 = vmatpush1.bf16.msra.mxu0 0
        %4373 = vmatprep.subr.bf16.mxu0 0
        %4374 = vmatpush1.bf16.msra.mxu0 0
        %4375 = vmatprep.subr.bf16.mxu0 0
        %4376 = vmatpush1.bf16.msra.mxu0 0
        %4377 = vmatprep.subr.bf16.mxu0 0
        %4378 = vmatpush1.bf16.msra.mxu0 0
        %4379 = vmatprep.subr.bf16.mxu0 0
        %4380 = vmatpush1.bf16.msra.mxu0 0
        %4381 = vmatprep.subr.bf16.mxu0 0
        %4382 = vmatpush1.bf16.msra.mxu0 0
        %4383 = vmatprep.mubr.bf16.mxu0 0
        %4384 = vmatmul.mubr.bf16.gmra.mrb[0].mxu0 %v4243
        %v4385 = vpop.f32.mrb[0].mxu0
        %v4386 = vadd.f32 0.0, %v4385
        %v4387 = vpop.f32.mrb[0].mxu0
        %v4388 = vadd.f32 0.0, %v4387
        %v4389 = vpop.f32.mrb[0].mxu0
        %v4390 = vpop.f32.mrb[0].mxu0
        %4391 = vdwg.mxu0
        %4392 = vmatprep.subr.bf16.mxu0 %v4267
        %4393 = vmatpush1.bf16.msra.mxu0 %v4264
        %4394 = vmatprep.subr.bf16.mxu0 0
        %4395 = vmatpush1.bf16.msra.mxu0 0
        %4396 = vmatprep.subr.bf16.mxu0 0
        %4397 = vmatpush1.bf16.msra.mxu0 0
        %4398 = vmatprep.subr.bf16.mxu0 0
        %4399 = vmatpush1.bf16.msra.mxu0 0
        %4400 = vmatprep.subr.bf16.mxu0 0
        %4401 = vmatpush1.bf16.msra.mxu0 0
        %4402 = vmatprep.subr.bf16.mxu0 0
        %4403 = vmatpush1.bf16.msra.mxu0 0
        %4404 = vmatprep.subr.bf16.mxu0 0
        %4405 = vmatpush1.bf16.msra.mxu0 0
        %4406 = vmatprep.subr.bf16.mxu0 0
        %4407 = vmatpush1.bf16.msra.mxu0 0
        %4408 = vmatprep.subr.bf16.mxu0 0
        %4409 = vmatpush1.bf16.msra.mxu0 0
        %4410 = vmatprep.subr.bf16.mxu0 0
        %4411 = vmatpush1.bf16.msra.mxu0 0
        %4412 = vmatprep.subr.bf16.mxu0 0
        %4413 = vmatpush1.bf16.msra.mxu0 0
        %4414 = vmatprep.subr.bf16.mxu0 0
        %4415 = vmatpush1.bf16.msra.mxu0 0
        %4416 = vmatprep.subr.bf16.mxu0 0
        %4417 = vmatpush1.bf16.msra.mxu0 0
        %4418 = vmatprep.subr.bf16.mxu0 0
        %4419 = vmatpush1.bf16.msra.mxu0 0
        %4420 = vmatprep.subr.bf16.mxu0 0
        %4421 = vmatpush1.bf16.msra.mxu0 0
        %4422 = vmatprep.subr.bf16.mxu0 0
        %4423 = vmatpush1.bf16.msra.mxu0 0
        %4424 = vmatprep.mubr.bf16.mxu0 0
        %4425 = vmatmul.mubr.bf16.gmra.mrb[0].mxu0 %v4243
        %v4426 = vpop.f32.mrb[0].mxu0
        %v4427 = vadd.f32 0.0, %v4426
        %v4428 = vpop.f32.mrb[0].mxu0
        %v4429 = vadd.f32 0.0, %v4428
        %v4430 = vpop.f32.mrb[0].mxu0
        %v4431 = vpop.f32.mrb[0].mxu0
        %4432 = vdwg.mxu0
        %v4433 = vadd.f32 %v4158, %v4304
        %v4434 = vadd.f32 %v4159, %v4306
        %v4435 = vadd.f32 %v4160, %v4345
        %v4436 = vadd.f32 %v4161, %v4347
        %v4437 = vadd.f32 %v4162, %v4386
        %v4438 = vadd.f32 %v4163, %v4388
        %v4439 = vadd.f32 %v4164, %v4427
        %v4440 = vadd.f32 %v4165, %v4429
        %v4441 = vld [vmem:[#allocation2] sm:$0xff]
        %v4442 = vld [vmem:[#allocation2 + $0x8] sm:$0xff]
        %v4443 = vld [vmem:[#allocation2 + $0x10] sm:$0x3]
        %s4444 = scalar_lea.vmem %s0, 60
        %v4445 = vld [vmem:[%s4444] sm:$0xf]
        %v4449 = vcombine.high %v4441, %v4441
        %v4451 = vunpack.c.l.s4 1983009808
        %v4452 = vunpack.c.0.s8 %v4451
        %v4453 = vlaneseq
        %v4454 = vshrl.u32 %v4453, 7
        %v4455 = vsub.s32 %v4452, %v4454
        %v4456 = vrot.slane %v4441, %v4455
        %v4458 = vunpack.c.l.s4 1983009808
        %v4459 = vunpack.c.0.s8 %v4458
        %v4460 = vlaneseq
        %v4461 = vshrl.u32 %v4460, 7
        %v4462 = vsub.s32 %v4459, %v4461
        %v4463 = vrot.slane %v4449, %v4462
        %v4464 = vcombine.high %v4456, %v4456
        %v4465 = vcombine.high %v4463, %v4463
        %v4466 = vcombine.high %v4442, %v4442
        %v4468 = vunpack.c.l.s4 1983009808
        %v4469 = vunpack.c.0.s8 %v4468
        %v4470 = vlaneseq
        %v4471 = vshrl.u32 %v4470, 7
        %v4472 = vsub.s32 %v4469, %v4471
        %v4473 = vrot.slane %v4442, %v4472
        %v4475 = vunpack.c.l.s4 1983009808
        %v4476 = vunpack.c.0.s8 %v4475
        %v4477 = vlaneseq
        %v4478 = vshrl.u32 %v4477, 7
        %v4479 = vsub.s32 %v4476, %v4478
        %v4480 = vrot.slane %v4466, %v4479
        %v4481 = vcombine.high %v4473, %v4473
        %v4482 = vcombine.high %v4480, %v4480
        %v4484 = vunpack.c.l.s4 1983009808
        %v4485 = vunpack.c.0.s8 %v4484
        %v4486 = vlaneseq
        %v4487 = vshrl.u32 %v4486, 7
        %v4488 = vsub.s32 %v4485, %v4487
        %v4489 = vrot.slane %v4443, %v4488
        %4490 = vrot.lane.b32.xlu0 %v4456, 8
        %v4491 = vpop.permute.xlu0 %4490
        %4492 = vrot.lane.b32.xlu0 %v4464, 8
        %v4493 = vpop.permute.xlu0 %4492
        %4494 = vrot.lane.b32.xlu0 %v4463, 8
        %v4495 = vpop.permute.xlu0 %4494
        %4496 = vrot.lane.b32.xlu0 %v4465, 8
        %v4497 = vpop.permute.xlu0 %4496
        %4498 = vrot.lane.b32.xlu0 %v4473, 8
        %v4499 = vpop.permute.xlu0 %4498
        %4500 = vrot.lane.b32.xlu0 %v4481, 8
        %v4501 = vpop.permute.xlu0 %4500
        %4502 = vrot.lane.b32.xlu0 %v4480, 8
        %v4503 = vpop.permute.xlu0 %4502
        %4504 = vrot.lane.b32.xlu0 %v4482, 8
        %v4505 = vpop.permute.xlu0 %4504
        %4506 = vrot.lane.b32.xlu0 %v4489, 8
        %v4507 = vpop.permute.xlu0 %4506
        %vm4508 = vcmask 64512
        %v4509 = vsel %vm4508, %v4491, %v4493
        %v4510 = vsel %vm4508, %v4493, %v4495
        %v4511 = vsel %vm4508, %v4495, %v4497
        %v4512 = vsel %vm4508, %v4497, %v4499
        %v4513 = vsel %vm4508, %v4499, %v4501
        %v4514 = vsel %vm4508, %v4501, %v4503
        %v4515 = vsel %vm4508, %v4503, %v4505
        %v4516 = vsel %vm4508, %v4505, %v4507
        %v4518 = vsel %vm482, %v4445, 0
        %v4521 = vsel %vm486, %v4509, 0
        %v4524 = vsel %vm486, %v4510, 0
        %v4527 = vsel %vm486, %v4511, 0
        %v4530 = vsel %vm486, %v4512, 0
        %v4533 = vsel %vm486, %v4513, 0
        %v4536 = vsel %vm486, %v4514, 0
        %v4539 = vsel %vm486, %v4515, 0
        %v4542 = vsel %vm486, %v4516, 0
        %4544 = vmatprep.subr.bf16.mxu0 %v4524
        %4545 = vmatpush1.bf16.msra.mxu0 %v4521
        %4546 = vmatprep.subr.bf16.mxu0 0
        %4547 = vmatpush1.bf16.msra.mxu0 0
        %4548 = vmatprep.subr.bf16.mxu0 0
        %4549 = vmatpush1.bf16.msra.mxu0 0
        %4550 = vmatprep.subr.bf16.mxu0 0
        %4551 = vmatpush1.bf16.msra.mxu0 0
        %4552 = vmatprep.subr.bf16.mxu0 0
        %4553 = vmatpush1.bf16.msra.mxu0 0
        %4554 = vmatprep.subr.bf16.mxu0 0
        %4555 = vmatpush1.bf16.msra.mxu0 0
        %4556 = vmatprep.subr.bf16.mxu0 0
        %4557 = vmatpush1.bf16.msra.mxu0 0
        %4558 = vmatprep.subr.bf16.mxu0 0
        %4559 = vmatpush1.bf16.msra.mxu0 0
        %4560 = vmatprep.subr.bf16.mxu0 0
        %4561 = vmatpush1.bf16.msra.mxu0 0
        %4562 = vmatprep.subr.bf16.mxu0 0
        %4563 = vmatpush1.bf16.msra.mxu0 0
        %4564 = vmatprep.subr.bf16.mxu0 0
        %4565 = vmatpush1.bf16.msra.mxu0 0
        %4566 = vmatprep.subr.bf16.mxu0 0
        %4567 = vmatpush1.bf16.msra.mxu0 0
        %4568 = vmatprep.subr.bf16.mxu0 0
        %4569 = vmatpush1.bf16.msra.mxu0 0
        %4570 = vmatprep.subr.bf16.mxu0 0
        %4571 = vmatpush1.bf16.msra.mxu0 0
        %4572 = vmatprep.subr.bf16.mxu0 0
        %4573 = vmatpush1.bf16.msra.mxu0 0
        %4574 = vmatprep.subr.bf16.mxu0 0
        %4575 = vmatpush1.bf16.msra.mxu0 0
        %4576 = vmatprep.mubr.bf16.mxu0 0
        %4577 = vmatmul.mubr.bf16.gmra.mrb[0].mxu0 %v4518
        %v4578 = vpop.f32.mrb[0].mxu0
        %v4579 = vadd.f32 0.0, %v4578
        %v4580 = vpop.f32.mrb[0].mxu0
        %v4581 = vadd.f32 0.0, %v4580
        %v4582 = vpop.f32.mrb[0].mxu0
        %v4583 = vpop.f32.mrb[0].mxu0
        %4584 = vdwg.mxu0
        %4585 = vmatprep.subr.bf16.mxu0 %v4530
        %4586 = vmatpush1.bf16.msra.mxu0 %v4527
        %4587 = vmatprep.subr.bf16.mxu0 0
        %4588 = vmatpush1.bf16.msra.mxu0 0
        %4589 = vmatprep.subr.bf16.mxu0 0
        %4590 = vmatpush1.bf16.msra.mxu0 0
        %4591 = vmatprep.subr.bf16.mxu0 0
        %4592 = vmatpush1.bf16.msra.mxu0 0
        %4593 = vmatprep.subr.bf16.mxu0 0
        %4594 = vmatpush1.bf16.msra.mxu0 0
        %4595 = vmatprep.subr.bf16.mxu0 0
        %4596 = vmatpush1.bf16.msra.mxu0 0
        %4597 = vmatprep.subr.bf16.mxu0 0
        %4598 = vmatpush1.bf16.msra.mxu0 0
        %4599 = vmatprep.subr.bf16.mxu0 0
        %4600 = vmatpush1.bf16.msra.mxu0 0
        %4601 = vmatprep.subr.bf16.mxu0 0
        %4602 = vmatpush1.bf16.msra.mxu0 0
        %4603 = vmatprep.subr.bf16.mxu0 0
        %4604 = vmatpush1.bf16.msra.mxu0 0
        %4605 = vmatprep.subr.bf16.mxu0 0
        %4606 = vmatpush1.bf16.msra.mxu0 0
        %4607 = vmatprep.subr.bf16.mxu0 0
        %4608 = vmatpush1.bf16.msra.mxu0 0
        %4609 = vmatprep.subr.bf16.mxu0 0
        %4610 = vmatpush1.bf16.msra.mxu0 0
        %4611 = vmatprep.subr.bf16.mxu0 0
        %4612 = vmatpush1.bf16.msra.mxu0 0
        %4613 = vmatprep.subr.bf16.mxu0 0
        %4614 = vmatpush1.bf16.msra.mxu0 0
        %4615 = vmatprep.subr.bf16.mxu0 0
        %4616 = vmatpush1.bf16.msra.mxu0 0
        %4617 = vmatprep.mubr.bf16.mxu0 0
        %4618 = vmatmul.mubr.bf16.gmra.mrb[0].mxu0 %v4518
        %v4619 = vpop.f32.mrb[0].mxu0
        %v4620 = vadd.f32 0.0, %v4619
        %v4621 = vpop.f32.mrb[0].mxu0
        %v4622 = vadd.f32 0.0, %v4621
        %v4623 = vpop.f32.mrb[0].mxu0
        %v4624 = vpop.f32.mrb[0].mxu0
        %4625 = vdwg.mxu0
        %4626 = vmatprep.subr.bf16.mxu0 %v4536
        %4627 = vmatpush1.bf16.msra.mxu0 %v4533
        %4628 = vmatprep.subr.bf16.mxu0 0
        %4629 = vmatpush1.bf16.msra.mxu0 0
        %4630 = vmatprep.subr.bf16.mxu0 0
        %4631 = vmatpush1.bf16.msra.mxu0 0
        %4632 = vmatprep.subr.bf16.mxu0 0
        %4633 = vmatpush1.bf16.msra.mxu0 0
        %4634 = vmatprep.subr.bf16.mxu0 0
        %4635 = vmatpush1.bf16.msra.mxu0 0
        %4636 = vmatprep.subr.bf16.mxu0 0
        %4637 = vmatpush1.bf16.msra.mxu0 0
        %4638 = vmatprep.subr.bf16.mxu0 0
        %4639 = vmatpush1.bf16.msra.mxu0 0
        %4640 = vmatprep.subr.bf16.mxu0 0
        %4641 = vmatpush1.bf16.msra.mxu0 0
        %4642 = vmatprep.subr.bf16.mxu0 0
        %4643 = vmatpush1.bf16.msra.mxu0 0
        %4644 = vmatprep.subr.bf16.mxu0 0
        %4645 = vmatpush1.bf16.msra.mxu0 0
        %4646 = vmatprep.subr.bf16.mxu0 0
        %4647 = vmatpush1.bf16.msra.mxu0 0
        %4648 = vmatprep.subr.bf16.mxu0 0
        %4649 = vmatpush1.bf16.msra.mxu0 0
        %4650 = vmatprep.subr.bf16.mxu0 0
        %4651 = vmatpush1.bf16.msra.mxu0 0
        %4652 = vmatprep.subr.bf16.mxu0 0
        %4653 = vmatpush1.bf16.msra.mxu0 0
        %4654 = vmatprep.subr.bf16.mxu0 0
        %4655 = vmatpush1.bf16.msra.mxu0 0
        %4656 = vmatprep.subr.bf16.mxu0 0
        %4657 = vmatpush1.bf16.msra.mxu0 0
        %4658 = vmatprep.mubr.bf16.mxu0 0
        %4659 = vmatmul.mubr.bf16.gmra.mrb[0].mxu0 %v4518
        %v4660 = vpop.f32.mrb[0].mxu0
        %v4661 = vadd.f32 0.0, %v4660
        %v4662 = vpop.f32.mrb[0].mxu0
        %v4663 = vadd.f32 0.0, %v4662
        %v4664 = vpop.f32.mrb[0].mxu0
        %v4665 = vpop.f32.mrb[0].mxu0
        %4666 = vdwg.mxu0
        %4667 = vmatprep.subr.bf16.mxu0 %v4542
        %4668 = vmatpush1.bf16.msra.mxu0 %v4539
        %4669 = vmatprep.subr.bf16.mxu0 0
        %4670 = vmatpush1.bf16.msra.mxu0 0
        %4671 = vmatprep.subr.bf16.mxu0 0
        %4672 = vmatpush1.bf16.msra.mxu0 0
        %4673 = vmatprep.subr.bf16.mxu0 0
        %4674 = vmatpush1.bf16.msra.mxu0 0
        %4675 = vmatprep.subr.bf16.mxu0 0
        %4676 = vmatpush1.bf16.msra.mxu0 0
        %4677 = vmatprep.subr.bf16.mxu0 0
        %4678 = vmatpush1.bf16.msra.mxu0 0
        %4679 = vmatprep.subr.bf16.mxu0 0
        %4680 = vmatpush1.bf16.msra.mxu0 0
        %4681 = vmatprep.subr.bf16.mxu0 0
        %4682 = vmatpush1.bf16.msra.mxu0 0
        %4683 = vmatprep.subr.bf16.mxu0 0
        %4684 = vmatpush1.bf16.msra.mxu0 0
        %4685 = vmatprep.subr.bf16.mxu0 0
        %4686 = vmatpush1.bf16.msra.mxu0 0
        %4687 = vmatprep.subr.bf16.mxu0 0
        %4688 = vmatpush1.bf16.msra.mxu0 0
        %4689 = vmatprep.subr.bf16.mxu0 0
        %4690 = vmatpush1.bf16.msra.mxu0 0
        %4691 = vmatprep.subr.bf16.mxu0 0
        %4692 = vmatpush1.bf16.msra.mxu0 0
        %4693 = vmatprep.subr.bf16.mxu0 0
        %4694 = vmatpush1.bf16.msra.mxu0 0
        %4695 = vmatprep.subr.bf16.mxu0 0
        %4696 = vmatpush1.bf16.msra.mxu0 0
        %4697 = vmatprep.subr.bf16.mxu0 0
        %4698 = vmatpush1.bf16.msra.mxu0 0
        %4699 = vmatprep.mubr.bf16.mxu0 0
        %4700 = vmatmul.mubr.bf16.gmra.mrb[0].mxu0 %v4518
        %v4701 = vpop.f32.mrb[0].mxu0
        %v4702 = vadd.f32 0.0, %v4701
        %v4703 = vpop.f32.mrb[0].mxu0
        %v4704 = vadd.f32 0.0, %v4703
        %v4705 = vpop.f32.mrb[0].mxu0
        %v4706 = vpop.f32.mrb[0].mxu0
        %4707 = vdwg.mxu0
        %v4708 = vadd.f32 %v4433, %v4579
        %v4709 = vadd.f32 %v4434, %v4581
        %v4710 = vadd.f32 %v4435, %v4620
        %v4711 = vadd.f32 %v4436, %v4622
        %v4712 = vadd.f32 %v4437, %v4661
        %v4713 = vadd.f32 %v4438, %v4663
        %v4714 = vadd.f32 %v4439, %v4702
        %v4715 = vadd.f32 %v4440, %v4704
        %v4716 = vld [vmem:[#allocation2] sm:$0xff]
        %v4717 = vld [vmem:[#allocation2 + $0x8] sm:$0xff]
        %v4718 = vld [vmem:[#allocation2 + $0x10] sm:$0x3]
        %s4719 = scalar_lea.vmem %s0, 64
        %v4720 = vld [vmem:[%s4719] sm:$0xf]
        %v4724 = vcombine.high %v4716, %v4716
        %v4726 = vunpack.c.l.s4 1983009808
        %v4727 = vunpack.c.0.s8 %v4726
        %v4728 = vlaneseq
        %v4729 = vshrl.u32 %v4728, 7
        %v4730 = vsub.s32 %v4727, %v4729
        %v4731 = vrot.slane %v4716, %v4730
        %v4733 = vunpack.c.l.s4 1983009808
        %v4734 = vunpack.c.0.s8 %v4733
        %v4735 = vlaneseq
        %v4736 = vshrl.u32 %v4735, 7
        %v4737 = vsub.s32 %v4734, %v4736
        %v4738 = vrot.slane %v4724, %v4737
        %v4739 = vcombine.high %v4731, %v4731
        %v4740 = vcombine.high %v4738, %v4738
        %v4741 = vcombine.high %v4717, %v4717
        %v4743 = vunpack.c.l.s4 1983009808
        %v4744 = vunpack.c.0.s8 %v4743
        %v4745 = vlaneseq
        %v4746 = vshrl.u32 %v4745, 7
        %v4747 = vsub.s32 %v4744, %v4746
        %v4748 = vrot.slane %v4717, %v4747
        %v4750 = vunpack.c.l.s4 1983009808
        %v4751 = vunpack.c.0.s8 %v4750
        %v4752 = vlaneseq
        %v4753 = vshrl.u32 %v4752, 7
        %v4754 = vsub.s32 %v4751, %v4753
        %v4755 = vrot.slane %v4741, %v4754
        %v4756 = vcombine.high %v4748, %v4748
        %v4757 = vcombine.high %v4755, %v4755
        %v4759 = vunpack.c.l.s4 1983009808
        %v4760 = vunpack.c.0.s8 %v4759
        %v4761 = vlaneseq
        %v4762 = vshrl.u32 %v4761, 7
        %v4763 = vsub.s32 %v4760, %v4762
        %v4764 = vrot.slane %v4718, %v4763
        %4765 = vrot.lane.b32.xlu0 %v4731, 7
        %v4766 = vpop.permute.xlu0 %4765
        %4767 = vrot.lane.b32.xlu0 %v4739, 7
        %v4768 = vpop.permute.xlu0 %4767
        %4769 = vrot.lane.b32.xlu0 %v4738, 7
        %v4770 = vpop.permute.xlu0 %4769
        %4771 = vrot.lane.b32.xlu0 %v4740, 7
        %v4772 = vpop.permute.xlu0 %4771
        %4773 = vrot.lane.b32.xlu0 %v4748, 7
        %v4774 = vpop.permute.xlu0 %4773
        %4775 = vrot.lane.b32.xlu0 %v4756, 7
        %v4776 = vpop.permute.xlu0 %4775
        %4777 = vrot.lane.b32.xlu0 %v4755, 7
        %v4778 = vpop.permute.xlu0 %4777
        %4779 = vrot.lane.b32.xlu0 %v4757, 7
        %v4780 = vpop.permute.xlu0 %4779
        %4781 = vrot.lane.b32.xlu0 %v4764, 7
        %v4782 = vpop.permute.xlu0 %4781
        %vm4783 = vcmask 56320
        %v4784 = vsel %vm4783, %v4766, %v4768
        %v4785 = vsel %vm4783, %v4768, %v4770
        %v4786 = vsel %vm4783, %v4770, %v4772
        %v4787 = vsel %vm4783, %v4772, %v4774
        %v4788 = vsel %vm4783, %v4774, %v4776
        %v4789 = vsel %vm4783, %v4776, %v4778
        %v4790 = vsel %vm4783, %v4778, %v4780
        %v4791 = vsel %vm4783, %v4780, %v4782
        %v4793 = vsel %vm482, %v4720, 0
        %v4796 = vsel %vm486, %v4784, 0
        %v4799 = vsel %vm486, %v4785, 0
        %v4802 = vsel %vm486, %v4786, 0
        %v4805 = vsel %vm486, %v4787, 0
        %v4808 = vsel %vm486, %v4788, 0
        %v4811 = vsel %vm486, %v4789, 0
        %v4814 = vsel %vm486, %v4790, 0
        %v4817 = vsel %vm486, %v4791, 0
        %4819 = vmatprep.subr.bf16.mxu0 %v4799
        %4820 = vmatpush1.bf16.msra.mxu0 %v4796
        %4821 = vmatprep.subr.bf16.mxu0 0
        %4822 = vmatpush1.bf16.msra.mxu0 0
        %4823 = vmatprep.subr.bf16.mxu0 0
        %4824 = vmatpush1.bf16.msra.mxu0 0
        %4825 = vmatprep.subr.bf16.mxu0 0
        %4826 = vmatpush1.bf16.msra.mxu0 0
        %4827 = vmatprep.subr.bf16.mxu0 0
        %4828 = vmatpush1.bf16.msra.mxu0 0
        %4829 = vmatprep.subr.bf16.mxu0 0
        %4830 = vmatpush1.bf16.msra.mxu0 0
        %4831 = vmatprep.subr.bf16.mxu0 0
        %4832 = vmatpush1.bf16.msra.mxu0 0
        %4833 = vmatprep.subr.bf16.mxu0 0
        %4834 = vmatpush1.bf16.msra.mxu0 0
        %4835 = vmatprep.subr.bf16.mxu0 0
        %4836 = vmatpush1.bf16.msra.mxu0 0
        %4837 = vmatprep.subr.bf16.mxu0 0
        %4838 = vmatpush1.bf16.msra.mxu0 0
        %4839 = vmatprep.subr.bf16.mxu0 0
        %4840 = vmatpush1.bf16.msra.mxu0 0
        %4841 = vmatprep.subr.bf16.mxu0 0
        %4842 = vmatpush1.bf16.msra.mxu0 0
        %4843 = vmatprep.subr.bf16.mxu0 0
        %4844 = vmatpush1.bf16.msra.mxu0 0
        %4845 = vmatprep.subr.bf16.mxu0 0
        %4846 = vmatpush1.bf16.msra.mxu0 0
        %4847 = vmatprep.subr.bf16.mxu0 0
        %4848 = vmatpush1.bf16.msra.mxu0 0
        %4849 = vmatprep.subr.bf16.mxu0 0
        %4850 = vmatpush1.bf16.msra.mxu0 0
        %4851 = vmatprep.mubr.bf16.mxu0 0
        %4852 = vmatmul.mubr.bf16.gmra.mrb[0].mxu0 %v4793
        %v4853 = vpop.f32.mrb[0].mxu0
        %v4854 = vadd.f32 0.0, %v4853
        %v4855 = vpop.f32.mrb[0].mxu0
        %v4856 = vadd.f32 0.0, %v4855
        %v4857 = vpop.f32.mrb[0].mxu0
        %v4858 = vpop.f32.mrb[0].mxu0
        %4859 = vdwg.mxu0
        %4860 = vmatprep.subr.bf16.mxu0 %v4805
        %4861 = vmatpush1.bf16.msra.mxu0 %v4802
        %4862 = vmatprep.subr.bf16.mxu0 0
        %4863 = vmatpush1.bf16.msra.mxu0 0
        %4864 = vmatprep.subr.bf16.mxu0 0
        %4865 = vmatpush1.bf16.msra.mxu0 0
        %4866 = vmatprep.subr.bf16.mxu0 0
        %4867 = vmatpush1.bf16.msra.mxu0 0
        %4868 = vmatprep.subr.bf16.mxu0 0
        %4869 = vmatpush1.bf16.msra.mxu0 0
        %4870 = vmatprep.subr.bf16.mxu0 0
        %4871 = vmatpush1.bf16.msra.mxu0 0
        %4872 = vmatprep.subr.bf16.mxu0 0
        %4873 = vmatpush1.bf16.msra.mxu0 0
        %4874 = vmatprep.subr.bf16.mxu0 0
        %4875 = vmatpush1.bf16.msra.mxu0 0
        %4876 = vmatprep.subr.bf16.mxu0 0
        %4877 = vmatpush1.bf16.msra.mxu0 0
        %4878 = vmatprep.subr.bf16.mxu0 0
        %4879 = vmatpush1.bf16.msra.mxu0 0
        %4880 = vmatprep.subr.bf16.mxu0 0
        %4881 = vmatpush1.bf16.msra.mxu0 0
        %4882 = vmatprep.subr.bf16.mxu0 0
        %4883 = vmatpush1.bf16.msra.mxu0 0
        %4884 = vmatprep.subr.bf16.mxu0 0
        %4885 = vmatpush1.bf16.msra.mxu0 0
        %4886 = vmatprep.subr.bf16.mxu0 0
        %4887 = vmatpush1.bf16.msra.mxu0 0
        %4888 = vmatprep.subr.bf16.mxu0 0
        %4889 = vmatpush1.bf16.msra.mxu0 0
        %4890 = vmatprep.subr.bf16.mxu0 0
        %4891 = vmatpush1.bf16.msra.mxu0 0
        %4892 = vmatprep.mubr.bf16.mxu0 0
        %4893 = vmatmul.mubr.bf16.gmra.mrb[0].mxu0 %v4793
        %v4894 = vpop.f32.mrb[0].mxu0
        %v4895 = vadd.f32 0.0, %v4894
        %v4896 = vpop.f32.mrb[0].mxu0
        %v4897 = vadd.f32 0.0, %v4896
        %v4898 = vpop.f32.mrb[0].mxu0
        %v4899 = vpop.f32.mrb[0].mxu0
        %4900 = vdwg.mxu0
        %4901 = vmatprep.subr.bf16.mxu0 %v4811
        %4902 = vmatpush1.bf16.msra.mxu0 %v4808
        %4903 = vmatprep.subr.bf16.mxu0 0
        %4904 = vmatpush1.bf16.msra.mxu0 0
        %4905 = vmatprep.subr.bf16.mxu0 0
        %4906 = vmatpush1.bf16.msra.mxu0 0
        %4907 = vmatprep.subr.bf16.mxu0 0
        %4908 = vmatpush1.bf16.msra.mxu0 0
        %4909 = vmatprep.subr.bf16.mxu0 0
        %4910 = vmatpush1.bf16.msra.mxu0 0
        %4911 = vmatprep.subr.bf16.mxu0 0
        %4912 = vmatpush1.bf16.msra.mxu0 0
        %4913 = vmatprep.subr.bf16.mxu0 0
        %4914 = vmatpush1.bf16.msra.mxu0 0
        %4915 = vmatprep.subr.bf16.mxu0 0
        %4916 = vmatpush1.bf16.msra.mxu0 0
        %4917 = vmatprep.subr.bf16.mxu0 0
        %4918 = vmatpush1.bf16.msra.mxu0 0
        %4919 = vmatprep.subr.bf16.mxu0 0
        %4920 = vmatpush1.bf16.msra.mxu0 0
        %4921 = vmatprep.subr.bf16.mxu0 0
        %4922 = vmatpush1.bf16.msra.mxu0 0
        %4923 = vmatprep.subr.bf16.mxu0 0
        %4924 = vmatpush1.bf16.msra.mxu0 0
        %4925 = vmatprep.subr.bf16.mxu0 0
        %4926 = vmatpush1.bf16.msra.mxu0 0
        %4927 = vmatprep.subr.bf16.mxu0 0
        %4928 = vmatpush1.bf16.msra.mxu0 0
        %4929 = vmatprep.subr.bf16.mxu0 0
        %4930 = vmatpush1.bf16.msra.mxu0 0
        %4931 = vmatprep.subr.bf16.mxu0 0
        %4932 = vmatpush1.bf16.msra.mxu0 0
        %4933 = vmatprep.mubr.bf16.mxu0 0
        %4934 = vmatmul.mubr.bf16.gmra.mrb[0].mxu0 %v4793
        %v4935 = vpop.f32.mrb[0].mxu0
        %v4936 = vadd.f32 0.0, %v4935
        %v4937 = vpop.f32.mrb[0].mxu0
        %v4938 = vadd.f32 0.0, %v4937
        %v4939 = vpop.f32.mrb[0].mxu0
        %v4940 = vpop.f32.mrb[0].mxu0
        %4941 = vdwg.mxu0
        %4942 = vmatprep.subr.bf16.mxu0 %v4817
        %4943 = vmatpush1.bf16.msra.mxu0 %v4814
        %4944 = vmatprep.subr.bf16.mxu0 0
        %4945 = vmatpush1.bf16.msra.mxu0 0
        %4946 = vmatprep.subr.bf16.mxu0 0
        %4947 = vmatpush1.bf16.msra.mxu0 0
        %4948 = vmatprep.subr.bf16.mxu0 0
        %4949 = vmatpush1.bf16.msra.mxu0 0
        %4950 = vmatprep.subr.bf16.mxu0 0
        %4951 = vmatpush1.bf16.msra.mxu0 0
        %4952 = vmatprep.subr.bf16.mxu0 0
        %4953 = vmatpush1.bf16.msra.mxu0 0
        %4954 = vmatprep.subr.bf16.mxu0 0
        %4955 = vmatpush1.bf16.msra.mxu0 0
        %4956 = vmatprep.subr.bf16.mxu0 0
        %4957 = vmatpush1.bf16.msra.mxu0 0
        %4958 = vmatprep.subr.bf16.mxu0 0
        %4959 = vmatpush1.bf16.msra.mxu0 0
        %4960 = vmatprep.subr.bf16.mxu0 0
        %4961 = vmatpush1.bf16.msra.mxu0 0
        %4962 = vmatprep.subr.bf16.mxu0 0
        %4963 = vmatpush1.bf16.msra.mxu0 0
        %4964 = vmatprep.subr.bf16.mxu0 0
        %4965 = vmatpush1.bf16.msra.mxu0 0
        %4966 = vmatprep.subr.bf16.mxu0 0
        %4967 = vmatpush1.bf16.msra.mxu0 0
        %4968 = vmatprep.subr.bf16.mxu0 0
        %4969 = vmatpush1.bf16.msra.mxu0 0
        %4970 = vmatprep.subr.bf16.mxu0 0
        %4971 = vmatpush1.bf16.msra.mxu0 0
        %4972 = vmatprep.subr.bf16.mxu0 0
        %4973 = vmatpush1.bf16.msra.mxu0 0
        %4974 = vmatprep.mubr.bf16.mxu0 0
        %4975 = vmatmul.mubr.bf16.gmra.mrb[0].mxu0 %v4793
        %v4976 = vpop.f32.mrb[0].mxu0
        %v4977 = vadd.f32 0.0, %v4976
        %v4978 = vpop.f32.mrb[0].mxu0
        %v4979 = vadd.f32 0.0, %v4978
        %v4980 = vpop.f32.mrb[0].mxu0
        %v4981 = vpop.f32.mrb[0].mxu0
        %4982 = vdwg.mxu0
        %v4983 = vadd.f32 %v4708, %v4854
        %v4984 = vadd.f32 %v4709, %v4856
        %v4985 = vadd.f32 %v4710, %v4895
        %v4986 = vadd.f32 %v4711, %v4897
        %v4987 = vadd.f32 %v4712, %v4936
        %v4988 = vadd.f32 %v4713, %v4938
        %v4989 = vadd.f32 %v4714, %v4977
        %v4990 = vadd.f32 %v4715, %v4979
        %v4991 = vld [vmem:[#allocation2] sm:$0xff]
        %v4992 = vld [vmem:[#allocation2 + $0x8] sm:$0xff]
        %v4993 = vld [vmem:[#allocation2 + $0x10] sm:$0x3]
        %s4994 = scalar_lea.vmem %s0, 68
        %v4995 = vld [vmem:[%s4994] sm:$0xf]
        %v4999 = vcombine.high %v4991, %v4991
        %v5001 = vunpack.c.l.s4 1983009808
        %v5002 = vunpack.c.0.s8 %v5001
        %v5003 = vlaneseq
        %v5004 = vshrl.u32 %v5003, 7
        %v5005 = vsub.s32 %v5002, %v5004
        %v5006 = vrot.slane %v4991, %v5005
        %v5008 = vunpack.c.l.s4 1983009808
        %v5009 = vunpack.c.0.s8 %v5008
        %v5010 = vlaneseq
        %v5011 = vshrl.u32 %v5010, 7
        %v5012 = vsub.s32 %v5009, %v5011
        %v5013 = vrot.slane %v4999, %v5012
        %v5014 = vcombine.high %v5006, %v5006
        %v5015 = vcombine.high %v5013, %v5013
        %v5016 = vcombine.high %v4992, %v4992
        %v5018 = vunpack.c.l.s4 1983009808
        %v5019 = vunpack.c.0.s8 %v5018
        %v5020 = vlaneseq
        %v5021 = vshrl.u32 %v5020, 7
        %v5022 = vsub.s32 %v5019, %v5021
        %v5023 = vrot.slane %v4992, %v5022
        %v5025 = vunpack.c.l.s4 1983009808
        %v5026 = vunpack.c.0.s8 %v5025
        %v5027 = vlaneseq
        %v5028 = vshrl.u32 %v5027, 7
        %v5029 = vsub.s32 %v5026, %v5028
        %v5030 = vrot.slane %v5016, %v5029
        %v5031 = vcombine.high %v5023, %v5023
        %v5032 = vcombine.high %v5030, %v5030
        %v5034 = vunpack.c.l.s4 1983009808
        %v5035 = vunpack.c.0.s8 %v5034
        %v5036 = vlaneseq
        %v5037 = vshrl.u32 %v5036, 7
        %v5038 = vsub.s32 %v5035, %v5037
        %v5039 = vrot.slane %v4993, %v5038
        %5040 = vrot.lane.b32.xlu0 %v5006, 6
        %v5041 = vpop.permute.xlu0 %5040
        %5042 = vrot.lane.b32.xlu0 %v5014, 6
        %v5043 = vpop.permute.xlu0 %5042
        %5044 = vrot.lane.b32.xlu0 %v5013, 6
        %v5045 = vpop.permute.xlu0 %5044
        %5046 = vrot.lane.b32.xlu0 %v5015, 6
        %v5047 = vpop.permute.xlu0 %5046
        %5048 = vrot.lane.b32.xlu0 %v5023, 6
        %v5049 = vpop.permute.xlu0 %5048
        %5050 = vrot.lane.b32.xlu0 %v5031, 6
        %v5051 = vpop.permute.xlu0 %5050
        %5052 = vrot.lane.b32.xlu0 %v5030, 6
        %v5053 = vpop.permute.xlu0 %5052
        %5054 = vrot.lane.b32.xlu0 %v5032, 6
        %v5055 = vpop.permute.xlu0 %5054
        %5056 = vrot.lane.b32.xlu0 %v5039, 6
        %v5057 = vpop.permute.xlu0 %5056
        %vm5058 = vcmask 48128
        %v5059 = vsel %vm5058, %v5041, %v5043
        %v5060 = vsel %vm5058, %v5043, %v5045
        %v5061 = vsel %vm5058, %v5045, %v5047
        %v5062 = vsel %vm5058, %v5047, %v5049
        %v5063 = vsel %vm5058, %v5049, %v5051
        %v5064 = vsel %vm5058, %v5051, %v5053
        %v5065 = vsel %vm5058, %v5053, %v5055
        %v5066 = vsel %vm5058, %v5055, %v5057
        %v5068 = vsel %vm482, %v4995, 0
        %v5071 = vsel %vm486, %v5059, 0
        %v5074 = vsel %vm486, %v5060, 0
        %v5077 = vsel %vm486, %v5061, 0
        %v5080 = vsel %vm486, %v5062, 0
        %v5083 = vsel %vm486, %v5063, 0
        %v5086 = vsel %vm486, %v5064, 0
        %v5089 = vsel %vm486, %v5065, 0
        %v5092 = vsel %vm486, %v5066, 0
        %5094 = vmatprep.subr.bf16.mxu0 %v5074
        %5095 = vmatpush1.bf16.msra.mxu0 %v5071
        %5096 = vmatprep.subr.bf16.mxu0 0
        %5097 = vmatpush1.bf16.msra.mxu0 0
        %5098 = vmatprep.subr.bf16.mxu0 0
        %5099 = vmatpush1.bf16.msra.mxu0 0
        %5100 = vmatprep.subr.bf16.mxu0 0
        %5101 = vmatpush1.bf16.msra.mxu0 0
        %5102 = vmatprep.subr.bf16.mxu0 0
        %5103 = vmatpush1.bf16.msra.mxu0 0
        %5104 = vmatprep.subr.bf16.mxu0 0
        %5105 = vmatpush1.bf16.msra.mxu0 0
        %5106 = vmatprep.subr.bf16.mxu0 0
        %5107 = vmatpush1.bf16.msra.mxu0 0
        %5108 = vmatprep.subr.bf16.mxu0 0
        %5109 = vmatpush1.bf16.msra.mxu0 0
        %5110 = vmatprep.subr.bf16.mxu0 0
        %5111 = vmatpush1.bf16.msra.mxu0 0
        %5112 = vmatprep.subr.bf16.mxu0 0
        %5113 = vmatpush1.bf16.msra.mxu0 0
        %5114 = vmatprep.subr.bf16.mxu0 0
        %5115 = vmatpush1.bf16.msra.mxu0 0
        %5116 = vmatprep.subr.bf16.mxu0 0
        %5117 = vmatpush1.bf16.msra.mxu0 0
        %5118 = vmatprep.subr.bf16.mxu0 0
        %5119 = vmatpush1.bf16.msra.mxu0 0
        %5120 = vmatprep.subr.bf16.mxu0 0
        %5121 = vmatpush1.bf16.msra.mxu0 0
        %5122 = vmatprep.subr.bf16.mxu0 0
        %5123 = vmatpush1.bf16.msra.mxu0 0
        %5124 = vmatprep.subr.bf16.mxu0 0
        %5125 = vmatpush1.bf16.msra.mxu0 0
        %5126 = vmatprep.mubr.bf16.mxu0 0
        %5127 = vmatmul.mubr.bf16.gmra.mrb[0].mxu0 %v5068
        %v5128 = vpop.f32.mrb[0].mxu0
        %v5129 = vadd.f32 0.0, %v5128
        %v5130 = vpop.f32.mrb[0].mxu0
        %v5131 = vadd.f32 0.0, %v5130
        %v5132 = vpop.f32.mrb[0].mxu0
        %v5133 = vpop.f32.mrb[0].mxu0
        %5134 = vdwg.mxu0
        %5135 = vmatprep.subr.bf16.mxu0 %v5080
        %5136 = vmatpush1.bf16.msra.mxu0 %v5077
        %5137 = vmatprep.subr.bf16.mxu0 0
        %5138 = vmatpush1.bf16.msra.mxu0 0
        %5139 = vmatprep.subr.bf16.mxu0 0
        %5140 = vmatpush1.bf16.msra.mxu0 0
        %5141 = vmatprep.subr.bf16.mxu0 0
        %5142 = vmatpush1.bf16.msra.mxu0 0
        %5143 = vmatprep.subr.bf16.mxu0 0
        %5144 = vmatpush1.bf16.msra.mxu0 0
        %5145 = vmatprep.subr.bf16.mxu0 0
        %5146 = vmatpush1.bf16.msra.mxu0 0
        %5147 = vmatprep.subr.bf16.mxu0 0
        %5148 = vmatpush1.bf16.msra.mxu0 0
        %5149 = vmatprep.subr.bf16.mxu0 0
        %5150 = vmatpush1.bf16.msra.mxu0 0
        %5151 = vmatprep.subr.bf16.mxu0 0
        %5152 = vmatpush1.bf16.msra.mxu0 0
        %5153 = vmatprep.subr.bf16.mxu0 0
        %5154 = vmatpush1.bf16.msra.mxu0 0
        %5155 = vmatprep.subr.bf16.mxu0 0
        %5156 = vmatpush1.bf16.msra.mxu0 0
        %5157 = vmatprep.subr.bf16.mxu0 0
        %5158 = vmatpush1.bf16.msra.mxu0 0
        %5159 = vmatprep.subr.bf16.mxu0 0
        %5160 = vmatpush1.bf16.msra.mxu0 0
        %5161 = vmatprep.subr.bf16.mxu0 0
        %5162 = vmatpush1.bf16.msra.mxu0 0
        %5163 = vmatprep.subr.bf16.mxu0 0
        %5164 = vmatpush1.bf16.msra.mxu0 0
        %5165 = vmatprep.subr.bf16.mxu0 0
        %5166 = vmatpush1.bf16.msra.mxu0 0
        %5167 = vmatprep.mubr.bf16.mxu0 0
        %5168 = vmatmul.mubr.bf16.gmra.mrb[0].mxu0 %v5068
        %v5169 = vpop.f32.mrb[0].mxu0
        %v5170 = vadd.f32 0.0, %v5169
        %v5171 = vpop.f32.mrb[0].mxu0
        %v5172 = vadd.f32 0.0, %v5171
        %v5173 = vpop.f32.mrb[0].mxu0
        %v5174 = vpop.f32.mrb[0].mxu0
        %5175 = vdwg.mxu0
        %5176 = vmatprep.subr.bf16.mxu0 %v5086
        %5177 = vmatpush1.bf16.msra.mxu0 %v5083
        %5178 = vmatprep.subr.bf16.mxu0 0
        %5179 = vmatpush1.bf16.msra.mxu0 0
        %5180 = vmatprep.subr.bf16.mxu0 0
        %5181 = vmatpush1.bf16.msra.mxu0 0
        %5182 = vmatprep.subr.bf16.mxu0 0
        %5183 = vmatpush1.bf16.msra.mxu0 0
        %5184 = vmatprep.subr.bf16.mxu0 0
        %5185 = vmatpush1.bf16.msra.mxu0 0
        %5186 = vmatprep.subr.bf16.mxu0 0
        %5187 = vmatpush1.bf16.msra.mxu0 0
        %5188 = vmatprep.subr.bf16.mxu0 0
        %5189 = vmatpush1.bf16.msra.mxu0 0
        %5190 = vmatprep.subr.bf16.mxu0 0
        %5191 = vmatpush1.bf16.msra.mxu0 0
        %5192 = vmatprep.subr.bf16.mxu0 0
        %5193 = vmatpush1.bf16.msra.mxu0 0
        %5194 = vmatprep.subr.bf16.mxu0 0
        %5195 = vmatpush1.bf16.msra.mxu0 0
        %5196 = vmatprep.subr.bf16.mxu0 0
        %5197 = vmatpush1.bf16.msra.mxu0 0
        %5198 = vmatprep.subr.bf16.mxu0 0
        %5199 = vmatpush1.bf16.msra.mxu0 0
        %5200 = vmatprep.subr.bf16.mxu0 0
        %5201 = vmatpush1.bf16.msra.mxu0 0
        %5202 = vmatprep.subr.bf16.mxu0 0
        %5203 = vmatpush1.bf16.msra.mxu0 0
        %5204 = vmatprep.subr.bf16.mxu0 0
        %5205 = vmatpush1.bf16.msra.mxu0 0
        %5206 = vmatprep.subr.bf16.mxu0 0
        %5207 = vmatpush1.bf16.msra.mxu0 0
        %5208 = vmatprep.mubr.bf16.mxu0 0
        %5209 = vmatmul.mubr.bf16.gmra.mrb[0].mxu0 %v5068
        %v5210 = vpop.f32.mrb[0].mxu0
        %v5211 = vadd.f32 0.0, %v5210
        %v5212 = vpop.f32.mrb[0].mxu0
        %v5213 = vadd.f32 0.0, %v5212
        %v5214 = vpop.f32.mrb[0].mxu0
        %v5215 = vpop.f32.mrb[0].mxu0
        %5216 = vdwg.mxu0
        %5217 = vmatprep.subr.bf16.mxu0 %v5092
        %5218 = vmatpush1.bf16.msra.mxu0 %v5089
        %5219 = vmatprep.subr.bf16.mxu0 0
        %5220 = vmatpush1.bf16.msra.mxu0 0
        %5221 = vmatprep.subr.bf16.mxu0 0
        %5222 = vmatpush1.bf16.msra.mxu0 0
        %5223 = vmatprep.subr.bf16.mxu0 0
        %5224 = vmatpush1.bf16.msra.mxu0 0
        %5225 = vmatprep.subr.bf16.mxu0 0
        %5226 = vmatpush1.bf16.msra.mxu0 0
        %5227 = vmatprep.subr.bf16.mxu0 0
        %5228 = vmatpush1.bf16.msra.mxu0 0
        %5229 = vmatprep.subr.bf16.mxu0 0
        %5230 = vmatpush1.bf16.msra.mxu0 0
        %5231 = vmatprep.subr.bf16.mxu0 0
        %5232 = vmatpush1.bf16.msra.mxu0 0
        %5233 = vmatprep.subr.bf16.mxu0 0
        %5234 = vmatpush1.bf16.msra.mxu0 0
        %5235 = vmatprep.subr.bf16.mxu0 0
        %5236 = vmatpush1.bf16.msra.mxu0 0
        %5237 = vmatprep.subr.bf16.mxu0 0
        %5238 = vmatpush1.bf16.msra.mxu0 0
        %5239 = vmatprep.subr.bf16.mxu0 0
        %5240 = vmatpush1.bf16.msra.mxu0 0
        %5241 = vmatprep.subr.bf16.mxu0 0
        %5242 = vmatpush1.bf16.msra.mxu0 0
        %5243 = vmatprep.subr.bf16.mxu0 0
        %5244 = vmatpush1.bf16.msra.mxu0 0
        %5245 = vmatprep.subr.bf16.mxu0 0
        %5246 = vmatpush1.bf16.msra.mxu0 0
        %5247 = vmatprep.subr.bf16.mxu0 0
        %5248 = vmatpush1.bf16.msra.mxu0 0
        %5249 = vmatprep.mubr.bf16.mxu0 0
        %5250 = vmatmul.mubr.bf16.gmra.mrb[0].mxu0 %v5068
        %v5251 = vpop.f32.mrb[0].mxu0
        %v5252 = vadd.f32 0.0, %v5251
        %v5253 = vpop.f32.mrb[0].mxu0
        %v5254 = vadd.f32 0.0, %v5253
        %v5255 = vpop.f32.mrb[0].mxu0
        %v5256 = vpop.f32.mrb[0].mxu0
        %5257 = vdwg.mxu0
        %v5258 = vadd.f32 %v4983, %v5129
        %v5259 = vadd.f32 %v4984, %v5131
        %v5260 = vadd.f32 %v4985, %v5170
        %v5261 = vadd.f32 %v4986, %v5172
        %v5262 = vadd.f32 %v4987, %v5211
        %v5263 = vadd.f32 %v4988, %v5213
        %v5264 = vadd.f32 %v4989, %v5252
        %v5265 = vadd.f32 %v4990, %v5254
        %v5266 = vld [vmem:[#allocation2 + $0x2] sm:$0xff]
        %v5267 = vld [vmem:[#allocation2 + $0xa] sm:$0xff]
        %v5268 = vld [vmem:[#allocation2 + $0x12] sm:$0x3]
        %s5269 = scalar_lea.vmem %s0, 72
        %v5270 = vld [vmem:[%s5269] sm:$0xf]
        %v5274 = vcombine.high %v5266, %v5266
        %v5276 = vunpack.c.l.s4 1983009808
        %v5277 = vunpack.c.0.s8 %v5276
        %v5278 = vlaneseq
        %v5279 = vshrl.u32 %v5278, 7
        %v5280 = vsub.s32 %v5277, %v5279
        %v5281 = vrot.slane %v5266, %v5280
        %v5283 = vunpack.c.l.s4 1983009808
        %v5284 = vunpack.c.0.s8 %v5283
        %v5285 = vlaneseq
        %v5286 = vshrl.u32 %v5285, 7
        %v5287 = vsub.s32 %v5284, %v5286
        %v5288 = vrot.slane %v5274, %v5287
        %v5289 = vcombine.high %v5281, %v5281
        %v5290 = vcombine.high %v5288, %v5288
        %v5291 = vcombine.high %v5267, %v5267
        %v5293 = vunpack.c.l.s4 1983009808
        %v5294 = vunpack.c.0.s8 %v5293
        %v5295 = vlaneseq
        %v5296 = vshrl.u32 %v5295, 7
        %v5297 = vsub.s32 %v5294, %v5296
        %v5298 = vrot.slane %v5267, %v5297
        %v5300 = vunpack.c.l.s4 1983009808
        %v5301 = vunpack.c.0.s8 %v5300
        %v5302 = vlaneseq
        %v5303 = vshrl.u32 %v5302, 7
        %v5304 = vsub.s32 %v5301, %v5303
        %v5305 = vrot.slane %v5291, %v5304
        %v5306 = vcombine.high %v5298, %v5298
        %v5307 = vcombine.high %v5305, %v5305
        %v5309 = vunpack.c.l.s4 1983009808
        %v5310 = vunpack.c.0.s8 %v5309
        %v5311 = vlaneseq
        %v5312 = vshrl.u32 %v5311, 7
        %v5313 = vsub.s32 %v5310, %v5312
        %v5314 = vrot.slane %v5268, %v5313
        %5315 = vrot.lane.b32.xlu0 %v5281, 56
        %v5316 = vpop.permute.xlu0 %5315
        %5317 = vrot.lane.b32.xlu0 %v5289, 56
        %v5318 = vpop.permute.xlu0 %5317
        %5319 = vrot.lane.b32.xlu0 %v5288, 56
        %v5320 = vpop.permute.xlu0 %5319
        %5321 = vrot.lane.b32.xlu0 %v5290, 56
        %v5322 = vpop.permute.xlu0 %5321
        %5323 = vrot.lane.b32.xlu0 %v5298, 56
        %v5324 = vpop.permute.xlu0 %5323
        %5325 = vrot.lane.b32.xlu0 %v5306, 56
        %v5326 = vpop.permute.xlu0 %5325
        %5327 = vrot.lane.b32.xlu0 %v5305, 56
        %v5328 = vpop.permute.xlu0 %5327
        %5329 = vrot.lane.b32.xlu0 %v5307, 56
        %v5330 = vpop.permute.xlu0 %5329
        %5331 = vrot.lane.b32.xlu0 %v5314, 56
        %v5332 = vpop.permute.xlu0 %5331
        %vm5333 = vcmask 457728
        %v5334 = vsel %vm5333, %v5316, %v5318
        %v5335 = vsel %vm5333, %v5318, %v5320
        %v5336 = vsel %vm5333, %v5320, %v5322
        %v5337 = vsel %vm5333, %v5322, %v5324
        %v5338 = vsel %vm5333, %v5324, %v5326
        %v5339 = vsel %vm5333, %v5326, %v5328
        %v5340 = vsel %vm5333, %v5328, %v5330
        %v5341 = vsel %vm5333, %v5330, %v5332
        %v5343 = vsel %vm482, %v5270, 0
        %v5346 = vsel %vm486, %v5334, 0
        %v5349 = vsel %vm486, %v5335, 0
        %v5352 = vsel %vm486, %v5336, 0
        %v5355 = vsel %vm486, %v5337, 0
        %v5358 = vsel %vm486, %v5338, 0
        %v5361 = vsel %vm486, %v5339, 0
        %v5364 = vsel %vm486, %v5340, 0
        %v5367 = vsel %vm486, %v5341, 0
        %5369 = vmatprep.subr.bf16.mxu0 %v5349
        %5370 = vmatpush1.bf16.msra.mxu0 %v5346
        %5371 = vmatprep.subr.bf16.mxu0 0
        %5372 = vmatpush1.bf16.msra.mxu0 0
        %5373 = vmatprep.subr.bf16.mxu0 0
        %5374 = vmatpush1.bf16.msra.mxu0 0
        %5375 = vmatprep.subr.bf16.mxu0 0
        %5376 = vmatpush1.bf16.msra.mxu0 0
        %5377 = vmatprep.subr.bf16.mxu0 0
        %5378 = vmatpush1.bf16.msra.mxu0 0
        %5379 = vmatprep.subr.bf16.mxu0 0
        %5380 = vmatpush1.bf16.msra.mxu0 0
        %5381 = vmatprep.subr.bf16.mxu0 0
        %5382 = vmatpush1.bf16.msra.mxu0 0
        %5383 = vmatprep.subr.bf16.mxu0 0
        %5384 = vmatpush1.bf16.msra.mxu0 0
        %5385 = vmatprep.subr.bf16.mxu0 0
        %5386 = vmatpush1.bf16.msra.mxu0 0
        %5387 = vmatprep.subr.bf16.mxu0 0
        %5388 = vmatpush1.bf16.msra.mxu0 0
        %5389 = vmatprep.subr.bf16.mxu0 0
        %5390 = vmatpush1.bf16.msra.mxu0 0
        %5391 = vmatprep.subr.bf16.mxu0 0
        %5392 = vmatpush1.bf16.msra.mxu0 0
        %5393 = vmatprep.subr.bf16.mxu0 0
        %5394 = vmatpush1.bf16.msra.mxu0 0
        %5395 = vmatprep.subr.bf16.mxu0 0
        %5396 = vmatpush1.bf16.msra.mxu0 0
        %5397 = vmatprep.subr.bf16.mxu0 0
        %5398 = vmatpush1.bf16.msra.mxu0 0
        %5399 = vmatprep.subr.bf16.mxu0 0
        %5400 = vmatpush1.bf16.msra.mxu0 0
        %5401 = vmatprep.mubr.bf16.mxu0 0
        %5402 = vmatmul.mubr.bf16.gmra.mrb[0].mxu0 %v5343
        %v5403 = vpop.f32.mrb[0].mxu0
        %v5404 = vadd.f32 0.0, %v5403
        %v5405 = vpop.f32.mrb[0].mxu0
        %v5406 = vadd.f32 0.0, %v5405
        %v5407 = vpop.f32.mrb[0].mxu0
        %v5408 = vpop.f32.mrb[0].mxu0
        %5409 = vdwg.mxu0
        %5410 = vmatprep.subr.bf16.mxu0 %v5355
        %5411 = vmatpush1.bf16.msra.mxu0 %v5352
        %5412 = vmatprep.subr.bf16.mxu0 0
        %5413 = vmatpush1.bf16.msra.mxu0 0
        %5414 = vmatprep.subr.bf16.mxu0 0
        %5415 = vmatpush1.bf16.msra.mxu0 0
        %5416 = vmatprep.subr.bf16.mxu0 0
        %5417 = vmatpush1.bf16.msra.mxu0 0
        %5418 = vmatprep.subr.bf16.mxu0 0
        %5419 = vmatpush1.bf16.msra.mxu0 0
        %5420 = vmatprep.subr.bf16.mxu0 0
        %5421 = vmatpush1.bf16.msra.mxu0 0
        %5422 = vmatprep.subr.bf16.mxu0 0
        %5423 = vmatpush1.bf16.msra.mxu0 0
        %5424 = vmatprep.subr.bf16.mxu0 0
        %5425 = vmatpush1.bf16.msra.mxu0 0
        %5426 = vmatprep.subr.bf16.mxu0 0
        %5427 = vmatpush1.bf16.msra.mxu0 0
        %5428 = vmatprep.subr.bf16.mxu0 0
        %5429 = vmatpush1.bf16.msra.mxu0 0
        %5430 = vmatprep.subr.bf16.mxu0 0
        %5431 = vmatpush1.bf16.msra.mxu0 0
        %5432 = vmatprep.subr.bf16.mxu0 0
        %5433 = vmatpush1.bf16.msra.mxu0 0
        %5434 = vmatprep.subr.bf16.mxu0 0
        %5435 = vmatpush1.bf16.msra.mxu0 0
        %5436 = vmatprep.subr.bf16.mxu0 0
        %5437 = vmatpush1.bf16.msra.mxu0 0
        %5438 = vmatprep.subr.bf16.mxu0 0
        %5439 = vmatpush1.bf16.msra.mxu0 0
        %5440 = vmatprep.subr.bf16.mxu0 0
        %5441 = vmatpush1.bf16.msra.mxu0 0
        %5442 = vmatprep.mubr.bf16.mxu0 0
        %5443 = vmatmul.mubr.bf16.gmra.mrb[0].mxu0 %v5343
        %v5444 = vpop.f32.mrb[0].mxu0
        %v5445 = vadd.f32 0.0, %v5444
        %v5446 = vpop.f32.mrb[0].mxu0
        %v5447 = vadd.f32 0.0, %v5446
        %v5448 = vpop.f32.mrb[0].mxu0
        %v5449 = vpop.f32.mrb[0].mxu0
        %5450 = vdwg.mxu0
        %5451 = vmatprep.subr.bf16.mxu0 %v5361
        %5452 = vmatpush1.bf16.msra.mxu0 %v5358
        %5453 = vmatprep.subr.bf16.mxu0 0
        %5454 = vmatpush1.bf16.msra.mxu0 0
        %5455 = vmatprep.subr.bf16.mxu0 0
        %5456 = vmatpush1.bf16.msra.mxu0 0
        %5457 = vmatprep.subr.bf16.mxu0 0
        %5458 = vmatpush1.bf16.msra.mxu0 0
        %5459 = vmatprep.subr.bf16.mxu0 0
        %5460 = vmatpush1.bf16.msra.mxu0 0
        %5461 = vmatprep.subr.bf16.mxu0 0
        %5462 = vmatpush1.bf16.msra.mxu0 0
        %5463 = vmatprep.subr.bf16.mxu0 0
        %5464 = vmatpush1.bf16.msra.mxu0 0
        %5465 = vmatprep.subr.bf16.mxu0 0
        %5466 = vmatpush1.bf16.msra.mxu0 0
        %5467 = vmatprep.subr.bf16.mxu0 0
        %5468 = vmatpush1.bf16.msra.mxu0 0
        %5469 = vmatprep.subr.bf16.mxu0 0
        %5470 = vmatpush1.bf16.msra.mxu0 0
        %5471 = vmatprep.subr.bf16.mxu0 0
        %5472 = vmatpush1.bf16.msra.mxu0 0
        %5473 = vmatprep.subr.bf16.mxu0 0
        %5474 = vmatpush1.bf16.msra.mxu0 0
        %5475 = vmatprep.subr.bf16.mxu0 0
        %5476 = vmatpush1.bf16.msra.mxu0 0
        %5477 = vmatprep.subr.bf16.mxu0 0
        %5478 = vmatpush1.bf16.msra.mxu0 0
        %5479 = vmatprep.subr.bf16.mxu0 0
        %5480 = vmatpush1.bf16.msra.mxu0 0
        %5481 = vmatprep.subr.bf16.mxu0 0
        %5482 = vmatpush1.bf16.msra.mxu0 0
        %5483 = vmatprep.mubr.bf16.mxu0 0
        %5484 = vmatmul.mubr.bf16.gmra.mrb[0].mxu0 %v5343
        %v5485 = vpop.f32.mrb[0].mxu0
        %v5486 = vadd.f32 0.0, %v5485
        %v5487 = vpop.f32.mrb[0].mxu0
        %v5488 = vadd.f32 0.0, %v5487
        %v5489 = vpop.f32.mrb[0].mxu0
        %v5490 = vpop.f32.mrb[0].mxu0
        %5491 = vdwg.mxu0
        %5492 = vmatprep.subr.bf16.mxu0 %v5367
        %5493 = vmatpush1.bf16.msra.mxu0 %v5364
        %5494 = vmatprep.subr.bf16.mxu0 0
        %5495 = vmatpush1.bf16.msra.mxu0 0
        %5496 = vmatprep.subr.bf16.mxu0 0
        %5497 = vmatpush1.bf16.msra.mxu0 0
        %5498 = vmatprep.subr.bf16.mxu0 0
        %5499 = vmatpush1.bf16.msra.mxu0 0
        %5500 = vmatprep.subr.bf16.mxu0 0
        %5501 = vmatpush1.bf16.msra.mxu0 0
        %5502 = vmatprep.subr.bf16.mxu0 0
        %5503 = vmatpush1.bf16.msra.mxu0 0
        %5504 = vmatprep.subr.bf16.mxu0 0
        %5505 = vmatpush1.bf16.msra.mxu0 0
        %5506 = vmatprep.subr.bf16.mxu0 0
        %5507 = vmatpush1.bf16.msra.mxu0 0
        %5508 = vmatprep.subr.bf16.mxu0 0
        %5509 = vmatpush1.bf16.msra.mxu0 0
        %5510 = vmatprep.subr.bf16.mxu0 0
        %5511 = vmatpush1.bf16.msra.mxu0 0
        %5512 = vmatprep.subr.bf16.mxu0 0
        %5513 = vmatpush1.bf16.msra.mxu0 0
        %5514 = vmatprep.subr.bf16.mxu0 0
        %5515 = vmatpush1.bf16.msra.mxu0 0
        %5516 = vmatprep.subr.bf16.mxu0 0
        %5517 = vmatpush1.bf16.msra.mxu0 0
        %5518 = vmatprep.subr.bf16.mxu0 0
        %5519 = vmatpush1.bf16.msra.mxu0 0
        %5520 = vmatprep.subr.bf16.mxu0 0
        %5521 = vmatpush1.bf16.msra.mxu0 0
        %5522 = vmatprep.subr.bf16.mxu0 0
        %5523 = vmatpush1.bf16.msra.mxu0 0
        %5524 = vmatprep.mubr.bf16.mxu0 0
        %5525 = vmatmul.mubr.bf16.gmra.mrb[0].mxu0 %v5343
        %v5526 = vpop.f32.mrb[0].mxu0
        %v5527 = vadd.f32 0.0, %v5526
        %v5528 = vpop.f32.mrb[0].mxu0
        %v5529 = vadd.f32 0.0, %v5528
        %v5530 = vpop.f32.mrb[0].mxu0
        %v5531 = vpop.f32.mrb[0].mxu0
        %5532 = vdwg.mxu0
        %v5533 = vadd.f32 %v5258, %v5404
        %v5534 = vadd.f32 %v5259, %v5406
        %v5535 = vadd.f32 %v5260, %v5445
        %v5536 = vadd.f32 %v5261, %v5447
        %v5537 = vadd.f32 %v5262, %v5486
        %v5538 = vadd.f32 %v5263, %v5488
        %v5539 = vadd.f32 %v5264, %v5527
        %v5540 = vadd.f32 %v5265, %v5529
        %v5541 = vld [vmem:[#allocation2 + $0x2] sm:$0xff]
        %v5542 = vld [vmem:[#allocation2 + $0xa] sm:$0xff]
        %v5543 = vld [vmem:[#allocation2 + $0x12] sm:$0x3]
        %s5544 = scalar_lea.vmem %s0, 76
        %v5545 = vld [vmem:[%s5544] sm:$0xf]
        %v5549 = vcombine.high %v5541, %v5541
        %v5551 = vunpack.c.l.s4 1983009808
        %v5552 = vunpack.c.0.s8 %v5551
        %v5553 = vlaneseq
        %v5554 = vshrl.u32 %v5553, 7
        %v5555 = vsub.s32 %v5552, %v5554
        %v5556 = vrot.slane %v5541, %v5555
        %v5558 = vunpack.c.l.s4 1983009808
        %v5559 = vunpack.c.0.s8 %v5558
        %v5560 = vlaneseq
        %v5561 = vshrl.u32 %v5560, 7
        %v5562 = vsub.s32 %v5559, %v5561
        %v5563 = vrot.slane %v5549, %v5562
        %v5564 = vcombine.high %v5556, %v5556
        %v5565 = vcombine.high %v5563, %v5563
        %v5566 = vcombine.high %v5542, %v5542
        %v5568 = vunpack.c.l.s4 1983009808
        %v5569 = vunpack.c.0.s8 %v5568
        %v5570 = vlaneseq
        %v5571 = vshrl.u32 %v5570, 7
        %v5572 = vsub.s32 %v5569, %v5571
        %v5573 = vrot.slane %v5542, %v5572
        %v5575 = vunpack.c.l.s4 1983009808
        %v5576 = vunpack.c.0.s8 %v5575
        %v5577 = vlaneseq
        %v5578 = vshrl.u32 %v5577, 7
        %v5579 = vsub.s32 %v5576, %v5578
        %v5580 = vrot.slane %v5566, %v5579
        %v5581 = vcombine.high %v5573, %v5573
        %v5582 = vcombine.high %v5580, %v5580
        %v5584 = vunpack.c.l.s4 1983009808
        %v5585 = vunpack.c.0.s8 %v5584
        %v5586 = vlaneseq
        %v5587 = vshrl.u32 %v5586, 7
        %v5588 = vsub.s32 %v5585, %v5587
        %v5589 = vrot.slane %v5543, %v5588
        %5590 = vrot.lane.b32.xlu0 %v5556, 55
        %v5591 = vpop.permute.xlu0 %5590
        %5592 = vrot.lane.b32.xlu0 %v5564, 55
        %v5593 = vpop.permute.xlu0 %5592
        %5594 = vrot.lane.b32.xlu0 %v5563, 55
        %v5595 = vpop.permute.xlu0 %5594
        %5596 = vrot.lane.b32.xlu0 %v5565, 55
        %v5597 = vpop.permute.xlu0 %5596
        %5598 = vrot.lane.b32.xlu0 %v5573, 55
        %v5599 = vpop.permute.xlu0 %5598
        %5600 = vrot.lane.b32.xlu0 %v5581, 55
        %v5601 = vpop.permute.xlu0 %5600
        %5602 = vrot.lane.b32.xlu0 %v5580, 55
        %v5603 = vpop.permute.xlu0 %5602
        %5604 = vrot.lane.b32.xlu0 %v5582, 55
        %v5605 = vpop.permute.xlu0 %5604
        %5606 = vrot.lane.b32.xlu0 %v5589, 55
        %v5607 = vpop.permute.xlu0 %5606
        %vm5608 = vcmask 449536
        %v5609 = vsel %vm5608, %v5591, %v5593
        %v5610 = vsel %vm5608, %v5593, %v5595
        %v5611 = vsel %vm5608, %v5595, %v5597
        %v5612 = vsel %vm5608, %v5597, %v5599
        %v5613 = vsel %vm5608, %v5599, %v5601
        %v5614 = vsel %vm5608, %v5601, %v5603
        %v5615 = vsel %vm5608, %v5603, %v5605
        %v5616 = vsel %vm5608, %v5605, %v5607
        %v5618 = vsel %vm482, %v5545, 0
        %v5621 = vsel %vm486, %v5609, 0
        %v5624 = vsel %vm486, %v5610, 0
        %v5627 = vsel %vm486, %v5611, 0
        %v5630 = vsel %vm486, %v5612, 0
        %v5633 = vsel %vm486, %v5613, 0
        %v5636 = vsel %vm486, %v5614, 0
        %v5639 = vsel %vm486, %v5615, 0
        %v5642 = vsel %vm486, %v5616, 0
        %5644 = vmatprep.subr.bf16.mxu0 %v5624
        %5645 = vmatpush1.bf16.msra.mxu0 %v5621
        %5646 = vmatprep.subr.bf16.mxu0 0
        %5647 = vmatpush1.bf16.msra.mxu0 0
        %5648 = vmatprep.subr.bf16.mxu0 0
        %5649 = vmatpush1.bf16.msra.mxu0 0
        %5650 = vmatprep.subr.bf16.mxu0 0
        %5651 = vmatpush1.bf16.msra.mxu0 0
        %5652 = vmatprep.subr.bf16.mxu0 0
        %5653 = vmatpush1.bf16.msra.mxu0 0
        %5654 = vmatprep.subr.bf16.mxu0 0
        %5655 = vmatpush1.bf16.msra.mxu0 0
        %5656 = vmatprep.subr.bf16.mxu0 0
        %5657 = vmatpush1.bf16.msra.mxu0 0
        %5658 = vmatprep.subr.bf16.mxu0 0
        %5659 = vmatpush1.bf16.msra.mxu0 0
        %5660 = vmatprep.subr.bf16.mxu0 0
        %5661 = vmatpush1.bf16.msra.mxu0 0
        %5662 = vmatprep.subr.bf16.mxu0 0
        %5663 = vmatpush1.bf16.msra.mxu0 0
        %5664 = vmatprep.subr.bf16.mxu0 0
        %5665 = vmatpush1.bf16.msra.mxu0 0
        %5666 = vmatprep.subr.bf16.mxu0 0
        %5667 = vmatpush1.bf16.msra.mxu0 0
        %5668 = vmatprep.subr.bf16.mxu0 0
        %5669 = vmatpush1.bf16.msra.mxu0 0
        %5670 = vmatprep.subr.bf16.mxu0 0
        %5671 = vmatpush1.bf16.msra.mxu0 0
        %5672 = vmatprep.subr.bf16.mxu0 0
        %5673 = vmatpush1.bf16.msra.mxu0 0
        %5674 = vmatprep.subr.bf16.mxu0 0
        %5675 = vmatpush1.bf16.msra.mxu0 0
        %5676 = vmatprep.mubr.bf16.mxu0 0
        %5677 = vmatmul.mubr.bf16.gmra.mrb[0].mxu0 %v5618
        %v5678 = vpop.f32.mrb[0].mxu0
        %v5679 = vadd.f32 0.0, %v5678
        %v5680 = vpop.f32.mrb[0].mxu0
        %v5681 = vadd.f32 0.0, %v5680
        %v5682 = vpop.f32.mrb[0].mxu0
        %v5683 = vpop.f32.mrb[0].mxu0
        %5684 = vdwg.mxu0
        %5685 = vmatprep.subr.bf16.mxu0 %v5630
        %5686 = vmatpush1.bf16.msra.mxu0 %v5627
        %5687 = vmatprep.subr.bf16.mxu0 0
        %5688 = vmatpush1.bf16.msra.mxu0 0
        %5689 = vmatprep.subr.bf16.mxu0 0
        %5690 = vmatpush1.bf16.msra.mxu0 0
        %5691 = vmatprep.subr.bf16.mxu0 0
        %5692 = vmatpush1.bf16.msra.mxu0 0
        %5693 = vmatprep.subr.bf16.mxu0 0
        %5694 = vmatpush1.bf16.msra.mxu0 0
        %5695 = vmatprep.subr.bf16.mxu0 0
        %5696 = vmatpush1.bf16.msra.mxu0 0
        %5697 = vmatprep.subr.bf16.mxu0 0
        %5698 = vmatpush1.bf16.msra.mxu0 0
        %5699 = vmatprep.subr.bf16.mxu0 0
        %5700 = vmatpush1.bf16.msra.mxu0 0
        %5701 = vmatprep.subr.bf16.mxu0 0
        %5702 = vmatpush1.bf16.msra.mxu0 0
        %5703 = vmatprep.subr.bf16.mxu0 0
        %5704 = vmatpush1.bf16.msra.mxu0 0
        %5705 = vmatprep.subr.bf16.mxu0 0
        %5706 = vmatpush1.bf16.msra.mxu0 0
        %5707 = vmatprep.subr.bf16.mxu0 0
        %5708 = vmatpush1.bf16.msra.mxu0 0
        %5709 = vmatprep.subr.bf16.mxu0 0
        %5710 = vmatpush1.bf16.msra.mxu0 0
        %5711 = vmatprep.subr.bf16.mxu0 0
        %5712 = vmatpush1.bf16.msra.mxu0 0
        %5713 = vmatprep.subr.bf16.mxu0 0
        %5714 = vmatpush1.bf16.msra.mxu0 0
        %5715 = vmatprep.subr.bf16.mxu0 0
        %5716 = vmatpush1.bf16.msra.mxu0 0
        %5717 = vmatprep.mubr.bf16.mxu0 0
        %5718 = vmatmul.mubr.bf16.gmra.mrb[0].mxu0 %v5618
        %v5719 = vpop.f32.mrb[0].mxu0
        %v5720 = vadd.f32 0.0, %v5719
        %v5721 = vpop.f32.mrb[0].mxu0
        %v5722 = vadd.f32 0.0, %v5721
        %v5723 = vpop.f32.mrb[0].mxu0
        %v5724 = vpop.f32.mrb[0].mxu0
        %5725 = vdwg.mxu0
        %5726 = vmatprep.subr.bf16.mxu0 %v5636
        %5727 = vmatpush1.bf16.msra.mxu0 %v5633
        %5728 = vmatprep.subr.bf16.mxu0 0
        %5729 = vmatpush1.bf16.msra.mxu0 0
        %5730 = vmatprep.subr.bf16.mxu0 0
        %5731 = vmatpush1.bf16.msra.mxu0 0
        %5732 = vmatprep.subr.bf16.mxu0 0
        %5733 = vmatpush1.bf16.msra.mxu0 0
        %5734 = vmatprep.subr.bf16.mxu0 0
        %5735 = vmatpush1.bf16.msra.mxu0 0
        %5736 = vmatprep.subr.bf16.mxu0 0
        %5737 = vmatpush1.bf16.msra.mxu0 0
        %5738 = vmatprep.subr.bf16.mxu0 0
        %5739 = vmatpush1.bf16.msra.mxu0 0
        %5740 = vmatprep.subr.bf16.mxu0 0
        %5741 = vmatpush1.bf16.msra.mxu0 0
        %5742 = vmatprep.subr.bf16.mxu0 0
        %5743 = vmatpush1.bf16.msra.mxu0 0
        %5744 = vmatprep.subr.bf16.mxu0 0
        %5745 = vmatpush1.bf16.msra.mxu0 0
        %5746 = vmatprep.subr.bf16.mxu0 0
        %5747 = vmatpush1.bf16.msra.mxu0 0
        %5748 = vmatprep.subr.bf16.mxu0 0
        %5749 = vmatpush1.bf16.msra.mxu0 0
        %5750 = vmatprep.subr.bf16.mxu0 0
        %5751 = vmatpush1.bf16.msra.mxu0 0
        %5752 = vmatprep.subr.bf16.mxu0 0
        %5753 = vmatpush1.bf16.msra.mxu0 0
        %5754 = vmatprep.subr.bf16.mxu0 0
        %5755 = vmatpush1.bf16.msra.mxu0 0
        %5756 = vmatprep.subr.bf16.mxu0 0
        %5757 = vmatpush1.bf16.msra.mxu0 0
        %5758 = vmatprep.mubr.bf16.mxu0 0
        %5759 = vmatmul.mubr.bf16.gmra.mrb[0].mxu0 %v5618
        %v5760 = vpop.f32.mrb[0].mxu0
        %v5761 = vadd.f32 0.0, %v5760
        %v5762 = vpop.f32.mrb[0].mxu0
        %v5763 = vadd.f32 0.0, %v5762
        %v5764 = vpop.f32.mrb[0].mxu0
        %v5765 = vpop.f32.mrb[0].mxu0
        %5766 = vdwg.mxu0
        %5767 = vmatprep.subr.bf16.mxu0 %v5642
        %5768 = vmatpush1.bf16.msra.mxu0 %v5639
        %5769 = vmatprep.subr.bf16.mxu0 0
        %5770 = vmatpush1.bf16.msra.mxu0 0
        %5771 = vmatprep.subr.bf16.mxu0 0
        %5772 = vmatpush1.bf16.msra.mxu0 0
        %5773 = vmatprep.subr.bf16.mxu0 0
        %5774 = vmatpush1.bf16.msra.mxu0 0
        %5775 = vmatprep.subr.bf16.mxu0 0
        %5776 = vmatpush1.bf16.msra.mxu0 0
        %5777 = vmatprep.subr.bf16.mxu0 0
        %5778 = vmatpush1.bf16.msra.mxu0 0
        %5779 = vmatprep.subr.bf16.mxu0 0
        %5780 = vmatpush1.bf16.msra.mxu0 0
        %5781 = vmatprep.subr.bf16.mxu0 0
        %5782 = vmatpush1.bf16.msra.mxu0 0
        %5783 = vmatprep.subr.bf16.mxu0 0
        %5784 = vmatpush1.bf16.msra.mxu0 0
        %5785 = vmatprep.subr.bf16.mxu0 0
        %5786 = vmatpush1.bf16.msra.mxu0 0
        %5787 = vmatprep.subr.bf16.mxu0 0
        %5788 = vmatpush1.bf16.msra.mxu0 0
        %5789 = vmatprep.subr.bf16.mxu0 0
        %5790 = vmatpush1.bf16.msra.mxu0 0
        %5791 = vmatprep.subr.bf16.mxu0 0
        %5792 = vmatpush1.bf16.msra.mxu0 0
        %5793 = vmatprep.subr.bf16.mxu0 0
        %5794 = vmatpush1.bf16.msra.mxu0 0
        %5795 = vmatprep.subr.bf16.mxu0 0
        %5796 = vmatpush1.bf16.msra.mxu0 0
        %5797 = vmatprep.subr.bf16.mxu0 0
        %5798 = vmatpush1.bf16.msra.mxu0 0
        %5799 = vmatprep.mubr.bf16.mxu0 0
        %5800 = vmatmul.mubr.bf16.gmra.mrb[0].mxu0 %v5618
        %v5801 = vpop.f32.mrb[0].mxu0
        %v5802 = vadd.f32 0.0, %v5801
        %v5803 = vpop.f32.mrb[0].mxu0
        %v5804 = vadd.f32 0.0, %v5803
        %v5805 = vpop.f32.mrb[0].mxu0
        %v5806 = vpop.f32.mrb[0].mxu0
        %5807 = vdwg.mxu0
        %v5808 = vadd.f32 %v5533, %v5679
        %v5809 = vadd.f32 %v5534, %v5681
        %v5810 = vadd.f32 %v5535, %v5720
        %v5811 = vadd.f32 %v5536, %v5722
        %v5812 = vadd.f32 %v5537, %v5761
        %v5813 = vadd.f32 %v5538, %v5763
        %v5814 = vadd.f32 %v5539, %v5802
        %v5815 = vadd.f32 %v5540, %v5804
        %v5816 = vld [vmem:[#allocation2 + $0x2] sm:$0xff]
        %v5817 = vld [vmem:[#allocation2 + $0xa] sm:$0xff]
        %v5818 = vld [vmem:[#allocation2 + $0x12] sm:$0x3]
        %s5819 = scalar_lea.vmem %s0, 80
        %v5820 = vld [vmem:[%s5819] sm:$0xf]
        %v5824 = vcombine.high %v5816, %v5816
        %v5826 = vunpack.c.l.s4 1983009808
        %v5827 = vunpack.c.0.s8 %v5826
        %v5828 = vlaneseq
        %v5829 = vshrl.u32 %v5828, 7
        %v5830 = vsub.s32 %v5827, %v5829
        %v5831 = vrot.slane %v5816, %v5830
        %v5833 = vunpack.c.l.s4 1983009808
        %v5834 = vunpack.c.0.s8 %v5833
        %v5835 = vlaneseq
        %v5836 = vshrl.u32 %v5835, 7
        %v5837 = vsub.s32 %v5834, %v5836
        %v5838 = vrot.slane %v5824, %v5837
        %v5839 = vcombine.high %v5831, %v5831
        %v5840 = vcombine.high %v5838, %v5838
        %v5841 = vcombine.high %v5817, %v5817
        %v5843 = vunpack.c.l.s4 1983009808
        %v5844 = vunpack.c.0.s8 %v5843
        %v5845 = vlaneseq
        %v5846 = vshrl.u32 %v5845, 7
        %v5847 = vsub.s32 %v5844, %v5846
        %v5848 = vrot.slane %v5817, %v5847
        %v5850 = vunpack.c.l.s4 1983009808
        %v5851 = vunpack.c.0.s8 %v5850
        %v5852 = vlaneseq
        %v5853 = vshrl.u32 %v5852, 7
        %v5854 = vsub.s32 %v5851, %v5853
        %v5855 = vrot.slane %v5841, %v5854
        %v5856 = vcombine.high %v5848, %v5848
        %v5857 = vcombine.high %v5855, %v5855
        %v5859 = vunpack.c.l.s4 1983009808
        %v5860 = vunpack.c.0.s8 %v5859
        %v5861 = vlaneseq
        %v5862 = vshrl.u32 %v5861, 7
        %v5863 = vsub.s32 %v5860, %v5862
        %v5864 = vrot.slane %v5818, %v5863
        %5865 = vrot.lane.b32.xlu0 %v5831, 54
        %v5866 = vpop.permute.xlu0 %5865
        %5867 = vrot.lane.b32.xlu0 %v5839, 54
        %v5868 = vpop.permute.xlu0 %5867
        %5869 = vrot.lane.b32.xlu0 %v5838, 54
        %v5870 = vpop.permute.xlu0 %5869
        %5871 = vrot.lane.b32.xlu0 %v5840, 54
        %v5872 = vpop.permute.xlu0 %5871
        %5873 = vrot.lane.b32.xlu0 %v5848, 54
        %v5874 = vpop.permute.xlu0 %5873
        %5875 = vrot.lane.b32.xlu0 %v5856, 54
        %v5876 = vpop.permute.xlu0 %5875
        %5877 = vrot.lane.b32.xlu0 %v5855, 54
        %v5878 = vpop.permute.xlu0 %5877
        %5879 = vrot.lane.b32.xlu0 %v5857, 54
        %v5880 = vpop.permute.xlu0 %5879
        %5881 = vrot.lane.b32.xlu0 %v5864, 54
        %v5882 = vpop.permute.xlu0 %5881
        %vm5883 = vcmask 441344
        %v5884 = vsel %vm5883, %v5866, %v5868
        %v5885 = vsel %vm5883, %v5868, %v5870
        %v5886 = vsel %vm5883, %v5870, %v5872
        %v5887 = vsel %vm5883, %v5872, %v5874
        %v5888 = vsel %vm5883, %v5874, %v5876
        %v5889 = vsel %vm5883, %v5876, %v5878
        %v5890 = vsel %vm5883, %v5878, %v5880
        %v5891 = vsel %vm5883, %v5880, %v5882
        %v5893 = vsel %vm482, %v5820, 0
        %v5896 = vsel %vm486, %v5884, 0
        %v5899 = vsel %vm486, %v5885, 0
        %v5902 = vsel %vm486, %v5886, 0
        %v5905 = vsel %vm486, %v5887, 0
        %v5908 = vsel %vm486, %v5888, 0
        %v5911 = vsel %vm486, %v5889, 0
        %v5914 = vsel %vm486, %v5890, 0
        %v5917 = vsel %vm486, %v5891, 0
        %5919 = vmatprep.subr.bf16.mxu0 %v5899
        %5920 = vmatpush1.bf16.msra.mxu0 %v5896
        %5921 = vmatprep.subr.bf16.mxu0 0
        %5922 = vmatpush1.bf16.msra.mxu0 0
        %5923 = vmatprep.subr.bf16.mxu0 0
        %5924 = vmatpush1.bf16.msra.mxu0 0
        %5925 = vmatprep.subr.bf16.mxu0 0
        %5926 = vmatpush1.bf16.msra.mxu0 0
        %5927 = vmatprep.subr.bf16.mxu0 0
        %5928 = vmatpush1.bf16.msra.mxu0 0
        %5929 = vmatprep.subr.bf16.mxu0 0
        %5930 = vmatpush1.bf16.msra.mxu0 0
        %5931 = vmatprep.subr.bf16.mxu0 0
        %5932 = vmatpush1.bf16.msra.mxu0 0
        %5933 = vmatprep.subr.bf16.mxu0 0
        %5934 = vmatpush1.bf16.msra.mxu0 0
        %5935 = vmatprep.subr.bf16.mxu0 0
        %5936 = vmatpush1.bf16.msra.mxu0 0
        %5937 = vmatprep.subr.bf16.mxu0 0
        %5938 = vmatpush1.bf16.msra.mxu0 0
        %5939 = vmatprep.subr.bf16.mxu0 0
        %5940 = vmatpush1.bf16.msra.mxu0 0
        %5941 = vmatprep.subr.bf16.mxu0 0
        %5942 = vmatpush1.bf16.msra.mxu0 0
        %5943 = vmatprep.subr.bf16.mxu0 0
        %5944 = vmatpush1.bf16.msra.mxu0 0
        %5945 = vmatprep.subr.bf16.mxu0 0
        %5946 = vmatpush1.bf16.msra.mxu0 0
        %5947 = vmatprep.subr.bf16.mxu0 0
        %5948 = vmatpush1.bf16.msra.mxu0 0
        %5949 = vmatprep.subr.bf16.mxu0 0
        %5950 = vmatpush1.bf16.msra.mxu0 0
        %5951 = vmatprep.mubr.bf16.mxu0 0
        %5952 = vmatmul.mubr.bf16.gmra.mrb[0].mxu0 %v5893
        %v5953 = vpop.f32.mrb[0].mxu0
        %v5954 = vadd.f32 0.0, %v5953
        %v5955 = vpop.f32.mrb[0].mxu0
        %v5956 = vadd.f32 0.0, %v5955
        %v5957 = vpop.f32.mrb[0].mxu0
        %v5958 = vpop.f32.mrb[0].mxu0
        %5959 = vdwg.mxu0
        %5960 = vmatprep.subr.bf16.mxu0 %v5905
        %5961 = vmatpush1.bf16.msra.mxu0 %v5902
        %5962 = vmatprep.subr.bf16.mxu0 0
        %5963 = vmatpush1.bf16.msra.mxu0 0
        %5964 = vmatprep.subr.bf16.mxu0 0
        %5965 = vmatpush1.bf16.msra.mxu0 0
        %5966 = vmatprep.subr.bf16.mxu0 0
        %5967 = vmatpush1.bf16.msra.mxu0 0
        %5968 = vmatprep.subr.bf16.mxu0 0
        %5969 = vmatpush1.bf16.msra.mxu0 0
        %5970 = vmatprep.subr.bf16.mxu0 0
        %5971 = vmatpush1.bf16.msra.mxu0 0
        %5972 = vmatprep.subr.bf16.mxu0 0
        %5973 = vmatpush1.bf16.msra.mxu0 0
        %5974 = vmatprep.subr.bf16.mxu0 0
        %5975 = vmatpush1.bf16.msra.mxu0 0
        %5976 = vmatprep.subr.bf16.mxu0 0
        %5977 = vmatpush1.bf16.msra.mxu0 0
        %5978 = vmatprep.subr.bf16.mxu0 0
        %5979 = vmatpush1.bf16.msra.mxu0 0
        %5980 = vmatprep.subr.bf16.mxu0 0
        %5981 = vmatpush1.bf16.msra.mxu0 0
        %5982 = vmatprep.subr.bf16.mxu0 0
        %5983 = vmatpush1.bf16.msra.mxu0 0
        %5984 = vmatprep.subr.bf16.mxu0 0
        %5985 = vmatpush1.bf16.msra.mxu0 0
        %5986 = vmatprep.subr.bf16.mxu0 0
        %5987 = vmatpush1.bf16.msra.mxu0 0
        %5988 = vmatprep.subr.bf16.mxu0 0
        %5989 = vmatpush1.bf16.msra.mxu0 0
        %5990 = vmatprep.subr.bf16.mxu0 0
        %5991 = vmatpush1.bf16.msra.mxu0 0
        %5992 = vmatprep.mubr.bf16.mxu0 0
        %5993 = vmatmul.mubr.bf16.gmra.mrb[0].mxu0 %v5893
        %v5994 = vpop.f32.mrb[0].mxu0
        %v5995 = vadd.f32 0.0, %v5994
        %v5996 = vpop.f32.mrb[0].mxu0
        %v5997 = vadd.f32 0.0, %v5996
        %v5998 = vpop.f32.mrb[0].mxu0
        %v5999 = vpop.f32.mrb[0].mxu0
        %6000 = vdwg.mxu0
        %6001 = vmatprep.subr.bf16.mxu0 %v5911
        %6002 = vmatpush1.bf16.msra.mxu0 %v5908
        %6003 = vmatprep.subr.bf16.mxu0 0
        %6004 = vmatpush1.bf16.msra.mxu0 0
        %6005 = vmatprep.subr.bf16.mxu0 0
        %6006 = vmatpush1.bf16.msra.mxu0 0
        %6007 = vmatprep.subr.bf16.mxu0 0
        %6008 = vmatpush1.bf16.msra.mxu0 0
        %6009 = vmatprep.subr.bf16.mxu0 0
        %6010 = vmatpush1.bf16.msra.mxu0 0
        %6011 = vmatprep.subr.bf16.mxu0 0
        %6012 = vmatpush1.bf16.msra.mxu0 0
        %6013 = vmatprep.subr.bf16.mxu0 0
        %6014 = vmatpush1.bf16.msra.mxu0 0
        %6015 = vmatprep.subr.bf16.mxu0 0
        %6016 = vmatpush1.bf16.msra.mxu0 0
        %6017 = vmatprep.subr.bf16.mxu0 0
        %6018 = vmatpush1.bf16.msra.mxu0 0
        %6019 = vmatprep.subr.bf16.mxu0 0
        %6020 = vmatpush1.bf16.msra.mxu0 0
        %6021 = vmatprep.subr.bf16.mxu0 0
        %6022 = vmatpush1.bf16.msra.mxu0 0
        %6023 = vmatprep.subr.bf16.mxu0 0
        %6024 = vmatpush1.bf16.msra.mxu0 0
        %6025 = vmatprep.subr.bf16.mxu0 0
        %6026 = vmatpush1.bf16.msra.mxu0 0
        %6027 = vmatprep.subr.bf16.mxu0 0
        %6028 = vmatpush1.bf16.msra.mxu0 0
        %6029 = vmatprep.subr.bf16.mxu0 0
        %6030 = vmatpush1.bf16.msra.mxu0 0
        %6031 = vmatprep.subr.bf16.mxu0 0
        %6032 = vmatpush1.bf16.msra.mxu0 0
        %6033 = vmatprep.mubr.bf16.mxu0 0
        %6034 = vmatmul.mubr.bf16.gmra.mrb[0].mxu0 %v5893
        %v6035 = vpop.f32.mrb[0].mxu0
        %v6036 = vadd.f32 0.0, %v6035
        %v6037 = vpop.f32.mrb[0].mxu0
        %v6038 = vadd.f32 0.0, %v6037
        %v6039 = vpop.f32.mrb[0].mxu0
        %v6040 = vpop.f32.mrb[0].mxu0
        %6041 = vdwg.mxu0
        %6042 = vmatprep.subr.bf16.mxu0 %v5917
        %6043 = vmatpush1.bf16.msra.mxu0 %v5914
        %6044 = vmatprep.subr.bf16.mxu0 0
        %6045 = vmatpush1.bf16.msra.mxu0 0
        %6046 = vmatprep.subr.bf16.mxu0 0
        %6047 = vmatpush1.bf16.msra.mxu0 0
        %6048 = vmatprep.subr.bf16.mxu0 0
        %6049 = vmatpush1.bf16.msra.mxu0 0
        %6050 = vmatprep.subr.bf16.mxu0 0
        %6051 = vmatpush1.bf16.msra.mxu0 0
        %6052 = vmatprep.subr.bf16.mxu0 0
        %6053 = vmatpush1.bf16.msra.mxu0 0
        %6054 = vmatprep.subr.bf16.mxu0 0
        %6055 = vmatpush1.bf16.msra.mxu0 0
        %6056 = vmatprep.subr.bf16.mxu0 0
        %6057 = vmatpush1.bf16.msra.mxu0 0
        %6058 = vmatprep.subr.bf16.mxu0 0
        %6059 = vmatpush1.bf16.msra.mxu0 0
        %6060 = vmatprep.subr.bf16.mxu0 0
        %6061 = vmatpush1.bf16.msra.mxu0 0
        %6062 = vmatprep.subr.bf16.mxu0 0
        %6063 = vmatpush1.bf16.msra.mxu0 0
        %6064 = vmatprep.subr.bf16.mxu0 0
        %6065 = vmatpush1.bf16.msra.mxu0 0
        %6066 = vmatprep.subr.bf16.mxu0 0
        %6067 = vmatpush1.bf16.msra.mxu0 0
        %6068 = vmatprep.subr.bf16.mxu0 0
        %6069 = vmatpush1.bf16.msra.mxu0 0
        %6070 = vmatprep.subr.bf16.mxu0 0
        %6071 = vmatpush1.bf16.msra.mxu0 0
        %6072 = vmatprep.subr.bf16.mxu0 0
        %6073 = vmatpush1.bf16.msra.mxu0 0
        %6074 = vmatprep.mubr.bf16.mxu0 0
        %6075 = vmatmul.mubr.bf16.gmra.mrb[0].mxu0 %v5893
        %v6076 = vpop.f32.mrb[0].mxu0
        %v6077 = vadd.f32 0.0, %v6076
        %v6078 = vpop.f32.mrb[0].mxu0
        %v6079 = vadd.f32 0.0, %v6078
        %v6080 = vpop.f32.mrb[0].mxu0
        %v6081 = vpop.f32.mrb[0].mxu0
        %6082 = vdwg.mxu0
        %v6083 = vadd.f32 %v5808, %v5954
        %v6084 = vadd.f32 %v5809, %v5956
        %v6085 = vadd.f32 %v5810, %v5995
        %v6086 = vadd.f32 %v5811, %v5997
        %v6087 = vadd.f32 %v5812, %v6036
        %v6088 = vadd.f32 %v5813, %v6038
        %v6089 = vadd.f32 %v5814, %v6077
        %v6090 = vadd.f32 %v5815, %v6079
        %v6091 = vld [vmem:[#allocation2 + $0x2] sm:$0xff]
        %v6092 = vld [vmem:[#allocation2 + $0xa] sm:$0xff]
        %v6093 = vld [vmem:[#allocation2 + $0x12] sm:$0x3]
        %s6094 = scalar_lea.vmem %s0, 84
        %v6095 = vld [vmem:[%s6094] sm:$0xf]
        %v6099 = vcombine.high %v6091, %v6091
        %v6101 = vunpack.c.l.s4 1983009808
        %v6102 = vunpack.c.0.s8 %v6101
        %v6103 = vlaneseq
        %v6104 = vshrl.u32 %v6103, 7
        %v6105 = vsub.s32 %v6102, %v6104
        %v6106 = vrot.slane %v6091, %v6105
        %v6108 = vunpack.c.l.s4 1983009808
        %v6109 = vunpack.c.0.s8 %v6108
        %v6110 = vlaneseq
        %v6111 = vshrl.u32 %v6110, 7
        %v6112 = vsub.s32 %v6109, %v6111
        %v6113 = vrot.slane %v6099, %v6112
        %v6114 = vcombine.high %v6106, %v6106
        %v6115 = vcombine.high %v6113, %v6113
        %v6116 = vcombine.high %v6092, %v6092
        %v6118 = vunpack.c.l.s4 1983009808
        %v6119 = vunpack.c.0.s8 %v6118
        %v6120 = vlaneseq
        %v6121 = vshrl.u32 %v6120, 7
        %v6122 = vsub.s32 %v6119, %v6121
        %v6123 = vrot.slane %v6092, %v6122
        %v6125 = vunpack.c.l.s4 1983009808
        %v6126 = vunpack.c.0.s8 %v6125
        %v6127 = vlaneseq
        %v6128 = vshrl.u32 %v6127, 7
        %v6129 = vsub.s32 %v6126, %v6128
        %v6130 = vrot.slane %v6116, %v6129
        %v6131 = vcombine.high %v6123, %v6123
        %v6132 = vcombine.high %v6130, %v6130
        %v6134 = vunpack.c.l.s4 1983009808
        %v6135 = vunpack.c.0.s8 %v6134
        %v6136 = vlaneseq
        %v6137 = vshrl.u32 %v6136, 7
        %v6138 = vsub.s32 %v6135, %v6137
        %v6139 = vrot.slane %v6093, %v6138
        %6140 = vrot.lane.b32.xlu0 %v6106, 46
        %v6141 = vpop.permute.xlu0 %6140
        %6142 = vrot.lane.b32.xlu0 %v6114, 46
        %v6143 = vpop.permute.xlu0 %6142
        %6144 = vrot.lane.b32.xlu0 %v6113, 46
        %v6145 = vpop.permute.xlu0 %6144
        %6146 = vrot.lane.b32.xlu0 %v6115, 46
        %v6147 = vpop.permute.xlu0 %6146
        %6148 = vrot.lane.b32.xlu0 %v6123, 46
        %v6149 = vpop.permute.xlu0 %6148
        %6150 = vrot.lane.b32.xlu0 %v6131, 46
        %v6151 = vpop.permute.xlu0 %6150
        %6152 = vrot.lane.b32.xlu0 %v6130, 46
        %v6153 = vpop.permute.xlu0 %6152
        %6154 = vrot.lane.b32.xlu0 %v6132, 46
        %v6155 = vpop.permute.xlu0 %6154
        %6156 = vrot.lane.b32.xlu0 %v6139, 46
        %v6157 = vpop.permute.xlu0 %6156
        %vm6158 = vcmask 375808
        %v6159 = vsel %vm6158, %v6141, %v6143
        %v6160 = vsel %vm6158, %v6143, %v6145
        %v6161 = vsel %vm6158, %v6145, %v6147
        %v6162 = vsel %vm6158, %v6147, %v6149
        %v6163 = vsel %vm6158, %v6149, %v6151
        %v6164 = vsel %vm6158, %v6151, %v6153
        %v6165 = vsel %vm6158, %v6153, %v6155
        %v6166 = vsel %vm6158, %v6155, %v6157
        %v6168 = vsel %vm482, %v6095, 0
        %v6171 = vsel %vm486, %v6159, 0
        %v6174 = vsel %vm486, %v6160, 0
        %v6177 = vsel %vm486, %v6161, 0
        %v6180 = vsel %vm486, %v6162, 0
        %v6183 = vsel %vm486, %v6163, 0
        %v6186 = vsel %vm486, %v6164, 0
        %v6189 = vsel %vm486, %v6165, 0
        %v6192 = vsel %vm486, %v6166, 0
        %6194 = vmatprep.subr.bf16.mxu0 %v6174
        %6195 = vmatpush1.bf16.msra.mxu0 %v6171
        %6196 = vmatprep.subr.bf16.mxu0 0
        %6197 = vmatpush1.bf16.msra.mxu0 0
        %6198 = vmatprep.subr.bf16.mxu0 0
        %6199 = vmatpush1.bf16.msra.mxu0 0
        %6200 = vmatprep.subr.bf16.mxu0 0
        %6201 = vmatpush1.bf16.msra.mxu0 0
        %6202 = vmatprep.subr.bf16.mxu0 0
        %6203 = vmatpush1.bf16.msra.mxu0 0
        %6204 = vmatprep.subr.bf16.mxu0 0
        %6205 = vmatpush1.bf16.msra.mxu0 0
        %6206 = vmatprep.subr.bf16.mxu0 0
        %6207 = vmatpush1.bf16.msra.mxu0 0
        %6208 = vmatprep.subr.bf16.mxu0 0
        %6209 = vmatpush1.bf16.msra.mxu0 0
        %6210 = vmatprep.subr.bf16.mxu0 0
        %6211 = vmatpush1.bf16.msra.mxu0 0
        %6212 = vmatprep.subr.bf16.mxu0 0
        %6213 = vmatpush1.bf16.msra.mxu0 0
        %6214 = vmatprep.subr.bf16.mxu0 0
        %6215 = vmatpush1.bf16.msra.mxu0 0
        %6216 = vmatprep.subr.bf16.mxu0 0
        %6217 = vmatpush1.bf16.msra.mxu0 0
        %6218 = vmatprep.subr.bf16.mxu0 0
        %6219 = vmatpush1.bf16.msra.mxu0 0
        %6220 = vmatprep.subr.bf16.mxu0 0
        %6221 = vmatpush1.bf16.msra.mxu0 0
        %6222 = vmatprep.subr.bf16.mxu0 0
        %6223 = vmatpush1.bf16.msra.mxu0 0
        %6224 = vmatprep.subr.bf16.mxu0 0
        %6225 = vmatpush1.bf16.msra.mxu0 0
        %6226 = vmatprep.mubr.bf16.mxu0 0
        %6227 = vmatmul.mubr.bf16.gmra.mrb[0].mxu0 %v6168
        %v6228 = vpop.f32.mrb[0].mxu0
        %v6229 = vadd.f32 0.0, %v6228
        %v6230 = vpop.f32.mrb[0].mxu0
        %v6231 = vadd.f32 0.0, %v6230
        %v6232 = vpop.f32.mrb[0].mxu0
        %v6233 = vpop.f32.mrb[0].mxu0
        %6234 = vdwg.mxu0
        %6235 = vmatprep.subr.bf16.mxu0 %v6180
        %6236 = vmatpush1.bf16.msra.mxu0 %v6177
        %6237 = vmatprep.subr.bf16.mxu0 0
        %6238 = vmatpush1.bf16.msra.mxu0 0
        %6239 = vmatprep.subr.bf16.mxu0 0
        %6240 = vmatpush1.bf16.msra.mxu0 0
        %6241 = vmatprep.subr.bf16.mxu0 0
        %6242 = vmatpush1.bf16.msra.mxu0 0
        %6243 = vmatprep.subr.bf16.mxu0 0
        %6244 = vmatpush1.bf16.msra.mxu0 0
        %6245 = vmatprep.subr.bf16.mxu0 0
        %6246 = vmatpush1.bf16.msra.mxu0 0
        %6247 = vmatprep.subr.bf16.mxu0 0
        %6248 = vmatpush1.bf16.msra.mxu0 0
        %6249 = vmatprep.subr.bf16.mxu0 0
        %6250 = vmatpush1.bf16.msra.mxu0 0
        %6251 = vmatprep.subr.bf16.mxu0 0
        %6252 = vmatpush1.bf16.msra.mxu0 0
        %6253 = vmatprep.subr.bf16.mxu0 0
        %6254 = vmatpush1.bf16.msra.mxu0 0
        %6255 = vmatprep.subr.bf16.mxu0 0
        %6256 = vmatpush1.bf16.msra.mxu0 0
        %6257 = vmatprep.subr.bf16.mxu0 0
        %6258 = vmatpush1.bf16.msra.mxu0 0
        %6259 = vmatprep.subr.bf16.mxu0 0
        %6260 = vmatpush1.bf16.msra.mxu0 0
        %6261 = vmatprep.subr.bf16.mxu0 0
        %6262 = vmatpush1.bf16.msra.mxu0 0
        %6263 = vmatprep.subr.bf16.mxu0 0
        %6264 = vmatpush1.bf16.msra.mxu0 0
        %6265 = vmatprep.subr.bf16.mxu0 0
        %6266 = vmatpush1.bf16.msra.mxu0 0
        %6267 = vmatprep.mubr.bf16.mxu0 0
        %6268 = vmatmul.mubr.bf16.gmra.mrb[0].mxu0 %v6168
        %v6269 = vpop.f32.mrb[0].mxu0
        %v6270 = vadd.f32 0.0, %v6269
        %v6271 = vpop.f32.mrb[0].mxu0
        %v6272 = vadd.f32 0.0, %v6271
        %v6273 = vpop.f32.mrb[0].mxu0
        %v6274 = vpop.f32.mrb[0].mxu0
        %6275 = vdwg.mxu0
        %6276 = vmatprep.subr.bf16.mxu0 %v6186
        %6277 = vmatpush1.bf16.msra.mxu0 %v6183
        %6278 = vmatprep.subr.bf16.mxu0 0
        %6279 = vmatpush1.bf16.msra.mxu0 0
        %6280 = vmatprep.subr.bf16.mxu0 0
        %6281 = vmatpush1.bf16.msra.mxu0 0
        %6282 = vmatprep.subr.bf16.mxu0 0
        %6283 = vmatpush1.bf16.msra.mxu0 0
        %6284 = vmatprep.subr.bf16.mxu0 0
        %6285 = vmatpush1.bf16.msra.mxu0 0
        %6286 = vmatprep.subr.bf16.mxu0 0
        %6287 = vmatpush1.bf16.msra.mxu0 0
        %6288 = vmatprep.subr.bf16.mxu0 0
        %6289 = vmatpush1.bf16.msra.mxu0 0
        %6290 = vmatprep.subr.bf16.mxu0 0
        %6291 = vmatpush1.bf16.msra.mxu0 0
        %6292 = vmatprep.subr.bf16.mxu0 0
        %6293 = vmatpush1.bf16.msra.mxu0 0
        %6294 = vmatprep.subr.bf16.mxu0 0
        %6295 = vmatpush1.bf16.msra.mxu0 0
        %6296 = vmatprep.subr.bf16.mxu0 0
        %6297 = vmatpush1.bf16.msra.mxu0 0
        %6298 = vmatprep.subr.bf16.mxu0 0
        %6299 = vmatpush1.bf16.msra.mxu0 0
        %6300 = vmatprep.subr.bf16.mxu0 0
        %6301 = vmatpush1.bf16.msra.mxu0 0
        %6302 = vmatprep.subr.bf16.mxu0 0
        %6303 = vmatpush1.bf16.msra.mxu0 0
        %6304 = vmatprep.subr.bf16.mxu0 0
        %6305 = vmatpush1.bf16.msra.mxu0 0
        %6306 = vmatprep.subr.bf16.mxu0 0
        %6307 = vmatpush1.bf16.msra.mxu0 0
        %6308 = vmatprep.mubr.bf16.mxu0 0
        %6309 = vmatmul.mubr.bf16.gmra.mrb[0].mxu0 %v6168
        %v6310 = vpop.f32.mrb[0].mxu0
        %v6311 = vadd.f32 0.0, %v6310
        %v6312 = vpop.f32.mrb[0].mxu0
        %v6313 = vadd.f32 0.0, %v6312
        %v6314 = vpop.f32.mrb[0].mxu0
        %v6315 = vpop.f32.mrb[0].mxu0
        %6316 = vdwg.mxu0
        %6317 = vmatprep.subr.bf16.mxu0 %v6192
        %6318 = vmatpush1.bf16.msra.mxu0 %v6189
        %6319 = vmatprep.subr.bf16.mxu0 0
        %6320 = vmatpush1.bf16.msra.mxu0 0
        %6321 = vmatprep.subr.bf16.mxu0 0
        %6322 = vmatpush1.bf16.msra.mxu0 0
        %6323 = vmatprep.subr.bf16.mxu0 0
        %6324 = vmatpush1.bf16.msra.mxu0 0
        %6325 = vmatprep.subr.bf16.mxu0 0
        %6326 = vmatpush1.bf16.msra.mxu0 0
        %6327 = vmatprep.subr.bf16.mxu0 0
        %6328 = vmatpush1.bf16.msra.mxu0 0
        %6329 = vmatprep.subr.bf16.mxu0 0
        %6330 = vmatpush1.bf16.msra.mxu0 0
        %6331 = vmatprep.subr.bf16.mxu0 0
        %6332 = vmatpush1.bf16.msra.mxu0 0
        %6333 = vmatprep.subr.bf16.mxu0 0
        %6334 = vmatpush1.bf16.msra.mxu0 0
        %6335 = vmatprep.subr.bf16.mxu0 0
        %6336 = vmatpush1.bf16.msra.mxu0 0
        %6337 = vmatprep.subr.bf16.mxu0 0
        %6338 = vmatpush1.bf16.msra.mxu0 0
        %6339 = vmatprep.subr.bf16.mxu0 0
        %6340 = vmatpush1.bf16.msra.mxu0 0
        %6341 = vmatprep.subr.bf16.mxu0 0
        %6342 = vmatpush1.bf16.msra.mxu0 0
        %6343 = vmatprep.subr.bf16.mxu0 0
        %6344 = vmatpush1.bf16.msra.mxu0 0
        %6345 = vmatprep.subr.bf16.mxu0 0
        %6346 = vmatpush1.bf16.msra.mxu0 0
        %6347 = vmatprep.subr.bf16.mxu0 0
        %6348 = vmatpush1.bf16.msra.mxu0 0
        %6349 = vmatprep.mubr.bf16.mxu0 0
        %6350 = vmatmul.mubr.bf16.gmra.mrb[0].mxu0 %v6168
        %v6351 = vpop.f32.mrb[0].mxu0
        %v6352 = vadd.f32 0.0, %v6351
        %v6353 = vpop.f32.mrb[0].mxu0
        %v6354 = vadd.f32 0.0, %v6353
        %v6355 = vpop.f32.mrb[0].mxu0
        %v6356 = vpop.f32.mrb[0].mxu0
        %6357 = vdwg.mxu0
        %v6358 = vadd.f32 %v6083, %v6229
        %v6359 = vadd.f32 %v6084, %v6231
        %v6360 = vadd.f32 %v6085, %v6270
        %v6361 = vadd.f32 %v6086, %v6272
        %v6362 = vadd.f32 %v6087, %v6311
        %v6363 = vadd.f32 %v6088, %v6313
        %v6364 = vadd.f32 %v6089, %v6352
        %v6365 = vadd.f32 %v6090, %v6354
        %v6366 = vld [vmem:[#allocation2 + $0x2] sm:$0xff]
        %v6367 = vld [vmem:[#allocation2 + $0xa] sm:$0xff]
        %v6368 = vld [vmem:[#allocation2 + $0x12] sm:$0x3]
        %s6369 = scalar_lea.vmem %s0, 88
        %v6370 = vld [vmem:[%s6369] sm:$0xf]
        %v6374 = vcombine.high %v6366, %v6366
        %v6376 = vunpack.c.l.s4 1983009808
        %v6377 = vunpack.c.0.s8 %v6376
        %v6378 = vlaneseq
        %v6379 = vshrl.u32 %v6378, 7
        %v6380 = vsub.s32 %v6377, %v6379
        %v6381 = vrot.slane %v6366, %v6380
        %v6383 = vunpack.c.l.s4 1983009808
        %v6384 = vunpack.c.0.s8 %v6383
        %v6385 = vlaneseq
        %v6386 = vshrl.u32 %v6385, 7
        %v6387 = vsub.s32 %v6384, %v6386
        %v6388 = vrot.slane %v6374, %v6387
        %v6389 = vcombine.high %v6381, %v6381
        %v6390 = vcombine.high %v6388, %v6388
        %v6391 = vcombine.high %v6367, %v6367
        %v6393 = vunpack.c.l.s4 1983009808
        %v6394 = vunpack.c.0.s8 %v6393
        %v6395 = vlaneseq
        %v6396 = vshrl.u32 %v6395, 7
        %v6397 = vsub.s32 %v6394, %v6396
        %v6398 = vrot.slane %v6367, %v6397
        %v6400 = vunpack.c.l.s4 1983009808
        %v6401 = vunpack.c.0.s8 %v6400
        %v6402 = vlaneseq
        %v6403 = vshrl.u32 %v6402, 7
        %v6404 = vsub.s32 %v6401, %v6403
        %v6405 = vrot.slane %v6391, %v6404
        %v6406 = vcombine.high %v6398, %v6398
        %v6407 = vcombine.high %v6405, %v6405
        %v6409 = vunpack.c.l.s4 1983009808
        %v6410 = vunpack.c.0.s8 %v6409
        %v6411 = vlaneseq
        %v6412 = vshrl.u32 %v6411, 7
        %v6413 = vsub.s32 %v6410, %v6412
        %v6414 = vrot.slane %v6368, %v6413
        %6415 = vrot.lane.b32.xlu0 %v6381, 45
        %v6416 = vpop.permute.xlu0 %6415
        %6417 = vrot.lane.b32.xlu0 %v6389, 45
        %v6418 = vpop.permute.xlu0 %6417
        %6419 = vrot.lane.b32.xlu0 %v6388, 45
        %v6420 = vpop.permute.xlu0 %6419
        %6421 = vrot.lane.b32.xlu0 %v6390, 45
        %v6422 = vpop.permute.xlu0 %6421
        %6423 = vrot.lane.b32.xlu0 %v6398, 45
        %v6424 = vpop.permute.xlu0 %6423
        %6425 = vrot.lane.b32.xlu0 %v6406, 45
        %v6426 = vpop.permute.xlu0 %6425
        %6427 = vrot.lane.b32.xlu0 %v6405, 45
        %v6428 = vpop.permute.xlu0 %6427
        %6429 = vrot.lane.b32.xlu0 %v6407, 45
        %v6430 = vpop.permute.xlu0 %6429
        %6431 = vrot.lane.b32.xlu0 %v6414, 45
        %v6432 = vpop.permute.xlu0 %6431
        %vm6433 = vcmask 367616
        %v6434 = vsel %vm6433, %v6416, %v6418
        %v6435 = vsel %vm6433, %v6418, %v6420
        %v6436 = vsel %vm6433, %v6420, %v6422
        %v6437 = vsel %vm6433, %v6422, %v6424
        %v6438 = vsel %vm6433, %v6424, %v6426
        %v6439 = vsel %vm6433, %v6426, %v6428
        %v6440 = vsel %vm6433, %v6428, %v6430
        %v6441 = vsel %vm6433, %v6430, %v6432
        %v6443 = vsel %vm482, %v6370, 0
        %v6446 = vsel %vm486, %v6434, 0
        %v6449 = vsel %vm486, %v6435, 0
        %v6452 = vsel %vm486, %v6436, 0
        %v6455 = vsel %vm486, %v6437, 0
        %v6458 = vsel %vm486, %v6438, 0
        %v6461 = vsel %vm486, %v6439, 0
        %v6464 = vsel %vm486, %v6440, 0
        %v6467 = vsel %vm486, %v6441, 0
        %6469 = vmatprep.subr.bf16.mxu0 %v6449
        %6470 = vmatpush1.bf16.msra.mxu0 %v6446
        %6471 = vmatprep.subr.bf16.mxu0 0
        %6472 = vmatpush1.bf16.msra.mxu0 0
        %6473 = vmatprep.subr.bf16.mxu0 0
        %6474 = vmatpush1.bf16.msra.mxu0 0
        %6475 = vmatprep.subr.bf16.mxu0 0
        %6476 = vmatpush1.bf16.msra.mxu0 0
        %6477 = vmatprep.subr.bf16.mxu0 0
        %6478 = vmatpush1.bf16.msra.mxu0 0
        %6479 = vmatprep.subr.bf16.mxu0 0
        %6480 = vmatpush1.bf16.msra.mxu0 0
        %6481 = vmatprep.subr.bf16.mxu0 0
        %6482 = vmatpush1.bf16.msra.mxu0 0
        %6483 = vmatprep.subr.bf16.mxu0 0
        %6484 = vmatpush1.bf16.msra.mxu0 0
        %6485 = vmatprep.subr.bf16.mxu0 0
        %6486 = vmatpush1.bf16.msra.mxu0 0
        %6487 = vmatprep.subr.bf16.mxu0 0
        %6488 = vmatpush1.bf16.msra.mxu0 0
        %6489 = vmatprep.subr.bf16.mxu0 0
        %6490 = vmatpush1.bf16.msra.mxu0 0
        %6491 = vmatprep.subr.bf16.mxu0 0
        %6492 = vmatpush1.bf16.msra.mxu0 0
        %6493 = vmatprep.subr.bf16.mxu0 0
        %6494 = vmatpush1.bf16.msra.mxu0 0
        %6495 = vmatprep.subr.bf16.mxu0 0
        %6496 = vmatpush1.bf16.msra.mxu0 0
        %6497 = vmatprep.subr.bf16.mxu0 0
        %6498 = vmatpush1.bf16.msra.mxu0 0
        %6499 = vmatprep.subr.bf16.mxu0 0
        %6500 = vmatpush1.bf16.msra.mxu0 0
        %6501 = vmatprep.mubr.bf16.mxu0 0
        %6502 = vmatmul.mubr.bf16.gmra.mrb[0].mxu0 %v6443
        %v6503 = vpop.f32.mrb[0].mxu0
        %v6504 = vadd.f32 0.0, %v6503
        %v6505 = vpop.f32.mrb[0].mxu0
        %v6506 = vadd.f32 0.0, %v6505
        %v6507 = vpop.f32.mrb[0].mxu0
        %v6508 = vpop.f32.mrb[0].mxu0
        %6509 = vdwg.mxu0
        %6510 = vmatprep.subr.bf16.mxu0 %v6455
        %6511 = vmatpush1.bf16.msra.mxu0 %v6452
        %6512 = vmatprep.subr.bf16.mxu0 0
        %6513 = vmatpush1.bf16.msra.mxu0 0
        %6514 = vmatprep.subr.bf16.mxu0 0
        %6515 = vmatpush1.bf16.msra.mxu0 0
        %6516 = vmatprep.subr.bf16.mxu0 0
        %6517 = vmatpush1.bf16.msra.mxu0 0
        %6518 = vmatprep.subr.bf16.mxu0 0
        %6519 = vmatpush1.bf16.msra.mxu0 0
        %6520 = vmatprep.subr.bf16.mxu0 0
        %6521 = vmatpush1.bf16.msra.mxu0 0
        %6522 = vmatprep.subr.bf16.mxu0 0
        %6523 = vmatpush1.bf16.msra.mxu0 0
        %6524 = vmatprep.subr.bf16.mxu0 0
        %6525 = vmatpush1.bf16.msra.mxu0 0
        %6526 = vmatprep.subr.bf16.mxu0 0
        %6527 = vmatpush1.bf16.msra.mxu0 0
        %6528 = vmatprep.subr.bf16.mxu0 0
        %6529 = vmatpush1.bf16.msra.mxu0 0
        %6530 = vmatprep.subr.bf16.mxu0 0
        %6531 = vmatpush1.bf16.msra.mxu0 0
        %6532 = vmatprep.subr.bf16.mxu0 0
        %6533 = vmatpush1.bf16.msra.mxu0 0
        %6534 = vmatprep.subr.bf16.mxu0 0
        %6535 = vmatpush1.bf16.msra.mxu0 0
        %6536 = vmatprep.subr.bf16.mxu0 0
        %6537 = vmatpush1.bf16.msra.mxu0 0
        %6538 = vmatprep.subr.bf16.mxu0 0
        %6539 = vmatpush1.bf16.msra.mxu0 0
        %6540 = vmatprep.subr.bf16.mxu0 0
        %6541 = vmatpush1.bf16.msra.mxu0 0
        %6542 = vmatprep.mubr.bf16.mxu0 0
        %6543 = vmatmul.mubr.bf16.gmra.mrb[0].mxu0 %v6443
        %v6544 = vpop.f32.mrb[0].mxu0
        %v6545 = vadd.f32 0.0, %v6544
        %v6546 = vpop.f32.mrb[0].mxu0
        %v6547 = vadd.f32 0.0, %v6546
        %v6548 = vpop.f32.mrb[0].mxu0
        %v6549 = vpop.f32.mrb[0].mxu0
        %6550 = vdwg.mxu0
        %6551 = vmatprep.subr.bf16.mxu0 %v6461
        %6552 = vmatpush1.bf16.msra.mxu0 %v6458
        %6553 = vmatprep.subr.bf16.mxu0 0
        %6554 = vmatpush1.bf16.msra.mxu0 0
        %6555 = vmatprep.subr.bf16.mxu0 0
        %6556 = vmatpush1.bf16.msra.mxu0 0
        %6557 = vmatprep.subr.bf16.mxu0 0
        %6558 = vmatpush1.bf16.msra.mxu0 0
        %6559 = vmatprep.subr.bf16.mxu0 0
        %6560 = vmatpush1.bf16.msra.mxu0 0
        %6561 = vmatprep.subr.bf16.mxu0 0
        %6562 = vmatpush1.bf16.msra.mxu0 0
        %6563 = vmatprep.subr.bf16.mxu0 0
        %6564 = vmatpush1.bf16.msra.mxu0 0
        %6565 = vmatprep.subr.bf16.mxu0 0
        %6566 = vmatpush1.bf16.msra.mxu0 0
        %6567 = vmatprep.subr.bf16.mxu0 0
        %6568 = vmatpush1.bf16.msra.mxu0 0
        %6569 = vmatprep.subr.bf16.mxu0 0
        %6570 = vmatpush1.bf16.msra.mxu0 0
        %6571 = vmatprep.subr.bf16.mxu0 0
        %6572 = vmatpush1.bf16.msra.mxu0 0
        %6573 = vmatprep.subr.bf16.mxu0 0
        %6574 = vmatpush1.bf16.msra.mxu0 0
        %6575 = vmatprep.subr.bf16.mxu0 0
        %6576 = vmatpush1.bf16.msra.mxu0 0
        %6577 = vmatprep.subr.bf16.mxu0 0
        %6578 = vmatpush1.bf16.msra.mxu0 0
        %6579 = vmatprep.subr.bf16.mxu0 0
        %6580 = vmatpush1.bf16.msra.mxu0 0
        %6581 = vmatprep.subr.bf16.mxu0 0
        %6582 = vmatpush1.bf16.msra.mxu0 0
        %6583 = vmatprep.mubr.bf16.mxu0 0
        %6584 = vmatmul.mubr.bf16.gmra.mrb[0].mxu0 %v6443
        %v6585 = vpop.f32.mrb[0].mxu0
        %v6586 = vadd.f32 0.0, %v6585
        %v6587 = vpop.f32.mrb[0].mxu0
        %v6588 = vadd.f32 0.0, %v6587
        %v6589 = vpop.f32.mrb[0].mxu0
        %v6590 = vpop.f32.mrb[0].mxu0
        %6591 = vdwg.mxu0
        %6592 = vmatprep.subr.bf16.mxu0 %v6467
        %6593 = vmatpush1.bf16.msra.mxu0 %v6464
        %6594 = vmatprep.subr.bf16.mxu0 0
        %6595 = vmatpush1.bf16.msra.mxu0 0
        %6596 = vmatprep.subr.bf16.mxu0 0
        %6597 = vmatpush1.bf16.msra.mxu0 0
        %6598 = vmatprep.subr.bf16.mxu0 0
        %6599 = vmatpush1.bf16.msra.mxu0 0
        %6600 = vmatprep.subr.bf16.mxu0 0
        %6601 = vmatpush1.bf16.msra.mxu0 0
        %6602 = vmatprep.subr.bf16.mxu0 0
        %6603 = vmatpush1.bf16.msra.mxu0 0
        %6604 = vmatprep.subr.bf16.mxu0 0
        %6605 = vmatpush1.bf16.msra.mxu0 0
        %6606 = vmatprep.subr.bf16.mxu0 0
        %6607 = vmatpush1.bf16.msra.mxu0 0
        %6608 = vmatprep.subr.bf16.mxu0 0
        %6609 = vmatpush1.bf16.msra.mxu0 0
        %6610 = vmatprep.subr.bf16.mxu0 0
        %6611 = vmatpush1.bf16.msra.mxu0 0
        %6612 = vmatprep.subr.bf16.mxu0 0
        %6613 = vmatpush1.bf16.msra.mxu0 0
        %6614 = vmatprep.subr.bf16.mxu0 0
        %6615 = vmatpush1.bf16.msra.mxu0 0
        %6616 = vmatprep.subr.bf16.mxu0 0
        %6617 = vmatpush1.bf16.msra.mxu0 0
        %6618 = vmatprep.subr.bf16.mxu0 0
        %6619 = vmatpush1.bf16.msra.mxu0 0
        %6620 = vmatprep.subr.bf16.mxu0 0
        %6621 = vmatpush1.bf16.msra.mxu0 0
        %6622 = vmatprep.subr.bf16.mxu0 0
        %6623 = vmatpush1.bf16.msra.mxu0 0
        %6624 = vmatprep.mubr.bf16.mxu0 0
        %6625 = vmatmul.mubr.bf16.gmra.mrb[0].mxu0 %v6443
        %v6626 = vpop.f32.mrb[0].mxu0
        %v6627 = vadd.f32 0.0, %v6626
        %v6628 = vpop.f32.mrb[0].mxu0
        %v6629 = vadd.f32 0.0, %v6628
        %v6630 = vpop.f32.mrb[0].mxu0
        %v6631 = vpop.f32.mrb[0].mxu0
        %6632 = vdwg.mxu0
        %v6633 = vadd.f32 %v6358, %v6504
        %v6634 = vadd.f32 %v6359, %v6506
        %v6635 = vadd.f32 %v6360, %v6545
        %v6636 = vadd.f32 %v6361, %v6547
        %v6637 = vadd.f32 %v6362, %v6586
        %v6638 = vadd.f32 %v6363, %v6588
        %v6639 = vadd.f32 %v6364, %v6627
        %v6640 = vadd.f32 %v6365, %v6629
        %v6641 = vld [vmem:[#allocation2 + $0x2] sm:$0xff]
        %v6642 = vld [vmem:[#allocation2 + $0xa] sm:$0xff]
        %v6643 = vld [vmem:[#allocation2 + $0x12] sm:$0x3]
        %s6644 = scalar_lea.vmem %s0, 92
        %v6645 = vld [vmem:[%s6644] sm:$0xf]
        %v6649 = vcombine.high %v6641, %v6641
        %v6651 = vunpack.c.l.s4 1983009808
        %v6652 = vunpack.c.0.s8 %v6651
        %v6653 = vlaneseq
        %v6654 = vshrl.u32 %v6653, 7
        %v6655 = vsub.s32 %v6652, %v6654
        %v6656 = vrot.slane %v6641, %v6655
        %v6658 = vunpack.c.l.s4 1983009808
        %v6659 = vunpack.c.0.s8 %v6658
        %v6660 = vlaneseq
        %v6661 = vshrl.u32 %v6660, 7
        %v6662 = vsub.s32 %v6659, %v6661
        %v6663 = vrot.slane %v6649, %v6662
        %v6664 = vcombine.high %v6656, %v6656
        %v6665 = vcombine.high %v6663, %v6663
        %v6666 = vcombine.high %v6642, %v6642
        %v6668 = vunpack.c.l.s4 1983009808
        %v6669 = vunpack.c.0.s8 %v6668
        %v6670 = vlaneseq
        %v6671 = vshrl.u32 %v6670, 7
        %v6672 = vsub.s32 %v6669, %v6671
        %v6673 = vrot.slane %v6642, %v6672
        %v6675 = vunpack.c.l.s4 1983009808
        %v6676 = vunpack.c.0.s8 %v6675
        %v6677 = vlaneseq
        %v6678 = vshrl.u32 %v6677, 7
        %v6679 = vsub.s32 %v6676, %v6678
        %v6680 = vrot.slane %v6666, %v6679
        %v6681 = vcombine.high %v6673, %v6673
        %v6682 = vcombine.high %v6680, %v6680
        %v6684 = vunpack.c.l.s4 1983009808
        %v6685 = vunpack.c.0.s8 %v6684
        %v6686 = vlaneseq
        %v6687 = vshrl.u32 %v6686, 7
        %v6688 = vsub.s32 %v6685, %v6687
        %v6689 = vrot.slane %v6643, %v6688
        %6690 = vrot.lane.b32.xlu0 %v6656, 44
        %v6691 = vpop.permute.xlu0 %6690
        %6692 = vrot.lane.b32.xlu0 %v6664, 44
        %v6693 = vpop.permute.xlu0 %6692
        %6694 = vrot.lane.b32.xlu0 %v6663, 44
        %v6695 = vpop.permute.xlu0 %6694
        %6696 = vrot.lane.b32.xlu0 %v6665, 44
        %v6697 = vpop.permute.xlu0 %6696
        %6698 = vrot.lane.b32.xlu0 %v6673, 44
        %v6699 = vpop.permute.xlu0 %6698
        %6700 = vrot.lane.b32.xlu0 %v6681, 44
        %v6701 = vpop.permute.xlu0 %6700
        %6702 = vrot.lane.b32.xlu0 %v6680, 44
        %v6703 = vpop.permute.xlu0 %6702
        %6704 = vrot.lane.b32.xlu0 %v6682, 44
        %v6705 = vpop.permute.xlu0 %6704
        %6706 = vrot.lane.b32.xlu0 %v6689, 44
        %v6707 = vpop.permute.xlu0 %6706
        %vm6708 = vcmask 359424
        %v6709 = vsel %vm6708, %v6691, %v6693
        %v6710 = vsel %vm6708, %v6693, %v6695
        %v6711 = vsel %vm6708, %v6695, %v6697
        %v6712 = vsel %vm6708, %v6697, %v6699
        %v6713 = vsel %vm6708, %v6699, %v6701
        %v6714 = vsel %vm6708, %v6701, %v6703
        %v6715 = vsel %vm6708, %v6703, %v6705
        %v6716 = vsel %vm6708, %v6705, %v6707
        %v6718 = vsel %vm482, %v6645, 0
        %v6721 = vsel %vm486, %v6709, 0
        %v6724 = vsel %vm486, %v6710, 0
        %v6727 = vsel %vm486, %v6711, 0
        %v6730 = vsel %vm486, %v6712, 0
        %v6733 = vsel %vm486, %v6713, 0
        %v6736 = vsel %vm486, %v6714, 0
        %v6739 = vsel %vm486, %v6715, 0
        %v6742 = vsel %vm486, %v6716, 0
        %6744 = vmatprep.subr.bf16.mxu0 %v6724
        %6745 = vmatpush1.bf16.msra.mxu0 %v6721
        %6746 = vmatprep.subr.bf16.mxu0 0
        %6747 = vmatpush1.bf16.msra.mxu0 0
        %6748 = vmatprep.subr.bf16.mxu0 0
        %6749 = vmatpush1.bf16.msra.mxu0 0
        %6750 = vmatprep.subr.bf16.mxu0 0
        %6751 = vmatpush1.bf16.msra.mxu0 0
        %6752 = vmatprep.subr.bf16.mxu0 0
        %6753 = vmatpush1.bf16.msra.mxu0 0
        %6754 = vmatprep.subr.bf16.mxu0 0
        %6755 = vmatpush1.bf16.msra.mxu0 0
        %6756 = vmatprep.subr.bf16.mxu0 0
        %6757 = vmatpush1.bf16.msra.mxu0 0
        %6758 = vmatprep.subr.bf16.mxu0 0
        %6759 = vmatpush1.bf16.msra.mxu0 0
        %6760 = vmatprep.subr.bf16.mxu0 0
        %6761 = vmatpush1.bf16.msra.mxu0 0
        %6762 = vmatprep.subr.bf16.mxu0 0
        %6763 = vmatpush1.bf16.msra.mxu0 0
        %6764 = vmatprep.subr.bf16.mxu0 0
        %6765 = vmatpush1.bf16.msra.mxu0 0
        %6766 = vmatprep.subr.bf16.mxu0 0
        %6767 = vmatpush1.bf16.msra.mxu0 0
        %6768 = vmatprep.subr.bf16.mxu0 0
        %6769 = vmatpush1.bf16.msra.mxu0 0
        %6770 = vmatprep.subr.bf16.mxu0 0
        %6771 = vmatpush1.bf16.msra.mxu0 0
        %6772 = vmatprep.subr.bf16.mxu0 0
        %6773 = vmatpush1.bf16.msra.mxu0 0
        %6774 = vmatprep.subr.bf16.mxu0 0
        %6775 = vmatpush1.bf16.msra.mxu0 0
        %6776 = vmatprep.mubr.bf16.mxu0 0
        %6777 = vmatmul.mubr.bf16.gmra.mrb[0].mxu0 %v6718
        %v6778 = vpop.f32.mrb[0].mxu0
        %v6779 = vadd.f32 0.0, %v6778
        %v6780 = vpop.f32.mrb[0].mxu0
        %v6781 = vadd.f32 0.0, %v6780
        %v6782 = vpop.f32.mrb[0].mxu0
        %v6783 = vpop.f32.mrb[0].mxu0
        %6784 = vdwg.mxu0
        %6785 = vmatprep.subr.bf16.mxu0 %v6730
        %6786 = vmatpush1.bf16.msra.mxu0 %v6727
        %6787 = vmatprep.subr.bf16.mxu0 0
        %6788 = vmatpush1.bf16.msra.mxu0 0
        %6789 = vmatprep.subr.bf16.mxu0 0
        %6790 = vmatpush1.bf16.msra.mxu0 0
        %6791 = vmatprep.subr.bf16.mxu0 0
        %6792 = vmatpush1.bf16.msra.mxu0 0
        %6793 = vmatprep.subr.bf16.mxu0 0
        %6794 = vmatpush1.bf16.msra.mxu0 0
        %6795 = vmatprep.subr.bf16.mxu0 0
        %6796 = vmatpush1.bf16.msra.mxu0 0
        %6797 = vmatprep.subr.bf16.mxu0 0
        %6798 = vmatpush1.bf16.msra.mxu0 0
        %6799 = vmatprep.subr.bf16.mxu0 0
        %6800 = vmatpush1.bf16.msra.mxu0 0
        %6801 = vmatprep.subr.bf16.mxu0 0
        %6802 = vmatpush1.bf16.msra.mxu0 0
        %6803 = vmatprep.subr.bf16.mxu0 0
        %6804 = vmatpush1.bf16.msra.mxu0 0
        %6805 = vmatprep.subr.bf16.mxu0 0
        %6806 = vmatpush1.bf16.msra.mxu0 0
        %6807 = vmatprep.subr.bf16.mxu0 0
        %6808 = vmatpush1.bf16.msra.mxu0 0
        %6809 = vmatprep.subr.bf16.mxu0 0
        %6810 = vmatpush1.bf16.msra.mxu0 0
        %6811 = vmatprep.subr.bf16.mxu0 0
        %6812 = vmatpush1.bf16.msra.mxu0 0
        %6813 = vmatprep.subr.bf16.mxu0 0
        %6814 = vmatpush1.bf16.msra.mxu0 0
        %6815 = vmatprep.subr.bf16.mxu0 0
        %6816 = vmatpush1.bf16.msra.mxu0 0
        %6817 = vmatprep.mubr.bf16.mxu0 0
        %6818 = vmatmul.mubr.bf16.gmra.mrb[0].mxu0 %v6718
        %v6819 = vpop.f32.mrb[0].mxu0
        %v6820 = vadd.f32 0.0, %v6819
        %v6821 = vpop.f32.mrb[0].mxu0
        %v6822 = vadd.f32 0.0, %v6821
        %v6823 = vpop.f32.mrb[0].mxu0
        %v6824 = vpop.f32.mrb[0].mxu0
        %6825 = vdwg.mxu0
        %6826 = vmatprep.subr.bf16.mxu0 %v6736
        %6827 = vmatpush1.bf16.msra.mxu0 %v6733
        %6828 = vmatprep.subr.bf16.mxu0 0
        %6829 = vmatpush1.bf16.msra.mxu0 0
        %6830 = vmatprep.subr.bf16.mxu0 0
        %6831 = vmatpush1.bf16.msra.mxu0 0
        %6832 = vmatprep.subr.bf16.mxu0 0
        %6833 = vmatpush1.bf16.msra.mxu0 0
        %6834 = vmatprep.subr.bf16.mxu0 0
        %6835 = vmatpush1.bf16.msra.mxu0 0
        %6836 = vmatprep.subr.bf16.mxu0 0
        %6837 = vmatpush1.bf16.msra.mxu0 0
        %6838 = vmatprep.subr.bf16.mxu0 0
        %6839 = vmatpush1.bf16.msra.mxu0 0
        %6840 = vmatprep.subr.bf16.mxu0 0
        %6841 = vmatpush1.bf16.msra.mxu0 0
        %6842 = vmatprep.subr.bf16.mxu0 0
        %6843 = vmatpush1.bf16.msra.mxu0 0
        %6844 = vmatprep.subr.bf16.mxu0 0
        %6845 = vmatpush1.bf16.msra.mxu0 0
        %6846 = vmatprep.subr.bf16.mxu0 0
        %6847 = vmatpush1.bf16.msra.mxu0 0
        %6848 = vmatprep.subr.bf16.mxu0 0
        %6849 = vmatpush1.bf16.msra.mxu0 0
        %6850 = vmatprep.subr.bf16.mxu0 0
        %6851 = vmatpush1.bf16.msra.mxu0 0
        %6852 = vmatprep.subr.bf16.mxu0 0
        %6853 = vmatpush1.bf16.msra.mxu0 0
        %6854 = vmatprep.subr.bf16.mxu0 0
        %6855 = vmatpush1.bf16.msra.mxu0 0
        %6856 = vmatprep.subr.bf16.mxu0 0
        %6857 = vmatpush1.bf16.msra.mxu0 0
        %6858 = vmatprep.mubr.bf16.mxu0 0
        %6859 = vmatmul.mubr.bf16.gmra.mrb[0].mxu0 %v6718
        %v6860 = vpop.f32.mrb[0].mxu0
        %v6861 = vadd.f32 0.0, %v6860
        %v6862 = vpop.f32.mrb[0].mxu0
        %v6863 = vadd.f32 0.0, %v6862
        %v6864 = vpop.f32.mrb[0].mxu0
        %v6865 = vpop.f32.mrb[0].mxu0
        %6866 = vdwg.mxu0
        %6867 = vmatprep.subr.bf16.mxu0 %v6742
        %6868 = vmatpush1.bf16.msra.mxu0 %v6739
        %6869 = vmatprep.subr.bf16.mxu0 0
        %6870 = vmatpush1.bf16.msra.mxu0 0
        %6871 = vmatprep.subr.bf16.mxu0 0
        %6872 = vmatpush1.bf16.msra.mxu0 0
        %6873 = vmatprep.subr.bf16.mxu0 0
        %6874 = vmatpush1.bf16.msra.mxu0 0
        %6875 = vmatprep.subr.bf16.mxu0 0
        %6876 = vmatpush1.bf16.msra.mxu0 0
        %6877 = vmatprep.subr.bf16.mxu0 0
        %6878 = vmatpush1.bf16.msra.mxu0 0
        %6879 = vmatprep.subr.bf16.mxu0 0
        %6880 = vmatpush1.bf16.msra.mxu0 0
        %6881 = vmatprep.subr.bf16.mxu0 0
        %6882 = vmatpush1.bf16.msra.mxu0 0
        %6883 = vmatprep.subr.bf16.mxu0 0
        %6884 = vmatpush1.bf16.msra.mxu0 0
        %6885 = vmatprep.subr.bf16.mxu0 0
        %6886 = vmatpush1.bf16.msra.mxu0 0
        %6887 = vmatprep.subr.bf16.mxu0 0
        %6888 = vmatpush1.bf16.msra.mxu0 0
        %6889 = vmatprep.subr.bf16.mxu0 0
        %6890 = vmatpush1.bf16.msra.mxu0 0
        %6891 = vmatprep.subr.bf16.mxu0 0
        %6892 = vmatpush1.bf16.msra.mxu0 0
        %6893 = vmatprep.subr.bf16.mxu0 0
        %6894 = vmatpush1.bf16.msra.mxu0 0
        %6895 = vmatprep.subr.bf16.mxu0 0
        %6896 = vmatpush1.bf16.msra.mxu0 0
        %6897 = vmatprep.subr.bf16.mxu0 0
        %6898 = vmatpush1.bf16.msra.mxu0 0
        %6899 = vmatprep.mubr.bf16.mxu0 0
        %6900 = vmatmul.mubr.bf16.gmra.mrb[0].mxu0 %v6718
        %v6901 = vpop.f32.mrb[0].mxu0
        %v6902 = vadd.f32 0.0, %v6901
        %v6903 = vpop.f32.mrb[0].mxu0
        %v6904 = vadd.f32 0.0, %v6903
        %v6905 = vpop.f32.mrb[0].mxu0
        %v6906 = vpop.f32.mrb[0].mxu0
        %6907 = vdwg.mxu0
        %v6908 = vadd.f32 %v6633, %v6779
        %v6909 = vadd.f32 %v6634, %v6781
        %v6910 = vadd.f32 %v6635, %v6820
        %v6911 = vadd.f32 %v6636, %v6822
        %v6912 = vadd.f32 %v6637, %v6861
        %v6913 = vadd.f32 %v6638, %v6863
        %v6914 = vadd.f32 %v6639, %v6902
        %v6915 = vadd.f32 %v6640, %v6904
        %v6916 = vld [vmem:[#allocation2 + $0x2] sm:$0xff]
        %v6917 = vld [vmem:[#allocation2 + $0xa] sm:$0xff]
        %v6918 = vld [vmem:[#allocation2 + $0x12] sm:$0x3]
        %s6919 = scalar_lea.vmem %s0, 96
        %v6920 = vld [vmem:[%s6919] sm:$0xf]
        %v6924 = vcombine.high %v6916, %v6916
        %v6926 = vunpack.c.l.s4 1983009808
        %v6927 = vunpack.c.0.s8 %v6926
        %v6928 = vlaneseq
        %v6929 = vshrl.u32 %v6928, 7
        %v6930 = vsub.s32 %v6927, %v6929
        %v6931 = vrot.slane %v6916, %v6930
        %v6933 = vunpack.c.l.s4 1983009808
        %v6934 = vunpack.c.0.s8 %v6933
        %v6935 = vlaneseq
        %v6936 = vshrl.u32 %v6935, 7
        %v6937 = vsub.s32 %v6934, %v6936
        %v6938 = vrot.slane %v6924, %v6937
        %v6939 = vcombine.high %v6931, %v6931
        %v6940 = vcombine.high %v6938, %v6938
        %v6941 = vcombine.high %v6917, %v6917
        %v6943 = vunpack.c.l.s4 1983009808
        %v6944 = vunpack.c.0.s8 %v6943
        %v6945 = vlaneseq
        %v6946 = vshrl.u32 %v6945, 7
        %v6947 = vsub.s32 %v6944, %v6946
        %v6948 = vrot.slane %v6917, %v6947
        %v6950 = vunpack.c.l.s4 1983009808
        %v6951 = vunpack.c.0.s8 %v6950
        %v6952 = vlaneseq
        %v6953 = vshrl.u32 %v6952, 7
        %v6954 = vsub.s32 %v6951, %v6953
        %v6955 = vrot.slane %v6941, %v6954
        %v6956 = vcombine.high %v6948, %v6948
        %v6957 = vcombine.high %v6955, %v6955
        %v6959 = vunpack.c.l.s4 1983009808
        %v6960 = vunpack.c.0.s8 %v6959
        %v6961 = vlaneseq
        %v6962 = vshrl.u32 %v6961, 7
        %v6963 = vsub.s32 %v6960, %v6962
        %v6964 = vrot.slane %v6918, %v6963
        %6965 = vrot.lane.b32.xlu0 %v6931, 36
        %v6966 = vpop.permute.xlu0 %6965
        %6967 = vrot.lane.b32.xlu0 %v6939, 36
        %v6968 = vpop.permute.xlu0 %6967
        %6969 = vrot.lane.b32.xlu0 %v6938, 36
        %v6970 = vpop.permute.xlu0 %6969
        %6971 = vrot.lane.b32.xlu0 %v6940, 36
        %v6972 = vpop.permute.xlu0 %6971
        %6973 = vrot.lane.b32.xlu0 %v6948, 36
        %v6974 = vpop.permute.xlu0 %6973
        %6975 = vrot.lane.b32.xlu0 %v6956, 36
        %v6976 = vpop.permute.xlu0 %6975
        %6977 = vrot.lane.b32.xlu0 %v6955, 36
        %v6978 = vpop.permute.xlu0 %6977
        %6979 = vrot.lane.b32.xlu0 %v6957, 36
        %v6980 = vpop.permute.xlu0 %6979
        %6981 = vrot.lane.b32.xlu0 %v6964, 36
        %v6982 = vpop.permute.xlu0 %6981
        %vm6983 = vcmask 293888
        %v6984 = vsel %vm6983, %v6966, %v6968
        %v6985 = vsel %vm6983, %v6968, %v6970
        %v6986 = vsel %vm6983, %v6970, %v6972
        %v6987 = vsel %vm6983, %v6972, %v6974
        %v6988 = vsel %vm6983, %v6974, %v6976
        %v6989 = vsel %vm6983, %v6976, %v6978
        %v6990 = vsel %vm6983, %v6978, %v6980
        %v6991 = vsel %vm6983, %v6980, %v6982
        %v6993 = vsel %vm482, %v6920, 0
        %v6996 = vsel %vm486, %v6984, 0
        %v6999 = vsel %vm486, %v6985, 0
        %v7002 = vsel %vm486, %v6986, 0
        %v7005 = vsel %vm486, %v6987, 0
        %v7008 = vsel %vm486, %v6988, 0
        %v7011 = vsel %vm486, %v6989, 0
        %v7014 = vsel %vm486, %v6990, 0
        %v7017 = vsel %vm486, %v6991, 0
        %7019 = vmatprep.subr.bf16.mxu0 %v6999
        %7020 = vmatpush1.bf16.msra.mxu0 %v6996
        %7021 = vmatprep.subr.bf16.mxu0 0
        %7022 = vmatpush1.bf16.msra.mxu0 0
        %7023 = vmatprep.subr.bf16.mxu0 0
        %7024 = vmatpush1.bf16.msra.mxu0 0
        %7025 = vmatprep.subr.bf16.mxu0 0
        %7026 = vmatpush1.bf16.msra.mxu0 0
        %7027 = vmatprep.subr.bf16.mxu0 0
        %7028 = vmatpush1.bf16.msra.mxu0 0
        %7029 = vmatprep.subr.bf16.mxu0 0
        %7030 = vmatpush1.bf16.msra.mxu0 0
        %7031 = vmatprep.subr.bf16.mxu0 0
        %7032 = vmatpush1.bf16.msra.mxu0 0
        %7033 = vmatprep.subr.bf16.mxu0 0
        %7034 = vmatpush1.bf16.msra.mxu0 0
        %7035 = vmatprep.subr.bf16.mxu0 0
        %7036 = vmatpush1.bf16.msra.mxu0 0
        %7037 = vmatprep.subr.bf16.mxu0 0
        %7038 = vmatpush1.bf16.msra.mxu0 0
        %7039 = vmatprep.subr.bf16.mxu0 0
        %7040 = vmatpush1.bf16.msra.mxu0 0
        %7041 = vmatprep.subr.bf16.mxu0 0
        %7042 = vmatpush1.bf16.msra.mxu0 0
        %7043 = vmatprep.subr.bf16.mxu0 0
        %7044 = vmatpush1.bf16.msra.mxu0 0
        %7045 = vmatprep.subr.bf16.mxu0 0
        %7046 = vmatpush1.bf16.msra.mxu0 0
        %7047 = vmatprep.subr.bf16.mxu0 0
        %7048 = vmatpush1.bf16.msra.mxu0 0
        %7049 = vmatprep.subr.bf16.mxu0 0
        %7050 = vmatpush1.bf16.msra.mxu0 0
        %7051 = vmatprep.mubr.bf16.mxu0 0
        %7052 = vmatmul.mubr.bf16.gmra.mrb[0].mxu0 %v6993
        %v7053 = vpop.f32.mrb[0].mxu0
        %v7054 = vadd.f32 0.0, %v7053
        %v7055 = vpop.f32.mrb[0].mxu0
        %v7056 = vadd.f32 0.0, %v7055
        %v7057 = vpop.f32.mrb[0].mxu0
        %v7058 = vpop.f32.mrb[0].mxu0
        %7059 = vdwg.mxu0
        %7060 = vmatprep.subr.bf16.mxu0 %v7005
        %7061 = vmatpush1.bf16.msra.mxu0 %v7002
        %7062 = vmatprep.subr.bf16.mxu0 0
        %7063 = vmatpush1.bf16.msra.mxu0 0
        %7064 = vmatprep.subr.bf16.mxu0 0
        %7065 = vmatpush1.bf16.msra.mxu0 0
        %7066 = vmatprep.subr.bf16.mxu0 0
        %7067 = vmatpush1.bf16.msra.mxu0 0
        %7068 = vmatprep.subr.bf16.mxu0 0
        %7069 = vmatpush1.bf16.msra.mxu0 0
        %7070 = vmatprep.subr.bf16.mxu0 0
        %7071 = vmatpush1.bf16.msra.mxu0 0
        %7072 = vmatprep.subr.bf16.mxu0 0
        %7073 = vmatpush1.bf16.msra.mxu0 0
        %7074 = vmatprep.subr.bf16.mxu0 0
        %7075 = vmatpush1.bf16.msra.mxu0 0
        %7076 = vmatprep.subr.bf16.mxu0 0
        %7077 = vmatpush1.bf16.msra.mxu0 0
        %7078 = vmatprep.subr.bf16.mxu0 0
        %7079 = vmatpush1.bf16.msra.mxu0 0
        %7080 = vmatprep.subr.bf16.mxu0 0
        %7081 = vmatpush1.bf16.msra.mxu0 0
        %7082 = vmatprep.subr.bf16.mxu0 0
        %7083 = vmatpush1.bf16.msra.mxu0 0
        %7084 = vmatprep.subr.bf16.mxu0 0
        %7085 = vmatpush1.bf16.msra.mxu0 0
        %7086 = vmatprep.subr.bf16.mxu0 0
        %7087 = vmatpush1.bf16.msra.mxu0 0
        %7088 = vmatprep.subr.bf16.mxu0 0
        %7089 = vmatpush1.bf16.msra.mxu0 0
        %7090 = vmatprep.subr.bf16.mxu0 0
        %7091 = vmatpush1.bf16.msra.mxu0 0
        %7092 = vmatprep.mubr.bf16.mxu0 0
        %7093 = vmatmul.mubr.bf16.gmra.mrb[0].mxu0 %v6993
        %v7094 = vpop.f32.mrb[0].mxu0
        %v7095 = vadd.f32 0.0, %v7094
        %v7096 = vpop.f32.mrb[0].mxu0
        %v7097 = vadd.f32 0.0, %v7096
        %v7098 = vpop.f32.mrb[0].mxu0
        %v7099 = vpop.f32.mrb[0].mxu0
        %7100 = vdwg.mxu0
        %7101 = vmatprep.subr.bf16.mxu0 %v7011
        %7102 = vmatpush1.bf16.msra.mxu0 %v7008
        %7103 = vmatprep.subr.bf16.mxu0 0
        %7104 = vmatpush1.bf16.msra.mxu0 0
        %7105 = vmatprep.subr.bf16.mxu0 0
        %7106 = vmatpush1.bf16.msra.mxu0 0
        %7107 = vmatprep.subr.bf16.mxu0 0
        %7108 = vmatpush1.bf16.msra.mxu0 0
        %7109 = vmatprep.subr.bf16.mxu0 0
        %7110 = vmatpush1.bf16.msra.mxu0 0
        %7111 = vmatprep.subr.bf16.mxu0 0
        %7112 = vmatpush1.bf16.msra.mxu0 0
        %7113 = vmatprep.subr.bf16.mxu0 0
        %7114 = vmatpush1.bf16.msra.mxu0 0
        %7115 = vmatprep.subr.bf16.mxu0 0
        %7116 = vmatpush1.bf16.msra.mxu0 0
        %7117 = vmatprep.subr.bf16.mxu0 0
        %7118 = vmatpush1.bf16.msra.mxu0 0
        %7119 = vmatprep.subr.bf16.mxu0 0
        %7120 = vmatpush1.bf16.msra.mxu0 0
        %7121 = vmatprep.subr.bf16.mxu0 0
        %7122 = vmatpush1.bf16.msra.mxu0 0
        %7123 = vmatprep.subr.bf16.mxu0 0
        %7124 = vmatpush1.bf16.msra.mxu0 0
        %7125 = vmatprep.subr.bf16.mxu0 0
        %7126 = vmatpush1.bf16.msra.mxu0 0
        %7127 = vmatprep.subr.bf16.mxu0 0
        %7128 = vmatpush1.bf16.msra.mxu0 0
        %7129 = vmatprep.subr.bf16.mxu0 0
        %7130 = vmatpush1.bf16.msra.mxu0 0
        %7131 = vmatprep.subr.bf16.mxu0 0
        %7132 = vmatpush1.bf16.msra.mxu0 0
        %7133 = vmatprep.mubr.bf16.mxu0 0
        %7134 = vmatmul.mubr.bf16.gmra.mrb[0].mxu0 %v6993
        %v7135 = vpop.f32.mrb[0].mxu0
        %v7136 = vadd.f32 0.0, %v7135
        %v7137 = vpop.f32.mrb[0].mxu0
        %v7138 = vadd.f32 0.0, %v7137
        %v7139 = vpop.f32.mrb[0].mxu0
        %v7140 = vpop.f32.mrb[0].mxu0
        %7141 = vdwg.mxu0
        %7142 = vmatprep.subr.bf16.mxu0 %v7017
        %7143 = vmatpush1.bf16.msra.mxu0 %v7014
        %7144 = vmatprep.subr.bf16.mxu0 0
        %7145 = vmatpush1.bf16.msra.mxu0 0
        %7146 = vmatprep.subr.bf16.mxu0 0
        %7147 = vmatpush1.bf16.msra.mxu0 0
        %7148 = vmatprep.subr.bf16.mxu0 0
        %7149 = vmatpush1.bf16.msra.mxu0 0
        %7150 = vmatprep.subr.bf16.mxu0 0
        %7151 = vmatpush1.bf16.msra.mxu0 0
        %7152 = vmatprep.subr.bf16.mxu0 0
        %7153 = vmatpush1.bf16.msra.mxu0 0
        %7154 = vmatprep.subr.bf16.mxu0 0
        %7155 = vmatpush1.bf16.msra.mxu0 0
        %7156 = vmatprep.subr.bf16.mxu0 0
        %7157 = vmatpush1.bf16.msra.mxu0 0
        %7158 = vmatprep.subr.bf16.mxu0 0
        %7159 = vmatpush1.bf16.msra.mxu0 0
        %7160 = vmatprep.subr.bf16.mxu0 0
        %7161 = vmatpush1.bf16.msra.mxu0 0
        %7162 = vmatprep.subr.bf16.mxu0 0
        %7163 = vmatpush1.bf16.msra.mxu0 0
        %7164 = vmatprep.subr.bf16.mxu0 0
        %7165 = vmatpush1.bf16.msra.mxu0 0
        %7166 = vmatprep.subr.bf16.mxu0 0
        %7167 = vmatpush1.bf16.msra.mxu0 0
        %7168 = vmatprep.subr.bf16.mxu0 0
        %7169 = vmatpush1.bf16.msra.mxu0 0
        %7170 = vmatprep.subr.bf16.mxu0 0
        %7171 = vmatpush1.bf16.msra.mxu0 0
        %7172 = vmatprep.subr.bf16.mxu0 0
        %7173 = vmatpush1.bf16.msra.mxu0 0
        %7174 = vmatprep.mubr.bf16.mxu0 0
        %7175 = vmatmul.mubr.bf16.gmra.mrb[0].mxu0 %v6993
        %v7176 = vpop.f32.mrb[0].mxu0
        %v7177 = vadd.f32 0.0, %v7176
        %v7178 = vpop.f32.mrb[0].mxu0
        %v7179 = vadd.f32 0.0, %v7178
        %v7180 = vpop.f32.mrb[0].mxu0
        %v7181 = vpop.f32.mrb[0].mxu0
        %7182 = vdwg.mxu0
        %v7183 = vadd.f32 %v6908, %v7054
        %v7184 = vadd.f32 %v6909, %v7056
        %v7185 = vadd.f32 %v6910, %v7095
        %v7186 = vadd.f32 %v6911, %v7097
        %v7187 = vadd.f32 %v6912, %v7136
        %v7188 = vadd.f32 %v6913, %v7138
        %v7189 = vadd.f32 %v6914, %v7177
        %v7190 = vadd.f32 %v6915, %v7179
        %v7191 = vld [vmem:[#allocation2 + $0x2] sm:$0xff]
        %v7192 = vld [vmem:[#allocation2 + $0xa] sm:$0xff]
        %v7193 = vld [vmem:[#allocation2 + $0x12] sm:$0x3]
        %s7194 = scalar_lea.vmem %s0, 100
        %v7195 = vld [vmem:[%s7194] sm:$0xf]
        %v7199 = vcombine.high %v7191, %v7191
        %v7201 = vunpack.c.l.s4 1983009808
        %v7202 = vunpack.c.0.s8 %v7201
        %v7203 = vlaneseq
        %v7204 = vshrl.u32 %v7203, 7
        %v7205 = vsub.s32 %v7202, %v7204
        %v7206 = vrot.slane %v7191, %v7205
        %v7208 = vunpack.c.l.s4 1983009808
        %v7209 = vunpack.c.0.s8 %v7208
        %v7210 = vlaneseq
        %v7211 = vshrl.u32 %v7210, 7
        %v7212 = vsub.s32 %v7209, %v7211
        %v7213 = vrot.slane %v7199, %v7212
        %v7214 = vcombine.high %v7206, %v7206
        %v7215 = vcombine.high %v7213, %v7213
        %v7216 = vcombine.high %v7192, %v7192
        %v7218 = vunpack.c.l.s4 1983009808
        %v7219 = vunpack.c.0.s8 %v7218
        %v7220 = vlaneseq
        %v7221 = vshrl.u32 %v7220, 7
        %v7222 = vsub.s32 %v7219, %v7221
        %v7223 = vrot.slane %v7192, %v7222
        %v7225 = vunpack.c.l.s4 1983009808
        %v7226 = vunpack.c.0.s8 %v7225
        %v7227 = vlaneseq
        %v7228 = vshrl.u32 %v7227, 7
        %v7229 = vsub.s32 %v7226, %v7228
        %v7230 = vrot.slane %v7216, %v7229
        %v7231 = vcombine.high %v7223, %v7223
        %v7232 = vcombine.high %v7230, %v7230
        %v7234 = vunpack.c.l.s4 1983009808
        %v7235 = vunpack.c.0.s8 %v7234
        %v7236 = vlaneseq
        %v7237 = vshrl.u32 %v7236, 7
        %v7238 = vsub.s32 %v7235, %v7237
        %v7239 = vrot.slane %v7193, %v7238
        %7240 = vrot.lane.b32.xlu0 %v7206, 35
        %v7241 = vpop.permute.xlu0 %7240
        %7242 = vrot.lane.b32.xlu0 %v7214, 35
        %v7243 = vpop.permute.xlu0 %7242
        %7244 = vrot.lane.b32.xlu0 %v7213, 35
        %v7245 = vpop.permute.xlu0 %7244
        %7246 = vrot.lane.b32.xlu0 %v7215, 35
        %v7247 = vpop.permute.xlu0 %7246
        %7248 = vrot.lane.b32.xlu0 %v7223, 35
        %v7249 = vpop.permute.xlu0 %7248
        %7250 = vrot.lane.b32.xlu0 %v7231, 35
        %v7251 = vpop.permute.xlu0 %7250
        %7252 = vrot.lane.b32.xlu0 %v7230, 35
        %v7253 = vpop.permute.xlu0 %7252
        %7254 = vrot.lane.b32.xlu0 %v7232, 35
        %v7255 = vpop.permute.xlu0 %7254
        %7256 = vrot.lane.b32.xlu0 %v7239, 35
        %v7257 = vpop.permute.xlu0 %7256
        %vm7258 = vcmask 285696
        %v7259 = vsel %vm7258, %v7241, %v7243
        %v7260 = vsel %vm7258, %v7243, %v7245
        %v7261 = vsel %vm7258, %v7245, %v7247
        %v7262 = vsel %vm7258, %v7247, %v7249
        %v7263 = vsel %vm7258, %v7249, %v7251
        %v7264 = vsel %vm7258, %v7251, %v7253
        %v7265 = vsel %vm7258, %v7253, %v7255
        %v7266 = vsel %vm7258, %v7255, %v7257
        %v7268 = vsel %vm482, %v7195, 0
        %v7271 = vsel %vm486, %v7259, 0
        %v7274 = vsel %vm486, %v7260, 0
        %v7277 = vsel %vm486, %v7261, 0
        %v7280 = vsel %vm486, %v7262, 0
        %v7283 = vsel %vm486, %v7263, 0
        %v7286 = vsel %vm486, %v7264, 0
        %v7289 = vsel %vm486, %v7265, 0
        %v7292 = vsel %vm486, %v7266, 0
        %7294 = vmatprep.subr.bf16.mxu0 %v7274
        %7295 = vmatpush1.bf16.msra.mxu0 %v7271
        %7296 = vmatprep.subr.bf16.mxu0 0
        %7297 = vmatpush1.bf16.msra.mxu0 0
        %7298 = vmatprep.subr.bf16.mxu0 0
        %7299 = vmatpush1.bf16.msra.mxu0 0
        %7300 = vmatprep.subr.bf16.mxu0 0
        %7301 = vmatpush1.bf16.msra.mxu0 0
        %7302 = vmatprep.subr.bf16.mxu0 0
        %7303 = vmatpush1.bf16.msra.mxu0 0
        %7304 = vmatprep.subr.bf16.mxu0 0
        %7305 = vmatpush1.bf16.msra.mxu0 0
        %7306 = vmatprep.subr.bf16.mxu0 0
        %7307 = vmatpush1.bf16.msra.mxu0 0
        %7308 = vmatprep.subr.bf16.mxu0 0
        %7309 = vmatpush1.bf16.msra.mxu0 0
        %7310 = vmatprep.subr.bf16.mxu0 0
        %7311 = vmatpush1.bf16.msra.mxu0 0
        %7312 = vmatprep.subr.bf16.mxu0 0
        %7313 = vmatpush1.bf16.msra.mxu0 0
        %7314 = vmatprep.subr.bf16.mxu0 0
        %7315 = vmatpush1.bf16.msra.mxu0 0
        %7316 = vmatprep.subr.bf16.mxu0 0
        %7317 = vmatpush1.bf16.msra.mxu0 0
        %7318 = vmatprep.subr.bf16.mxu0 0
        %7319 = vmatpush1.bf16.msra.mxu0 0
        %7320 = vmatprep.subr.bf16.mxu0 0
        %7321 = vmatpush1.bf16.msra.mxu0 0
        %7322 = vmatprep.subr.bf16.mxu0 0
        %7323 = vmatpush1.bf16.msra.mxu0 0
        %7324 = vmatprep.subr.bf16.mxu0 0
        %7325 = vmatpush1.bf16.msra.mxu0 0
        %7326 = vmatprep.mubr.bf16.mxu0 0
        %7327 = vmatmul.mubr.bf16.gmra.mrb[0].mxu0 %v7268
        %v7328 = vpop.f32.mrb[0].mxu0
        %v7329 = vadd.f32 0.0, %v7328
        %v7330 = vpop.f32.mrb[0].mxu0
        %v7331 = vadd.f32 0.0, %v7330
        %v7332 = vpop.f32.mrb[0].mxu0
        %v7333 = vpop.f32.mrb[0].mxu0
        %7334 = vdwg.mxu0
        %7335 = vmatprep.subr.bf16.mxu0 %v7280
        %7336 = vmatpush1.bf16.msra.mxu0 %v7277
        %7337 = vmatprep.subr.bf16.mxu0 0
        %7338 = vmatpush1.bf16.msra.mxu0 0
        %7339 = vmatprep.subr.bf16.mxu0 0
        %7340 = vmatpush1.bf16.msra.mxu0 0
        %7341 = vmatprep.subr.bf16.mxu0 0
        %7342 = vmatpush1.bf16.msra.mxu0 0
        %7343 = vmatprep.subr.bf16.mxu0 0
        %7344 = vmatpush1.bf16.msra.mxu0 0
        %7345 = vmatprep.subr.bf16.mxu0 0
        %7346 = vmatpush1.bf16.msra.mxu0 0
        %7347 = vmatprep.subr.bf16.mxu0 0
        %7348 = vmatpush1.bf16.msra.mxu0 0
        %7349 = vmatprep.subr.bf16.mxu0 0
        %7350 = vmatpush1.bf16.msra.mxu0 0
        %7351 = vmatprep.subr.bf16.mxu0 0
        %7352 = vmatpush1.bf16.msra.mxu0 0
        %7353 = vmatprep.subr.bf16.mxu0 0
        %7354 = vmatpush1.bf16.msra.mxu0 0
        %7355 = vmatprep.subr.bf16.mxu0 0
        %7356 = vmatpush1.bf16.msra.mxu0 0
        %7357 = vmatprep.subr.bf16.mxu0 0
        %7358 = vmatpush1.bf16.msra.mxu0 0
        %7359 = vmatprep.subr.bf16.mxu0 0
        %7360 = vmatpush1.bf16.msra.mxu0 0
        %7361 = vmatprep.subr.bf16.mxu0 0
        %7362 = vmatpush1.bf16.msra.mxu0 0
        %7363 = vmatprep.subr.bf16.mxu0 0
        %7364 = vmatpush1.bf16.msra.mxu0 0
        %7365 = vmatprep.subr.bf16.mxu0 0
        %7366 = vmatpush1.bf16.msra.mxu0 0
        %7367 = vmatprep.mubr.bf16.mxu0 0
        %7368 = vmatmul.mubr.bf16.gmra.mrb[0].mxu0 %v7268
        %v7369 = vpop.f32.mrb[0].mxu0
        %v7370 = vadd.f32 0.0, %v7369
        %v7371 = vpop.f32.mrb[0].mxu0
        %v7372 = vadd.f32 0.0, %v7371
        %v7373 = vpop.f32.mrb[0].mxu0
        %v7374 = vpop.f32.mrb[0].mxu0
        %7375 = vdwg.mxu0
        %7376 = vmatprep.subr.bf16.mxu0 %v7286
        %7377 = vmatpush1.bf16.msra.mxu0 %v7283
        %7378 = vmatprep.subr.bf16.mxu0 0
        %7379 = vmatpush1.bf16.msra.mxu0 0
        %7380 = vmatprep.subr.bf16.mxu0 0
        %7381 = vmatpush1.bf16.msra.mxu0 0
        %7382 = vmatprep.subr.bf16.mxu0 0
        %7383 = vmatpush1.bf16.msra.mxu0 0
        %7384 = vmatprep.subr.bf16.mxu0 0
        %7385 = vmatpush1.bf16.msra.mxu0 0
        %7386 = vmatprep.subr.bf16.mxu0 0
        %7387 = vmatpush1.bf16.msra.mxu0 0
        %7388 = vmatprep.subr.bf16.mxu0 0
        %7389 = vmatpush1.bf16.msra.mxu0 0
        %7390 = vmatprep.subr.bf16.mxu0 0
        %7391 = vmatpush1.bf16.msra.mxu0 0
        %7392 = vmatprep.subr.bf16.mxu0 0
        %7393 = vmatpush1.bf16.msra.mxu0 0
        %7394 = vmatprep.subr.bf16.mxu0 0
        %7395 = vmatpush1.bf16.msra.mxu0 0
        %7396 = vmatprep.subr.bf16.mxu0 0
        %7397 = vmatpush1.bf16.msra.mxu0 0
        %7398 = vmatprep.subr.bf16.mxu0 0
        %7399 = vmatpush1.bf16.msra.mxu0 0
        %7400 = vmatprep.subr.bf16.mxu0 0
        %7401 = vmatpush1.bf16.msra.mxu0 0
        %7402 = vmatprep.subr.bf16.mxu0 0
        %7403 = vmatpush1.bf16.msra.mxu0 0
        %7404 = vmatprep.subr.bf16.mxu0 0
        %7405 = vmatpush1.bf16.msra.mxu0 0
        %7406 = vmatprep.subr.bf16.mxu0 0
        %7407 = vmatpush1.bf16.msra.mxu0 0
        %7408 = vmatprep.mubr.bf16.mxu0 0
        %7409 = vmatmul.mubr.bf16.gmra.mrb[0].mxu0 %v7268
        %v7410 = vpop.f32.mrb[0].mxu0
        %v7411 = vadd.f32 0.0, %v7410
        %v7412 = vpop.f32.mrb[0].mxu0
        %v7413 = vadd.f32 0.0, %v7412
        %v7414 = vpop.f32.mrb[0].mxu0
        %v7415 = vpop.f32.mrb[0].mxu0
        %7416 = vdwg.mxu0
        %7417 = vmatprep.subr.bf16.mxu0 %v7292
        %7418 = vmatpush1.bf16.msra.mxu0 %v7289
        %7419 = vmatprep.subr.bf16.mxu0 0
        %7420 = vmatpush1.bf16.msra.mxu0 0
        %7421 = vmatprep.subr.bf16.mxu0 0
        %7422 = vmatpush1.bf16.msra.mxu0 0
        %7423 = vmatprep.subr.bf16.mxu0 0
        %7424 = vmatpush1.bf16.msra.mxu0 0
        %7425 = vmatprep.subr.bf16.mxu0 0
        %7426 = vmatpush1.bf16.msra.mxu0 0
        %7427 = vmatprep.subr.bf16.mxu0 0
        %7428 = vmatpush1.bf16.msra.mxu0 0
        %7429 = vmatprep.subr.bf16.mxu0 0
        %7430 = vmatpush1.bf16.msra.mxu0 0
        %7431 = vmatprep.subr.bf16.mxu0 0
        %7432 = vmatpush1.bf16.msra.mxu0 0
        %7433 = vmatprep.subr.bf16.mxu0 0
        %7434 = vmatpush1.bf16.msra.mxu0 0
        %7435 = vmatprep.subr.bf16.mxu0 0
        %7436 = vmatpush1.bf16.msra.mxu0 0
        %7437 = vmatprep.subr.bf16.mxu0 0
        %7438 = vmatpush1.bf16.msra.mxu0 0
        %7439 = vmatprep.subr.bf16.mxu0 0
        %7440 = vmatpush1.bf16.msra.mxu0 0
        %7441 = vmatprep.subr.bf16.mxu0 0
        %7442 = vmatpush1.bf16.msra.mxu0 0
        %7443 = vmatprep.subr.bf16.mxu0 0
        %7444 = vmatpush1.bf16.msra.mxu0 0
        %7445 = vmatprep.subr.bf16.mxu0 0
        %7446 = vmatpush1.bf16.msra.mxu0 0
        %7447 = vmatprep.subr.bf16.mxu0 0
        %7448 = vmatpush1.bf16.msra.mxu0 0
        %7449 = vmatprep.mubr.bf16.mxu0 0
        %7450 = vmatmul.mubr.bf16.gmra.mrb[0].mxu0 %v7268
        %v7451 = vpop.f32.mrb[0].mxu0
        %v7452 = vadd.f32 0.0, %v7451
        %v7453 = vpop.f32.mrb[0].mxu0
        %v7454 = vadd.f32 0.0, %v7453
        %v7455 = vpop.f32.mrb[0].mxu0
        %v7456 = vpop.f32.mrb[0].mxu0
        %7457 = vdwg.mxu0
        %v7458 = vadd.f32 %v7183, %v7329
        %v7459 = vadd.f32 %v7184, %v7331
        %v7460 = vadd.f32 %v7185, %v7370
        %v7461 = vadd.f32 %v7186, %v7372
        %v7462 = vadd.f32 %v7187, %v7411
        %v7463 = vadd.f32 %v7188, %v7413
        %v7464 = vadd.f32 %v7189, %v7452
        %v7465 = vadd.f32 %v7190, %v7454
        %v7466 = vld [vmem:[#allocation2 + $0x2] sm:$0xff]
        %v7467 = vld [vmem:[#allocation2 + $0xa] sm:$0xff]
        %v7468 = vld [vmem:[#allocation2 + $0x12] sm:$0x3]
        %s7469 = scalar_lea.vmem %s0, 104
        %v7470 = vld [vmem:[%s7469] sm:$0xf]
        %v7474 = vcombine.high %v7466, %v7466
        %v7476 = vunpack.c.l.s4 1983009808
        %v7477 = vunpack.c.0.s8 %v7476
        %v7478 = vlaneseq
        %v7479 = vshrl.u32 %v7478, 7
        %v7480 = vsub.s32 %v7477, %v7479
        %v7481 = vrot.slane %v7466, %v7480
        %v7483 = vunpack.c.l.s4 1983009808
        %v7484 = vunpack.c.0.s8 %v7483
        %v7485 = vlaneseq
        %v7486 = vshrl.u32 %v7485, 7
        %v7487 = vsub.s32 %v7484, %v7486
        %v7488 = vrot.slane %v7474, %v7487
        %v7489 = vcombine.high %v7481, %v7481
        %v7490 = vcombine.high %v7488, %v7488
        %v7491 = vcombine.high %v7467, %v7467
        %v7493 = vunpack.c.l.s4 1983009808
        %v7494 = vunpack.c.0.s8 %v7493
        %v7495 = vlaneseq
        %v7496 = vshrl.u32 %v7495, 7
        %v7497 = vsub.s32 %v7494, %v7496
        %v7498 = vrot.slane %v7467, %v7497
        %v7500 = vunpack.c.l.s4 1983009808
        %v7501 = vunpack.c.0.s8 %v7500
        %v7502 = vlaneseq
        %v7503 = vshrl.u32 %v7502, 7
        %v7504 = vsub.s32 %v7501, %v7503
        %v7505 = vrot.slane %v7491, %v7504
        %v7506 = vcombine.high %v7498, %v7498
        %v7507 = vcombine.high %v7505, %v7505
        %v7509 = vunpack.c.l.s4 1983009808
        %v7510 = vunpack.c.0.s8 %v7509
        %v7511 = vlaneseq
        %v7512 = vshrl.u32 %v7511, 7
        %v7513 = vsub.s32 %v7510, %v7512
        %v7514 = vrot.slane %v7468, %v7513
        %7515 = vrot.lane.b32.xlu0 %v7481, 34
        %v7516 = vpop.permute.xlu0 %7515
        %7517 = vrot.lane.b32.xlu0 %v7489, 34
        %v7518 = vpop.permute.xlu0 %7517
        %7519 = vrot.lane.b32.xlu0 %v7488, 34
        %v7520 = vpop.permute.xlu0 %7519
        %7521 = vrot.lane.b32.xlu0 %v7490, 34
        %v7522 = vpop.permute.xlu0 %7521
        %7523 = vrot.lane.b32.xlu0 %v7498, 34
        %v7524 = vpop.permute.xlu0 %7523
        %7525 = vrot.lane.b32.xlu0 %v7506, 34
        %v7526 = vpop.permute.xlu0 %7525
        %7527 = vrot.lane.b32.xlu0 %v7505, 34
        %v7528 = vpop.permute.xlu0 %7527
        %7529 = vrot.lane.b32.xlu0 %v7507, 34
        %v7530 = vpop.permute.xlu0 %7529
        %7531 = vrot.lane.b32.xlu0 %v7514, 34
        %v7532 = vpop.permute.xlu0 %7531
        %vm7533 = vcmask 277504
        %v7534 = vsel %vm7533, %v7516, %v7518
        %v7535 = vsel %vm7533, %v7518, %v7520
        %v7536 = vsel %vm7533, %v7520, %v7522
        %v7537 = vsel %vm7533, %v7522, %v7524
        %v7538 = vsel %vm7533, %v7524, %v7526
        %v7539 = vsel %vm7533, %v7526, %v7528
        %v7540 = vsel %vm7533, %v7528, %v7530
        %v7541 = vsel %vm7533, %v7530, %v7532
        %v7543 = vsel %vm482, %v7470, 0
        %v7546 = vsel %vm486, %v7534, 0
        %v7549 = vsel %vm486, %v7535, 0
        %v7552 = vsel %vm486, %v7536, 0
        %v7555 = vsel %vm486, %v7537, 0
        %v7558 = vsel %vm486, %v7538, 0
        %v7561 = vsel %vm486, %v7539, 0
        %v7564 = vsel %vm486, %v7540, 0
        %v7567 = vsel %vm486, %v7541, 0
        %7569 = vmatprep.subr.bf16.mxu0 %v7549
        %7570 = vmatpush1.bf16.msra.mxu0 %v7546
        %7571 = vmatprep.subr.bf16.mxu0 0
        %7572 = vmatpush1.bf16.msra.mxu0 0
        %7573 = vmatprep.subr.bf16.mxu0 0
        %7574 = vmatpush1.bf16.msra.mxu0 0
        %7575 = vmatprep.subr.bf16.mxu0 0
        %7576 = vmatpush1.bf16.msra.mxu0 0
        %7577 = vmatprep.subr.bf16.mxu0 0
        %7578 = vmatpush1.bf16.msra.mxu0 0
        %7579 = vmatprep.subr.bf16.mxu0 0
        %7580 = vmatpush1.bf16.msra.mxu0 0
        %7581 = vmatprep.subr.bf16.mxu0 0
        %7582 = vmatpush1.bf16.msra.mxu0 0
        %7583 = vmatprep.subr.bf16.mxu0 0
        %7584 = vmatpush1.bf16.msra.mxu0 0
        %7585 = vmatprep.subr.bf16.mxu0 0
        %7586 = vmatpush1.bf16.msra.mxu0 0
        %7587 = vmatprep.subr.bf16.mxu0 0
        %7588 = vmatpush1.bf16.msra.mxu0 0
        %7589 = vmatprep.subr.bf16.mxu0 0
        %7590 = vmatpush1.bf16.msra.mxu0 0
        %7591 = vmatprep.subr.bf16.mxu0 0
        %7592 = vmatpush1.bf16.msra.mxu0 0
        %7593 = vmatprep.subr.bf16.mxu0 0
        %7594 = vmatpush1.bf16.msra.mxu0 0
        %7595 = vmatprep.subr.bf16.mxu0 0
        %7596 = vmatpush1.bf16.msra.mxu0 0
        %7597 = vmatprep.subr.bf16.mxu0 0
        %7598 = vmatpush1.bf16.msra.mxu0 0
        %7599 = vmatprep.subr.bf16.mxu0 0
        %7600 = vmatpush1.bf16.msra.mxu0 0
        %7601 = vmatprep.mubr.bf16.mxu0 0
        %7602 = vmatmul.mubr.bf16.gmra.mrb[0].mxu0 %v7543
        %v7603 = vpop.f32.mrb[0].mxu0
        %v7604 = vadd.f32 0.0, %v7603
        %v7605 = vpop.f32.mrb[0].mxu0
        %v7606 = vadd.f32 0.0, %v7605
        %v7607 = vpop.f32.mrb[0].mxu0
        %v7608 = vpop.f32.mrb[0].mxu0
        %7609 = vdwg.mxu0
        %7610 = vmatprep.subr.bf16.mxu0 %v7555
        %7611 = vmatpush1.bf16.msra.mxu0 %v7552
        %7612 = vmatprep.subr.bf16.mxu0 0
        %7613 = vmatpush1.bf16.msra.mxu0 0
        %7614 = vmatprep.subr.bf16.mxu0 0
        %7615 = vmatpush1.bf16.msra.mxu0 0
        %7616 = vmatprep.subr.bf16.mxu0 0
        %7617 = vmatpush1.bf16.msra.mxu0 0
        %7618 = vmatprep.subr.bf16.mxu0 0
        %7619 = vmatpush1.bf16.msra.mxu0 0
        %7620 = vmatprep.subr.bf16.mxu0 0
        %7621 = vmatpush1.bf16.msra.mxu0 0
        %7622 = vmatprep.subr.bf16.mxu0 0
        %7623 = vmatpush1.bf16.msra.mxu0 0
        %7624 = vmatprep.subr.bf16.mxu0 0
        %7625 = vmatpush1.bf16.msra.mxu0 0
        %7626 = vmatprep.subr.bf16.mxu0 0
        %7627 = vmatpush1.bf16.msra.mxu0 0
        %7628 = vmatprep.subr.bf16.mxu0 0
        %7629 = vmatpush1.bf16.msra.mxu0 0
        %7630 = vmatprep.subr.bf16.mxu0 0
        %7631 = vmatpush1.bf16.msra.mxu0 0
        %7632 = vmatprep.subr.bf16.mxu0 0
        %7633 = vmatpush1.bf16.msra.mxu0 0
        %7634 = vmatprep.subr.bf16.mxu0 0
        %7635 = vmatpush1.bf16.msra.mxu0 0
        %7636 = vmatprep.subr.bf16.mxu0 0
        %7637 = vmatpush1.bf16.msra.mxu0 0
        %7638 = vmatprep.subr.bf16.mxu0 0
        %7639 = vmatpush1.bf16.msra.mxu0 0
        %7640 = vmatprep.subr.bf16.mxu0 0
        %7641 = vmatpush1.bf16.msra.mxu0 0
        %7642 = vmatprep.mubr.bf16.mxu0 0
        %7643 = vmatmul.mubr.bf16.gmra.mrb[0].mxu0 %v7543
        %v7644 = vpop.f32.mrb[0].mxu0
        %v7645 = vadd.f32 0.0, %v7644
        %v7646 = vpop.f32.mrb[0].mxu0
        %v7647 = vadd.f32 0.0, %v7646
        %v7648 = vpop.f32.mrb[0].mxu0
        %v7649 = vpop.f32.mrb[0].mxu0
        %7650 = vdwg.mxu0
        %7651 = vmatprep.subr.bf16.mxu0 %v7561
        %7652 = vmatpush1.bf16.msra.mxu0 %v7558
        %7653 = vmatprep.subr.bf16.mxu0 0
        %7654 = vmatpush1.bf16.msra.mxu0 0
        %7655 = vmatprep.subr.bf16.mxu0 0
        %7656 = vmatpush1.bf16.msra.mxu0 0
        %7657 = vmatprep.subr.bf16.mxu0 0
        %7658 = vmatpush1.bf16.msra.mxu0 0
        %7659 = vmatprep.subr.bf16.mxu0 0
        %7660 = vmatpush1.bf16.msra.mxu0 0
        %7661 = vmatprep.subr.bf16.mxu0 0
        %7662 = vmatpush1.bf16.msra.mxu0 0
        %7663 = vmatprep.subr.bf16.mxu0 0
        %7664 = vmatpush1.bf16.msra.mxu0 0
        %7665 = vmatprep.subr.bf16.mxu0 0
        %7666 = vmatpush1.bf16.msra.mxu0 0
        %7667 = vmatprep.subr.bf16.mxu0 0
        %7668 = vmatpush1.bf16.msra.mxu0 0
        %7669 = vmatprep.subr.bf16.mxu0 0
        %7670 = vmatpush1.bf16.msra.mxu0 0
        %7671 = vmatprep.subr.bf16.mxu0 0
        %7672 = vmatpush1.bf16.msra.mxu0 0
        %7673 = vmatprep.subr.bf16.mxu0 0
        %7674 = vmatpush1.bf16.msra.mxu0 0
        %7675 = vmatprep.subr.bf16.mxu0 0
        %7676 = vmatpush1.bf16.msra.mxu0 0
        %7677 = vmatprep.subr.bf16.mxu0 0
        %7678 = vmatpush1.bf16.msra.mxu0 0
        %7679 = vmatprep.subr.bf16.mxu0 0
        %7680 = vmatpush1.bf16.msra.mxu0 0
        %7681 = vmatprep.subr.bf16.mxu0 0
        %7682 = vmatpush1.bf16.msra.mxu0 0
        %7683 = vmatprep.mubr.bf16.mxu0 0
        %7684 = vmatmul.mubr.bf16.gmra.mrb[0].mxu0 %v7543
        %v7685 = vpop.f32.mrb[0].mxu0
        %v7686 = vadd.f32 0.0, %v7685
        %v7687 = vpop.f32.mrb[0].mxu0
        %v7688 = vadd.f32 0.0, %v7687
        %v7689 = vpop.f32.mrb[0].mxu0
        %v7690 = vpop.f32.mrb[0].mxu0
        %7691 = vdwg.mxu0
        %7692 = vmatprep.subr.bf16.mxu0 %v7567
        %7693 = vmatpush1.bf16.msra.mxu0 %v7564
        %7694 = vmatprep.subr.bf16.mxu0 0
        %7695 = vmatpush1.bf16.msra.mxu0 0
        %7696 = vmatprep.subr.bf16.mxu0 0
        %7697 = vmatpush1.bf16.msra.mxu0 0
        %7698 = vmatprep.subr.bf16.mxu0 0
        %7699 = vmatpush1.bf16.msra.mxu0 0
        %7700 = vmatprep.subr.bf16.mxu0 0
        %7701 = vmatpush1.bf16.msra.mxu0 0
        %7702 = vmatprep.subr.bf16.mxu0 0
        %7703 = vmatpush1.bf16.msra.mxu0 0
        %7704 = vmatprep.subr.bf16.mxu0 0
        %7705 = vmatpush1.bf16.msra.mxu0 0
        %7706 = vmatprep.subr.bf16.mxu0 0
        %7707 = vmatpush1.bf16.msra.mxu0 0
        %7708 = vmatprep.subr.bf16.mxu0 0
        %7709 = vmatpush1.bf16.msra.mxu0 0
        %7710 = vmatprep.subr.bf16.mxu0 0
        %7711 = vmatpush1.bf16.msra.mxu0 0
        %7712 = vmatprep.subr.bf16.mxu0 0
        %7713 = vmatpush1.bf16.msra.mxu0 0
        %7714 = vmatprep.subr.bf16.mxu0 0
        %7715 = vmatpush1.bf16.msra.mxu0 0
        %7716 = vmatprep.subr.bf16.mxu0 0
        %7717 = vmatpush1.bf16.msra.mxu0 0
        %7718 = vmatprep.subr.bf16.mxu0 0
        %7719 = vmatpush1.bf16.msra.mxu0 0
        %7720 = vmatprep.subr.bf16.mxu0 0
        %7721 = vmatpush1.bf16.msra.mxu0 0
        %7722 = vmatprep.subr.bf16.mxu0 0
        %7723 = vmatpush1.bf16.msra.mxu0 0
        %7724 = vmatprep.mubr.bf16.mxu0 0
        %7725 = vmatmul.mubr.bf16.gmra.mrb[0].mxu0 %v7543
        %v7726 = vpop.f32.mrb[0].mxu0
        %v7727 = vadd.f32 0.0, %v7726
        %v7728 = vpop.f32.mrb[0].mxu0
        %v7729 = vadd.f32 0.0, %v7728
        %v7730 = vpop.f32.mrb[0].mxu0
        %v7731 = vpop.f32.mrb[0].mxu0
        %7732 = vdwg.mxu0
        %v7733 = vadd.f32 %v7458, %v7604
        %v7734 = vadd.f32 %v7459, %v7606
        %v7735 = vadd.f32 %v7460, %v7645
        %v7736 = vadd.f32 %v7461, %v7647
        %v7737 = vadd.f32 %v7462, %v7686
        %v7738 = vadd.f32 %v7463, %v7688
        %v7739 = vadd.f32 %v7464, %v7727
        %v7740 = vadd.f32 %v7465, %v7729
        %v7741 = vpack.c.bf16 %v7733, %v7733
        %v7742 = vpack.c.bf16 %v7734, %v7734
        %v7743 = vpack.c.bf16 %v7735, %v7735
        %v7744 = vpack.c.bf16 %v7736, %v7736
        %v7745 = vpack.c.bf16 %v7737, %v7737
        %v7746 = vpack.c.bf16 %v7738, %v7738
        %v7747 = vpack.c.bf16 %v7739, %v7739
        %v7748 = vpack.c.bf16 %v7740, %v7740
        %v7757 = vunpack.c.l.b16 %v7741
        %v7758 = vunpack.c.l.b16 %v7742
        %v7759 = vunpack.c.l.b16 %v7743
        %v7760 = vunpack.c.l.b16 %v7744
        %v7761 = vunpack.c.l.b16 %v7745
        %v7762 = vunpack.c.l.b16 %v7746
        %v7763 = vunpack.c.l.b16 %v7747
        %v7764 = vunpack.c.l.b16 %v7748
        %v7765 = vpack.c.b16 %v7758, %v7757
        %v7766 = vpack.c.b16 %v7760, %v7759
        %v7767 = vpack.c.b16 %v7762, %v7761
        %v7768 = vpack.c.b16 %v7764, %v7763
        %7773 = vst [vmem:[%s332] sm:$0xff] %v7765
        %7774 = vst [vmem:[%s332 + $0x8] sm:$0xff] %v7766
        %7775 = vst [vmem:[%s332 + $0x10] sm:$0xff] %v7767
        %7776 = vst [vmem:[%s332 + $0x18] sm:$0xff] %v7768
        %v7777 = vld [vmem:[%s380] sm:$0xff]
        %v7778 = vunpack.c.l.bf16 %v7777
        %v7779 = vunpack.c.h.bf16 %v7777
        %v7780 = vld [vmem:[%s386] sm:$0xff]
        %v7783 = vlaneseq
        %v7784 = vshrl.u32 %v7783, 7
        %v7785 = vsub.s32 0, %v7784
        %v7786 = vrot.slane %v7778, %v7785
        %v7787 = vlaneseq
        %v7788 = vshrl.u32 %v7787, 7
        %v7789 = vsub.s32 2, %v7788
        %v7790 = vrot.slane %v7778, %v7789
        %v7791 = vlaneseq
        %v7792 = vshrl.u32 %v7791, 7
        %v7793 = vsub.s32 4, %v7792
        %v7794 = vrot.slane %v7778, %v7793
        %v7795 = vlaneseq
        %v7796 = vshrl.u32 %v7795, 7
        %v7797 = vsub.s32 6, %v7796
        %v7798 = vrot.slane %v7778, %v7797
        %v7799 = vlaneseq
        %v7800 = vshrl.u32 %v7799, 7
        %v7801 = vsub.s32 0, %v7800
        %v7802 = vrot.slane %v7779, %v7801
        %v7803 = vlaneseq
        %v7804 = vshrl.u32 %v7803, 7
        %v7805 = vsub.s32 2, %v7804
        %v7806 = vrot.slane %v7779, %v7805
        %v7807 = vlaneseq
        %v7808 = vshrl.u32 %v7807, 7
        %v7809 = vsub.s32 4, %v7808
        %v7810 = vrot.slane %v7779, %v7809
        %v7811 = vlaneseq
        %v7812 = vshrl.u32 %v7811, 7
        %v7813 = vsub.s32 6, %v7812
        %v7814 = vrot.slane %v7779, %v7813
        %v7823 = vlaneseq
        %v7824 = vshrl.u32 %v7823, 7
        %v7825 = vsub.s32 0, %v7824
        %v7826 = vrot.slane %v7786, %v7825
        %v7827 = vlaneseq
        %v7828 = vshrl.u32 %v7827, 7
        %v7829 = vsub.s32 0, %v7828
        %v7830 = vrot.slane %v7790, %v7829
        %v7831 = vlaneseq
        %v7832 = vshrl.u32 %v7831, 7
        %v7833 = vsub.s32 0, %v7832
        %v7834 = vrot.slane %v7794, %v7833
        %v7835 = vlaneseq
        %v7836 = vshrl.u32 %v7835, 7
        %v7837 = vsub.s32 0, %v7836
        %v7838 = vrot.slane %v7798, %v7837
        %v7839 = vlaneseq
        %v7840 = vshrl.u32 %v7839, 7
        %v7841 = vsub.s32 0, %v7840
        %v7842 = vrot.slane %v7802, %v7841
        %v7843 = vlaneseq
        %v7844 = vshrl.u32 %v7843, 7
        %v7845 = vsub.s32 0, %v7844
        %v7846 = vrot.slane %v7806, %v7845
        %v7847 = vlaneseq
        %v7848 = vshrl.u32 %v7847, 7
        %v7849 = vsub.s32 0, %v7848
        %v7850 = vrot.slane %v7810, %v7849
        %v7851 = vlaneseq
        %v7852 = vshrl.u32 %v7851, 7
        %v7853 = vsub.s32 0, %v7852
        %v7854 = vrot.slane %v7814, %v7853
        %v7855 = vmul.f32 %v7733, %v7826
        %v7856 = vmul.f32 %v7734, %v7830
        %v7857 = vmul.f32 %v7735, %v7834
        %v7858 = vmul.f32 %v7736, %v7838
        %v7859 = vmul.f32 %v7737, %v7842
        %v7860 = vmul.f32 %v7738, %v7846
        %v7861 = vmul.f32 %v7739, %v7850
        %v7862 = vmul.f32 %v7740, %v7854
        %v7863 = vadd.f32 %v7855, %v7856
        %v7864 = vadd.f32 %v7863, %v7857
        %v7865 = vadd.f32 %v7864, %v7858
        %v7866 = vadd.f32 %v7865, %v7859
        %v7867 = vadd.f32 %v7866, %v7860
        %v7868 = vadd.f32 %v7867, %v7861
        %v7869 = vadd.f32 %v7868, %v7862
        %7870 = vadd.xlane.f32.xlu0 %v7869
        %v7871 = vpop.xlane.xlu0 %7870
        %v7872 = vadd.f32 %v7780, %v7871
        %vm7873 = vcmask 7168
        %7874 = vst.msk [vmem:[%s386] sm:$0xff] %vm7873, %v7872
        %v7875 = vld [vmem:[%s390] sm:$0xff]
        %v7876 = vmul.f32 %v7733, %v7733
        %v7877 = vmul.f32 %v7734, %v7734
        %v7878 = vmul.f32 %v7735, %v7735
        %v7879 = vmul.f32 %v7736, %v7736
        %v7880 = vmul.f32 %v7737, %v7737
        %v7881 = vmul.f32 %v7738, %v7738
        %v7882 = vmul.f32 %v7739, %v7739
        %v7883 = vmul.f32 %v7740, %v7740
        %v7884 = vmul.f32 %v7876, %v7826
        %v7885 = vmul.f32 %v7877, %v7830
        %v7886 = vmul.f32 %v7878, %v7834
        %v7887 = vmul.f32 %v7879, %v7838
        %v7888 = vmul.f32 %v7880, %v7842
        %v7889 = vmul.f32 %v7881, %v7846
        %v7890 = vmul.f32 %v7882, %v7850
        %v7891 = vmul.f32 %v7883, %v7854
        %v7892 = vadd.f32 %v7884, %v7885
        %v7893 = vadd.f32 %v7892, %v7886
        %v7894 = vadd.f32 %v7893, %v7887
        %v7895 = vadd.f32 %v7894, %v7888
        %v7896 = vadd.f32 %v7895, %v7889
        %v7897 = vadd.f32 %v7896, %v7890
        %v7898 = vadd.f32 %v7897, %v7891
        %7899 = vadd.xlane.f32.xlu0 %v7898
        %v7900 = vpop.xlane.xlu0 %7899
        %v7901 = vadd.f32 %v7875, %v7900
        %7902 = vst.msk [vmem:[%s390] sm:$0xff] %vm7873, %v7901
        %s7903 = sand.u32 %s150, 1
        %s7904 = scalar_lea.sflag [#allocation4], %s7903
        %s7905 = sand.u32 %s150, 1
        %s7906 = smul.addr %s7905, 32
        %s7907 = scalar_lea.vmem [#allocation3], %s7906
        %p7908 = scmp.lt.s32.totalorder %s25, 1
        %s7909 = scalar_select %p7908, %s25, 1
        %s7910 = smul.addr %s7909, 8
        %s7911 = scalar_lea.vmem %s5, %s7910
        %p7912 = scmp.lt.s32.totalorder %s25, 1
        %s7913 = scalar_select %p7912, %s25, 1
        %s7914 = smul.addr %s7913, 8
        %s7915 = scalar_lea.vmem %s6, %s7914
        // Predicated region
        $region41: #{tpu_custom_call.1} parent=35 // pred_check
          %p7916 = pneg %p160
        $region42: #{tpu_custom_call.1} parent=35 // pred_check_branch
          %7918 = sbr.rel (%p7916) target = $region44
        $region43: #{tpu_custom_call.1} parent=35 // pred_region
          %s7919 = smul.u32 8, %s26
          %s7921 = ssub.s32 512, 512
          %7922 = vsyncadd %s7904, %s7921
          %s7923 = smul.addr %s25, 8
          %s7924 = sadd.s32 %s7919, %s7923
          %s7925 = smul.addr %s7924, 64
          %s7926 = scalar_lea.hbm %s4, %s7925
          %s7928 = sshll.u32 %s7907, 4
          %s7929 = int_to_ptr.vmem [resolvable:$true] %s7928
          %7931 = dma.vmem_to_hbm [thread:$0]  %s7929, 512, %s7926, %s7904
        $region44: #{tpu_custom_call.1} parent=35 // pred_fallthru
          _
        // Predicated region
        $region45: #{tpu_custom_call.1} parent=35 // pred_check
          %p7932 = pneg %p186
        $region46: #{tpu_custom_call.1} parent=35 // pred_check_branch
          %7934 = sbr.rel (%p7932) target = $region48
        $region47: #{tpu_custom_call.1} parent=35 // pred_region
          _
        $region48: #{tpu_custom_call.1} parent=35 // pred_fallthru
          _
        // Predicated region
        $region49: #{tpu_custom_call.1} parent=35 // pred_check
          %p7935 = pneg %p212
        $region50: #{tpu_custom_call.1} parent=35 // pred_check_branch
          %7937 = sbr.rel (%p7935) target = $region52
        $region51: #{tpu_custom_call.1} parent=35 // pred_region
          _
        $region52: #{tpu_custom_call.1} parent=35 // pred_fallthru
          _
      $region36: #{tpu_custom_call.1} parent=5 // pred_fallthru
        _
      %p7938 = scmp.le.s32.totalorder 2, %s16
      // Predicated region
      $region53: #{tpu_custom_call.1} parent=5 // pred_check
        %p7939 = pneg %p7938
      $region54: #{tpu_custom_call.1} parent=5 // pred_check_branch
        %7941 = sbr.rel (%p7939) target = $region56
      $region55: #{tpu_custom_call.1} parent=5 // pred_region
        %s7942 = ssub.s32 %s16, 2
        // Predicated region
        $region57: #{tpu_custom_call.1} parent=55 // pred_check
          %p7943 = pneg %p166
        $region58: #{tpu_custom_call.1} parent=55 // pred_check_branch
          %7945 = sbr.rel (%p7943) target = $region60
        $region59: #{tpu_custom_call.1} parent=55 // pred_region
          %s7946 = sand.u32 %s151, 1
          %s7947 = scalar_lea.sflag [#allocation4], %s7946
          %s7948 = sand.u32 %s151, 1
          %s7949 = smul.addr %s7948, 32
          %s7950 = scalar_lea.vmem [#allocation3], %s7949
          %7951 = dma.done %s7947, 512
        $region60: #{tpu_custom_call.1} parent=55 // pred_fallthru
          _
        // Predicated region
        $region61: #{tpu_custom_call.1} parent=55 // pred_check
          %p7952 = pneg %p192
        $region62: #{tpu_custom_call.1} parent=55 // pred_check_branch
          %7954 = sbr.rel (%p7952) target = $region64
        $region63: #{tpu_custom_call.1} parent=55 // pred_region
          %p7955 = scmp.lt.s32.totalorder %s27, 1
          %s7956 = scalar_select %p7955, %s27, 1
          %s7957 = smul.addr %s7956, 8
          %s7958 = scalar_lea.vmem %s5, %s7957
        $region64: #{tpu_custom_call.1} parent=55 // pred_fallthru
          _
        // Predicated region
        $region65: #{tpu_custom_call.1} parent=55 // pred_check
          %p7959 = pneg %p218
        $region66: #{tpu_custom_call.1} parent=55 // pred_check_branch
          %7961 = sbr.rel (%p7959) target = $region68
        $region67: #{tpu_custom_call.1} parent=55 // pred_region
          %p7962 = scmp.lt.s32.totalorder %s27, 1
          %s7963 = scalar_select %p7962, %s27, 1
          %s7964 = smul.addr %s7963, 8
          %s7965 = scalar_lea.vmem %s6, %s7964
        $region68: #{tpu_custom_call.1} parent=55 // pred_fallthru
          _
      $region56: #{tpu_custom_call.1} parent=5 // pred_fallthru
        _
    $region6: #{tpu_custom_call.1} parent=1 // loop_footer
      %s20 = sadd.s32 1, %s16
    $region7: #{tpu_custom_call.1} parent=1 // loop_footer_branch
      %15 = sbr.rel target = $region3
    $region8: #{tpu_custom_call.1} parent=1 // loop_exit
      _
    %7966 = vsyncpa [#allocation4], 1
    %s7967 = scalar_lea.sflag [#allocation4], 1
    %7968 = vsyncpa %s7967, 1

</llo_original>
